<compile_context>
chip_gen: v7x
topology: tpu7x:2x2x1
jax: 0.10.0
libtpu: 0.0.40
codegen_flags: <defaults>
</compile_context>

<pallas_src>
import numpy as np
import jax
import jax.numpy as jnp
from jax import lax
from jax.experimental import pallas as pl
from jax.experimental.pallas import tpu as pltpu

BATCH = 2
L_IN = 3200
K1, S1, P1 = 80, 4, 38
OUT_SZ = 6

SAMPLE = 1024                    # per-sample lane block (power of two >= 800)
L1, L2, L3, L4 = 800, 200, 50, 12   # valid lengths after conv1 / pool1 / pool2 / pool3

# Static sanity: rolled-in conv1 taps (<= 19 lanes) only ever touch lanes past
# the valid length, and the padded signal fits in the 4*SAMPLE phase buffer.
assert L1 + (K1 + S1 - 1) // S1 <= SAMPLE
assert P1 + L_IN <= S1 * SAMPLE


# ----------------------------- kernel helpers ------------------------------

def _pool4(x, step):
    """MaxPool1d(4) over logical positions living at lane-stride `step`.

    The pooled value for output position p lands on lane 4*step*p (the next
    stage simply uses stride 4*step); intermediate lanes carry don't-care data.
    """
    n = x.shape[1]
    r1 = pltpu.roll(x, shift=(n - step) % n, axis=1)
    r2 = pltpu.roll(x, shift=(n - 2 * step) % n, axis=1)
    r3 = pltpu.roll(x, shift=(n - 3 * step) % n, axis=1)
    return jnp.maximum(jnp.maximum(x, r1), jnp.maximum(r2, r3))


def _conv3_relu(x, w_ref, sh_ref, step, valid, first_mask, off):
    """Conv1d(k=3, s=1, pad=1) + folded BN + ReLU as ONE MXU matmul.

    x: (C_in, N) f32 with logical positions at lane-stride `step` inside each
    SAMPLE-lane block; `valid` is the logical sequence length.  The +-1 taps
    are produced with pltpu.roll and zero-masked at the per-sample boundaries
    (this implements the conv zero padding and isolates the folded samples).
    BN scale is pre-folded into w_ref; sh_ref is the per-channel shift.
    """
    n = x.shape[1]
    x_prev = jnp.where(first_mask, 0.0, pltpu.roll(x, shift=step, axis=1))
    x_next = jnp.where(off == (valid - 1) * step, 0.0,
                       pltpu.roll(x, shift=(n - step) % n, axis=1))
    op = jnp.concatenate([x_prev, x, x_next], axis=0).astype(jnp.bfloat16)
    y = jnp.dot(w_ref[...], op, preferred_element_type=jnp.float32)
    return jnp.maximum(y + sh_ref[...], 0.0)


# --------------------------------- kernel ----------------------------------

def music_net_kernel(ph_ref, w1_ref, sh1_ref, w2_ref, sh2_ref,
                     w3_ref, sh3_ref, w4_ref, sh4_ref,
                     wf_ref, bf_ref, out_ref):
    ph4 = ph_ref[...]                                   # (4, B*SAMPLE) f32
    n = ph4.shape[1]

    # Boundary iota, computed once and reused by every conv stage.
    off = lax.broadcasted_iota(jnp.int32, (1, n), 1) & (SAMPLE - 1)
    first_mask = off == 0

    # conv1 (k=80, stride=4, pad=38) as a single matmul: the operand rows are
    # the 4 stride-4 phase rows lane-rolled by v (v=0..3) and 4*u (u=0..4),
    # i.e. row 16*u + 4*v + p holds tap k = 16*u + 4*v + p -- exact tap order.
    ph16 = jnp.concatenate(
        [ph4] + [pltpu.roll(ph4, shift=(n - v) % n, axis=1) for v in range(1, 4)],
        axis=0)                                         # (16, n)
    op1 = jnp.concatenate(
        [ph16] + [pltpu.roll(ph16, shift=(n - 4 * u) % n, axis=1) for u in range(1, 5)],
        axis=0).astype(jnp.bfloat16)                    # (80, n)
    x = jnp.dot(w1_ref[...], op1, preferred_element_type=jnp.float32)
    x = jnp.maximum(x + sh1_ref[...], 0.0)              # (16, n), step 1, valid 800

    x = _pool4(x, step=1)                                            # step 4,   valid 200
    x = _conv3_relu(x, w2_ref, sh2_ref, 4, L2, first_mask, off)      # (16, n)
    x = _pool4(x, step=4)                                            # step 16,  valid 50
    x = _conv3_relu(x, w3_ref, sh3_ref, 16, L3, first_mask, off)     # (32, n)
    x = _pool4(x, step=16)                                           # step 64,  valid 12
    x = _conv3_relu(x, w4_ref, sh4_ref, 64, L4, first_mask, off)     # (64, n)
    x = _pool4(x, step=64)                                           # step 256, valid 3

    # avgPool(3): mean of logical positions 0,1,2 -> lands on per-sample lane 0.
    a = (x + pltpu.roll(x, shift=n - 256, axis=1)
           + pltpu.roll(x, shift=n - 512, axis=1)) * (1.0 / 3.0)     # (64, n)

    # fc0 (64 -> 6) as one MXU matmul with a lane-dense (8, n) f32 store; the
    # wrapper slices rows 0..5 at lanes b*SAMPLE.  Rows 6..7 of wf are zero.
    y = jnp.dot(wf_ref[...], a.astype(jnp.bfloat16),
                preferred_element_type=jnp.float32)                  # (8, n)
    out_ref[...] = y + bf_ref[...]


# --------------------------------- wrapper ---------------------------------

@jax.jit
def music_net_forward(x, kparams):
    B = x.shape[0]
    (w1, sh1, w2, sh2, w3, sh3, w4, sh4, wf, bfp) = kparams
    n = B * SAMPLE

    # Host-side glue is now only pad / reshape / transpose (one small fusion):
    # split the zero-padded signal into its 4 stride-4 phase rows; all the
    # tap-shift rolls happen inside the kernel.
    xp = jnp.pad(x.reshape(B, L_IN), ((0, 0), (P1, S1 * SAMPLE - L_IN - P1)))  # (B, 4096)
    phases = jnp.transpose(xp.reshape(B, SAMPLE, S1), (2, 0, 1)).reshape(S1, n)  # (4, n)

    vmem = pl.BlockSpec(memory_space=pltpu.MemorySpace.VMEM)
    out = pl.pallas_call(
        music_net_kernel,
        out_shape=jax.ShapeDtypeStruct((8, n), jnp.float32),
        in_specs=[vmem] * 11,
        out_specs=vmem,
    )(phases, w1, sh1, w2, sh2, w3, sh3, w4, sh4, wf, bfp)

    # Sample b's logits sit in column b*SAMPLE, rows 0..5.
    return out[:OUT_SZ, ::SAMPLE].T                     # (B, 6)


# ---------------------------- params / reference ---------------------------

def init_params(key):
    ks = jax.random.split(key, 10)

    def u(k, shape, fan_in):
        bound = 1.0 / np.sqrt(fan_in)
        return jax.random.uniform(k, shape, jnp.float32, -bound, bound)

    return dict(
        w1=u(ks[0], (16, 1, 80), 80),  b1=u(ks[1], (16,), 80),
        w2=u(ks[2], (16, 16, 3), 48),  b2=u(ks[3], (16,), 48),
        w3=u(ks[4], (32, 16, 3), 48),  b3=u(ks[5], (32,), 48),
        w4=u(ks[6], (64, 32, 3), 96),  b4=u(ks[7], (64,), 96),
        wf=u(ks[8], (6, 64), 64),      bf=u(ks[9], (6,), 64),
    )


def bn_fold(bias):
    # BatchNorm1d, inference mode: gamma=1, beta=0, running_mean=0, running_var=1
    c = bias.shape[0]
    eps = 1e-5
    gamma = jnp.ones((c,), jnp.float32)
    beta = jnp.zeros((c,), jnp.float32)
    mean = jnp.zeros((c,), jnp.float32)
    var = jnp.ones((c,), jnp.float32)
    sc = gamma / jnp.sqrt(var + eps)
    sh = beta + sc * (bias - mean)          # folds the conv bias into the shift
    return sc, sh


def pack_kernel_params(p):
    sc1, sh1 = bn_fold(p['b1']); sc2, sh2 = bn_fold(p['b2'])
    sc3, sh3 = bn_fold(p['b3']); sc4, sh4 = bn_fold(p['b4'])
    col = lambda v: v.reshape(-1, 1).astype(jnp.float32)

    def stack3(w, sc):
        # Fold BN scale into the weights, then (O, I, 3) -> (O, 3*I) with
        # row-block order [tap0 | tap1 | tap2] matching [x_prev; x; x_next].
        ws = w * sc[:, None, None]
        return jnp.transpose(ws, (0, 2, 1)).reshape(w.shape[0], -1).astype(jnp.bfloat16)

    # conv1: tap order k = 16u + 4v + p matches the in-kernel operand rows.
    w1 = (p['w1'] * sc1[:, None, None]).reshape(16, K1).astype(jnp.bfloat16)
    # fc0 packed as (8, 64) bf16 (rows 6,7 zero) and (8, 1) f32 bias.
    wf = jnp.zeros((8, 64), jnp.float32).at[:OUT_SZ, :].set(p['wf']).astype(jnp.bfloat16)
    bfp = jnp.zeros((8, 1), jnp.float32).at[:OUT_SZ, 0].set(p['bf'])

    return (w1, col(sh1),
            stack3(p['w2'], sc2), col(sh2),
            stack3(p['w3'], sc3), col(sh3),
            stack3(p['w4'], sc4), col(sh4),
            wf, bfp)


def reference_forward(x, p):
    """Pure-JAX reference mirroring the PyTorch forward (BN in eval mode)."""
    B = x.shape[0]
    h = x.reshape(B, 1, L_IN)
    hi = lax.Precision.HIGHEST

    def conv_bn_relu(h, w, b, stride, pad):
        y = lax.conv_general_dilated(
            h, w, (stride,), [(pad, pad)],
            dimension_numbers=('NCH', 'OIH', 'NCH'), precision=hi)
        sc, sh = bn_fold(b)
        return jnp.maximum(y * sc[None, :, None] + sh[None, :, None], 0.0)

    def maxpool(h, k):
        return lax.reduce_window(h, -jnp.inf, lax.max,
                                 (1, 1, k), (1, 1, k), 'VALID')

    h = maxpool(conv_bn_relu(h, p['w1'], p['b1'], 4, 38), 4)
    h = maxpool(conv_bn_relu(h, p['w2'], p['b2'], 1, 1), 4)
    h = maxpool(conv_bn_relu(h, p['w3'], p['b3'], 1, 1), 4)
    h = maxpool(conv_bn_relu(h, p['w4'], p['b4'], 1, 1), 4)
    h = lax.reduce_window(h, 0.0, lax.add,
                          (1, 1, 3), (1, 1, 3), 'VALID') / 3.0   # avgPool(3)
    h = jnp.transpose(h, (0, 2, 1))                              # (B, 1, 64)
    h = jnp.einsum('blc,oc->blo', h, p['wf'], precision=hi) + p['bf']
    return h[:, 0, :]


# ----------------------------------- main -----------------------------------

if __name__ == "__main__":
    key = jax.random.PRNGKey(0)
    kp, kx = jax.random.split(key)
    params = init_params(kp)
    x = jax.random.normal(kx, (BATCH, L_IN), jnp.float32)

    kparams = pack_kernel_params(params)
    out = jax.block_until_ready(music_net_forward(x, kparams))

    ref = reference_forward(x, params)
    assert out.shape == (BATCH, OUT_SZ)
    np.testing.assert_allclose(np.asarray(out), np.asarray(ref),
                               rtol=2e-2, atol=2e-2)
    print("KERNEL_OK")
</pallas_src>

<mosaic_0001>
module attributes {stable_mosaic.version = 11 : i64} {
  func.func @music_net_kernel(%arg0: memref<4x2048xf32, #tpu.memory_space<vmem>>, %arg1: memref<16x80xbf16, #tpu.memory_space<vmem>>, %arg2: memref<16x1xf32, #tpu.memory_space<vmem>>, %arg3: memref<16x48xbf16, #tpu.memory_space<vmem>>, %arg4: memref<16x1xf32, #tpu.memory_space<vmem>>, %arg5: memref<32x48xbf16, #tpu.memory_space<vmem>>, %arg6: memref<32x1xf32, #tpu.memory_space<vmem>>, %arg7: memref<64x96xbf16, #tpu.memory_space<vmem>>, %arg8: memref<64x1xf32, #tpu.memory_space<vmem>>, %arg9: memref<8x64xbf16, #tpu.memory_space<vmem>>, %arg10: memref<8x1xf32, #tpu.memory_space<vmem>>, %arg11: memref<8x2048xf32, #tpu.memory_space<vmem>>) attributes {dimension_semantics = [], scalar_prefetch = 0 : i64, scratch_operands = 0 : i64, tpu.core_type = #tpu.core_type<tc>} {
    %c0 = arith.constant 0 : index
    %c0_0 = arith.constant 0 : index
    %0 = vector.load %arg0[%c0, %c0_0] : memref<4x2048xf32, #tpu.memory_space<vmem>>, vector<4x2048xf32>
    %1 = tpu.iota {dimensions = array<i32: 1>} : vector<1x2048xi32>
    %c1023_i32 = arith.constant 1023 : i32
    %2 = vector.broadcast %c1023_i32 : i32 to vector<1x2048xi32>
    %3 = arith.andi %1, %2 : vector<1x2048xi32>
    %c0_i32 = arith.constant 0 : i32
    %4 = vector.broadcast %c0_i32 : i32 to vector<1x2048xi32>
    %5 = arith.cmpi eq, %3, %4 : vector<1x2048xi32>
    %c2047_i32 = arith.constant 2047 : i32
    %6 = tpu.dynamic_rotate %0 by %c2047_i32 dim 1 : vector<4x2048xf32>, i32 -> vector<4x2048xf32>
    %c2046_i32 = arith.constant 2046 : i32
    %7 = tpu.dynamic_rotate %0 by %c2046_i32 dim 1 : vector<4x2048xf32>, i32 -> vector<4x2048xf32>
    %c2045_i32 = arith.constant 2045 : i32
    %8 = tpu.dynamic_rotate %0 by %c2045_i32 dim 1 : vector<4x2048xf32>, i32 -> vector<4x2048xf32>
    %9 = tpu.concatenate %0, %6, %7, %8 in 0 : vector<4x2048xf32>, vector<4x2048xf32>, vector<4x2048xf32>, vector<4x2048xf32> -> vector<16x2048xf32>
    %c2044_i32 = arith.constant 2044 : i32
    %10 = tpu.dynamic_rotate %9 by %c2044_i32 dim 1 : vector<16x2048xf32>, i32 -> vector<16x2048xf32>
    %c2040_i32 = arith.constant 2040 : i32
    %11 = tpu.dynamic_rotate %9 by %c2040_i32 dim 1 : vector<16x2048xf32>, i32 -> vector<16x2048xf32>
    %c2036_i32 = arith.constant 2036 : i32
    %12 = tpu.dynamic_rotate %9 by %c2036_i32 dim 1 : vector<16x2048xf32>, i32 -> vector<16x2048xf32>
    %c2032_i32 = arith.constant 2032 : i32
    %13 = tpu.dynamic_rotate %9 by %c2032_i32 dim 1 : vector<16x2048xf32>, i32 -> vector<16x2048xf32>
    %14 = tpu.concatenate %9, %10, %11, %12, %13 in 0 : vector<16x2048xf32>, vector<16x2048xf32>, vector<16x2048xf32>, vector<16x2048xf32>, vector<16x2048xf32> -> vector<80x2048xf32>
    %15 = arith.truncf %14 : vector<80x2048xf32> to vector<80x2048xbf16>
    %c0_1 = arith.constant 0 : index
    %c0_2 = arith.constant 0 : index
    %16 = vector.load %arg1[%c0_1, %c0_2] : memref<16x80xbf16, #tpu.memory_space<vmem>>, vector<16x80xbf16>
    %cst = arith.constant dense<0.000000e+00> : vector<16x2048xf32>
    %17 = tpu.matmul %16, %15, %cst {dimension_numbers = #tpu.dot_dimension_numbers<[1], [0], [0], [1], [0, 0, 1, 1], [], []>} : vector<16x80xbf16>, vector<80x2048xbf16>, vector<16x2048xf32> -> vector<16x2048xf32>
    %c0_3 = arith.constant 0 : index
    %c0_4 = arith.constant 0 : index
    %18 = vector.load %arg2[%c0_3, %c0_4] : memref<16x1xf32, #tpu.memory_space<vmem>>, vector<16x1xf32>
    %19 = vector.broadcast %18 : vector<16x1xf32> to vector<16x2048xf32>
    %20 = arith.addf %17, %19 : vector<16x2048xf32>
    %cst_5 = arith.constant 0.000000e+00 : f32
    %21 = vector.broadcast %cst_5 : f32 to vector<16x2048xf32>
    %22 = arith.maximumf %20, %21 : vector<16x2048xf32>
    %c2047_i32_6 = arith.constant 2047 : i32
    %23 = tpu.dynamic_rotate %22 by %c2047_i32_6 dim 1 : vector<16x2048xf32>, i32 -> vector<16x2048xf32>
    %c2046_i32_7 = arith.constant 2046 : i32
    %24 = tpu.dynamic_rotate %22 by %c2046_i32_7 dim 1 : vector<16x2048xf32>, i32 -> vector<16x2048xf32>
    %c2045_i32_8 = arith.constant 2045 : i32
    %25 = tpu.dynamic_rotate %22 by %c2045_i32_8 dim 1 : vector<16x2048xf32>, i32 -> vector<16x2048xf32>
    %26 = arith.maximumf %22, %23 : vector<16x2048xf32>
    %27 = arith.maximumf %24, %25 : vector<16x2048xf32>
    %28 = arith.maximumf %26, %27 : vector<16x2048xf32>
    %c4_i32 = arith.constant 4 : i32
    %29 = tpu.dynamic_rotate %28 by %c4_i32 dim 1 : vector<16x2048xf32>, i32 -> vector<16x2048xf32>
    %cst_9 = arith.constant 0.000000e+00 : f32
    %30 = vector.shape_cast %5 : vector<1x2048xi1> to vector<1x2048xi1>
    %31 = vector.broadcast %30 : vector<1x2048xi1> to vector<16x2048xi1>
    %32 = vector.broadcast %cst_9 : f32 to vector<16x2048xf32>
    %33 = arith.select %31, %32, %29 : vector<16x2048xi1>, vector<16x2048xf32>
    %c796_i32 = arith.constant 796 : i32
    %34 = vector.broadcast %c796_i32 : i32 to vector<1x2048xi32>
    %35 = arith.cmpi eq, %3, %34 : vector<1x2048xi32>
    %c2044_i32_10 = arith.constant 2044 : i32
    %36 = tpu.dynamic_rotate %28 by %c2044_i32_10 dim 1 : vector<16x2048xf32>, i32 -> vector<16x2048xf32>
    %cst_11 = arith.constant 0.000000e+00 : f32
    %37 = vector.shape_cast %35 : vector<1x2048xi1> to vector<1x2048xi1>
    %38 = vector.broadcast %37 : vector<1x2048xi1> to vector<16x2048xi1>
    %39 = vector.broadcast %cst_11 : f32 to vector<16x2048xf32>
    %40 = arith.select %38, %39, %36 : vector<16x2048xi1>, vector<16x2048xf32>
    %41 = tpu.concatenate %33, %28, %40 in 0 : vector<16x2048xf32>, vector<16x2048xf32>, vector<16x2048xf32> -> vector<48x2048xf32>
    %42 = arith.truncf %41 : vector<48x2048xf32> to vector<48x2048xbf16>
    %c0_12 = arith.constant 0 : index
    %c0_13 = arith.constant 0 : index
    %43 = vector.load %arg3[%c0_12, %c0_13] : memref<16x48xbf16, #tpu.memory_space<vmem>>, vector<16x48xbf16>
    %cst_14 = arith.constant dense<0.000000e+00> : vector<16x2048xf32>
    %44 = tpu.matmul %43, %42, %cst_14 {dimension_numbers = #tpu.dot_dimension_numbers<[1], [0], [0], [1], [0, 0, 1, 1], [], []>} : vector<16x48xbf16>, vector<48x2048xbf16>, vector<16x2048xf32> -> vector<16x2048xf32>
    %c0_15 = arith.constant 0 : index
    %c0_16 = arith.constant 0 : index
    %45 = vector.load %arg4[%c0_15, %c0_16] : memref<16x1xf32, #tpu.memory_space<vmem>>, vector<16x1xf32>
    %46 = vector.broadcast %45 : vector<16x1xf32> to vector<16x2048xf32>
    %47 = arith.addf %44, %46 : vector<16x2048xf32>
    %cst_17 = arith.constant 0.000000e+00 : f32
    %48 = vector.broadcast %cst_17 : f32 to vector<16x2048xf32>
    %49 = arith.maximumf %47, %48 : vector<16x2048xf32>
    %c2044_i32_18 = arith.constant 2044 : i32
    %50 = tpu.dynamic_rotate %49 by %c2044_i32_18 dim 1 : vector<16x2048xf32>, i32 -> vector<16x2048xf32>
    %c2040_i32_19 = arith.constant 2040 : i32
    %51 = tpu.dynamic_rotate %49 by %c2040_i32_19 dim 1 : vector<16x2048xf32>, i32 -> vector<16x2048xf32>
    %c2036_i32_20 = arith.constant 2036 : i32
    %52 = tpu.dynamic_rotate %49 by %c2036_i32_20 dim 1 : vector<16x2048xf32>, i32 -> vector<16x2048xf32>
    %53 = arith.maximumf %49, %50 : vector<16x2048xf32>
    %54 = arith.maximumf %51, %52 : vector<16x2048xf32>
    %55 = arith.maximumf %53, %54 : vector<16x2048xf32>
    %c16_i32 = arith.constant 16 : i32
    %56 = tpu.dynamic_rotate %55 by %c16_i32 dim 1 : vector<16x2048xf32>, i32 -> vector<16x2048xf32>
    %cst_21 = arith.constant 0.000000e+00 : f32
    %57 = vector.shape_cast %5 : vector<1x2048xi1> to vector<1x2048xi1>
    %58 = vector.broadcast %57 : vector<1x2048xi1> to vector<16x2048xi1>
    %59 = vector.broadcast %cst_21 : f32 to vector<16x2048xf32>
    %60 = arith.select %58, %59, %56 : vector<16x2048xi1>, vector<16x2048xf32>
    %c784_i32 = arith.constant 784 : i32
    %61 = vector.broadcast %c784_i32 : i32 to vector<1x2048xi32>
    %62 = arith.cmpi eq, %3, %61 : vector<1x2048xi32>
    %c2032_i32_22 = arith.constant 2032 : i32
    %63 = tpu.dynamic_rotate %55 by %c2032_i32_22 dim 1 : vector<16x2048xf32>, i32 -> vector<16x2048xf32>
    %cst_23 = arith.constant 0.000000e+00 : f32
    %64 = vector.shape_cast %62 : vector<1x2048xi1> to vector<1x2048xi1>
    %65 = vector.broadcast %64 : vector<1x2048xi1> to vector<16x2048xi1>
    %66 = vector.broadcast %cst_23 : f32 to vector<16x2048xf32>
    %67 = arith.select %65, %66, %63 : vector<16x2048xi1>, vector<16x2048xf32>
    %68 = tpu.concatenate %60, %55, %67 in 0 : vector<16x2048xf32>, vector<16x2048xf32>, vector<16x2048xf32> -> vector<48x2048xf32>
    %69 = arith.truncf %68 : vector<48x2048xf32> to vector<48x2048xbf16>
    %c0_24 = arith.constant 0 : index
    %c0_25 = arith.constant 0 : index
    %70 = vector.load %arg5[%c0_24, %c0_25] : memref<32x48xbf16, #tpu.memory_space<vmem>>, vector<32x48xbf16>
    %cst_26 = arith.constant dense<0.000000e+00> : vector<32x2048xf32>
    %71 = tpu.matmul %70, %69, %cst_26 {dimension_numbers = #tpu.dot_dimension_numbers<[1], [0], [0], [1], [0, 0, 1, 1], [], []>} : vector<32x48xbf16>, vector<48x2048xbf16>, vector<32x2048xf32> -> vector<32x2048xf32>
    %c0_27 = arith.constant 0 : index
    %c0_28 = arith.constant 0 : index
    %72 = vector.load %arg6[%c0_27, %c0_28] : memref<32x1xf32, #tpu.memory_space<vmem>>, vector<32x1xf32>
    %73 = vector.broadcast %72 : vector<32x1xf32> to vector<32x2048xf32>
    %74 = arith.addf %71, %73 : vector<32x2048xf32>
    %cst_29 = arith.constant 0.000000e+00 : f32
    %75 = vector.broadcast %cst_29 : f32 to vector<32x2048xf32>
    %76 = arith.maximumf %74, %75 : vector<32x2048xf32>
    %c2032_i32_30 = arith.constant 2032 : i32
    %77 = tpu.dynamic_rotate %76 by %c2032_i32_30 dim 1 : vector<32x2048xf32>, i32 -> vector<32x2048xf32>
    %c2016_i32 = arith.constant 2016 : i32
    %78 = tpu.dynamic_rotate %76 by %c2016_i32 dim 1 : vector<32x2048xf32>, i32 -> vector<32x2048xf32>
    %c2000_i32 = arith.constant 2000 : i32
    %79 = tpu.dynamic_rotate %76 by %c2000_i32 dim 1 : vector<32x2048xf32>, i32 -> vector<32x2048xf32>
    %80 = arith.maximumf %76, %77 : vector<32x2048xf32>
    %81 = arith.maximumf %78, %79 : vector<32x2048xf32>
    %82 = arith.maximumf %80, %81 : vector<32x2048xf32>
    %c64_i32 = arith.constant 64 : i32
    %83 = tpu.dynamic_rotate %82 by %c64_i32 dim 1 : vector<32x2048xf32>, i32 -> vector<32x2048xf32>
    %cst_31 = arith.constant 0.000000e+00 : f32
    %84 = vector.shape_cast %5 : vector<1x2048xi1> to vector<1x2048xi1>
    %85 = vector.broadcast %84 : vector<1x2048xi1> to vector<32x2048xi1>
    %86 = vector.broadcast %cst_31 : f32 to vector<32x2048xf32>
    %87 = arith.select %85, %86, %83 : vector<32x2048xi1>, vector<32x2048xf32>
    %c704_i32 = arith.constant 704 : i32
    %88 = vector.broadcast %c704_i32 : i32 to vector<1x2048xi32>
    %89 = arith.cmpi eq, %3, %88 : vector<1x2048xi32>
    %c1984_i32 = arith.constant 1984 : i32
    %90 = tpu.dynamic_rotate %82 by %c1984_i32 dim 1 : vector<32x2048xf32>, i32 -> vector<32x2048xf32>
    %cst_32 = arith.constant 0.000000e+00 : f32
    %91 = vector.shape_cast %89 : vector<1x2048xi1> to vector<1x2048xi1>
    %92 = vector.broadcast %91 : vector<1x2048xi1> to vector<32x2048xi1>
    %93 = vector.broadcast %cst_32 : f32 to vector<32x2048xf32>
    %94 = arith.select %92, %93, %90 : vector<32x2048xi1>, vector<32x2048xf32>
    %95 = tpu.concatenate %87, %82, %94 in 0 : vector<32x2048xf32>, vector<32x2048xf32>, vector<32x2048xf32> -> vector<96x2048xf32>
    %96 = arith.truncf %95 : vector<96x2048xf32> to vector<96x2048xbf16>
    %c0_33 = arith.constant 0 : index
    %c0_34 = arith.constant 0 : index
    %97 = vector.load %arg7[%c0_33, %c0_34] : memref<64x96xbf16, #tpu.memory_space<vmem>>, vector<64x96xbf16>
    %cst_35 = arith.constant dense<0.000000e+00> : vector<64x2048xf32>
    %98 = tpu.matmul %97, %96, %cst_35 {dimension_numbers = #tpu.dot_dimension_numbers<[1], [0], [0], [1], [0, 0, 1, 1], [], []>} : vector<64x96xbf16>, vector<96x2048xbf16>, vector<64x2048xf32> -> vector<64x2048xf32>
    %c0_36 = arith.constant 0 : index
    %c0_37 = arith.constant 0 : index
    %99 = vector.load %arg8[%c0_36, %c0_37] : memref<64x1xf32, #tpu.memory_space<vmem>>, vector<64x1xf32>
    %100 = vector.broadcast %99 : vector<64x1xf32> to vector<64x2048xf32>
    %101 = arith.addf %98, %100 : vector<64x2048xf32>
    %cst_38 = arith.constant 0.000000e+00 : f32
    %102 = vector.broadcast %cst_38 : f32 to vector<64x2048xf32>
    %103 = arith.maximumf %101, %102 : vector<64x2048xf32>
    %c1984_i32_39 = arith.constant 1984 : i32
    %104 = tpu.dynamic_rotate %103 by %c1984_i32_39 dim 1 : vector<64x2048xf32>, i32 -> vector<64x2048xf32>
    %c1920_i32 = arith.constant 1920 : i32
    %105 = tpu.dynamic_rotate %103 by %c1920_i32 dim 1 : vector<64x2048xf32>, i32 -> vector<64x2048xf32>
    %c1856_i32 = arith.constant 1856 : i32
    %106 = tpu.dynamic_rotate %103 by %c1856_i32 dim 1 : vector<64x2048xf32>, i32 -> vector<64x2048xf32>
    %107 = arith.maximumf %103, %104 : vector<64x2048xf32>
    %108 = arith.maximumf %105, %106 : vector<64x2048xf32>
    %109 = arith.maximumf %107, %108 : vector<64x2048xf32>
    %c1792_i32 = arith.constant 1792 : i32
    %110 = tpu.dynamic_rotate %109 by %c1792_i32 dim 1 : vector<64x2048xf32>, i32 -> vector<64x2048xf32>
    %111 = arith.addf %109, %110 : vector<64x2048xf32>
    %c1536_i32 = arith.constant 1536 : i32
    %112 = tpu.dynamic_rotate %109 by %c1536_i32 dim 1 : vector<64x2048xf32>, i32 -> vector<64x2048xf32>
    %113 = arith.addf %111, %112 : vector<64x2048xf32>
    %cst_40 = arith.constant 0.333333343 : f32
    %114 = vector.broadcast %cst_40 : f32 to vector<64x2048xf32>
    %115 = arith.mulf %113, %114 : vector<64x2048xf32>
    %c0_41 = arith.constant 0 : index
    %c0_42 = arith.constant 0 : index
    %116 = vector.load %arg9[%c0_41, %c0_42] : memref<8x64xbf16, #tpu.memory_space<vmem>>, vector<8x64xbf16>
    %117 = arith.truncf %115 : vector<64x2048xf32> to vector<64x2048xbf16>
    %cst_43 = arith.constant dense<0.000000e+00> : vector<8x2048xf32>
    %118 = tpu.matmul %116, %117, %cst_43 {dimension_numbers = #tpu.dot_dimension_numbers<[1], [0], [0], [1], [0, 0, 1, 1], [], []>} : vector<8x64xbf16>, vector<64x2048xbf16>, vector<8x2048xf32> -> vector<8x2048xf32>
    %c0_44 = arith.constant 0 : index
    %c0_45 = arith.constant 0 : index
    %119 = vector.load %arg10[%c0_44, %c0_45] : memref<8x1xf32, #tpu.memory_space<vmem>>, vector<8x1xf32>
    %120 = vector.broadcast %119 : vector<8x1xf32> to vector<8x2048xf32>
    %121 = arith.addf %118, %120 : vector<8x2048xf32>
    %c0_46 = arith.constant 0 : index
    %c0_47 = arith.constant 0 : index
    %122 = vector.load %arg11[%c0_46, %c0_47] : memref<8x2048xf32, #tpu.memory_space<vmem>>, vector<8x2048xf32>
    tpu.vector_store %arg11[%c0_46, %c0_47], %121 {strides = array<i32>} : memref<8x2048xf32, #tpu.memory_space<vmem>>, vector<8x2048xf32>,
    return
  }
}

</mosaic_0001>

<llo_original>
// kernel: music_net_forward.1
$region0: #{music_net_forward.1}
  #allocation0 [shape = 'u32[]', space=smem, size = 0x4, offset = 0x4, fixed_abs, tag = 'smem constant byte address 0x4 - core index']
  #allocation1 [shape = 'u32[144,128]{1,0:T(1,128)}', space=vmem, size = 0x12000, scoped, tag = 'internal scratch']
  %s0 = inlined_call_operand.vmem [shape: f32[4,2048], index: 0, kind: input, shape index: {}]
  %s1 = inlined_call_operand.vmem [shape: bf16[16,80], index: 1, kind: input, shape index: {}]
  %s2 = inlined_call_operand.vmem [shape: f32[16,1], index: 2, kind: input, shape index: {}]
  %s3 = inlined_call_operand.vmem [shape: bf16[16,48], index: 3, kind: input, shape index: {}]
  %s4 = inlined_call_operand.vmem [shape: f32[16,1], index: 4, kind: input, shape index: {}]
  %s5 = inlined_call_operand.vmem [shape: bf16[32,48], index: 5, kind: input, shape index: {}]
  %s6 = inlined_call_operand.vmem [shape: f32[32,1], index: 6, kind: input, shape index: {}]
  %s7 = inlined_call_operand.vmem [shape: bf16[64,96], index: 7, kind: input, shape index: {}]
  %s8 = inlined_call_operand.vmem [shape: f32[64,1], index: 8, kind: input, shape index: {}]
  %s9 = inlined_call_operand.vmem [shape: bf16[8,64], index: 9, kind: input, shape index: {}]
  %s10 = inlined_call_operand.vmem [shape: f32[8,1], index: 10, kind: input, shape index: {}]
  %s11 = inlined_call_operand.vmem [shape: f32[8,2048], index: 11, kind: output, shape index: {}]
  %s12 = sld [smem:[#allocation0]]
  $region54: #{music_net_forward.1} parent=0
    _
  %s14 = ssub.s32 1, %s12
  %s15 = scalar_select 0, %s14, %s12
  // Predicated region
  $region2: #{music_net_forward.1} parent=0 // pred_check
    _
  $region3: #{music_net_forward.1} parent=0 // pred_check_branch
    %17 = sbr.rel (0) target = $region5
  $region4: #{music_net_forward.1} parent=0 // pred_region
    _
  $region5: #{music_net_forward.1} parent=0 // pred_fallthru
    _
  // Predicated region
  $region6: #{music_net_forward.1} parent=0 // pred_check
    _
  $region7: #{music_net_forward.1} parent=0 // pred_check_branch
    %19 = sbr.rel (0) target = $region9
  $region8: #{music_net_forward.1} parent=0 // pred_region
    _
  $region9: #{music_net_forward.1} parent=0 // pred_fallthru
    _
  // Predicated region
  $region10: #{music_net_forward.1} parent=0 // pred_check
    _
  $region11: #{music_net_forward.1} parent=0 // pred_check_branch
    %21 = sbr.rel (0) target = $region13
  $region12: #{music_net_forward.1} parent=0 // pred_region
    _
  $region13: #{music_net_forward.1} parent=0 // pred_fallthru
    _
  // Predicated region
  $region14: #{music_net_forward.1} parent=0 // pred_check
    _
  $region15: #{music_net_forward.1} parent=0 // pred_check_branch
    %23 = sbr.rel (0) target = $region17
  $region16: #{music_net_forward.1} parent=0 // pred_region
    _
  $region17: #{music_net_forward.1} parent=0 // pred_fallthru
    _
  // Predicated region
  $region18: #{music_net_forward.1} parent=0 // pred_check
    _
  $region19: #{music_net_forward.1} parent=0 // pred_check_branch
    %25 = sbr.rel (0) target = $region21
  $region20: #{music_net_forward.1} parent=0 // pred_region
    _
  $region21: #{music_net_forward.1} parent=0 // pred_fallthru
    _
  // Predicated region
  $region22: #{music_net_forward.1} parent=0 // pred_check
    _
  $region23: #{music_net_forward.1} parent=0 // pred_check_branch
    %27 = sbr.rel (0) target = $region25
  $region24: #{music_net_forward.1} parent=0 // pred_region
    _
  $region25: #{music_net_forward.1} parent=0 // pred_fallthru
    _
  // Predicated region
  $region26: #{music_net_forward.1} parent=0 // pred_check
    _
  $region27: #{music_net_forward.1} parent=0 // pred_check_branch
    %29 = sbr.rel (0) target = $region29
  $region28: #{music_net_forward.1} parent=0 // pred_region
    _
  $region29: #{music_net_forward.1} parent=0 // pred_fallthru
    _
  // Predicated region
  $region30: #{music_net_forward.1} parent=0 // pred_check
    _
  $region31: #{music_net_forward.1} parent=0 // pred_check_branch
    %31 = sbr.rel (0) target = $region33
  $region32: #{music_net_forward.1} parent=0 // pred_region
    _
  $region33: #{music_net_forward.1} parent=0 // pred_fallthru
    _
  // Predicated region
  $region34: #{music_net_forward.1} parent=0 // pred_check
    _
  $region35: #{music_net_forward.1} parent=0 // pred_check_branch
    %33 = sbr.rel (0) target = $region37
  $region36: #{music_net_forward.1} parent=0 // pred_region
    _
  $region37: #{music_net_forward.1} parent=0 // pred_fallthru
    _
  // Predicated region
  $region38: #{music_net_forward.1} parent=0 // pred_check
    _
  $region39: #{music_net_forward.1} parent=0 // pred_check_branch
    %35 = sbr.rel (0) target = $region41
  $region40: #{music_net_forward.1} parent=0 // pred_region
    _
  $region41: #{music_net_forward.1} parent=0 // pred_fallthru
    _
  // Predicated region
  $region42: #{music_net_forward.1} parent=0 // pred_check
    _
  $region43: #{music_net_forward.1} parent=0 // pred_check_branch
    %37 = sbr.rel (0) target = $region45
  $region44: #{music_net_forward.1} parent=0 // pred_region
    _
  $region45: #{music_net_forward.1} parent=0 // pred_fallthru
    _
  %v39 = vld [vmem:[%s0] sm:$0xff]
  %v40 = vld [vmem:[%s0 + $0x8] sm:$0xff]
  %v41 = vld [vmem:[%s0 + $0x10] sm:$0xff]
  %v42 = vld [vmem:[%s0 + $0x18] sm:$0xff]
  %v43 = vld [vmem:[%s0 + $0x20] sm:$0xff]
  %v44 = vld [vmem:[%s0 + $0x28] sm:$0xff]
  %v45 = vld [vmem:[%s0 + $0x30] sm:$0xff]
  %v46 = vld [vmem:[%s0 + $0x38] sm:$0xff]
  %v47 = vlaneseq
  %v48 = vand.u32 %v47, 127
  %v49 = vadd.s32 %v48, 128
  %v50 = vadd.s32 %v48, 256
  %v51 = vadd.s32 %v48, 384
  %v52 = vadd.s32 %v48, 512
  %v53 = vadd.s32 %v48, 640
  %v54 = vadd.s32 %v48, 768
  %v55 = vadd.s32 %v48, 896
  %v56 = vadd.s32 %v48, 1024
  %v57 = vadd.s32 %v48, 1152
  %v58 = vadd.s32 %v48, 1280
  %v59 = vadd.s32 %v48, 1408
  %v60 = vadd.s32 %v48, 1536
  %v61 = vadd.s32 %v48, 1664
  %v62 = vadd.s32 %v48, 1792
  %v63 = vadd.s32 %v48, 1920
  %v64 = vand.u32 %v48, 1023
  %v65 = vand.u32 %v49, 1023
  %v66 = vand.u32 %v50, 1023
  %v67 = vand.u32 %v51, 1023
  %v68 = vand.u32 %v52, 1023
  %v69 = vand.u32 %v53, 1023
  %v70 = vand.u32 %v54, 1023
  %v71 = vand.u32 %v55, 1023
  %v72 = vand.u32 %v56, 1023
  %v73 = vand.u32 %v57, 1023
  %v74 = vand.u32 %v58, 1023
  %v75 = vand.u32 %v59, 1023
  %v76 = vand.u32 %v60, 1023
  %v77 = vand.u32 %v61, 1023
  %v78 = vand.u32 %v62, 1023
  %v79 = vand.u32 %v63, 1023
  %vm80 = vcmp.eq.s32.totalorder %v64, 0
  %vm81 = vcmp.eq.s32.totalorder %v65, 0
  %vm82 = vcmp.eq.s32.totalorder %v66, 0
  %vm83 = vcmp.eq.s32.totalorder %v67, 0
  %vm84 = vcmp.eq.s32.totalorder %v68, 0
  %vm85 = vcmp.eq.s32.totalorder %v69, 0
  %vm86 = vcmp.eq.s32.totalorder %v70, 0
  %vm87 = vcmp.eq.s32.totalorder %v71, 0
  %vm88 = vcmp.eq.s32.totalorder %v72, 0
  %vm89 = vcmp.eq.s32.totalorder %v73, 0
  %vm90 = vcmp.eq.s32.totalorder %v74, 0
  %vm91 = vcmp.eq.s32.totalorder %v75, 0
  %vm92 = vcmp.eq.s32.totalorder %v76, 0
  %vm93 = vcmp.eq.s32.totalorder %v77, 0
  %vm94 = vcmp.eq.s32.totalorder %v78, 0
  %vm95 = vcmp.eq.s32.totalorder %v79, 0
  %v104 = vcombine.high %v39, %v39
  %v105 = vcombine.high %v40, %v40
  %v106 = vcombine.high %v41, %v41
  %v107 = vcombine.high %v42, %v42
  %v108 = vcombine.high %v43, %v43
  %v109 = vcombine.high %v44, %v44
  %v110 = vcombine.high %v45, %v45
  %v111 = vcombine.high %v46, %v46
  %120 = vrot.lane.b32.xlu0 %v39, 127
  %v121 = vpop.permute.xlu0 %120
  %122 = vrot.lane.b32.xlu0 %v104, 127
  %v123 = vpop.permute.xlu0 %122
  %124 = vrot.lane.b32.xlu0 %v40, 127
  %v125 = vpop.permute.xlu0 %124
  %126 = vrot.lane.b32.xlu0 %v105, 127
  %v127 = vpop.permute.xlu0 %126
  %128 = vrot.lane.b32.xlu0 %v41, 127
  %v129 = vpop.permute.xlu0 %128
  %130 = vrot.lane.b32.xlu0 %v106, 127
  %v131 = vpop.permute.xlu0 %130
  %132 = vrot.lane.b32.xlu0 %v42, 127
  %v133 = vpop.permute.xlu0 %132
  %134 = vrot.lane.b32.xlu0 %v107, 127
  %v135 = vpop.permute.xlu0 %134
  %136 = vrot.lane.b32.xlu0 %v43, 127
  %v137 = vpop.permute.xlu0 %136
  %138 = vrot.lane.b32.xlu0 %v108, 127
  %v139 = vpop.permute.xlu0 %138
  %140 = vrot.lane.b32.xlu0 %v44, 127
  %v141 = vpop.permute.xlu0 %140
  %142 = vrot.lane.b32.xlu0 %v109, 127
  %v143 = vpop.permute.xlu0 %142
  %144 = vrot.lane.b32.xlu0 %v45, 127
  %v145 = vpop.permute.xlu0 %144
  %146 = vrot.lane.b32.xlu0 %v110, 127
  %v147 = vpop.permute.xlu0 %146
  %148 = vrot.lane.b32.xlu0 %v46, 127
  %v149 = vpop.permute.xlu0 %148
  %150 = vrot.lane.b32.xlu0 %v111, 127
  %v151 = vpop.permute.xlu0 %150
  %vm152 = vcmp.lt.s32.totalorder %v48, 127
  %v153 = vsel %vm152, %v149, %v151
  %v154 = vsel %vm152, %v147, %v149
  %v155 = vsel %vm152, %v145, %v147
  %v156 = vsel %vm152, %v143, %v145
  %v157 = vsel %vm152, %v141, %v143
  %v158 = vsel %vm152, %v139, %v141
  %v159 = vsel %vm152, %v137, %v139
  %v160 = vsel %vm152, %v135, %v137
  %v161 = vsel %vm152, %v133, %v135
  %v162 = vsel %vm152, %v131, %v133
  %v163 = vsel %vm152, %v129, %v131
  %v164 = vsel %vm152, %v127, %v129
  %v165 = vsel %vm152, %v125, %v127
  %v166 = vsel %vm152, %v123, %v125
  %v167 = vsel %vm152, %v121, %v123
  %v168 = vsel %vm152, %v151, %v121
  %169 = vrot.lane.b32.xlu0 %v39, 126
  %v170 = vpop.permute.xlu0 %169
  %171 = vrot.lane.b32.xlu0 %v104, 126
  %v172 = vpop.permute.xlu0 %171
  %173 = vrot.lane.b32.xlu0 %v40, 126
  %v174 = vpop.permute.xlu0 %173
  %175 = vrot.lane.b32.xlu0 %v105, 126
  %v176 = vpop.permute.xlu0 %175
  %177 = vrot.lane.b32.xlu0 %v41, 126
  %v178 = vpop.permute.xlu0 %177
  %179 = vrot.lane.b32.xlu0 %v106, 126
  %v180 = vpop.permute.xlu0 %179
  %181 = vrot.lane.b32.xlu0 %v42, 126
  %v182 = vpop.permute.xlu0 %181
  %183 = vrot.lane.b32.xlu0 %v107, 126
  %v184 = vpop.permute.xlu0 %183
  %185 = vrot.lane.b32.xlu0 %v43, 126
  %v186 = vpop.permute.xlu0 %185
  %187 = vrot.lane.b32.xlu0 %v108, 126
  %v188 = vpop.permute.xlu0 %187
  %189 = vrot.lane.b32.xlu0 %v44, 126
  %v190 = vpop.permute.xlu0 %189
  %191 = vrot.lane.b32.xlu0 %v109, 126
  %v192 = vpop.permute.xlu0 %191
  %193 = vrot.lane.b32.xlu0 %v45, 126
  %v194 = vpop.permute.xlu0 %193
  %195 = vrot.lane.b32.xlu0 %v110, 126
  %v196 = vpop.permute.xlu0 %195
  %197 = vrot.lane.b32.xlu0 %v46, 126
  %v198 = vpop.permute.xlu0 %197
  %199 = vrot.lane.b32.xlu0 %v111, 126
  %v200 = vpop.permute.xlu0 %199
  %vm201 = vcmp.lt.s32.totalorder %v48, 126
  %v202 = vsel %vm201, %v198, %v200
  %v203 = vsel %vm201, %v196, %v198
  %v204 = vsel %vm201, %v194, %v196
  %v205 = vsel %vm201, %v192, %v194
  %v206 = vsel %vm201, %v190, %v192
  %v207 = vsel %vm201, %v188, %v190
  %v208 = vsel %vm201, %v186, %v188
  %v209 = vsel %vm201, %v184, %v186
  %v210 = vsel %vm201, %v182, %v184
  %v211 = vsel %vm201, %v180, %v182
  %v212 = vsel %vm201, %v178, %v180
  %v213 = vsel %vm201, %v176, %v178
  %v214 = vsel %vm201, %v174, %v176
  %v215 = vsel %vm201, %v172, %v174
  %v216 = vsel %vm201, %v170, %v172
  %v217 = vsel %vm201, %v200, %v170
  %218 = vrot.lane.b32.xlu0 %v39, 125
  %v219 = vpop.permute.xlu0 %218
  %220 = vrot.lane.b32.xlu0 %v104, 125
  %v221 = vpop.permute.xlu0 %220
  %222 = vrot.lane.b32.xlu0 %v40, 125
  %v223 = vpop.permute.xlu0 %222
  %224 = vrot.lane.b32.xlu0 %v105, 125
  %v225 = vpop.permute.xlu0 %224
  %226 = vrot.lane.b32.xlu0 %v41, 125
  %v227 = vpop.permute.xlu0 %226
  %228 = vrot.lane.b32.xlu0 %v106, 125
  %v229 = vpop.permute.xlu0 %228
  %230 = vrot.lane.b32.xlu0 %v42, 125
  %v231 = vpop.permute.xlu0 %230
  %232 = vrot.lane.b32.xlu0 %v107, 125
  %v233 = vpop.permute.xlu0 %232
  %234 = vrot.lane.b32.xlu0 %v43, 125
  %v235 = vpop.permute.xlu0 %234
  %236 = vrot.lane.b32.xlu0 %v108, 125
  %v237 = vpop.permute.xlu0 %236
  %238 = vrot.lane.b32.xlu0 %v44, 125
  %v239 = vpop.permute.xlu0 %238
  %240 = vrot.lane.b32.xlu0 %v109, 125
  %v241 = vpop.permute.xlu0 %240
  %242 = vrot.lane.b32.xlu0 %v45, 125
  %v243 = vpop.permute.xlu0 %242
  %244 = vrot.lane.b32.xlu0 %v110, 125
  %v245 = vpop.permute.xlu0 %244
  %246 = vrot.lane.b32.xlu0 %v46, 125
  %v247 = vpop.permute.xlu0 %246
  %248 = vrot.lane.b32.xlu0 %v111, 125
  %v249 = vpop.permute.xlu0 %248
  %vm250 = vcmp.lt.s32.totalorder %v48, 125
  %v251 = vsel %vm250, %v247, %v249
  %v252 = vsel %vm250, %v245, %v247
  %v253 = vsel %vm250, %v243, %v245
  %v254 = vsel %vm250, %v241, %v243
  %v255 = vsel %vm250, %v239, %v241
  %v256 = vsel %vm250, %v237, %v239
  %v257 = vsel %vm250, %v235, %v237
  %v258 = vsel %vm250, %v233, %v235
  %v259 = vsel %vm250, %v231, %v233
  %v260 = vsel %vm250, %v229, %v231
  %v261 = vsel %vm250, %v227, %v229
  %v262 = vsel %vm250, %v225, %v227
  %v263 = vsel %vm250, %v223, %v225
  %v264 = vsel %vm250, %v221, %v223
  %v265 = vsel %vm250, %v219, %v221
  %v266 = vsel %vm250, %v249, %v219
  %v283 = vrot.slane %v167, 4
  %v284 = vrot.slane %v166, 4
  %v285 = vrot.slane %v165, 4
  %v286 = vrot.slane %v164, 4
  %v287 = vrot.slane %v163, 4
  %v288 = vrot.slane %v162, 4
  %v289 = vrot.slane %v161, 4
  %v290 = vrot.slane %v160, 4
  %v291 = vrot.slane %v159, 4
  %v292 = vrot.slane %v158, 4
  %v293 = vrot.slane %v157, 4
  %v294 = vrot.slane %v156, 4
  %v295 = vrot.slane %v155, 4
  %v296 = vrot.slane %v154, 4
  %v297 = vrot.slane %v153, 4
  %v298 = vrot.slane %v168, 4
  %v331 = vrot.slane %v265, 4
  %v332 = vrot.slane %v264, 4
  %v333 = vrot.slane %v263, 4
  %v334 = vrot.slane %v262, 4
  %v335 = vrot.slane %v261, 4
  %v336 = vrot.slane %v260, 4
  %v337 = vrot.slane %v259, 4
  %v338 = vrot.slane %v258, 4
  %v339 = vrot.slane %v257, 4
  %v340 = vrot.slane %v256, 4
  %v341 = vrot.slane %v255, 4
  %v342 = vrot.slane %v254, 4
  %v343 = vrot.slane %v253, 4
  %v344 = vrot.slane %v252, 4
  %v345 = vrot.slane %v251, 4
  %v346 = vrot.slane %v266, 4
  %vm363 = vcmask 1043456
  %v364 = vsel %vm363, %v39, %v283
  %v365 = vsel %vm363, %v104, %v284
  %v366 = vsel %vm363, %v40, %v285
  %v367 = vsel %vm363, %v105, %v286
  %v368 = vsel %vm363, %v41, %v287
  %v369 = vsel %vm363, %v106, %v288
  %v370 = vsel %vm363, %v42, %v289
  %v371 = vsel %vm363, %v107, %v290
  %v372 = vsel %vm363, %v43, %v291
  %v373 = vsel %vm363, %v108, %v292
  %v374 = vsel %vm363, %v44, %v293
  %v375 = vsel %vm363, %v109, %v294
  %v376 = vsel %vm363, %v45, %v295
  %v377 = vsel %vm363, %v110, %v296
  %v378 = vsel %vm363, %v46, %v297
  %v379 = vsel %vm363, %v111, %v298
  %v380 = vsel %vm363, %v216, %v331
  %v381 = vsel %vm363, %v215, %v332
  %v382 = vsel %vm363, %v214, %v333
  %v383 = vsel %vm363, %v213, %v334
  %v384 = vsel %vm363, %v212, %v335
  %v385 = vsel %vm363, %v211, %v336
  %v386 = vsel %vm363, %v210, %v337
  %v387 = vsel %vm363, %v209, %v338
  %v388 = vsel %vm363, %v208, %v339
  %v389 = vsel %vm363, %v207, %v340
  %v390 = vsel %vm363, %v206, %v341
  %v391 = vsel %vm363, %v205, %v342
  %v392 = vsel %vm363, %v204, %v343
  %v393 = vsel %vm363, %v203, %v344
  %v394 = vsel %vm363, %v202, %v345
  %v395 = vsel %vm363, %v217, %v346
  %396 = vrot.lane.b32.xlu0 %v364, 124
  %v397 = vpop.permute.xlu0 %396
  %398 = vrot.lane.b32.xlu0 %v380, 124
  %v399 = vpop.permute.xlu0 %398
  %400 = vrot.lane.b32.xlu0 %v365, 124
  %v401 = vpop.permute.xlu0 %400
  %402 = vrot.lane.b32.xlu0 %v381, 124
  %v403 = vpop.permute.xlu0 %402
  %404 = vrot.lane.b32.xlu0 %v366, 124
  %v405 = vpop.permute.xlu0 %404
  %406 = vrot.lane.b32.xlu0 %v382, 124
  %v407 = vpop.permute.xlu0 %406
  %408 = vrot.lane.b32.xlu0 %v367, 124
  %v409 = vpop.permute.xlu0 %408
  %410 = vrot.lane.b32.xlu0 %v383, 124
  %v411 = vpop.permute.xlu0 %410
  %412 = vrot.lane.b32.xlu0 %v368, 124
  %v413 = vpop.permute.xlu0 %412
  %414 = vrot.lane.b32.xlu0 %v384, 124
  %v415 = vpop.permute.xlu0 %414
  %416 = vrot.lane.b32.xlu0 %v369, 124
  %v417 = vpop.permute.xlu0 %416
  %418 = vrot.lane.b32.xlu0 %v385, 124
  %v419 = vpop.permute.xlu0 %418
  %420 = vrot.lane.b32.xlu0 %v370, 124
  %v421 = vpop.permute.xlu0 %420
  %422 = vrot.lane.b32.xlu0 %v386, 124
  %v423 = vpop.permute.xlu0 %422
  %424 = vrot.lane.b32.xlu0 %v371, 124
  %v425 = vpop.permute.xlu0 %424
  %426 = vrot.lane.b32.xlu0 %v387, 124
  %v427 = vpop.permute.xlu0 %426
  %428 = vrot.lane.b32.xlu0 %v372, 124
  %v429 = vpop.permute.xlu0 %428
  %430 = vrot.lane.b32.xlu0 %v388, 124
  %v431 = vpop.permute.xlu0 %430
  %432 = vrot.lane.b32.xlu0 %v373, 124
  %v433 = vpop.permute.xlu0 %432
  %434 = vrot.lane.b32.xlu0 %v389, 124
  %v435 = vpop.permute.xlu0 %434
  %436 = vrot.lane.b32.xlu0 %v374, 124
  %v437 = vpop.permute.xlu0 %436
  %438 = vrot.lane.b32.xlu0 %v390, 124
  %v439 = vpop.permute.xlu0 %438
  %440 = vrot.lane.b32.xlu0 %v375, 124
  %v441 = vpop.permute.xlu0 %440
  %442 = vrot.lane.b32.xlu0 %v391, 124
  %v443 = vpop.permute.xlu0 %442
  %444 = vrot.lane.b32.xlu0 %v376, 124
  %v445 = vpop.permute.xlu0 %444
  %446 = vrot.lane.b32.xlu0 %v392, 124
  %v447 = vpop.permute.xlu0 %446
  %448 = vrot.lane.b32.xlu0 %v377, 124
  %v449 = vpop.permute.xlu0 %448
  %450 = vrot.lane.b32.xlu0 %v393, 124
  %v451 = vpop.permute.xlu0 %450
  %452 = vrot.lane.b32.xlu0 %v378, 124
  %v453 = vpop.permute.xlu0 %452
  %454 = vrot.lane.b32.xlu0 %v394, 124
  %v455 = vpop.permute.xlu0 %454
  %456 = vrot.lane.b32.xlu0 %v379, 124
  %v457 = vpop.permute.xlu0 %456
  %458 = vrot.lane.b32.xlu0 %v395, 124
  %v459 = vpop.permute.xlu0 %458
  %vm460 = vcmp.lt.s32.totalorder %v48, 124
  %v461 = vsel %vm460, %v453, %v457
  %v462 = vsel %vm460, %v455, %v459
  %v463 = vsel %vm460, %v449, %v453
  %v464 = vsel %vm460, %v451, %v455
  %v465 = vsel %vm460, %v445, %v449
  %v466 = vsel %vm460, %v447, %v451
  %v467 = vsel %vm460, %v441, %v445
  %v468 = vsel %vm460, %v443, %v447
  %v469 = vsel %vm460, %v437, %v441
  %v470 = vsel %vm460, %v439, %v443
  %v471 = vsel %vm460, %v433, %v437
  %v472 = vsel %vm460, %v435, %v439
  %v473 = vsel %vm460, %v429, %v433
  %v474 = vsel %vm460, %v431, %v435
  %v475 = vsel %vm460, %v425, %v429
  %v476 = vsel %vm460, %v427, %v431
  %v477 = vsel %vm460, %v421, %v425
  %v478 = vsel %vm460, %v423, %v427
  %v479 = vsel %vm460, %v417, %v421
  %v480 = vsel %vm460, %v419, %v423
  %v481 = vsel %vm460, %v413, %v417
  %v482 = vsel %vm460, %v415, %v419
  %v483 = vsel %vm460, %v409, %v413
  %v484 = vsel %vm460, %v411, %v415
  %v485 = vsel %vm460, %v405, %v409
  %v486 = vsel %vm460, %v407, %v411
  %v487 = vsel %vm460, %v401, %v405
  %v488 = vsel %vm460, %v403, %v407
  %v489 = vsel %vm460, %v397, %v401
  %v490 = vsel %vm460, %v399, %v403
  %v491 = vsel %vm460, %v457, %v397
  %v492 = vsel %vm460, %v459, %v399
  %493 = vrot.lane.b32.xlu0 %v364, 120
  %v494 = vpop.permute.xlu0 %493
  %495 = vrot.lane.b32.xlu0 %v380, 120
  %v496 = vpop.permute.xlu0 %495
  %497 = vrot.lane.b32.xlu0 %v365, 120
  %v498 = vpop.permute.xlu0 %497
  %499 = vrot.lane.b32.xlu0 %v381, 120
  %v500 = vpop.permute.xlu0 %499
  %501 = vrot.lane.b32.xlu0 %v366, 120
  %v502 = vpop.permute.xlu0 %501
  %503 = vrot.lane.b32.xlu0 %v382, 120
  %v504 = vpop.permute.xlu0 %503
  %505 = vrot.lane.b32.xlu0 %v367, 120
  %v506 = vpop.permute.xlu0 %505
  %507 = vrot.lane.b32.xlu0 %v383, 120
  %v508 = vpop.permute.xlu0 %507
  %509 = vrot.lane.b32.xlu0 %v368, 120
  %v510 = vpop.permute.xlu0 %509
  %511 = vrot.lane.b32.xlu0 %v384, 120
  %v512 = vpop.permute.xlu0 %511
  %513 = vrot.lane.b32.xlu0 %v369, 120
  %v514 = vpop.permute.xlu0 %513
  %515 = vrot.lane.b32.xlu0 %v385, 120
  %v516 = vpop.permute.xlu0 %515
  %517 = vrot.lane.b32.xlu0 %v370, 120
  %v518 = vpop.permute.xlu0 %517
  %519 = vrot.lane.b32.xlu0 %v386, 120
  %v520 = vpop.permute.xlu0 %519
  %521 = vrot.lane.b32.xlu0 %v371, 120
  %v522 = vpop.permute.xlu0 %521
  %523 = vrot.lane.b32.xlu0 %v387, 120
  %v524 = vpop.permute.xlu0 %523
  %525 = vrot.lane.b32.xlu0 %v372, 120
  %v526 = vpop.permute.xlu0 %525
  %527 = vrot.lane.b32.xlu0 %v388, 120
  %v528 = vpop.permute.xlu0 %527
  %529 = vrot.lane.b32.xlu0 %v373, 120
  %v530 = vpop.permute.xlu0 %529
  %531 = vrot.lane.b32.xlu0 %v389, 120
  %v532 = vpop.permute.xlu0 %531
  %533 = vrot.lane.b32.xlu0 %v374, 120
  %v534 = vpop.permute.xlu0 %533
  %535 = vrot.lane.b32.xlu0 %v390, 120
  %v536 = vpop.permute.xlu0 %535
  %537 = vrot.lane.b32.xlu0 %v375, 120
  %v538 = vpop.permute.xlu0 %537
  %539 = vrot.lane.b32.xlu0 %v391, 120
  %v540 = vpop.permute.xlu0 %539
  %541 = vrot.lane.b32.xlu0 %v376, 120
  %v542 = vpop.permute.xlu0 %541
  %543 = vrot.lane.b32.xlu0 %v392, 120
  %v544 = vpop.permute.xlu0 %543
  %545 = vrot.lane.b32.xlu0 %v377, 120
  %v546 = vpop.permute.xlu0 %545
  %547 = vrot.lane.b32.xlu0 %v393, 120
  %v548 = vpop.permute.xlu0 %547
  %549 = vrot.lane.b32.xlu0 %v378, 120
  %v550 = vpop.permute.xlu0 %549
  %551 = vrot.lane.b32.xlu0 %v394, 120
  %v552 = vpop.permute.xlu0 %551
  %553 = vrot.lane.b32.xlu0 %v379, 120
  %v554 = vpop.permute.xlu0 %553
  %555 = vrot.lane.b32.xlu0 %v395, 120
  %v556 = vpop.permute.xlu0 %555
  %vm557 = vcmp.lt.s32.totalorder %v48, 120
  %v558 = vsel %vm557, %v550, %v554
  %v559 = vsel %vm557, %v552, %v556
  %v560 = vsel %vm557, %v546, %v550
  %v561 = vsel %vm557, %v548, %v552
  %v562 = vsel %vm557, %v542, %v546
  %v563 = vsel %vm557, %v544, %v548
  %v564 = vsel %vm557, %v538, %v542
  %v565 = vsel %vm557, %v540, %v544
  %v566 = vsel %vm557, %v534, %v538
  %v567 = vsel %vm557, %v536, %v540
  %v568 = vsel %vm557, %v530, %v534
  %v569 = vsel %vm557, %v532, %v536
  %v570 = vsel %vm557, %v526, %v530
  %v571 = vsel %vm557, %v528, %v532
  %v572 = vsel %vm557, %v522, %v526
  %v573 = vsel %vm557, %v524, %v528
  %v574 = vsel %vm557, %v518, %v522
  %v575 = vsel %vm557, %v520, %v524
  %v576 = vsel %vm557, %v514, %v518
  %v577 = vsel %vm557, %v516, %v520
  %v578 = vsel %vm557, %v510, %v514
  %v579 = vsel %vm557, %v512, %v516
  %v580 = vsel %vm557, %v506, %v510
  %v581 = vsel %vm557, %v508, %v512
  %v582 = vsel %vm557, %v502, %v506
  %v583 = vsel %vm557, %v504, %v508
  %v584 = vsel %vm557, %v498, %v502
  %v585 = vsel %vm557, %v500, %v504
  %v586 = vsel %vm557, %v494, %v498
  %v587 = vsel %vm557, %v496, %v500
  %v588 = vsel %vm557, %v554, %v494
  %v589 = vsel %vm557, %v556, %v496
  %590 = vrot.lane.b32.xlu0 %v364, 116
  %v591 = vpop.permute.xlu0 %590
  %592 = vrot.lane.b32.xlu0 %v380, 116
  %v593 = vpop.permute.xlu0 %592
  %594 = vrot.lane.b32.xlu0 %v365, 116
  %v595 = vpop.permute.xlu0 %594
  %596 = vrot.lane.b32.xlu0 %v381, 116
  %v597 = vpop.permute.xlu0 %596
  %598 = vrot.lane.b32.xlu0 %v366, 116
  %v599 = vpop.permute.xlu0 %598
  %600 = vrot.lane.b32.xlu0 %v382, 116
  %v601 = vpop.permute.xlu0 %600
  %602 = vrot.lane.b32.xlu0 %v367, 116
  %v603 = vpop.permute.xlu0 %602
  %604 = vrot.lane.b32.xlu0 %v383, 116
  %v605 = vpop.permute.xlu0 %604
  %606 = vrot.lane.b32.xlu0 %v368, 116
  %v607 = vpop.permute.xlu0 %606
  %608 = vrot.lane.b32.xlu0 %v384, 116
  %v609 = vpop.permute.xlu0 %608
  %610 = vrot.lane.b32.xlu0 %v369, 116
  %v611 = vpop.permute.xlu0 %610
  %612 = vrot.lane.b32.xlu0 %v385, 116
  %v613 = vpop.permute.xlu0 %612
  %614 = vrot.lane.b32.xlu0 %v370, 116
  %v615 = vpop.permute.xlu0 %614
  %616 = vrot.lane.b32.xlu0 %v386, 116
  %v617 = vpop.permute.xlu0 %616
  %618 = vrot.lane.b32.xlu0 %v371, 116
  %v619 = vpop.permute.xlu0 %618
  %620 = vrot.lane.b32.xlu0 %v387, 116
  %v621 = vpop.permute.xlu0 %620
  %622 = vrot.lane.b32.xlu0 %v372, 116
  %v623 = vpop.permute.xlu0 %622
  %624 = vrot.lane.b32.xlu0 %v388, 116
  %v625 = vpop.permute.xlu0 %624
  %626 = vrot.lane.b32.xlu0 %v373, 116
  %v627 = vpop.permute.xlu0 %626
  %628 = vrot.lane.b32.xlu0 %v389, 116
  %v629 = vpop.permute.xlu0 %628
  %630 = vrot.lane.b32.xlu0 %v374, 116
  %v631 = vpop.permute.xlu0 %630
  %632 = vrot.lane.b32.xlu0 %v390, 116
  %v633 = vpop.permute.xlu0 %632
  %634 = vrot.lane.b32.xlu0 %v375, 116
  %v635 = vpop.permute.xlu0 %634
  %636 = vrot.lane.b32.xlu0 %v391, 116
  %v637 = vpop.permute.xlu0 %636
  %638 = vrot.lane.b32.xlu0 %v376, 116
  %v639 = vpop.permute.xlu0 %638
  %640 = vrot.lane.b32.xlu0 %v392, 116
  %v641 = vpop.permute.xlu0 %640
  %642 = vrot.lane.b32.xlu0 %v377, 116
  %v643 = vpop.permute.xlu0 %642
  %644 = vrot.lane.b32.xlu0 %v393, 116
  %v645 = vpop.permute.xlu0 %644
  %646 = vrot.lane.b32.xlu0 %v378, 116
  %v647 = vpop.permute.xlu0 %646
  %648 = vrot.lane.b32.xlu0 %v394, 116
  %v649 = vpop.permute.xlu0 %648
  %650 = vrot.lane.b32.xlu0 %v379, 116
  %v651 = vpop.permute.xlu0 %650
  %652 = vrot.lane.b32.xlu0 %v395, 116
  %v653 = vpop.permute.xlu0 %652
  %vm654 = vcmp.lt.s32.totalorder %v48, 116
  %v655 = vsel %vm654, %v647, %v651
  %v656 = vsel %vm654, %v649, %v653
  %v657 = vsel %vm654, %v643, %v647
  %v658 = vsel %vm654, %v645, %v649
  %v659 = vsel %vm654, %v639, %v643
  %v660 = vsel %vm654, %v641, %v645
  %v661 = vsel %vm654, %v635, %v639
  %v662 = vsel %vm654, %v637, %v641
  %v663 = vsel %vm654, %v631, %v635
  %v664 = vsel %vm654, %v633, %v637
  %v665 = vsel %vm654, %v627, %v631
  %v666 = vsel %vm654, %v629, %v633
  %v667 = vsel %vm654, %v623, %v627
  %v668 = vsel %vm654, %v625, %v629
  %v669 = vsel %vm654, %v619, %v623
  %v670 = vsel %vm654, %v621, %v625
  %v671 = vsel %vm654, %v615, %v619
  %v672 = vsel %vm654, %v617, %v621
  %v673 = vsel %vm654, %v611, %v615
  %v674 = vsel %vm654, %v613, %v617
  %v675 = vsel %vm654, %v607, %v611
  %v676 = vsel %vm654, %v609, %v613
  %v677 = vsel %vm654, %v603, %v607
  %v678 = vsel %vm654, %v605, %v609
  %v679 = vsel %vm654, %v599, %v603
  %v680 = vsel %vm654, %v601, %v605
  %v681 = vsel %vm654, %v595, %v599
  %v682 = vsel %vm654, %v597, %v601
  %v683 = vsel %vm654, %v591, %v595
  %v684 = vsel %vm654, %v593, %v597
  %v685 = vsel %vm654, %v651, %v591
  %v686 = vsel %vm654, %v653, %v593
  %687 = vrot.lane.b32.xlu0 %v364, 112
  %v688 = vpop.permute.xlu0 %687
  %689 = vrot.lane.b32.xlu0 %v380, 112
  %v690 = vpop.permute.xlu0 %689
  %691 = vrot.lane.b32.xlu0 %v365, 112
  %v692 = vpop.permute.xlu0 %691
  %693 = vrot.lane.b32.xlu0 %v381, 112
  %v694 = vpop.permute.xlu0 %693
  %695 = vrot.lane.b32.xlu0 %v366, 112
  %v696 = vpop.permute.xlu0 %695
  %697 = vrot.lane.b32.xlu0 %v382, 112
  %v698 = vpop.permute.xlu0 %697
  %699 = vrot.lane.b32.xlu0 %v367, 112
  %v700 = vpop.permute.xlu0 %699
  %701 = vrot.lane.b32.xlu0 %v383, 112
  %v702 = vpop.permute.xlu0 %701
  %703 = vrot.lane.b32.xlu0 %v368, 112
  %v704 = vpop.permute.xlu0 %703
  %705 = vrot.lane.b32.xlu0 %v384, 112
  %v706 = vpop.permute.xlu0 %705
  %707 = vrot.lane.b32.xlu0 %v369, 112
  %v708 = vpop.permute.xlu0 %707
  %709 = vrot.lane.b32.xlu0 %v385, 112
  %v710 = vpop.permute.xlu0 %709
  %711 = vrot.lane.b32.xlu0 %v370, 112
  %v712 = vpop.permute.xlu0 %711
  %713 = vrot.lane.b32.xlu0 %v386, 112
  %v714 = vpop.permute.xlu0 %713
  %715 = vrot.lane.b32.xlu0 %v371, 112
  %v716 = vpop.permute.xlu0 %715
  %717 = vrot.lane.b32.xlu0 %v387, 112
  %v718 = vpop.permute.xlu0 %717
  %719 = vrot.lane.b32.xlu0 %v372, 112
  %v720 = vpop.permute.xlu0 %719
  %721 = vrot.lane.b32.xlu0 %v388, 112
  %v722 = vpop.permute.xlu0 %721
  %723 = vrot.lane.b32.xlu0 %v373, 112
  %v724 = vpop.permute.xlu0 %723
  %725 = vrot.lane.b32.xlu0 %v389, 112
  %v726 = vpop.permute.xlu0 %725
  %727 = vrot.lane.b32.xlu0 %v374, 112
  %v728 = vpop.permute.xlu0 %727
  %729 = vrot.lane.b32.xlu0 %v390, 112
  %v730 = vpop.permute.xlu0 %729
  %731 = vrot.lane.b32.xlu0 %v375, 112
  %v732 = vpop.permute.xlu0 %731
  %733 = vrot.lane.b32.xlu0 %v391, 112
  %v734 = vpop.permute.xlu0 %733
  %735 = vrot.lane.b32.xlu0 %v376, 112
  %v736 = vpop.permute.xlu0 %735
  %737 = vrot.lane.b32.xlu0 %v392, 112
  %v738 = vpop.permute.xlu0 %737
  %739 = vrot.lane.b32.xlu0 %v377, 112
  %v740 = vpop.permute.xlu0 %739
  %741 = vrot.lane.b32.xlu0 %v393, 112
  %v742 = vpop.permute.xlu0 %741
  %743 = vrot.lane.b32.xlu0 %v378, 112
  %v744 = vpop.permute.xlu0 %743
  %745 = vrot.lane.b32.xlu0 %v394, 112
  %v746 = vpop.permute.xlu0 %745
  %747 = vrot.lane.b32.xlu0 %v379, 112
  %v748 = vpop.permute.xlu0 %747
  %749 = vrot.lane.b32.xlu0 %v395, 112
  %v750 = vpop.permute.xlu0 %749
  %vm751 = vcmp.lt.s32.totalorder %v48, 112
  %v752 = vsel %vm751, %v744, %v748
  %v753 = vsel %vm751, %v746, %v750
  %v754 = vsel %vm751, %v740, %v744
  %v755 = vsel %vm751, %v742, %v746
  %v756 = vsel %vm751, %v736, %v740
  %v757 = vsel %vm751, %v738, %v742
  %v758 = vsel %vm751, %v732, %v736
  %v759 = vsel %vm751, %v734, %v738
  %v760 = vsel %vm751, %v728, %v732
  %v761 = vsel %vm751, %v730, %v734
  %v762 = vsel %vm751, %v724, %v728
  %v763 = vsel %vm751, %v726, %v730
  %v764 = vsel %vm751, %v720, %v724
  %v765 = vsel %vm751, %v722, %v726
  %v766 = vsel %vm751, %v716, %v720
  %v767 = vsel %vm751, %v718, %v722
  %v768 = vsel %vm751, %v712, %v716
  %v769 = vsel %vm751, %v714, %v718
  %v770 = vsel %vm751, %v708, %v712
  %v771 = vsel %vm751, %v710, %v714
  %v772 = vsel %vm751, %v704, %v708
  %v773 = vsel %vm751, %v706, %v710
  %v774 = vsel %vm751, %v700, %v704
  %v775 = vsel %vm751, %v702, %v706
  %v776 = vsel %vm751, %v696, %v700
  %v777 = vsel %vm751, %v698, %v702
  %v778 = vsel %vm751, %v692, %v696
  %v779 = vsel %vm751, %v694, %v698
  %v780 = vsel %vm751, %v688, %v692
  %v781 = vsel %vm751, %v690, %v694
  %v782 = vsel %vm751, %v748, %v688
  %v783 = vsel %vm751, %v750, %v690
  %v784 = vpack.c.bf16 %v380, %v364
  %v785 = vpack.c.bf16 %v381, %v365
  %v786 = vpack.c.bf16 %v382, %v366
  %v787 = vpack.c.bf16 %v383, %v367
  %v788 = vpack.c.bf16 %v384, %v368
  %v789 = vpack.c.bf16 %v385, %v369
  %v790 = vpack.c.bf16 %v386, %v370
  %v791 = vpack.c.bf16 %v387, %v371
  %v792 = vpack.c.bf16 %v388, %v372
  %v793 = vpack.c.bf16 %v389, %v373
  %v794 = vpack.c.bf16 %v390, %v374
  %v795 = vpack.c.bf16 %v391, %v375
  %v796 = vpack.c.bf16 %v392, %v376
  %v797 = vpack.c.bf16 %v393, %v377
  %v798 = vpack.c.bf16 %v394, %v378
  %v799 = vpack.c.bf16 %v395, %v379
  %v800 = vpack.c.bf16 %v490, %v489
  %v801 = vpack.c.bf16 %v488, %v487
  %v802 = vpack.c.bf16 %v486, %v485
  %v803 = vpack.c.bf16 %v484, %v483
  %v804 = vpack.c.bf16 %v482, %v481
  %v805 = vpack.c.bf16 %v480, %v479
  %v806 = vpack.c.bf16 %v478, %v477
  %v807 = vpack.c.bf16 %v476, %v475
  %v808 = vpack.c.bf16 %v474, %v473
  %v809 = vpack.c.bf16 %v472, %v471
  %v810 = vpack.c.bf16 %v470, %v469
  %v811 = vpack.c.bf16 %v468, %v467
  %v812 = vpack.c.bf16 %v466, %v465
  %v813 = vpack.c.bf16 %v464, %v463
  %v814 = vpack.c.bf16 %v462, %v461
  %v815 = vpack.c.bf16 %v492, %v491
  %v816 = vpack.c.bf16 %v587, %v586
  %v817 = vpack.c.bf16 %v585, %v584
  %v818 = vpack.c.bf16 %v583, %v582
  %v819 = vpack.c.bf16 %v581, %v580
  %v820 = vpack.c.bf16 %v579, %v578
  %v821 = vpack.c.bf16 %v577, %v576
  %v822 = vpack.c.bf16 %v575, %v574
  %v823 = vpack.c.bf16 %v573, %v572
  %v824 = vpack.c.bf16 %v571, %v570
  %v825 = vpack.c.bf16 %v569, %v568
  %v826 = vpack.c.bf16 %v567, %v566
  %v827 = vpack.c.bf16 %v565, %v564
  %v828 = vpack.c.bf16 %v563, %v562
  %v829 = vpack.c.bf16 %v561, %v560
  %v830 = vpack.c.bf16 %v559, %v558
  %v831 = vpack.c.bf16 %v589, %v588
  %v832 = vpack.c.bf16 %v684, %v683
  %v833 = vpack.c.bf16 %v682, %v681
  %v834 = vpack.c.bf16 %v680, %v679
  %v835 = vpack.c.bf16 %v678, %v677
  %v836 = vpack.c.bf16 %v676, %v675
  %v837 = vpack.c.bf16 %v674, %v673
  %v838 = vpack.c.bf16 %v672, %v671
  %v839 = vpack.c.bf16 %v670, %v669
  %v840 = vpack.c.bf16 %v668, %v667
  %v841 = vpack.c.bf16 %v666, %v665
  %v842 = vpack.c.bf16 %v664, %v663
  %v843 = vpack.c.bf16 %v662, %v661
  %v844 = vpack.c.bf16 %v660, %v659
  %v845 = vpack.c.bf16 %v658, %v657
  %v846 = vpack.c.bf16 %v656, %v655
  %v847 = vpack.c.bf16 %v686, %v685
  %v848 = vpack.c.bf16 %v781, %v780
  %v849 = vpack.c.bf16 %v779, %v778
  %v850 = vpack.c.bf16 %v777, %v776
  %v851 = vpack.c.bf16 %v775, %v774
  %v852 = vpack.c.bf16 %v773, %v772
  %v853 = vpack.c.bf16 %v771, %v770
  %v854 = vpack.c.bf16 %v769, %v768
  %v855 = vpack.c.bf16 %v767, %v766
  %v856 = vpack.c.bf16 %v765, %v764
  %v857 = vpack.c.bf16 %v763, %v762
  %v858 = vpack.c.bf16 %v761, %v760
  %v859 = vpack.c.bf16 %v759, %v758
  %v860 = vpack.c.bf16 %v757, %v756
  %v861 = vpack.c.bf16 %v755, %v754
  %v862 = vpack.c.bf16 %v753, %v752
  %v863 = vpack.c.bf16 %v783, %v782
  %v864 = vld [vmem:[%s1] sm:$0xf]
  %v865 = vld [vmem:[%s1 + $0x4] sm:$0xf]
  %v866 = vld [vmem:[%s2] sm:$0xff]
  %v867 = vld [vmem:[%s2 + $0x8] sm:$0xff]
  %869 = vset.pattern.permute.xlu0 0
  %870 = vperm.xlu0 %869, %v866
  %v871 = vpop.permute.xlu0 %870
  %874 = vset.pattern.permute.xlu0 0
  %875 = vperm.xlu0 %874, %v867
  %v876 = vpop.permute.xlu0 %875
  %v880 = vunpack.c.l.b16 %v864
  %v881 = vunpack.c.l.b16 %v865
  %v882 = vpack.c.b16 %v881, %v880
  %vm883 = vcmask 654336
  %v885 = vsel %vm883, %v882, 0
  %887 = vmatprep.subr.bf16.mxu0 %v785
  %888 = vmatpush1.bf16.msra.mxu0 %v784
  %889 = vmatprep.subr.bf16.mxu0 %v801
  %890 = vmatpush1.bf16.msra.mxu0 %v800
  %891 = vmatprep.subr.bf16.mxu0 %v817
  %892 = vmatpush1.bf16.msra.mxu0 %v816
  %893 = vmatprep.subr.bf16.mxu0 %v833
  %894 = vmatpush1.bf16.msra.mxu0 %v832
  %895 = vmatprep.subr.bf16.mxu0 %v849
  %896 = vmatpush1.bf16.msra.mxu0 %v848
  %897 = vmatprep.subr.bf16.mxu0 0
  %898 = vmatpush1.bf16.msra.mxu0 0
  %899 = vmatprep.subr.bf16.mxu0 0
  %900 = vmatpush1.bf16.msra.mxu0 0
  %901 = vmatprep.subr.bf16.mxu0 0
  %902 = vmatpush1.bf16.msra.mxu0 0
  %903 = vmatprep.subr.bf16.mxu0 0
  %904 = vmatpush1.bf16.msra.mxu0 0
  %905 = vmatprep.subr.bf16.mxu0 0
  %906 = vmatpush1.bf16.msra.mxu0 0
  %907 = vmatprep.subr.bf16.mxu0 0
  %908 = vmatpush1.bf16.msra.mxu0 0
  %909 = vmatprep.subr.bf16.mxu0 0
  %910 = vmatpush1.bf16.msra.mxu0 0
  %911 = vmatprep.subr.bf16.mxu0 0
  %912 = vmatpush1.bf16.msra.mxu0 0
  %913 = vmatprep.subr.bf16.mxu0 0
  %914 = vmatpush1.bf16.msra.mxu0 0
  %915 = vmatprep.subr.bf16.mxu0 0
  %916 = vmatpush1.bf16.msra.mxu0 0
  %917 = vmatprep.subr.bf16.mxu0 0
  %918 = vmatpush1.bf16.msra.mxu0 0
  %919 = vmatprep.mubr.bf16.mxu0 0
  %920 = vmatmul.mubr.bf16.gmra.mrb[0].mxu0 %v885
  %v921 = vpop.f32.mrb[0].mxu0
  %v922 = vadd.f32 %v871, %v921
  %v923 = vpop.f32.mrb[0].mxu0
  %v924 = vadd.f32 %v871, %v923
  %v925 = vpop.f32.mrb[0].mxu0
  %v926 = vadd.f32 %v876, %v925
  %v927 = vpop.f32.mrb[0].mxu0
  %v928 = vadd.f32 %v876, %v927
  %929 = vdwg.mxu0
  %930 = vmatprep.subr.bf16.mxu0 %v787
  %931 = vmatpush1.bf16.msra.mxu0 %v786
  %932 = vmatprep.subr.bf16.mxu0 %v803
  %933 = vmatpush1.bf16.msra.mxu0 %v802
  %934 = vmatprep.subr.bf16.mxu0 %v819
  %935 = vmatpush1.bf16.msra.mxu0 %v818
  %936 = vmatprep.subr.bf16.mxu0 %v835
  %937 = vmatpush1.bf16.msra.mxu0 %v834
  %938 = vmatprep.subr.bf16.mxu0 %v851
  %939 = vmatpush1.bf16.msra.mxu0 %v850
  %940 = vmatprep.subr.bf16.mxu0 0
  %941 = vmatpush1.bf16.msra.mxu0 0
  %942 = vmatprep.subr.bf16.mxu0 0
  %943 = vmatpush1.bf16.msra.mxu0 0
  %944 = vmatprep.subr.bf16.mxu0 0
  %945 = vmatpush1.bf16.msra.mxu0 0
  %946 = vmatprep.subr.bf16.mxu0 0
  %947 = vmatpush1.bf16.msra.mxu0 0
  %948 = vmatprep.subr.bf16.mxu0 0
  %949 = vmatpush1.bf16.msra.mxu0 0
  %950 = vmatprep.subr.bf16.mxu0 0
  %951 = vmatpush1.bf16.msra.mxu0 0
  %952 = vmatprep.subr.bf16.mxu0 0
  %953 = vmatpush1.bf16.msra.mxu0 0
  %954 = vmatprep.subr.bf16.mxu0 0
  %955 = vmatpush1.bf16.msra.mxu0 0
  %956 = vmatprep.subr.bf16.mxu0 0
  %957 = vmatpush1.bf16.msra.mxu0 0
  %958 = vmatprep.subr.bf16.mxu0 0
  %959 = vmatpush1.bf16.msra.mxu0 0
  %960 = vmatprep.subr.bf16.mxu0 0
  %961 = vmatpush1.bf16.msra.mxu0 0
  %962 = vmatprep.mubr.bf16.mxu0 0
  %963 = vmatmul.mubr.bf16.gmra.mrb[0].mxu0 %v885
  %v964 = vpop.f32.mrb[0].mxu0
  %v965 = vadd.f32 %v871, %v964
  %v966 = vpop.f32.mrb[0].mxu0
  %v967 = vadd.f32 %v871, %v966
  %v968 = vpop.f32.mrb[0].mxu0
  %v969 = vadd.f32 %v876, %v968
  %v970 = vpop.f32.mrb[0].mxu0
  %v971 = vadd.f32 %v876, %v970
  %972 = vdwg.mxu0
  %973 = vmatprep.subr.bf16.mxu0 %v789
  %974 = vmatpush1.bf16.msra.mxu0 %v788
  %975 = vmatprep.subr.bf16.mxu0 %v805
  %976 = vmatpush1.bf16.msra.mxu0 %v804
  %977 = vmatprep.subr.bf16.mxu0 %v821
  %978 = vmatpush1.bf16.msra.mxu0 %v820
  %979 = vmatprep.subr.bf16.mxu0 %v837
  %980 = vmatpush1.bf16.msra.mxu0 %v836
  %981 = vmatprep.subr.bf16.mxu0 %v853
  %982 = vmatpush1.bf16.msra.mxu0 %v852
  %983 = vmatprep.subr.bf16.mxu0 0
  %984 = vmatpush1.bf16.msra.mxu0 0
  %985 = vmatprep.subr.bf16.mxu0 0
  %986 = vmatpush1.bf16.msra.mxu0 0
  %987 = vmatprep.subr.bf16.mxu0 0
  %988 = vmatpush1.bf16.msra.mxu0 0
  %989 = vmatprep.subr.bf16.mxu0 0
  %990 = vmatpush1.bf16.msra.mxu0 0
  %991 = vmatprep.subr.bf16.mxu0 0
  %992 = vmatpush1.bf16.msra.mxu0 0
  %993 = vmatprep.subr.bf16.mxu0 0
  %994 = vmatpush1.bf16.msra.mxu0 0
  %995 = vmatprep.subr.bf16.mxu0 0
  %996 = vmatpush1.bf16.msra.mxu0 0
  %997 = vmatprep.subr.bf16.mxu0 0
  %998 = vmatpush1.bf16.msra.mxu0 0
  %999 = vmatprep.subr.bf16.mxu0 0
  %1000 = vmatpush1.bf16.msra.mxu0 0
  %1001 = vmatprep.subr.bf16.mxu0 0
  %1002 = vmatpush1.bf16.msra.mxu0 0
  %1003 = vmatprep.subr.bf16.mxu0 0
  %1004 = vmatpush1.bf16.msra.mxu0 0
  %1005 = vmatprep.mubr.bf16.mxu0 0
  %1006 = vmatmul.mubr.bf16.gmra.mrb[0].mxu0 %v885
  %v1007 = vpop.f32.mrb[0].mxu0
  %v1008 = vadd.f32 %v871, %v1007
  %v1009 = vpop.f32.mrb[0].mxu0
  %v1010 = vadd.f32 %v871, %v1009
  %v1011 = vpop.f32.mrb[0].mxu0
  %v1012 = vadd.f32 %v876, %v1011
  %v1013 = vpop.f32.mrb[0].mxu0
  %v1014 = vadd.f32 %v876, %v1013
  %1015 = vdwg.mxu0
  %1016 = vmatprep.subr.bf16.mxu0 %v791
  %1017 = vmatpush1.bf16.msra.mxu0 %v790
  %1018 = vmatprep.subr.bf16.mxu0 %v807
  %1019 = vmatpush1.bf16.msra.mxu0 %v806
  %1020 = vmatprep.subr.bf16.mxu0 %v823
  %1021 = vmatpush1.bf16.msra.mxu0 %v822
  %1022 = vmatprep.subr.bf16.mxu0 %v839
  %1023 = vmatpush1.bf16.msra.mxu0 %v838
  %1024 = vmatprep.subr.bf16.mxu0 %v855
  %1025 = vmatpush1.bf16.msra.mxu0 %v854
  %1026 = vmatprep.subr.bf16.mxu0 0
  %1027 = vmatpush1.bf16.msra.mxu0 0
  %1028 = vmatprep.subr.bf16.mxu0 0
  %1029 = vmatpush1.bf16.msra.mxu0 0
  %1030 = vmatprep.subr.bf16.mxu0 0
  %1031 = vmatpush1.bf16.msra.mxu0 0
  %1032 = vmatprep.subr.bf16.mxu0 0
  %1033 = vmatpush1.bf16.msra.mxu0 0
  %1034 = vmatprep.subr.bf16.mxu0 0
  %1035 = vmatpush1.bf16.msra.mxu0 0
  %1036 = vmatprep.subr.bf16.mxu0 0
  %1037 = vmatpush1.bf16.msra.mxu0 0
  %1038 = vmatprep.subr.bf16.mxu0 0
  %1039 = vmatpush1.bf16.msra.mxu0 0
  %1040 = vmatprep.subr.bf16.mxu0 0
  %1041 = vmatpush1.bf16.msra.mxu0 0
  %1042 = vmatprep.subr.bf16.mxu0 0
  %1043 = vmatpush1.bf16.msra.mxu0 0
  %1044 = vmatprep.subr.bf16.mxu0 0
  %1045 = vmatpush1.bf16.msra.mxu0 0
  %1046 = vmatprep.subr.bf16.mxu0 0
  %1047 = vmatpush1.bf16.msra.mxu0 0
  %1048 = vmatprep.mubr.bf16.mxu0 0
  %1049 = vmatmul.mubr.bf16.gmra.mrb[0].mxu0 %v885
  %v1050 = vpop.f32.mrb[0].mxu0
  %v1051 = vadd.f32 %v871, %v1050
  %v1052 = vpop.f32.mrb[0].mxu0
  %v1053 = vadd.f32 %v871, %v1052
  %v1054 = vpop.f32.mrb[0].mxu0
  %v1055 = vadd.f32 %v876, %v1054
  %v1056 = vpop.f32.mrb[0].mxu0
  %v1057 = vadd.f32 %v876, %v1056
  %1058 = vdwg.mxu0
  %1059 = vmatprep.subr.bf16.mxu0 %v793
  %1060 = vmatpush1.bf16.msra.mxu0 %v792
  %1061 = vmatprep.subr.bf16.mxu0 %v809
  %1062 = vmatpush1.bf16.msra.mxu0 %v808
  %1063 = vmatprep.subr.bf16.mxu0 %v825
  %1064 = vmatpush1.bf16.msra.mxu0 %v824
  %1065 = vmatprep.subr.bf16.mxu0 %v841
  %1066 = vmatpush1.bf16.msra.mxu0 %v840
  %1067 = vmatprep.subr.bf16.mxu0 %v857
  %1068 = vmatpush1.bf16.msra.mxu0 %v856
  %1069 = vmatprep.subr.bf16.mxu0 0
  %1070 = vmatpush1.bf16.msra.mxu0 0
  %1071 = vmatprep.subr.bf16.mxu0 0
  %1072 = vmatpush1.bf16.msra.mxu0 0
  %1073 = vmatprep.subr.bf16.mxu0 0
  %1074 = vmatpush1.bf16.msra.mxu0 0
  %1075 = vmatprep.subr.bf16.mxu0 0
  %1076 = vmatpush1.bf16.msra.mxu0 0
  %1077 = vmatprep.subr.bf16.mxu0 0
  %1078 = vmatpush1.bf16.msra.mxu0 0
  %1079 = vmatprep.subr.bf16.mxu0 0
  %1080 = vmatpush1.bf16.msra.mxu0 0
  %1081 = vmatprep.subr.bf16.mxu0 0
  %1082 = vmatpush1.bf16.msra.mxu0 0
  %1083 = vmatprep.subr.bf16.mxu0 0
  %1084 = vmatpush1.bf16.msra.mxu0 0
  %1085 = vmatprep.subr.bf16.mxu0 0
  %1086 = vmatpush1.bf16.msra.mxu0 0
  %1087 = vmatprep.subr.bf16.mxu0 0
  %1088 = vmatpush1.bf16.msra.mxu0 0
  %1089 = vmatprep.subr.bf16.mxu0 0
  %1090 = vmatpush1.bf16.msra.mxu0 0
  %1091 = vmatprep.mubr.bf16.mxu0 0
  %1092 = vmatmul.mubr.bf16.gmra.mrb[0].mxu0 %v885
  %v1093 = vpop.f32.mrb[0].mxu0
  %v1094 = vadd.f32 %v871, %v1093
  %v1095 = vpop.f32.mrb[0].mxu0
  %v1096 = vadd.f32 %v871, %v1095
  %v1097 = vpop.f32.mrb[0].mxu0
  %v1098 = vadd.f32 %v876, %v1097
  %v1099 = vpop.f32.mrb[0].mxu0
  %v1100 = vadd.f32 %v876, %v1099
  %1101 = vdwg.mxu0
  %1102 = vmatprep.subr.bf16.mxu0 %v795
  %1103 = vmatpush1.bf16.msra.mxu0 %v794
  %1104 = vmatprep.subr.bf16.mxu0 %v811
  %1105 = vmatpush1.bf16.msra.mxu0 %v810
  %1106 = vmatprep.subr.bf16.mxu0 %v827
  %1107 = vmatpush1.bf16.msra.mxu0 %v826
  %1108 = vmatprep.subr.bf16.mxu0 %v843
  %1109 = vmatpush1.bf16.msra.mxu0 %v842
  %1110 = vmatprep.subr.bf16.mxu0 %v859
  %1111 = vmatpush1.bf16.msra.mxu0 %v858
  %1112 = vmatprep.subr.bf16.mxu0 0
  %1113 = vmatpush1.bf16.msra.mxu0 0
  %1114 = vmatprep.subr.bf16.mxu0 0
  %1115 = vmatpush1.bf16.msra.mxu0 0
  %1116 = vmatprep.subr.bf16.mxu0 0
  %1117 = vmatpush1.bf16.msra.mxu0 0
  %1118 = vmatprep.subr.bf16.mxu0 0
  %1119 = vmatpush1.bf16.msra.mxu0 0
  %1120 = vmatprep.subr.bf16.mxu0 0
  %1121 = vmatpush1.bf16.msra.mxu0 0
  %1122 = vmatprep.subr.bf16.mxu0 0
  %1123 = vmatpush1.bf16.msra.mxu0 0
  %1124 = vmatprep.subr.bf16.mxu0 0
  %1125 = vmatpush1.bf16.msra.mxu0 0
  %1126 = vmatprep.subr.bf16.mxu0 0
  %1127 = vmatpush1.bf16.msra.mxu0 0
  %1128 = vmatprep.subr.bf16.mxu0 0
  %1129 = vmatpush1.bf16.msra.mxu0 0
  %1130 = vmatprep.subr.bf16.mxu0 0
  %1131 = vmatpush1.bf16.msra.mxu0 0
  %1132 = vmatprep.subr.bf16.mxu0 0
  %1133 = vmatpush1.bf16.msra.mxu0 0
  %1134 = vmatprep.mubr.bf16.mxu0 0
  %1135 = vmatmul.mubr.bf16.gmra.mrb[0].mxu0 %v885
  %v1136 = vpop.f32.mrb[0].mxu0
  %v1137 = vadd.f32 %v871, %v1136
  %v1138 = vpop.f32.mrb[0].mxu0
  %v1139 = vadd.f32 %v871, %v1138
  %v1140 = vpop.f32.mrb[0].mxu0
  %v1141 = vadd.f32 %v876, %v1140
  %v1142 = vpop.f32.mrb[0].mxu0
  %v1143 = vadd.f32 %v876, %v1142
  %1144 = vdwg.mxu0
  %1145 = vmatprep.subr.bf16.mxu0 %v797
  %1146 = vmatpush1.bf16.msra.mxu0 %v796
  %1147 = vmatprep.subr.bf16.mxu0 %v813
  %1148 = vmatpush1.bf16.msra.mxu0 %v812
  %1149 = vmatprep.subr.bf16.mxu0 %v829
  %1150 = vmatpush1.bf16.msra.mxu0 %v828
  %1151 = vmatprep.subr.bf16.mxu0 %v845
  %1152 = vmatpush1.bf16.msra.mxu0 %v844
  %1153 = vmatprep.subr.bf16.mxu0 %v861
  %1154 = vmatpush1.bf16.msra.mxu0 %v860
  %1155 = vmatprep.subr.bf16.mxu0 0
  %1156 = vmatpush1.bf16.msra.mxu0 0
  %1157 = vmatprep.subr.bf16.mxu0 0
  %1158 = vmatpush1.bf16.msra.mxu0 0
  %1159 = vmatprep.subr.bf16.mxu0 0
  %1160 = vmatpush1.bf16.msra.mxu0 0
  %1161 = vmatprep.subr.bf16.mxu0 0
  %1162 = vmatpush1.bf16.msra.mxu0 0
  %1163 = vmatprep.subr.bf16.mxu0 0
  %1164 = vmatpush1.bf16.msra.mxu0 0
  %1165 = vmatprep.subr.bf16.mxu0 0
  %1166 = vmatpush1.bf16.msra.mxu0 0
  %1167 = vmatprep.subr.bf16.mxu0 0
  %1168 = vmatpush1.bf16.msra.mxu0 0
  %1169 = vmatprep.subr.bf16.mxu0 0
  %1170 = vmatpush1.bf16.msra.mxu0 0
  %1171 = vmatprep.subr.bf16.mxu0 0
  %1172 = vmatpush1.bf16.msra.mxu0 0
  %1173 = vmatprep.subr.bf16.mxu0 0
  %1174 = vmatpush1.bf16.msra.mxu0 0
  %1175 = vmatprep.subr.bf16.mxu0 0
  %1176 = vmatpush1.bf16.msra.mxu0 0
  %1177 = vmatprep.mubr.bf16.mxu0 0
  %1178 = vmatmul.mubr.bf16.gmra.mrb[0].mxu0 %v885
  %v1179 = vpop.f32.mrb[0].mxu0
  %v1180 = vadd.f32 %v871, %v1179
  %v1181 = vpop.f32.mrb[0].mxu0
  %v1182 = vadd.f32 %v871, %v1181
  %v1183 = vpop.f32.mrb[0].mxu0
  %v1184 = vadd.f32 %v876, %v1183
  %v1185 = vpop.f32.mrb[0].mxu0
  %v1186 = vadd.f32 %v876, %v1185
  %1187 = vdwg.mxu0
  %1188 = vmatprep.subr.bf16.mxu0 %v799
  %1189 = vmatpush1.bf16.msra.mxu0 %v798
  %1190 = vmatprep.subr.bf16.mxu0 %v815
  %1191 = vmatpush1.bf16.msra.mxu0 %v814
  %1192 = vmatprep.subr.bf16.mxu0 %v831
  %1193 = vmatpush1.bf16.msra.mxu0 %v830
  %1194 = vmatprep.subr.bf16.mxu0 %v847
  %1195 = vmatpush1.bf16.msra.mxu0 %v846
  %1196 = vmatprep.subr.bf16.mxu0 %v863
  %1197 = vmatpush1.bf16.msra.mxu0 %v862
  %1198 = vmatprep.subr.bf16.mxu0 0
  %1199 = vmatpush1.bf16.msra.mxu0 0
  %1200 = vmatprep.subr.bf16.mxu0 0
  %1201 = vmatpush1.bf16.msra.mxu0 0
  %1202 = vmatprep.subr.bf16.mxu0 0
  %1203 = vmatpush1.bf16.msra.mxu0 0
  %1204 = vmatprep.subr.bf16.mxu0 0
  %1205 = vmatpush1.bf16.msra.mxu0 0
  %1206 = vmatprep.subr.bf16.mxu0 0
  %1207 = vmatpush1.bf16.msra.mxu0 0
  %1208 = vmatprep.subr.bf16.mxu0 0
  %1209 = vmatpush1.bf16.msra.mxu0 0
  %1210 = vmatprep.subr.bf16.mxu0 0
  %1211 = vmatpush1.bf16.msra.mxu0 0
  %1212 = vmatprep.subr.bf16.mxu0 0
  %1213 = vmatpush1.bf16.msra.mxu0 0
  %1214 = vmatprep.subr.bf16.mxu0 0
  %1215 = vmatpush1.bf16.msra.mxu0 0
  %1216 = vmatprep.subr.bf16.mxu0 0
  %1217 = vmatpush1.bf16.msra.mxu0 0
  %1218 = vmatprep.subr.bf16.mxu0 0
  %1219 = vmatpush1.bf16.msra.mxu0 0
  %1220 = vmatprep.mubr.bf16.mxu0 0
  %1221 = vmatmul.mubr.bf16.gmra.mrb[0].mxu0 %v885
  %v1222 = vpop.f32.mrb[0].mxu0
  %v1223 = vadd.f32 %v871, %v1222
  %v1224 = vpop.f32.mrb[0].mxu0
  %v1225 = vadd.f32 %v871, %v1224
  %v1226 = vpop.f32.mrb[0].mxu0
  %v1227 = vadd.f32 %v876, %v1226
  %v1228 = vpop.f32.mrb[0].mxu0
  %v1229 = vadd.f32 %v876, %v1228
  %1230 = vdwg.mxu0
  %v1231 = vmax.f32 %v922, 0.0
  %v1232 = vmax.f32 %v924, 0.0
  %v1233 = vmax.f32 %v965, 0.0
  %v1234 = vmax.f32 %v967, 0.0
  %v1235 = vmax.f32 %v1008, 0.0
  %v1236 = vmax.f32 %v1010, 0.0
  %v1237 = vmax.f32 %v1051, 0.0
  %v1238 = vmax.f32 %v1053, 0.0
  %v1239 = vmax.f32 %v1094, 0.0
  %v1240 = vmax.f32 %v1096, 0.0
  %v1241 = vmax.f32 %v1137, 0.0
  %v1242 = vmax.f32 %v1139, 0.0
  %v1243 = vmax.f32 %v1180, 0.0
  %v1244 = vmax.f32 %v1182, 0.0
  %v1245 = vmax.f32 %v1223, 0.0
  %v1246 = vmax.f32 %v1225, 0.0
  %v1247 = vmax.f32 %v926, 0.0
  %v1248 = vmax.f32 %v928, 0.0
  %v1249 = vmax.f32 %v969, 0.0
  %v1250 = vmax.f32 %v971, 0.0
  %v1251 = vmax.f32 %v1012, 0.0
  %v1252 = vmax.f32 %v1014, 0.0
  %v1253 = vmax.f32 %v1055, 0.0
  %v1254 = vmax.f32 %v1057, 0.0
  %v1255 = vmax.f32 %v1098, 0.0
  %v1256 = vmax.f32 %v1100, 0.0
  %v1257 = vmax.f32 %v1141, 0.0
  %v1258 = vmax.f32 %v1143, 0.0
  %v1259 = vmax.f32 %v1184, 0.0
  %v1260 = vmax.f32 %v1186, 0.0
  %v1261 = vmax.f32 %v1227, 0.0
  %v1262 = vmax.f32 %v1229, 0.0
  %1263 = vrot.lane.b32.xlu0 %v1231, 127
  %v1264 = vpop.permute.xlu0 %1263
  %1265 = vrot.lane.b32.xlu0 %v1247, 127
  %v1266 = vpop.permute.xlu0 %1265
  %1267 = vrot.lane.b32.xlu0 %v1232, 127
  %v1268 = vpop.permute.xlu0 %1267
  %1269 = vrot.lane.b32.xlu0 %v1248, 127
  %v1270 = vpop.permute.xlu0 %1269
  %1271 = vrot.lane.b32.xlu0 %v1233, 127
  %v1272 = vpop.permute.xlu0 %1271
  %1273 = vrot.lane.b32.xlu0 %v1249, 127
  %v1274 = vpop.permute.xlu0 %1273
  %1275 = vrot.lane.b32.xlu0 %v1234, 127
  %v1276 = vpop.permute.xlu0 %1275
  %1277 = vrot.lane.b32.xlu0 %v1250, 127
  %v1278 = vpop.permute.xlu0 %1277
  %1279 = vrot.lane.b32.xlu0 %v1235, 127
  %v1280 = vpop.permute.xlu0 %1279
  %1281 = vrot.lane.b32.xlu0 %v1251, 127
  %v1282 = vpop.permute.xlu0 %1281
  %1283 = vrot.lane.b32.xlu0 %v1236, 127
  %v1284 = vpop.permute.xlu0 %1283
  %1285 = vrot.lane.b32.xlu0 %v1252, 127
  %v1286 = vpop.permute.xlu0 %1285
  %1287 = vrot.lane.b32.xlu0 %v1237, 127
  %v1288 = vpop.permute.xlu0 %1287
  %1289 = vrot.lane.b32.xlu0 %v1253, 127
  %v1290 = vpop.permute.xlu0 %1289
  %1291 = vrot.lane.b32.xlu0 %v1238, 127
  %v1292 = vpop.permute.xlu0 %1291
  %1293 = vrot.lane.b32.xlu0 %v1254, 127
  %v1294 = vpop.permute.xlu0 %1293
  %1295 = vrot.lane.b32.xlu0 %v1239, 127
  %v1296 = vpop.permute.xlu0 %1295
  %1297 = vrot.lane.b32.xlu0 %v1255, 127
  %v1298 = vpop.permute.xlu0 %1297
  %1299 = vrot.lane.b32.xlu0 %v1240, 127
  %v1300 = vpop.permute.xlu0 %1299
  %1301 = vrot.lane.b32.xlu0 %v1256, 127
  %v1302 = vpop.permute.xlu0 %1301
  %1303 = vrot.lane.b32.xlu0 %v1241, 127
  %v1304 = vpop.permute.xlu0 %1303
  %1305 = vrot.lane.b32.xlu0 %v1257, 127
  %v1306 = vpop.permute.xlu0 %1305
  %1307 = vrot.lane.b32.xlu0 %v1242, 127
  %v1308 = vpop.permute.xlu0 %1307
  %1309 = vrot.lane.b32.xlu0 %v1258, 127
  %v1310 = vpop.permute.xlu0 %1309
  %1311 = vrot.lane.b32.xlu0 %v1243, 127
  %v1312 = vpop.permute.xlu0 %1311
  %1313 = vrot.lane.b32.xlu0 %v1259, 127
  %v1314 = vpop.permute.xlu0 %1313
  %1315 = vrot.lane.b32.xlu0 %v1244, 127
  %v1316 = vpop.permute.xlu0 %1315
  %1317 = vrot.lane.b32.xlu0 %v1260, 127
  %v1318 = vpop.permute.xlu0 %1317
  %1319 = vrot.lane.b32.xlu0 %v1245, 127
  %v1320 = vpop.permute.xlu0 %1319
  %1321 = vrot.lane.b32.xlu0 %v1261, 127
  %v1322 = vpop.permute.xlu0 %1321
  %1323 = vrot.lane.b32.xlu0 %v1246, 127
  %v1324 = vpop.permute.xlu0 %1323
  %1325 = vrot.lane.b32.xlu0 %v1262, 127
  %v1326 = vpop.permute.xlu0 %1325
  %v1327 = vsel %vm152, %v1320, %v1324
  %v1328 = vsel %vm152, %v1322, %v1326
  %v1329 = vsel %vm152, %v1316, %v1320
  %v1330 = vsel %vm152, %v1318, %v1322
  %v1331 = vsel %vm152, %v1312, %v1316
  %v1332 = vsel %vm152, %v1314, %v1318
  %v1333 = vsel %vm152, %v1308, %v1312
  %v1334 = vsel %vm152, %v1310, %v1314
  %v1335 = vsel %vm152, %v1304, %v1308
  %v1336 = vsel %vm152, %v1306, %v1310
  %v1337 = vsel %vm152, %v1300, %v1304
  %v1338 = vsel %vm152, %v1302, %v1306
  %v1339 = vsel %vm152, %v1296, %v1300
  %v1340 = vsel %vm152, %v1298, %v1302
  %v1341 = vsel %vm152, %v1292, %v1296
  %v1342 = vsel %vm152, %v1294, %v1298
  %v1343 = vsel %vm152, %v1288, %v1292
  %v1344 = vsel %vm152, %v1290, %v1294
  %v1345 = vsel %vm152, %v1284, %v1288
  %v1346 = vsel %vm152, %v1286, %v1290
  %v1347 = vsel %vm152, %v1280, %v1284
  %v1348 = vsel %vm152, %v1282, %v1286
  %v1349 = vsel %vm152, %v1276, %v1280
  %v1350 = vsel %vm152, %v1278, %v1282
  %v1351 = vsel %vm152, %v1272, %v1276
  %v1352 = vsel %vm152, %v1274, %v1278
  %v1353 = vsel %vm152, %v1268, %v1272
  %v1354 = vsel %vm152, %v1270, %v1274
  %v1355 = vsel %vm152, %v1264, %v1268
  %v1356 = vsel %vm152, %v1266, %v1270
  %v1357 = vsel %vm152, %v1324, %v1264
  %v1358 = vsel %vm152, %v1326, %v1266
  %1359 = vrot.lane.b32.xlu0 %v1231, 126
  %v1360 = vpop.permute.xlu0 %1359
  %1361 = vrot.lane.b32.xlu0 %v1247, 126
  %v1362 = vpop.permute.xlu0 %1361
  %1363 = vrot.lane.b32.xlu0 %v1232, 126
  %v1364 = vpop.permute.xlu0 %1363
  %1365 = vrot.lane.b32.xlu0 %v1248, 126
  %v1366 = vpop.permute.xlu0 %1365
  %1367 = vrot.lane.b32.xlu0 %v1233, 126
  %v1368 = vpop.permute.xlu0 %1367
  %1369 = vrot.lane.b32.xlu0 %v1249, 126
  %v1370 = vpop.permute.xlu0 %1369
  %1371 = vrot.lane.b32.xlu0 %v1234, 126
  %v1372 = vpop.permute.xlu0 %1371
  %1373 = vrot.lane.b32.xlu0 %v1250, 126
  %v1374 = vpop.permute.xlu0 %1373
  %1375 = vrot.lane.b32.xlu0 %v1235, 126
  %v1376 = vpop.permute.xlu0 %1375
  %1377 = vrot.lane.b32.xlu0 %v1251, 126
  %v1378 = vpop.permute.xlu0 %1377
  %1379 = vrot.lane.b32.xlu0 %v1236, 126
  %v1380 = vpop.permute.xlu0 %1379
  %1381 = vrot.lane.b32.xlu0 %v1252, 126
  %v1382 = vpop.permute.xlu0 %1381
  %1383 = vrot.lane.b32.xlu0 %v1237, 126
  %v1384 = vpop.permute.xlu0 %1383
  %1385 = vrot.lane.b32.xlu0 %v1253, 126
  %v1386 = vpop.permute.xlu0 %1385
  %1387 = vrot.lane.b32.xlu0 %v1238, 126
  %v1388 = vpop.permute.xlu0 %1387
  %1389 = vrot.lane.b32.xlu0 %v1254, 126
  %v1390 = vpop.permute.xlu0 %1389
  %1391 = vrot.lane.b32.xlu0 %v1239, 126
  %v1392 = vpop.permute.xlu0 %1391
  %1393 = vrot.lane.b32.xlu0 %v1255, 126
  %v1394 = vpop.permute.xlu0 %1393
  %1395 = vrot.lane.b32.xlu0 %v1240, 126
  %v1396 = vpop.permute.xlu0 %1395
  %1397 = vrot.lane.b32.xlu0 %v1256, 126
  %v1398 = vpop.permute.xlu0 %1397
  %1399 = vrot.lane.b32.xlu0 %v1241, 126
  %v1400 = vpop.permute.xlu0 %1399
  %1401 = vrot.lane.b32.xlu0 %v1257, 126
  %v1402 = vpop.permute.xlu0 %1401
  %1403 = vrot.lane.b32.xlu0 %v1242, 126
  %v1404 = vpop.permute.xlu0 %1403
  %1405 = vrot.lane.b32.xlu0 %v1258, 126
  %v1406 = vpop.permute.xlu0 %1405
  %1407 = vrot.lane.b32.xlu0 %v1243, 126
  %v1408 = vpop.permute.xlu0 %1407
  %1409 = vrot.lane.b32.xlu0 %v1259, 126
  %v1410 = vpop.permute.xlu0 %1409
  %1411 = vrot.lane.b32.xlu0 %v1244, 126
  %v1412 = vpop.permute.xlu0 %1411
  %1413 = vrot.lane.b32.xlu0 %v1260, 126
  %v1414 = vpop.permute.xlu0 %1413
  %1415 = vrot.lane.b32.xlu0 %v1245, 126
  %v1416 = vpop.permute.xlu0 %1415
  %1417 = vrot.lane.b32.xlu0 %v1261, 126
  %v1418 = vpop.permute.xlu0 %1417
  %1419 = vrot.lane.b32.xlu0 %v1246, 126
  %v1420 = vpop.permute.xlu0 %1419
  %1421 = vrot.lane.b32.xlu0 %v1262, 126
  %v1422 = vpop.permute.xlu0 %1421
  %v1423 = vsel %vm201, %v1416, %v1420
  %v1424 = vsel %vm201, %v1418, %v1422
  %v1425 = vsel %vm201, %v1412, %v1416
  %v1426 = vsel %vm201, %v1414, %v1418
  %v1427 = vsel %vm201, %v1408, %v1412
  %v1428 = vsel %vm201, %v1410, %v1414
  %v1429 = vsel %vm201, %v1404, %v1408
  %v1430 = vsel %vm201, %v1406, %v1410
  %v1431 = vsel %vm201, %v1400, %v1404
  %v1432 = vsel %vm201, %v1402, %v1406
  %v1433 = vsel %vm201, %v1396, %v1400
  %v1434 = vsel %vm201, %v1398, %v1402
  %v1435 = vsel %vm201, %v1392, %v1396
  %v1436 = vsel %vm201, %v1394, %v1398
  %v1437 = vsel %vm201, %v1388, %v1392
  %v1438 = vsel %vm201, %v1390, %v1394
  %v1439 = vsel %vm201, %v1384, %v1388
  %v1440 = vsel %vm201, %v1386, %v1390
  %v1441 = vsel %vm201, %v1380, %v1384
  %v1442 = vsel %vm201, %v1382, %v1386
  %v1443 = vsel %vm201, %v1376, %v1380
  %v1444 = vsel %vm201, %v1378, %v1382
  %v1445 = vsel %vm201, %v1372, %v1376
  %v1446 = vsel %vm201, %v1374, %v1378
  %v1447 = vsel %vm201, %v1368, %v1372
  %v1448 = vsel %vm201, %v1370, %v1374
  %v1449 = vsel %vm201, %v1364, %v1368
  %v1450 = vsel %vm201, %v1366, %v1370
  %v1451 = vsel %vm201, %v1360, %v1364
  %v1452 = vsel %vm201, %v1362, %v1366
  %v1453 = vsel %vm201, %v1420, %v1360
  %v1454 = vsel %vm201, %v1422, %v1362
  %1455 = vrot.lane.b32.xlu0 %v1231, 125
  %v1456 = vpop.permute.xlu0 %1455
  %1457 = vrot.lane.b32.xlu0 %v1247, 125
  %v1458 = vpop.permute.xlu0 %1457
  %1459 = vrot.lane.b32.xlu0 %v1232, 125
  %v1460 = vpop.permute.xlu0 %1459
  %1461 = vrot.lane.b32.xlu0 %v1248, 125
  %v1462 = vpop.permute.xlu0 %1461
  %1463 = vrot.lane.b32.xlu0 %v1233, 125
  %v1464 = vpop.permute.xlu0 %1463
  %1465 = vrot.lane.b32.xlu0 %v1249, 125
  %v1466 = vpop.permute.xlu0 %1465
  %1467 = vrot.lane.b32.xlu0 %v1234, 125
  %v1468 = vpop.permute.xlu0 %1467
  %1469 = vrot.lane.b32.xlu0 %v1250, 125
  %v1470 = vpop.permute.xlu0 %1469
  %1471 = vrot.lane.b32.xlu0 %v1235, 125
  %v1472 = vpop.permute.xlu0 %1471
  %1473 = vrot.lane.b32.xlu0 %v1251, 125
  %v1474 = vpop.permute.xlu0 %1473
  %1475 = vrot.lane.b32.xlu0 %v1236, 125
  %v1476 = vpop.permute.xlu0 %1475
  %1477 = vrot.lane.b32.xlu0 %v1252, 125
  %v1478 = vpop.permute.xlu0 %1477
  %1479 = vrot.lane.b32.xlu0 %v1237, 125
  %v1480 = vpop.permute.xlu0 %1479
  %1481 = vrot.lane.b32.xlu0 %v1253, 125
  %v1482 = vpop.permute.xlu0 %1481
  %1483 = vrot.lane.b32.xlu0 %v1238, 125
  %v1484 = vpop.permute.xlu0 %1483
  %1485 = vrot.lane.b32.xlu0 %v1254, 125
  %v1486 = vpop.permute.xlu0 %1485
  %1487 = vrot.lane.b32.xlu0 %v1239, 125
  %v1488 = vpop.permute.xlu0 %1487
  %1489 = vrot.lane.b32.xlu0 %v1255, 125
  %v1490 = vpop.permute.xlu0 %1489
  %1491 = vrot.lane.b32.xlu0 %v1240, 125
  %v1492 = vpop.permute.xlu0 %1491
  %1493 = vrot.lane.b32.xlu0 %v1256, 125
  %v1494 = vpop.permute.xlu0 %1493
  %1495 = vrot.lane.b32.xlu0 %v1241, 125
  %v1496 = vpop.permute.xlu0 %1495
  %1497 = vrot.lane.b32.xlu0 %v1257, 125
  %v1498 = vpop.permute.xlu0 %1497
  %1499 = vrot.lane.b32.xlu0 %v1242, 125
  %v1500 = vpop.permute.xlu0 %1499
  %1501 = vrot.lane.b32.xlu0 %v1258, 125
  %v1502 = vpop.permute.xlu0 %1501
  %1503 = vrot.lane.b32.xlu0 %v1243, 125
  %v1504 = vpop.permute.xlu0 %1503
  %1505 = vrot.lane.b32.xlu0 %v1259, 125
  %v1506 = vpop.permute.xlu0 %1505
  %1507 = vrot.lane.b32.xlu0 %v1244, 125
  %v1508 = vpop.permute.xlu0 %1507
  %1509 = vrot.lane.b32.xlu0 %v1260, 125
  %v1510 = vpop.permute.xlu0 %1509
  %1511 = vrot.lane.b32.xlu0 %v1245, 125
  %v1512 = vpop.permute.xlu0 %1511
  %1513 = vrot.lane.b32.xlu0 %v1261, 125
  %v1514 = vpop.permute.xlu0 %1513
  %1515 = vrot.lane.b32.xlu0 %v1246, 125
  %v1516 = vpop.permute.xlu0 %1515
  %1517 = vrot.lane.b32.xlu0 %v1262, 125
  %v1518 = vpop.permute.xlu0 %1517
  %v1519 = vsel %vm250, %v1512, %v1516
  %v1520 = vsel %vm250, %v1514, %v1518
  %v1521 = vsel %vm250, %v1508, %v1512
  %v1522 = vsel %vm250, %v1510, %v1514
  %v1523 = vsel %vm250, %v1504, %v1508
  %v1524 = vsel %vm250, %v1506, %v1510
  %v1525 = vsel %vm250, %v1500, %v1504
  %v1526 = vsel %vm250, %v1502, %v1506
  %v1527 = vsel %vm250, %v1496, %v1500
  %v1528 = vsel %vm250, %v1498, %v1502
  %v1529 = vsel %vm250, %v1492, %v1496
  %v1530 = vsel %vm250, %v1494, %v1498
  %v1531 = vsel %vm250, %v1488, %v1492
  %v1532 = vsel %vm250, %v1490, %v1494
  %v1533 = vsel %vm250, %v1484, %v1488
  %v1534 = vsel %vm250, %v1486, %v1490
  %v1535 = vsel %vm250, %v1480, %v1484
  %v1536 = vsel %vm250, %v1482, %v1486
  %v1537 = vsel %vm250, %v1476, %v1480
  %v1538 = vsel %vm250, %v1478, %v1482
  %v1539 = vsel %vm250, %v1472, %v1476
  %v1540 = vsel %vm250, %v1474, %v1478
  %v1541 = vsel %vm250, %v1468, %v1472
  %v1542 = vsel %vm250, %v1470, %v1474
  %v1543 = vsel %vm250, %v1464, %v1468
  %v1544 = vsel %vm250, %v1466, %v1470
  %v1545 = vsel %vm250, %v1460, %v1464
  %v1546 = vsel %vm250, %v1462, %v1466
  %v1547 = vsel %vm250, %v1456, %v1460
  %v1548 = vsel %vm250, %v1458, %v1462
  %v1549 = vsel %vm250, %v1516, %v1456
  %v1550 = vsel %vm250, %v1518, %v1458
  %v1551 = vmax.f32 %v1231, %v1355
  %v1552 = vmax.f32 %v1232, %v1353
  %v1553 = vmax.f32 %v1233, %v1351
  %v1554 = vmax.f32 %v1234, %v1349
  %v1555 = vmax.f32 %v1235, %v1347
  %v1556 = vmax.f32 %v1236, %v1345
  %v1557 = vmax.f32 %v1237, %v1343
  %v1558 = vmax.f32 %v1238, %v1341
  %v1559 = vmax.f32 %v1239, %v1339
  %v1560 = vmax.f32 %v1240, %v1337
  %v1561 = vmax.f32 %v1241, %v1335
  %v1562 = vmax.f32 %v1242, %v1333
  %v1563 = vmax.f32 %v1243, %v1331
  %v1564 = vmax.f32 %v1244, %v1329
  %v1565 = vmax.f32 %v1245, %v1327
  %v1566 = vmax.f32 %v1246, %v1357
  %v1567 = vmax.f32 %v1247, %v1356
  %v1568 = vmax.f32 %v1248, %v1354
  %v1569 = vmax.f32 %v1249, %v1352
  %v1570 = vmax.f32 %v1250, %v1350
  %v1571 = vmax.f32 %v1251, %v1348
  %v1572 = vmax.f32 %v1252, %v1346
  %v1573 = vmax.f32 %v1253, %v1344
  %v1574 = vmax.f32 %v1254, %v1342
  %v1575 = vmax.f32 %v1255, %v1340
  %v1576 = vmax.f32 %v1256, %v1338
  %v1577 = vmax.f32 %v1257, %v1336
  %v1578 = vmax.f32 %v1258, %v1334
  %v1579 = vmax.f32 %v1259, %v1332
  %v1580 = vmax.f32 %v1260, %v1330
  %v1581 = vmax.f32 %v1261, %v1328
  %v1582 = vmax.f32 %v1262, %v1358
  %v1583 = vmax.f32 %v1451, %v1547
  %v1584 = vmax.f32 %v1449, %v1545
  %v1585 = vmax.f32 %v1447, %v1543
  %v1586 = vmax.f32 %v1445, %v1541
  %v1587 = vmax.f32 %v1443, %v1539
  %v1588 = vmax.f32 %v1441, %v1537
  %v1589 = vmax.f32 %v1439, %v1535
  %v1590 = vmax.f32 %v1437, %v1533
  %v1591 = vmax.f32 %v1435, %v1531
  %v1592 = vmax.f32 %v1433, %v1529
  %v1593 = vmax.f32 %v1431, %v1527
  %v1594 = vmax.f32 %v1429, %v1525
  %v1595 = vmax.f32 %v1427, %v1523
  %v1596 = vmax.f32 %v1425, %v1521
  %v1597 = vmax.f32 %v1423, %v1519
  %v1598 = vmax.f32 %v1453, %v1549
  %v1599 = vmax.f32 %v1452, %v1548
  %v1600 = vmax.f32 %v1450, %v1546
  %v1601 = vmax.f32 %v1448, %v1544
  %v1602 = vmax.f32 %v1446, %v1542
  %v1603 = vmax.f32 %v1444, %v1540
  %v1604 = vmax.f32 %v1442, %v1538
  %v1605 = vmax.f32 %v1440, %v1536
  %v1606 = vmax.f32 %v1438, %v1534
  %v1607 = vmax.f32 %v1436, %v1532
  %v1608 = vmax.f32 %v1434, %v1530
  %v1609 = vmax.f32 %v1432, %v1528
  %v1610 = vmax.f32 %v1430, %v1526
  %v1611 = vmax.f32 %v1428, %v1524
  %v1612 = vmax.f32 %v1426, %v1522
  %v1613 = vmax.f32 %v1424, %v1520
  %v1614 = vmax.f32 %v1454, %v1550
  %v1615 = vmax.f32 %v1551, %v1583
  %v1616 = vmax.f32 %v1552, %v1584
  %v1617 = vmax.f32 %v1553, %v1585
  %v1618 = vmax.f32 %v1554, %v1586
  %v1619 = vmax.f32 %v1555, %v1587
  %v1620 = vmax.f32 %v1556, %v1588
  %v1621 = vmax.f32 %v1557, %v1589
  %v1622 = vmax.f32 %v1558, %v1590
  %v1623 = vmax.f32 %v1559, %v1591
  %v1624 = vmax.f32 %v1560, %v1592
  %v1625 = vmax.f32 %v1561, %v1593
  %v1626 = vmax.f32 %v1562, %v1594
  %v1627 = vmax.f32 %v1563, %v1595
  %v1628 = vmax.f32 %v1564, %v1596
  %v1629 = vmax.f32 %v1565, %v1597
  %v1630 = vmax.f32 %v1566, %v1598
  %v1631 = vmax.f32 %v1567, %v1599
  %v1632 = vmax.f32 %v1568, %v1600
  %v1633 = vmax.f32 %v1569, %v1601
  %v1634 = vmax.f32 %v1570, %v1602
  %v1635 = vmax.f32 %v1571, %v1603
  %v1636 = vmax.f32 %v1572, %v1604
  %v1637 = vmax.f32 %v1573, %v1605
  %v1638 = vmax.f32 %v1574, %v1606
  %v1639 = vmax.f32 %v1575, %v1607
  %v1640 = vmax.f32 %v1576, %v1608
  %v1641 = vmax.f32 %v1577, %v1609
  %v1642 = vmax.f32 %v1578, %v1610
  %v1643 = vmax.f32 %v1579, %v1611
  %v1644 = vmax.f32 %v1580, %v1612
  %v1645 = vmax.f32 %v1581, %v1613
  %v1646 = vmax.f32 %v1582, %v1614
  %1647 = vrot.lane.b32.xlu0 %v1615, 4
  %v1648 = vpop.permute.xlu0 %1647
  %1649 = vrot.lane.b32.xlu0 %v1631, 4
  %v1650 = vpop.permute.xlu0 %1649
  %1651 = vrot.lane.b32.xlu0 %v1616, 4
  %v1652 = vpop.permute.xlu0 %1651
  %1653 = vrot.lane.b32.xlu0 %v1632, 4
  %v1654 = vpop.permute.xlu0 %1653
  %1655 = vrot.lane.b32.xlu0 %v1617, 4
  %v1656 = vpop.permute.xlu0 %1655
  %1657 = vrot.lane.b32.xlu0 %v1633, 4
  %v1658 = vpop.permute.xlu0 %1657
  %1659 = vrot.lane.b32.xlu0 %v1618, 4
  %v1660 = vpop.permute.xlu0 %1659
  %1661 = vrot.lane.b32.xlu0 %v1634, 4
  %v1662 = vpop.permute.xlu0 %1661
  %1663 = vrot.lane.b32.xlu0 %v1619, 4
  %v1664 = vpop.permute.xlu0 %1663
  %1665 = vrot.lane.b32.xlu0 %v1635, 4
  %v1666 = vpop.permute.xlu0 %1665
  %1667 = vrot.lane.b32.xlu0 %v1620, 4
  %v1668 = vpop.permute.xlu0 %1667
  %1669 = vrot.lane.b32.xlu0 %v1636, 4
  %v1670 = vpop.permute.xlu0 %1669
  %1671 = vrot.lane.b32.xlu0 %v1621, 4
  %v1672 = vpop.permute.xlu0 %1671
  %1673 = vrot.lane.b32.xlu0 %v1637, 4
  %v1674 = vpop.permute.xlu0 %1673
  %1675 = vrot.lane.b32.xlu0 %v1622, 4
  %v1676 = vpop.permute.xlu0 %1675
  %1677 = vrot.lane.b32.xlu0 %v1638, 4
  %v1678 = vpop.permute.xlu0 %1677
  %1679 = vrot.lane.b32.xlu0 %v1623, 4
  %v1680 = vpop.permute.xlu0 %1679
  %1681 = vrot.lane.b32.xlu0 %v1639, 4
  %v1682 = vpop.permute.xlu0 %1681
  %1683 = vrot.lane.b32.xlu0 %v1624, 4
  %v1684 = vpop.permute.xlu0 %1683
  %1685 = vrot.lane.b32.xlu0 %v1640, 4
  %v1686 = vpop.permute.xlu0 %1685
  %1687 = vrot.lane.b32.xlu0 %v1625, 4
  %v1688 = vpop.permute.xlu0 %1687
  %1689 = vrot.lane.b32.xlu0 %v1641, 4
  %v1690 = vpop.permute.xlu0 %1689
  %1691 = vrot.lane.b32.xlu0 %v1626, 4
  %v1692 = vpop.permute.xlu0 %1691
  %1693 = vrot.lane.b32.xlu0 %v1642, 4
  %v1694 = vpop.permute.xlu0 %1693
  %1695 = vrot.lane.b32.xlu0 %v1627, 4
  %v1696 = vpop.permute.xlu0 %1695
  %1697 = vrot.lane.b32.xlu0 %v1643, 4
  %v1698 = vpop.permute.xlu0 %1697
  %1699 = vrot.lane.b32.xlu0 %v1628, 4
  %v1700 = vpop.permute.xlu0 %1699
  %1701 = vrot.lane.b32.xlu0 %v1644, 4
  %v1702 = vpop.permute.xlu0 %1701
  %1703 = vrot.lane.b32.xlu0 %v1629, 4
  %v1704 = vpop.permute.xlu0 %1703
  %1705 = vrot.lane.b32.xlu0 %v1645, 4
  %v1706 = vpop.permute.xlu0 %1705
  %1707 = vrot.lane.b32.xlu0 %v1630, 4
  %v1708 = vpop.permute.xlu0 %1707
  %1709 = vrot.lane.b32.xlu0 %v1646, 4
  %v1710 = vpop.permute.xlu0 %1709
  %vm1711 = vcmp.lt.s32.totalorder %v48, 4
  %v1712 = vsel %vm1711, %v1704, %v1708
  %v1713 = vsel %vm1711, %v1706, %v1710
  %v1714 = vsel %vm1711, %v1700, %v1704
  %v1715 = vsel %vm1711, %v1702, %v1706
  %v1716 = vsel %vm1711, %v1696, %v1700
  %v1717 = vsel %vm1711, %v1698, %v1702
  %v1718 = vsel %vm1711, %v1692, %v1696
  %v1719 = vsel %vm1711, %v1694, %v1698
  %v1720 = vsel %vm1711, %v1688, %v1692
  %v1721 = vsel %vm1711, %v1690, %v1694
  %v1722 = vsel %vm1711, %v1684, %v1688
  %v1723 = vsel %vm1711, %v1686, %v1690
  %v1724 = vsel %vm1711, %v1680, %v1684
  %v1725 = vsel %vm1711, %v1682, %v1686
  %v1726 = vsel %vm1711, %v1676, %v1680
  %v1727 = vsel %vm1711, %v1678, %v1682
  %v1728 = vsel %vm1711, %v1672, %v1676
  %v1729 = vsel %vm1711, %v1674, %v1678
  %v1730 = vsel %vm1711, %v1668, %v1672
  %v1731 = vsel %vm1711, %v1670, %v1674
  %v1732 = vsel %vm1711, %v1664, %v1668
  %v1733 = vsel %vm1711, %v1666, %v1670
  %v1734 = vsel %vm1711, %v1660, %v1664
  %v1735 = vsel %vm1711, %v1662, %v1666
  %v1736 = vsel %vm1711, %v1656, %v1660
  %v1737 = vsel %vm1711, %v1658, %v1662
  %v1738 = vsel %vm1711, %v1652, %v1656
  %v1739 = vsel %vm1711, %v1654, %v1658
  %v1740 = vsel %vm1711, %v1648, %v1652
  %v1741 = vsel %vm1711, %v1650, %v1654
  %v1742 = vsel %vm1711, %v1708, %v1648
  %v1743 = vsel %vm1711, %v1710, %v1650
  %v1744 = vsel %vm80, 1, 0
  %v1745 = vsel %vm81, 1, 0
  %v1746 = vsel %vm82, 1, 0
  %v1747 = vsel %vm83, 1, 0
  %v1748 = vsel %vm84, 1, 0
  %v1749 = vsel %vm85, 1, 0
  %v1750 = vsel %vm86, 1, 0
  %v1751 = vsel %vm87, 1, 0
  %v1752 = vsel %vm88, 1, 0
  %v1753 = vsel %vm89, 1, 0
  %v1754 = vsel %vm90, 1, 0
  %v1755 = vsel %vm91, 1, 0
  %v1756 = vsel %vm92, 1, 0
  %v1757 = vsel %vm93, 1, 0
  %v1758 = vsel %vm94, 1, 0
  %v1759 = vsel %vm95, 1, 0
  %vm1760 = vcmp.eq.s32.totalorder %v1744, 1
  %vm1761 = vcmp.eq.s32.totalorder %v1745, 1
  %vm1762 = vcmp.eq.s32.totalorder %v1746, 1
  %vm1763 = vcmp.eq.s32.totalorder %v1747, 1
  %vm1764 = vcmp.eq.s32.totalorder %v1748, 1
  %vm1765 = vcmp.eq.s32.totalorder %v1749, 1
  %vm1766 = vcmp.eq.s32.totalorder %v1750, 1
  %vm1767 = vcmp.eq.s32.totalorder %v1751, 1
  %vm1768 = vcmp.eq.s32.totalorder %v1752, 1
  %vm1769 = vcmp.eq.s32.totalorder %v1753, 1
  %vm1770 = vcmp.eq.s32.totalorder %v1754, 1
  %vm1771 = vcmp.eq.s32.totalorder %v1755, 1
  %vm1772 = vcmp.eq.s32.totalorder %v1756, 1
  %vm1773 = vcmp.eq.s32.totalorder %v1757, 1
  %vm1774 = vcmp.eq.s32.totalorder %v1758, 1
  %vm1775 = vcmp.eq.s32.totalorder %v1759, 1
  %v1776 = vsel %vm1760, 0.0, %v1742
  %v1777 = vsel %vm1761, 0.0, %v1740
  %v1778 = vsel %vm1762, 0.0, %v1738
  %v1779 = vsel %vm1763, 0.0, %v1736
  %v1780 = vsel %vm1764, 0.0, %v1734
  %v1781 = vsel %vm1765, 0.0, %v1732
  %v1782 = vsel %vm1766, 0.0, %v1730
  %v1783 = vsel %vm1767, 0.0, %v1728
  %v1784 = vsel %vm1768, 0.0, %v1726
  %v1785 = vsel %vm1769, 0.0, %v1724
  %v1786 = vsel %vm1770, 0.0, %v1722
  %v1787 = vsel %vm1771, 0.0, %v1720
  %v1788 = vsel %vm1772, 0.0, %v1718
  %v1789 = vsel %vm1773, 0.0, %v1716
  %v1790 = vsel %vm1774, 0.0, %v1714
  %v1791 = vsel %vm1775, 0.0, %v1712
  %v1792 = vsel %vm1760, 0.0, %v1743
  %v1793 = vsel %vm1761, 0.0, %v1741
  %v1794 = vsel %vm1762, 0.0, %v1739
  %v1795 = vsel %vm1763, 0.0, %v1737
  %v1796 = vsel %vm1764, 0.0, %v1735
  %v1797 = vsel %vm1765, 0.0, %v1733
  %v1798 = vsel %vm1766, 0.0, %v1731
  %v1799 = vsel %vm1767, 0.0, %v1729
  %v1800 = vsel %vm1768, 0.0, %v1727
  %v1801 = vsel %vm1769, 0.0, %v1725
  %v1802 = vsel %vm1770, 0.0, %v1723
  %v1803 = vsel %vm1771, 0.0, %v1721
  %v1804 = vsel %vm1772, 0.0, %v1719
  %v1805 = vsel %vm1773, 0.0, %v1717
  %v1806 = vsel %vm1774, 0.0, %v1715
  %v1807 = vsel %vm1775, 0.0, %v1713
  %vm1808 = vcmp.eq.s32.totalorder %v64, 796
  %vm1809 = vcmp.eq.s32.totalorder %v65, 796
  %vm1810 = vcmp.eq.s32.totalorder %v66, 796
  %vm1811 = vcmp.eq.s32.totalorder %v67, 796
  %vm1812 = vcmp.eq.s32.totalorder %v68, 796
  %vm1813 = vcmp.eq.s32.totalorder %v69, 796
  %vm1814 = vcmp.eq.s32.totalorder %v70, 796
  %vm1815 = vcmp.eq.s32.totalorder %v71, 796
  %vm1816 = vcmp.eq.s32.totalorder %v72, 796
  %vm1817 = vcmp.eq.s32.totalorder %v73, 796
  %vm1818 = vcmp.eq.s32.totalorder %v74, 796
  %vm1819 = vcmp.eq.s32.totalorder %v75, 796
  %vm1820 = vcmp.eq.s32.totalorder %v76, 796
  %vm1821 = vcmp.eq.s32.totalorder %v77, 796
  %vm1822 = vcmp.eq.s32.totalorder %v78, 796
  %vm1823 = vcmp.eq.s32.totalorder %v79, 796
  %1824 = vrot.lane.b32.xlu0 %v1615, 124
  %v1825 = vpop.permute.xlu0 %1824
  %1826 = vrot.lane.b32.xlu0 %v1631, 124
  %v1827 = vpop.permute.xlu0 %1826
  %1828 = vrot.lane.b32.xlu0 %v1616, 124
  %v1829 = vpop.permute.xlu0 %1828
  %1830 = vrot.lane.b32.xlu0 %v1632, 124
  %v1831 = vpop.permute.xlu0 %1830
  %1832 = vrot.lane.b32.xlu0 %v1617, 124
  %v1833 = vpop.permute.xlu0 %1832
  %1834 = vrot.lane.b32.xlu0 %v1633, 124
  %v1835 = vpop.permute.xlu0 %1834
  %1836 = vrot.lane.b32.xlu0 %v1618, 124
  %v1837 = vpop.permute.xlu0 %1836
  %1838 = vrot.lane.b32.xlu0 %v1634, 124
  %v1839 = vpop.permute.xlu0 %1838
  %1840 = vrot.lane.b32.xlu0 %v1619, 124
  %v1841 = vpop.permute.xlu0 %1840
  %1842 = vrot.lane.b32.xlu0 %v1635, 124
  %v1843 = vpop.permute.xlu0 %1842
  %1844 = vrot.lane.b32.xlu0 %v1620, 124
  %v1845 = vpop.permute.xlu0 %1844
  %1846 = vrot.lane.b32.xlu0 %v1636, 124
  %v1847 = vpop.permute.xlu0 %1846
  %1848 = vrot.lane.b32.xlu0 %v1621, 124
  %v1849 = vpop.permute.xlu0 %1848
  %1850 = vrot.lane.b32.xlu0 %v1637, 124
  %v1851 = vpop.permute.xlu0 %1850
  %1852 = vrot.lane.b32.xlu0 %v1622, 124
  %v1853 = vpop.permute.xlu0 %1852
  %1854 = vrot.lane.b32.xlu0 %v1638, 124
  %v1855 = vpop.permute.xlu0 %1854
  %1856 = vrot.lane.b32.xlu0 %v1623, 124
  %v1857 = vpop.permute.xlu0 %1856
  %1858 = vrot.lane.b32.xlu0 %v1639, 124
  %v1859 = vpop.permute.xlu0 %1858
  %1860 = vrot.lane.b32.xlu0 %v1624, 124
  %v1861 = vpop.permute.xlu0 %1860
  %1862 = vrot.lane.b32.xlu0 %v1640, 124
  %v1863 = vpop.permute.xlu0 %1862
  %1864 = vrot.lane.b32.xlu0 %v1625, 124
  %v1865 = vpop.permute.xlu0 %1864
  %1866 = vrot.lane.b32.xlu0 %v1641, 124
  %v1867 = vpop.permute.xlu0 %1866
  %1868 = vrot.lane.b32.xlu0 %v1626, 124
  %v1869 = vpop.permute.xlu0 %1868
  %1870 = vrot.lane.b32.xlu0 %v1642, 124
  %v1871 = vpop.permute.xlu0 %1870
  %1872 = vrot.lane.b32.xlu0 %v1627, 124
  %v1873 = vpop.permute.xlu0 %1872
  %1874 = vrot.lane.b32.xlu0 %v1643, 124
  %v1875 = vpop.permute.xlu0 %1874
  %1876 = vrot.lane.b32.xlu0 %v1628, 124
  %v1877 = vpop.permute.xlu0 %1876
  %1878 = vrot.lane.b32.xlu0 %v1644, 124
  %v1879 = vpop.permute.xlu0 %1878
  %1880 = vrot.lane.b32.xlu0 %v1629, 124
  %v1881 = vpop.permute.xlu0 %1880
  %1882 = vrot.lane.b32.xlu0 %v1645, 124
  %v1883 = vpop.permute.xlu0 %1882
  %1884 = vrot.lane.b32.xlu0 %v1630, 124
  %v1885 = vpop.permute.xlu0 %1884
  %1886 = vrot.lane.b32.xlu0 %v1646, 124
  %v1887 = vpop.permute.xlu0 %1886
  %v1888 = vsel %vm460, %v1881, %v1885
  %v1889 = vsel %vm460, %v1883, %v1887
  %v1890 = vsel %vm460, %v1877, %v1881
  %v1891 = vsel %vm460, %v1879, %v1883
  %v1892 = vsel %vm460, %v1873, %v1877
  %v1893 = vsel %vm460, %v1875, %v1879
  %v1894 = vsel %vm460, %v1869, %v1873
  %v1895 = vsel %vm460, %v1871, %v1875
  %v1896 = vsel %vm460, %v1865, %v1869
  %v1897 = vsel %vm460, %v1867, %v1871
  %v1898 = vsel %vm460, %v1861, %v1865
  %v1899 = vsel %vm460, %v1863, %v1867
  %v1900 = vsel %vm460, %v1857, %v1861
  %v1901 = vsel %vm460, %v1859, %v1863
  %v1902 = vsel %vm460, %v1853, %v1857
  %v1903 = vsel %vm460, %v1855, %v1859
  %v1904 = vsel %vm460, %v1849, %v1853
  %v1905 = vsel %vm460, %v1851, %v1855
  %v1906 = vsel %vm460, %v1845, %v1849
  %v1907 = vsel %vm460, %v1847, %v1851
  %v1908 = vsel %vm460, %v1841, %v1845
  %v1909 = vsel %vm460, %v1843, %v1847
  %v1910 = vsel %vm460, %v1837, %v1841
  %v1911 = vsel %vm460, %v1839, %v1843
  %v1912 = vsel %vm460, %v1833, %v1837
  %v1913 = vsel %vm460, %v1835, %v1839
  %v1914 = vsel %vm460, %v1829, %v1833
  %v1915 = vsel %vm460, %v1831, %v1835
  %v1916 = vsel %vm460, %v1825, %v1829
  %v1917 = vsel %vm460, %v1827, %v1831
  %v1918 = vsel %vm460, %v1885, %v1825
  %v1919 = vsel %vm460, %v1887, %v1827
  %v1920 = vsel %vm1808, 1, 0
  %v1921 = vsel %vm1809, 1, 0
  %v1922 = vsel %vm1810, 1, 0
  %v1923 = vsel %vm1811, 1, 0
  %v1924 = vsel %vm1812, 1, 0
  %v1925 = vsel %vm1813, 1, 0
  %v1926 = vsel %vm1814, 1, 0
  %v1927 = vsel %vm1815, 1, 0
  %v1928 = vsel %vm1816, 1, 0
  %v1929 = vsel %vm1817, 1, 0
  %v1930 = vsel %vm1818, 1, 0
  %v1931 = vsel %vm1819, 1, 0
  %v1932 = vsel %vm1820, 1, 0
  %v1933 = vsel %vm1821, 1, 0
  %v1934 = vsel %vm1822, 1, 0
  %v1935 = vsel %vm1823, 1, 0
  %vm1936 = vcmp.eq.s32.totalorder %v1920, 1
  %vm1937 = vcmp.eq.s32.totalorder %v1921, 1
  %vm1938 = vcmp.eq.s32.totalorder %v1922, 1
  %vm1939 = vcmp.eq.s32.totalorder %v1923, 1
  %vm1940 = vcmp.eq.s32.totalorder %v1924, 1
  %vm1941 = vcmp.eq.s32.totalorder %v1925, 1
  %vm1942 = vcmp.eq.s32.totalorder %v1926, 1
  %vm1943 = vcmp.eq.s32.totalorder %v1927, 1
  %vm1944 = vcmp.eq.s32.totalorder %v1928, 1
  %vm1945 = vcmp.eq.s32.totalorder %v1929, 1
  %vm1946 = vcmp.eq.s32.totalorder %v1930, 1
  %vm1947 = vcmp.eq.s32.totalorder %v1931, 1
  %vm1948 = vcmp.eq.s32.totalorder %v1932, 1
  %vm1949 = vcmp.eq.s32.totalorder %v1933, 1
  %vm1950 = vcmp.eq.s32.totalorder %v1934, 1
  %vm1951 = vcmp.eq.s32.totalorder %v1935, 1
  %v1952 = vsel %vm1936, 0.0, %v1916
  %v1953 = vsel %vm1937, 0.0, %v1914
  %v1954 = vsel %vm1938, 0.0, %v1912
  %v1955 = vsel %vm1939, 0.0, %v1910
  %v1956 = vsel %vm1940, 0.0, %v1908
  %v1957 = vsel %vm1941, 0.0, %v1906
  %v1958 = vsel %vm1942, 0.0, %v1904
  %v1959 = vsel %vm1943, 0.0, %v1902
  %v1960 = vsel %vm1944, 0.0, %v1900
  %v1961 = vsel %vm1945, 0.0, %v1898
  %v1962 = vsel %vm1946, 0.0, %v1896
  %v1963 = vsel %vm1947, 0.0, %v1894
  %v1964 = vsel %vm1948, 0.0, %v1892
  %v1965 = vsel %vm1949, 0.0, %v1890
  %v1966 = vsel %vm1950, 0.0, %v1888
  %v1967 = vsel %vm1951, 0.0, %v1918
  %v1968 = vsel %vm1936, 0.0, %v1917
  %v1969 = vsel %vm1937, 0.0, %v1915
  %v1970 = vsel %vm1938, 0.0, %v1913
  %v1971 = vsel %vm1939, 0.0, %v1911
  %v1972 = vsel %vm1940, 0.0, %v1909
  %v1973 = vsel %vm1941, 0.0, %v1907
  %v1974 = vsel %vm1942, 0.0, %v1905
  %v1975 = vsel %vm1943, 0.0, %v1903
  %v1976 = vsel %vm1944, 0.0, %v1901
  %v1977 = vsel %vm1945, 0.0, %v1899
  %v1978 = vsel %vm1946, 0.0, %v1897
  %v1979 = vsel %vm1947, 0.0, %v1895
  %v1980 = vsel %vm1948, 0.0, %v1893
  %v1981 = vsel %vm1949, 0.0, %v1891
  %v1982 = vsel %vm1950, 0.0, %v1889
  %v1983 = vsel %vm1951, 0.0, %v1919
  %v1984 = vpack.c.bf16 %v1792, %v1776
  %v1985 = vpack.c.bf16 %v1793, %v1777
  %v1986 = vpack.c.bf16 %v1794, %v1778
  %v1987 = vpack.c.bf16 %v1795, %v1779
  %v1988 = vpack.c.bf16 %v1796, %v1780
  %v1989 = vpack.c.bf16 %v1797, %v1781
  %v1990 = vpack.c.bf16 %v1798, %v1782
  %v1991 = vpack.c.bf16 %v1799, %v1783
  %v1992 = vpack.c.bf16 %v1800, %v1784
  %v1993 = vpack.c.bf16 %v1801, %v1785
  %v1994 = vpack.c.bf16 %v1802, %v1786
  %v1995 = vpack.c.bf16 %v1803, %v1787
  %v1996 = vpack.c.bf16 %v1804, %v1788
  %v1997 = vpack.c.bf16 %v1805, %v1789
  %v1998 = vpack.c.bf16 %v1806, %v1790
  %v1999 = vpack.c.bf16 %v1807, %v1791
  %v2000 = vpack.c.bf16 %v1631, %v1615
  %v2001 = vpack.c.bf16 %v1632, %v1616
  %v2002 = vpack.c.bf16 %v1633, %v1617
  %v2003 = vpack.c.bf16 %v1634, %v1618
  %v2004 = vpack.c.bf16 %v1635, %v1619
  %v2005 = vpack.c.bf16 %v1636, %v1620
  %v2006 = vpack.c.bf16 %v1637, %v1621
  %v2007 = vpack.c.bf16 %v1638, %v1622
  %v2008 = vpack.c.bf16 %v1639, %v1623
  %v2009 = vpack.c.bf16 %v1640, %v1624
  %v2010 = vpack.c.bf16 %v1641, %v1625
  %v2011 = vpack.c.bf16 %v1642, %v1626
  %v2012 = vpack.c.bf16 %v1643, %v1627
  %v2013 = vpack.c.bf16 %v1644, %v1628
  %v2014 = vpack.c.bf16 %v1645, %v1629
  %v2015 = vpack.c.bf16 %v1646, %v1630
  %v2016 = vpack.c.bf16 %v1968, %v1952
  %v2017 = vpack.c.bf16 %v1969, %v1953
  %v2018 = vpack.c.bf16 %v1970, %v1954
  %v2019 = vpack.c.bf16 %v1971, %v1955
  %v2020 = vpack.c.bf16 %v1972, %v1956
  %v2021 = vpack.c.bf16 %v1973, %v1957
  %v2022 = vpack.c.bf16 %v1974, %v1958
  %v2023 = vpack.c.bf16 %v1975, %v1959
  %v2024 = vpack.c.bf16 %v1976, %v1960
  %v2025 = vpack.c.bf16 %v1977, %v1961
  %v2026 = vpack.c.bf16 %v1978, %v1962
  %v2027 = vpack.c.bf16 %v1979, %v1963
  %v2028 = vpack.c.bf16 %v1980, %v1964
  %v2029 = vpack.c.bf16 %v1981, %v1965
  %v2030 = vpack.c.bf16 %v1982, %v1966
  %v2031 = vpack.c.bf16 %v1983, %v1967
  %v2032 = vld [vmem:[%s3] sm:$0xf]
  %v2033 = vld [vmem:[%s3 + $0x4] sm:$0xf]
  %v2034 = vld [vmem:[%s4] sm:$0xff]
  %v2035 = vld [vmem:[%s4 + $0x8] sm:$0xff]
  %2037 = vset.pattern.permute.xlu0 0
  %2038 = vperm.xlu0 %2037, %v2034
  %v2039 = vpop.permute.xlu0 %2038
  %2042 = vset.pattern.permute.xlu0 0
  %2043 = vperm.xlu0 %2042, %v2035
  %v2044 = vpop.permute.xlu0 %2043
  %v2048 = vunpack.c.l.b16 %v2032
  %v2049 = vunpack.c.l.b16 %v2033
  %v2050 = vpack.c.b16 %v2049, %v2048
  %vm2051 = vcmask 392192
  %v2053 = vsel %vm2051, %v2050, 0
  %2055 = vmatprep.subr.bf16.mxu0 %v1985
  %2056 = vmatpush1.bf16.msra.mxu0 %v1984
  %2057 = vmatprep.subr.bf16.mxu0 %v2001
  %2058 = vmatpush1.bf16.msra.mxu0 %v2000
  %2059 = vmatprep.subr.bf16.mxu0 %v2017
  %2060 = vmatpush1.bf16.msra.mxu0 %v2016
  %2061 = vmatprep.subr.bf16.mxu0 0
  %2062 = vmatpush1.bf16.msra.mxu0 0
  %2063 = vmatprep.subr.bf16.mxu0 0
  %2064 = vmatpush1.bf16.msra.mxu0 0
  %2065 = vmatprep.subr.bf16.mxu0 0
  %2066 = vmatpush1.bf16.msra.mxu0 0
  %2067 = vmatprep.subr.bf16.mxu0 0
  %2068 = vmatpush1.bf16.msra.mxu0 0
  %2069 = vmatprep.subr.bf16.mxu0 0
  %2070 = vmatpush1.bf16.msra.mxu0 0
  %2071 = vmatprep.subr.bf16.mxu0 0
  %2072 = vmatpush1.bf16.msra.mxu0 0
  %2073 = vmatprep.subr.bf16.mxu0 0
  %2074 = vmatpush1.bf16.msra.mxu0 0
  %2075 = vmatprep.subr.bf16.mxu0 0
  %2076 = vmatpush1.bf16.msra.mxu0 0
  %2077 = vmatprep.subr.bf16.mxu0 0
  %2078 = vmatpush1.bf16.msra.mxu0 0
  %2079 = vmatprep.subr.bf16.mxu0 0
  %2080 = vmatpush1.bf16.msra.mxu0 0
  %2081 = vmatprep.subr.bf16.mxu0 0
  %2082 = vmatpush1.bf16.msra.mxu0 0
  %2083 = vmatprep.subr.bf16.mxu0 0
  %2084 = vmatpush1.bf16.msra.mxu0 0
  %2085 = vmatprep.subr.bf16.mxu0 0
  %2086 = vmatpush1.bf16.msra.mxu0 0
  %2087 = vmatprep.mubr.bf16.mxu0 0
  %2088 = vmatmul.mubr.bf16.gmra.mrb[0].mxu0 %v2053
  %v2089 = vpop.f32.mrb[0].mxu0
  %v2090 = vadd.f32 %v2039, %v2089
  %v2091 = vpop.f32.mrb[0].mxu0
  %v2092 = vadd.f32 %v2039, %v2091
  %v2093 = vpop.f32.mrb[0].mxu0
  %v2094 = vadd.f32 %v2044, %v2093
  %v2095 = vpop.f32.mrb[0].mxu0
  %v2096 = vadd.f32 %v2044, %v2095
  %2097 = vdwg.mxu0
  %2098 = vmatprep.subr.bf16.mxu0 %v1987
  %2099 = vmatpush1.bf16.msra.mxu0 %v1986
  %2100 = vmatprep.subr.bf16.mxu0 %v2003
  %2101 = vmatpush1.bf16.msra.mxu0 %v2002
  %2102 = vmatprep.subr.bf16.mxu0 %v2019
  %2103 = vmatpush1.bf16.msra.mxu0 %v2018
  %2104 = vmatprep.subr.bf16.mxu0 0
  %2105 = vmatpush1.bf16.msra.mxu0 0
  %2106 = vmatprep.subr.bf16.mxu0 0
  %2107 = vmatpush1.bf16.msra.mxu0 0
  %2108 = vmatprep.subr.bf16.mxu0 0
  %2109 = vmatpush1.bf16.msra.mxu0 0
  %2110 = vmatprep.subr.bf16.mxu0 0
  %2111 = vmatpush1.bf16.msra.mxu0 0
  %2112 = vmatprep.subr.bf16.mxu0 0
  %2113 = vmatpush1.bf16.msra.mxu0 0
  %2114 = vmatprep.subr.bf16.mxu0 0
  %2115 = vmatpush1.bf16.msra.mxu0 0
  %2116 = vmatprep.subr.bf16.mxu0 0
  %2117 = vmatpush1.bf16.msra.mxu0 0
  %2118 = vmatprep.subr.bf16.mxu0 0
  %2119 = vmatpush1.bf16.msra.mxu0 0
  %2120 = vmatprep.subr.bf16.mxu0 0
  %2121 = vmatpush1.bf16.msra.mxu0 0
  %2122 = vmatprep.subr.bf16.mxu0 0
  %2123 = vmatpush1.bf16.msra.mxu0 0
  %2124 = vmatprep.subr.bf16.mxu0 0
  %2125 = vmatpush1.bf16.msra.mxu0 0
  %2126 = vmatprep.subr.bf16.mxu0 0
  %2127 = vmatpush1.bf16.msra.mxu0 0
  %2128 = vmatprep.subr.bf16.mxu0 0
  %2129 = vmatpush1.bf16.msra.mxu0 0
  %2130 = vmatprep.mubr.bf16.mxu0 0
  %2131 = vmatmul.mubr.bf16.gmra.mrb[0].mxu0 %v2053
  %v2132 = vpop.f32.mrb[0].mxu0
  %v2133 = vadd.f32 %v2039, %v2132
  %v2134 = vpop.f32.mrb[0].mxu0
  %v2135 = vadd.f32 %v2039, %v2134
  %v2136 = vpop.f32.mrb[0].mxu0
  %v2137 = vadd.f32 %v2044, %v2136
  %v2138 = vpop.f32.mrb[0].mxu0
  %v2139 = vadd.f32 %v2044, %v2138
  %2140 = vdwg.mxu0
  %2141 = vmatprep.subr.bf16.mxu0 %v1989
  %2142 = vmatpush1.bf16.msra.mxu0 %v1988
  %2143 = vmatprep.subr.bf16.mxu0 %v2005
  %2144 = vmatpush1.bf16.msra.mxu0 %v2004
  %2145 = vmatprep.subr.bf16.mxu0 %v2021
  %2146 = vmatpush1.bf16.msra.mxu0 %v2020
  %2147 = vmatprep.subr.bf16.mxu0 0
  %2148 = vmatpush1.bf16.msra.mxu0 0
  %2149 = vmatprep.subr.bf16.mxu0 0
  %2150 = vmatpush1.bf16.msra.mxu0 0
  %2151 = vmatprep.subr.bf16.mxu0 0
  %2152 = vmatpush1.bf16.msra.mxu0 0
  %2153 = vmatprep.subr.bf16.mxu0 0
  %2154 = vmatpush1.bf16.msra.mxu0 0
  %2155 = vmatprep.subr.bf16.mxu0 0
  %2156 = vmatpush1.bf16.msra.mxu0 0
  %2157 = vmatprep.subr.bf16.mxu0 0
  %2158 = vmatpush1.bf16.msra.mxu0 0
  %2159 = vmatprep.subr.bf16.mxu0 0
  %2160 = vmatpush1.bf16.msra.mxu0 0
  %2161 = vmatprep.subr.bf16.mxu0 0
  %2162 = vmatpush1.bf16.msra.mxu0 0
  %2163 = vmatprep.subr.bf16.mxu0 0
  %2164 = vmatpush1.bf16.msra.mxu0 0
  %2165 = vmatprep.subr.bf16.mxu0 0
  %2166 = vmatpush1.bf16.msra.mxu0 0
  %2167 = vmatprep.subr.bf16.mxu0 0
  %2168 = vmatpush1.bf16.msra.mxu0 0
  %2169 = vmatprep.subr.bf16.mxu0 0
  %2170 = vmatpush1.bf16.msra.mxu0 0
  %2171 = vmatprep.subr.bf16.mxu0 0
  %2172 = vmatpush1.bf16.msra.mxu0 0
  %2173 = vmatprep.mubr.bf16.mxu0 0
  %2174 = vmatmul.mubr.bf16.gmra.mrb[0].mxu0 %v2053
  %v2175 = vpop.f32.mrb[0].mxu0
  %v2176 = vadd.f32 %v2039, %v2175
  %v2177 = vpop.f32.mrb[0].mxu0
  %v2178 = vadd.f32 %v2039, %v2177
  %v2179 = vpop.f32.mrb[0].mxu0
  %v2180 = vadd.f32 %v2044, %v2179
  %v2181 = vpop.f32.mrb[0].mxu0
  %v2182 = vadd.f32 %v2044, %v2181
  %2183 = vdwg.mxu0
  %2184 = vmatprep.subr.bf16.mxu0 %v1991
  %2185 = vmatpush1.bf16.msra.mxu0 %v1990
  %2186 = vmatprep.subr.bf16.mxu0 %v2007
  %2187 = vmatpush1.bf16.msra.mxu0 %v2006
  %2188 = vmatprep.subr.bf16.mxu0 %v2023
  %2189 = vmatpush1.bf16.msra.mxu0 %v2022
  %2190 = vmatprep.subr.bf16.mxu0 0
  %2191 = vmatpush1.bf16.msra.mxu0 0
  %2192 = vmatprep.subr.bf16.mxu0 0
  %2193 = vmatpush1.bf16.msra.mxu0 0
  %2194 = vmatprep.subr.bf16.mxu0 0
  %2195 = vmatpush1.bf16.msra.mxu0 0
  %2196 = vmatprep.subr.bf16.mxu0 0
  %2197 = vmatpush1.bf16.msra.mxu0 0
  %2198 = vmatprep.subr.bf16.mxu0 0
  %2199 = vmatpush1.bf16.msra.mxu0 0
  %2200 = vmatprep.subr.bf16.mxu0 0
  %2201 = vmatpush1.bf16.msra.mxu0 0
  %2202 = vmatprep.subr.bf16.mxu0 0
  %2203 = vmatpush1.bf16.msra.mxu0 0
  %2204 = vmatprep.subr.bf16.mxu0 0
  %2205 = vmatpush1.bf16.msra.mxu0 0
  %2206 = vmatprep.subr.bf16.mxu0 0
  %2207 = vmatpush1.bf16.msra.mxu0 0
  %2208 = vmatprep.subr.bf16.mxu0 0
  %2209 = vmatpush1.bf16.msra.mxu0 0
  %2210 = vmatprep.subr.bf16.mxu0 0
  %2211 = vmatpush1.bf16.msra.mxu0 0
  %2212 = vmatprep.subr.bf16.mxu0 0
  %2213 = vmatpush1.bf16.msra.mxu0 0
  %2214 = vmatprep.subr.bf16.mxu0 0
  %2215 = vmatpush1.bf16.msra.mxu0 0
  %2216 = vmatprep.mubr.bf16.mxu0 0
  %2217 = vmatmul.mubr.bf16.gmra.mrb[0].mxu0 %v2053
  %v2218 = vpop.f32.mrb[0].mxu0
  %v2219 = vadd.f32 %v2039, %v2218
  %v2220 = vpop.f32.mrb[0].mxu0
  %v2221 = vadd.f32 %v2039, %v2220
  %v2222 = vpop.f32.mrb[0].mxu0
  %v2223 = vadd.f32 %v2044, %v2222
  %v2224 = vpop.f32.mrb[0].mxu0
  %v2225 = vadd.f32 %v2044, %v2224
  %2226 = vdwg.mxu0
  %2227 = vmatprep.subr.bf16.mxu0 %v1993
  %2228 = vmatpush1.bf16.msra.mxu0 %v1992
  %2229 = vmatprep.subr.bf16.mxu0 %v2009
  %2230 = vmatpush1.bf16.msra.mxu0 %v2008
  %2231 = vmatprep.subr.bf16.mxu0 %v2025
  %2232 = vmatpush1.bf16.msra.mxu0 %v2024
  %2233 = vmatprep.subr.bf16.mxu0 0
  %2234 = vmatpush1.bf16.msra.mxu0 0
  %2235 = vmatprep.subr.bf16.mxu0 0
  %2236 = vmatpush1.bf16.msra.mxu0 0
  %2237 = vmatprep.subr.bf16.mxu0 0
  %2238 = vmatpush1.bf16.msra.mxu0 0
  %2239 = vmatprep.subr.bf16.mxu0 0
  %2240 = vmatpush1.bf16.msra.mxu0 0
  %2241 = vmatprep.subr.bf16.mxu0 0
  %2242 = vmatpush1.bf16.msra.mxu0 0
  %2243 = vmatprep.subr.bf16.mxu0 0
  %2244 = vmatpush1.bf16.msra.mxu0 0
  %2245 = vmatprep.subr.bf16.mxu0 0
  %2246 = vmatpush1.bf16.msra.mxu0 0
  %2247 = vmatprep.subr.bf16.mxu0 0
  %2248 = vmatpush1.bf16.msra.mxu0 0
  %2249 = vmatprep.subr.bf16.mxu0 0
  %2250 = vmatpush1.bf16.msra.mxu0 0
  %2251 = vmatprep.subr.bf16.mxu0 0
  %2252 = vmatpush1.bf16.msra.mxu0 0
  %2253 = vmatprep.subr.bf16.mxu0 0
  %2254 = vmatpush1.bf16.msra.mxu0 0
  %2255 = vmatprep.subr.bf16.mxu0 0
  %2256 = vmatpush1.bf16.msra.mxu0 0
  %2257 = vmatprep.subr.bf16.mxu0 0
  %2258 = vmatpush1.bf16.msra.mxu0 0
  %2259 = vmatprep.mubr.bf16.mxu0 0
  %2260 = vmatmul.mubr.bf16.gmra.mrb[0].mxu0 %v2053
  %v2261 = vpop.f32.mrb[0].mxu0
  %v2262 = vadd.f32 %v2039, %v2261
  %v2263 = vpop.f32.mrb[0].mxu0
  %v2264 = vadd.f32 %v2039, %v2263
  %v2265 = vpop.f32.mrb[0].mxu0
  %v2266 = vadd.f32 %v2044, %v2265
  %v2267 = vpop.f32.mrb[0].mxu0
  %v2268 = vadd.f32 %v2044, %v2267
  %2269 = vdwg.mxu0
  %2270 = vmatprep.subr.bf16.mxu0 %v1995
  %2271 = vmatpush1.bf16.msra.mxu0 %v1994
  %2272 = vmatprep.subr.bf16.mxu0 %v2011
  %2273 = vmatpush1.bf16.msra.mxu0 %v2010
  %2274 = vmatprep.subr.bf16.mxu0 %v2027
  %2275 = vmatpush1.bf16.msra.mxu0 %v2026
  %2276 = vmatprep.subr.bf16.mxu0 0
  %2277 = vmatpush1.bf16.msra.mxu0 0
  %2278 = vmatprep.subr.bf16.mxu0 0
  %2279 = vmatpush1.bf16.msra.mxu0 0
  %2280 = vmatprep.subr.bf16.mxu0 0
  %2281 = vmatpush1.bf16.msra.mxu0 0
  %2282 = vmatprep.subr.bf16.mxu0 0
  %2283 = vmatpush1.bf16.msra.mxu0 0
  %2284 = vmatprep.subr.bf16.mxu0 0
  %2285 = vmatpush1.bf16.msra.mxu0 0
  %2286 = vmatprep.subr.bf16.mxu0 0
  %2287 = vmatpush1.bf16.msra.mxu0 0
  %2288 = vmatprep.subr.bf16.mxu0 0
  %2289 = vmatpush1.bf16.msra.mxu0 0
  %2290 = vmatprep.subr.bf16.mxu0 0
  %2291 = vmatpush1.bf16.msra.mxu0 0
  %2292 = vmatprep.subr.bf16.mxu0 0
  %2293 = vmatpush1.bf16.msra.mxu0 0
  %2294 = vmatprep.subr.bf16.mxu0 0
  %2295 = vmatpush1.bf16.msra.mxu0 0
  %2296 = vmatprep.subr.bf16.mxu0 0
  %2297 = vmatpush1.bf16.msra.mxu0 0
  %2298 = vmatprep.subr.bf16.mxu0 0
  %2299 = vmatpush1.bf16.msra.mxu0 0
  %2300 = vmatprep.subr.bf16.mxu0 0
  %2301 = vmatpush1.bf16.msra.mxu0 0
  %2302 = vmatprep.mubr.bf16.mxu0 0
  %2303 = vmatmul.mubr.bf16.gmra.mrb[0].mxu0 %v2053
  %v2304 = vpop.f32.mrb[0].mxu0
  %v2305 = vadd.f32 %v2039, %v2304
  %v2306 = vpop.f32.mrb[0].mxu0
  %v2307 = vadd.f32 %v2039, %v2306
  %v2308 = vpop.f32.mrb[0].mxu0
  %v2309 = vadd.f32 %v2044, %v2308
  %v2310 = vpop.f32.mrb[0].mxu0
  %v2311 = vadd.f32 %v2044, %v2310
  %2312 = vdwg.mxu0
  %2313 = vmatprep.subr.bf16.mxu0 %v1997
  %2314 = vmatpush1.bf16.msra.mxu0 %v1996
  %2315 = vmatprep.subr.bf16.mxu0 %v2013
  %2316 = vmatpush1.bf16.msra.mxu0 %v2012
  %2317 = vmatprep.subr.bf16.mxu0 %v2029
  %2318 = vmatpush1.bf16.msra.mxu0 %v2028
  %2319 = vmatprep.subr.bf16.mxu0 0
  %2320 = vmatpush1.bf16.msra.mxu0 0
  %2321 = vmatprep.subr.bf16.mxu0 0
  %2322 = vmatpush1.bf16.msra.mxu0 0
  %2323 = vmatprep.subr.bf16.mxu0 0
  %2324 = vmatpush1.bf16.msra.mxu0 0
  %2325 = vmatprep.subr.bf16.mxu0 0
  %2326 = vmatpush1.bf16.msra.mxu0 0
  %2327 = vmatprep.subr.bf16.mxu0 0
  %2328 = vmatpush1.bf16.msra.mxu0 0
  %2329 = vmatprep.subr.bf16.mxu0 0
  %2330 = vmatpush1.bf16.msra.mxu0 0
  %2331 = vmatprep.subr.bf16.mxu0 0
  %2332 = vmatpush1.bf16.msra.mxu0 0
  %2333 = vmatprep.subr.bf16.mxu0 0
  %2334 = vmatpush1.bf16.msra.mxu0 0
  %2335 = vmatprep.subr.bf16.mxu0 0
  %2336 = vmatpush1.bf16.msra.mxu0 0
  %2337 = vmatprep.subr.bf16.mxu0 0
  %2338 = vmatpush1.bf16.msra.mxu0 0
  %2339 = vmatprep.subr.bf16.mxu0 0
  %2340 = vmatpush1.bf16.msra.mxu0 0
  %2341 = vmatprep.subr.bf16.mxu0 0
  %2342 = vmatpush1.bf16.msra.mxu0 0
  %2343 = vmatprep.subr.bf16.mxu0 0
  %2344 = vmatpush1.bf16.msra.mxu0 0
  %2345 = vmatprep.mubr.bf16.mxu0 0
  %2346 = vmatmul.mubr.bf16.gmra.mrb[0].mxu0 %v2053
  %v2347 = vpop.f32.mrb[0].mxu0
  %v2348 = vadd.f32 %v2039, %v2347
  %v2349 = vpop.f32.mrb[0].mxu0
  %v2350 = vadd.f32 %v2039, %v2349
  %v2351 = vpop.f32.mrb[0].mxu0
  %v2352 = vadd.f32 %v2044, %v2351
  %v2353 = vpop.f32.mrb[0].mxu0
  %v2354 = vadd.f32 %v2044, %v2353
  %2355 = vdwg.mxu0
  %2356 = vmatprep.subr.bf16.mxu0 %v1999
  %2357 = vmatpush1.bf16.msra.mxu0 %v1998
  %2358 = vmatprep.subr.bf16.mxu0 %v2015
  %2359 = vmatpush1.bf16.msra.mxu0 %v2014
  %2360 = vmatprep.subr.bf16.mxu0 %v2031
  %2361 = vmatpush1.bf16.msra.mxu0 %v2030
  %2362 = vmatprep.subr.bf16.mxu0 0
  %2363 = vmatpush1.bf16.msra.mxu0 0
  %2364 = vmatprep.subr.bf16.mxu0 0
  %2365 = vmatpush1.bf16.msra.mxu0 0
  %2366 = vmatprep.subr.bf16.mxu0 0
  %2367 = vmatpush1.bf16.msra.mxu0 0
  %2368 = vmatprep.subr.bf16.mxu0 0
  %2369 = vmatpush1.bf16.msra.mxu0 0
  %2370 = vmatprep.subr.bf16.mxu0 0
  %2371 = vmatpush1.bf16.msra.mxu0 0
  %2372 = vmatprep.subr.bf16.mxu0 0
  %2373 = vmatpush1.bf16.msra.mxu0 0
  %2374 = vmatprep.subr.bf16.mxu0 0
  %2375 = vmatpush1.bf16.msra.mxu0 0
  %2376 = vmatprep.subr.bf16.mxu0 0
  %2377 = vmatpush1.bf16.msra.mxu0 0
  %2378 = vmatprep.subr.bf16.mxu0 0
  %2379 = vmatpush1.bf16.msra.mxu0 0
  %2380 = vmatprep.subr.bf16.mxu0 0
  %2381 = vmatpush1.bf16.msra.mxu0 0
  %2382 = vmatprep.subr.bf16.mxu0 0
  %2383 = vmatpush1.bf16.msra.mxu0 0
  %2384 = vmatprep.subr.bf16.mxu0 0
  %2385 = vmatpush1.bf16.msra.mxu0 0
  %2386 = vmatprep.subr.bf16.mxu0 0
  %2387 = vmatpush1.bf16.msra.mxu0 0
  %2388 = vmatprep.mubr.bf16.mxu0 0
  %2389 = vmatmul.mubr.bf16.gmra.mrb[0].mxu0 %v2053
  %v2390 = vpop.f32.mrb[0].mxu0
  %v2391 = vadd.f32 %v2039, %v2390
  %v2392 = vpop.f32.mrb[0].mxu0
  %v2393 = vadd.f32 %v2039, %v2392
  %v2394 = vpop.f32.mrb[0].mxu0
  %v2395 = vadd.f32 %v2044, %v2394
  %v2396 = vpop.f32.mrb[0].mxu0
  %v2397 = vadd.f32 %v2044, %v2396
  %2398 = vdwg.mxu0
  %v2399 = vmax.f32 %v2090, 0.0
  %v2400 = vmax.f32 %v2092, 0.0
  %v2401 = vmax.f32 %v2133, 0.0
  %v2402 = vmax.f32 %v2135, 0.0
  %v2403 = vmax.f32 %v2176, 0.0
  %v2404 = vmax.f32 %v2178, 0.0
  %v2405 = vmax.f32 %v2219, 0.0
  %v2406 = vmax.f32 %v2221, 0.0
  %v2407 = vmax.f32 %v2262, 0.0
  %v2408 = vmax.f32 %v2264, 0.0
  %v2409 = vmax.f32 %v2305, 0.0
  %v2410 = vmax.f32 %v2307, 0.0
  %v2411 = vmax.f32 %v2348, 0.0
  %v2412 = vmax.f32 %v2350, 0.0
  %v2413 = vmax.f32 %v2391, 0.0
  %v2414 = vmax.f32 %v2393, 0.0
  %v2415 = vmax.f32 %v2094, 0.0
  %v2416 = vmax.f32 %v2096, 0.0
  %v2417 = vmax.f32 %v2137, 0.0
  %v2418 = vmax.f32 %v2139, 0.0
  %v2419 = vmax.f32 %v2180, 0.0
  %v2420 = vmax.f32 %v2182, 0.0
  %v2421 = vmax.f32 %v2223, 0.0
  %v2422 = vmax.f32 %v2225, 0.0
  %v2423 = vmax.f32 %v2266, 0.0
  %v2424 = vmax.f32 %v2268, 0.0
  %v2425 = vmax.f32 %v2309, 0.0
  %v2426 = vmax.f32 %v2311, 0.0
  %v2427 = vmax.f32 %v2352, 0.0
  %v2428 = vmax.f32 %v2354, 0.0
  %v2429 = vmax.f32 %v2395, 0.0
  %v2430 = vmax.f32 %v2397, 0.0
  %2431 = vrot.lane.b32.xlu0 %v2399, 124
  %v2432 = vpop.permute.xlu0 %2431
  %2433 = vrot.lane.b32.xlu0 %v2415, 124
  %v2434 = vpop.permute.xlu0 %2433
  %2435 = vrot.lane.b32.xlu0 %v2400, 124
  %v2436 = vpop.permute.xlu0 %2435
  %2437 = vrot.lane.b32.xlu0 %v2416, 124
  %v2438 = vpop.permute.xlu0 %2437
  %2439 = vrot.lane.b32.xlu0 %v2401, 124
  %v2440 = vpop.permute.xlu0 %2439
  %2441 = vrot.lane.b32.xlu0 %v2417, 124
  %v2442 = vpop.permute.xlu0 %2441
  %2443 = vrot.lane.b32.xlu0 %v2402, 124
  %v2444 = vpop.permute.xlu0 %2443
  %2445 = vrot.lane.b32.xlu0 %v2418, 124
  %v2446 = vpop.permute.xlu0 %2445
  %2447 = vrot.lane.b32.xlu0 %v2403, 124
  %v2448 = vpop.permute.xlu0 %2447
  %2449 = vrot.lane.b32.xlu0 %v2419, 124
  %v2450 = vpop.permute.xlu0 %2449
  %2451 = vrot.lane.b32.xlu0 %v2404, 124
  %v2452 = vpop.permute.xlu0 %2451
  %2453 = vrot.lane.b32.xlu0 %v2420, 124
  %v2454 = vpop.permute.xlu0 %2453
  %2455 = vrot.lane.b32.xlu0 %v2405, 124
  %v2456 = vpop.permute.xlu0 %2455
  %2457 = vrot.lane.b32.xlu0 %v2421, 124
  %v2458 = vpop.permute.xlu0 %2457
  %2459 = vrot.lane.b32.xlu0 %v2406, 124
  %v2460 = vpop.permute.xlu0 %2459
  %2461 = vrot.lane.b32.xlu0 %v2422, 124
  %v2462 = vpop.permute.xlu0 %2461
  %2463 = vrot.lane.b32.xlu0 %v2407, 124
  %v2464 = vpop.permute.xlu0 %2463
  %2465 = vrot.lane.b32.xlu0 %v2423, 124
  %v2466 = vpop.permute.xlu0 %2465
  %2467 = vrot.lane.b32.xlu0 %v2408, 124
  %v2468 = vpop.permute.xlu0 %2467
  %2469 = vrot.lane.b32.xlu0 %v2424, 124
  %v2470 = vpop.permute.xlu0 %2469
  %2471 = vrot.lane.b32.xlu0 %v2409, 124
  %v2472 = vpop.permute.xlu0 %2471
  %2473 = vrot.lane.b32.xlu0 %v2425, 124
  %v2474 = vpop.permute.xlu0 %2473
  %2475 = vrot.lane.b32.xlu0 %v2410, 124
  %v2476 = vpop.permute.xlu0 %2475
  %2477 = vrot.lane.b32.xlu0 %v2426, 124
  %v2478 = vpop.permute.xlu0 %2477
  %2479 = vrot.lane.b32.xlu0 %v2411, 124
  %v2480 = vpop.permute.xlu0 %2479
  %2481 = vrot.lane.b32.xlu0 %v2427, 124
  %v2482 = vpop.permute.xlu0 %2481
  %2483 = vrot.lane.b32.xlu0 %v2412, 124
  %v2484 = vpop.permute.xlu0 %2483
  %2485 = vrot.lane.b32.xlu0 %v2428, 124
  %v2486 = vpop.permute.xlu0 %2485
  %2487 = vrot.lane.b32.xlu0 %v2413, 124
  %v2488 = vpop.permute.xlu0 %2487
  %2489 = vrot.lane.b32.xlu0 %v2429, 124
  %v2490 = vpop.permute.xlu0 %2489
  %2491 = vrot.lane.b32.xlu0 %v2414, 124
  %v2492 = vpop.permute.xlu0 %2491
  %2493 = vrot.lane.b32.xlu0 %v2430, 124
  %v2494 = vpop.permute.xlu0 %2493
  %v2495 = vsel %vm460, %v2488, %v2492
  %v2496 = vsel %vm460, %v2490, %v2494
  %v2497 = vsel %vm460, %v2484, %v2488
  %v2498 = vsel %vm460, %v2486, %v2490
  %v2499 = vsel %vm460, %v2480, %v2484
  %v2500 = vsel %vm460, %v2482, %v2486
  %v2501 = vsel %vm460, %v2476, %v2480
  %v2502 = vsel %vm460, %v2478, %v2482
  %v2503 = vsel %vm460, %v2472, %v2476
  %v2504 = vsel %vm460, %v2474, %v2478
  %v2505 = vsel %vm460, %v2468, %v2472
  %v2506 = vsel %vm460, %v2470, %v2474
  %v2507 = vsel %vm460, %v2464, %v2468
  %v2508 = vsel %vm460, %v2466, %v2470
  %v2509 = vsel %vm460, %v2460, %v2464
  %v2510 = vsel %vm460, %v2462, %v2466
  %v2511 = vsel %vm460, %v2456, %v2460
  %v2512 = vsel %vm460, %v2458, %v2462
  %v2513 = vsel %vm460, %v2452, %v2456
  %v2514 = vsel %vm460, %v2454, %v2458
  %v2515 = vsel %vm460, %v2448, %v2452
  %v2516 = vsel %vm460, %v2450, %v2454
  %v2517 = vsel %vm460, %v2444, %v2448
  %v2518 = vsel %vm460, %v2446, %v2450
  %v2519 = vsel %vm460, %v2440, %v2444
  %v2520 = vsel %vm460, %v2442, %v2446
  %v2521 = vsel %vm460, %v2436, %v2440
  %v2522 = vsel %vm460, %v2438, %v2442
  %v2523 = vsel %vm460, %v2432, %v2436
  %v2524 = vsel %vm460, %v2434, %v2438
  %v2525 = vsel %vm460, %v2492, %v2432
  %v2526 = vsel %vm460, %v2494, %v2434
  %2527 = vrot.lane.b32.xlu0 %v2399, 120
  %v2528 = vpop.permute.xlu0 %2527
  %2529 = vrot.lane.b32.xlu0 %v2415, 120
  %v2530 = vpop.permute.xlu0 %2529
  %2531 = vrot.lane.b32.xlu0 %v2400, 120
  %v2532 = vpop.permute.xlu0 %2531
  %2533 = vrot.lane.b32.xlu0 %v2416, 120
  %v2534 = vpop.permute.xlu0 %2533
  %2535 = vrot.lane.b32.xlu0 %v2401, 120
  %v2536 = vpop.permute.xlu0 %2535
  %2537 = vrot.lane.b32.xlu0 %v2417, 120
  %v2538 = vpop.permute.xlu0 %2537
  %2539 = vrot.lane.b32.xlu0 %v2402, 120
  %v2540 = vpop.permute.xlu0 %2539
  %2541 = vrot.lane.b32.xlu0 %v2418, 120
  %v2542 = vpop.permute.xlu0 %2541
  %2543 = vrot.lane.b32.xlu0 %v2403, 120
  %v2544 = vpop.permute.xlu0 %2543
  %2545 = vrot.lane.b32.xlu0 %v2419, 120
  %v2546 = vpop.permute.xlu0 %2545
  %2547 = vrot.lane.b32.xlu0 %v2404, 120
  %v2548 = vpop.permute.xlu0 %2547
  %2549 = vrot.lane.b32.xlu0 %v2420, 120
  %v2550 = vpop.permute.xlu0 %2549
  %2551 = vrot.lane.b32.xlu0 %v2405, 120
  %v2552 = vpop.permute.xlu0 %2551
  %2553 = vrot.lane.b32.xlu0 %v2421, 120
  %v2554 = vpop.permute.xlu0 %2553
  %2555 = vrot.lane.b32.xlu0 %v2406, 120
  %v2556 = vpop.permute.xlu0 %2555
  %2557 = vrot.lane.b32.xlu0 %v2422, 120
  %v2558 = vpop.permute.xlu0 %2557
  %2559 = vrot.lane.b32.xlu0 %v2407, 120
  %v2560 = vpop.permute.xlu0 %2559
  %2561 = vrot.lane.b32.xlu0 %v2423, 120
  %v2562 = vpop.permute.xlu0 %2561
  %2563 = vrot.lane.b32.xlu0 %v2408, 120
  %v2564 = vpop.permute.xlu0 %2563
  %2565 = vrot.lane.b32.xlu0 %v2424, 120
  %v2566 = vpop.permute.xlu0 %2565
  %2567 = vrot.lane.b32.xlu0 %v2409, 120
  %v2568 = vpop.permute.xlu0 %2567
  %2569 = vrot.lane.b32.xlu0 %v2425, 120
  %v2570 = vpop.permute.xlu0 %2569
  %2571 = vrot.lane.b32.xlu0 %v2410, 120
  %v2572 = vpop.permute.xlu0 %2571
  %2573 = vrot.lane.b32.xlu0 %v2426, 120
  %v2574 = vpop.permute.xlu0 %2573
  %2575 = vrot.lane.b32.xlu0 %v2411, 120
  %v2576 = vpop.permute.xlu0 %2575
  %2577 = vrot.lane.b32.xlu0 %v2427, 120
  %v2578 = vpop.permute.xlu0 %2577
  %2579 = vrot.lane.b32.xlu0 %v2412, 120
  %v2580 = vpop.permute.xlu0 %2579
  %2581 = vrot.lane.b32.xlu0 %v2428, 120
  %v2582 = vpop.permute.xlu0 %2581
  %2583 = vrot.lane.b32.xlu0 %v2413, 120
  %v2584 = vpop.permute.xlu0 %2583
  %2585 = vrot.lane.b32.xlu0 %v2429, 120
  %v2586 = vpop.permute.xlu0 %2585
  %2587 = vrot.lane.b32.xlu0 %v2414, 120
  %v2588 = vpop.permute.xlu0 %2587
  %2589 = vrot.lane.b32.xlu0 %v2430, 120
  %v2590 = vpop.permute.xlu0 %2589
  %v2591 = vsel %vm557, %v2584, %v2588
  %v2592 = vsel %vm557, %v2586, %v2590
  %v2593 = vsel %vm557, %v2580, %v2584
  %v2594 = vsel %vm557, %v2582, %v2586
  %v2595 = vsel %vm557, %v2576, %v2580
  %v2596 = vsel %vm557, %v2578, %v2582
  %v2597 = vsel %vm557, %v2572, %v2576
  %v2598 = vsel %vm557, %v2574, %v2578
  %v2599 = vsel %vm557, %v2568, %v2572
  %v2600 = vsel %vm557, %v2570, %v2574
  %v2601 = vsel %vm557, %v2564, %v2568
  %v2602 = vsel %vm557, %v2566, %v2570
  %v2603 = vsel %vm557, %v2560, %v2564
  %v2604 = vsel %vm557, %v2562, %v2566
  %v2605 = vsel %vm557, %v2556, %v2560
  %v2606 = vsel %vm557, %v2558, %v2562
  %v2607 = vsel %vm557, %v2552, %v2556
  %v2608 = vsel %vm557, %v2554, %v2558
  %v2609 = vsel %vm557, %v2548, %v2552
  %v2610 = vsel %vm557, %v2550, %v2554
  %v2611 = vsel %vm557, %v2544, %v2548
  %v2612 = vsel %vm557, %v2546, %v2550
  %v2613 = vsel %vm557, %v2540, %v2544
  %v2614 = vsel %vm557, %v2542, %v2546
  %v2615 = vsel %vm557, %v2536, %v2540
  %v2616 = vsel %vm557, %v2538, %v2542
  %v2617 = vsel %vm557, %v2532, %v2536
  %v2618 = vsel %vm557, %v2534, %v2538
  %v2619 = vsel %vm557, %v2528, %v2532
  %v2620 = vsel %vm557, %v2530, %v2534
  %v2621 = vsel %vm557, %v2588, %v2528
  %v2622 = vsel %vm557, %v2590, %v2530
  %2623 = vrot.lane.b32.xlu0 %v2399, 116
  %v2624 = vpop.permute.xlu0 %2623
  %2625 = vrot.lane.b32.xlu0 %v2415, 116
  %v2626 = vpop.permute.xlu0 %2625
  %2627 = vrot.lane.b32.xlu0 %v2400, 116
  %v2628 = vpop.permute.xlu0 %2627
  %2629 = vrot.lane.b32.xlu0 %v2416, 116
  %v2630 = vpop.permute.xlu0 %2629
  %2631 = vrot.lane.b32.xlu0 %v2401, 116
  %v2632 = vpop.permute.xlu0 %2631
  %2633 = vrot.lane.b32.xlu0 %v2417, 116
  %v2634 = vpop.permute.xlu0 %2633
  %2635 = vrot.lane.b32.xlu0 %v2402, 116
  %v2636 = vpop.permute.xlu0 %2635
  %2637 = vrot.lane.b32.xlu0 %v2418, 116
  %v2638 = vpop.permute.xlu0 %2637
  %2639 = vrot.lane.b32.xlu0 %v2403, 116
  %v2640 = vpop.permute.xlu0 %2639
  %2641 = vrot.lane.b32.xlu0 %v2419, 116
  %v2642 = vpop.permute.xlu0 %2641
  %2643 = vrot.lane.b32.xlu0 %v2404, 116
  %v2644 = vpop.permute.xlu0 %2643
  %2645 = vrot.lane.b32.xlu0 %v2420, 116
  %v2646 = vpop.permute.xlu0 %2645
  %2647 = vrot.lane.b32.xlu0 %v2405, 116
  %v2648 = vpop.permute.xlu0 %2647
  %2649 = vrot.lane.b32.xlu0 %v2421, 116
  %v2650 = vpop.permute.xlu0 %2649
  %2651 = vrot.lane.b32.xlu0 %v2406, 116
  %v2652 = vpop.permute.xlu0 %2651
  %2653 = vrot.lane.b32.xlu0 %v2422, 116
  %v2654 = vpop.permute.xlu0 %2653
  %2655 = vrot.lane.b32.xlu0 %v2407, 116
  %v2656 = vpop.permute.xlu0 %2655
  %2657 = vrot.lane.b32.xlu0 %v2423, 116
  %v2658 = vpop.permute.xlu0 %2657
  %2659 = vrot.lane.b32.xlu0 %v2408, 116
  %v2660 = vpop.permute.xlu0 %2659
  %2661 = vrot.lane.b32.xlu0 %v2424, 116
  %v2662 = vpop.permute.xlu0 %2661
  %2663 = vrot.lane.b32.xlu0 %v2409, 116
  %v2664 = vpop.permute.xlu0 %2663
  %2665 = vrot.lane.b32.xlu0 %v2425, 116
  %v2666 = vpop.permute.xlu0 %2665
  %2667 = vrot.lane.b32.xlu0 %v2410, 116
  %v2668 = vpop.permute.xlu0 %2667
  %2669 = vrot.lane.b32.xlu0 %v2426, 116
  %v2670 = vpop.permute.xlu0 %2669
  %2671 = vrot.lane.b32.xlu0 %v2411, 116
  %v2672 = vpop.permute.xlu0 %2671
  %2673 = vrot.lane.b32.xlu0 %v2427, 116
  %v2674 = vpop.permute.xlu0 %2673
  %2675 = vrot.lane.b32.xlu0 %v2412, 116
  %v2676 = vpop.permute.xlu0 %2675
  %2677 = vrot.lane.b32.xlu0 %v2428, 116
  %v2678 = vpop.permute.xlu0 %2677
  %2679 = vrot.lane.b32.xlu0 %v2413, 116
  %v2680 = vpop.permute.xlu0 %2679
  %2681 = vrot.lane.b32.xlu0 %v2429, 116
  %v2682 = vpop.permute.xlu0 %2681
  %2683 = vrot.lane.b32.xlu0 %v2414, 116
  %v2684 = vpop.permute.xlu0 %2683
  %2685 = vrot.lane.b32.xlu0 %v2430, 116
  %v2686 = vpop.permute.xlu0 %2685
  %v2687 = vsel %vm654, %v2680, %v2684
  %v2688 = vsel %vm654, %v2682, %v2686
  %v2689 = vsel %vm654, %v2676, %v2680
  %v2690 = vsel %vm654, %v2678, %v2682
  %v2691 = vsel %vm654, %v2672, %v2676
  %v2692 = vsel %vm654, %v2674, %v2678
  %v2693 = vsel %vm654, %v2668, %v2672
  %v2694 = vsel %vm654, %v2670, %v2674
  %v2695 = vsel %vm654, %v2664, %v2668
  %v2696 = vsel %vm654, %v2666, %v2670
  %v2697 = vsel %vm654, %v2660, %v2664
  %v2698 = vsel %vm654, %v2662, %v2666
  %v2699 = vsel %vm654, %v2656, %v2660
  %v2700 = vsel %vm654, %v2658, %v2662
  %v2701 = vsel %vm654, %v2652, %v2656
  %v2702 = vsel %vm654, %v2654, %v2658
  %v2703 = vsel %vm654, %v2648, %v2652
  %v2704 = vsel %vm654, %v2650, %v2654
  %v2705 = vsel %vm654, %v2644, %v2648
  %v2706 = vsel %vm654, %v2646, %v2650
  %v2707 = vsel %vm654, %v2640, %v2644
  %v2708 = vsel %vm654, %v2642, %v2646
  %v2709 = vsel %vm654, %v2636, %v2640
  %v2710 = vsel %vm654, %v2638, %v2642
  %v2711 = vsel %vm654, %v2632, %v2636
  %v2712 = vsel %vm654, %v2634, %v2638
  %v2713 = vsel %vm654, %v2628, %v2632
  %v2714 = vsel %vm654, %v2630, %v2634
  %v2715 = vsel %vm654, %v2624, %v2628
  %v2716 = vsel %vm654, %v2626, %v2630
  %v2717 = vsel %vm654, %v2684, %v2624
  %v2718 = vsel %vm654, %v2686, %v2626
  %v2719 = vmax.f32 %v2399, %v2523
  %v2720 = vmax.f32 %v2400, %v2521
  %v2721 = vmax.f32 %v2401, %v2519
  %v2722 = vmax.f32 %v2402, %v2517
  %v2723 = vmax.f32 %v2403, %v2515
  %v2724 = vmax.f32 %v2404, %v2513
  %v2725 = vmax.f32 %v2405, %v2511
  %v2726 = vmax.f32 %v2406, %v2509
  %v2727 = vmax.f32 %v2407, %v2507
  %v2728 = vmax.f32 %v2408, %v2505
  %v2729 = vmax.f32 %v2409, %v2503
  %v2730 = vmax.f32 %v2410, %v2501
  %v2731 = vmax.f32 %v2411, %v2499
  %v2732 = vmax.f32 %v2412, %v2497
  %v2733 = vmax.f32 %v2413, %v2495
  %v2734 = vmax.f32 %v2414, %v2525
  %v2735 = vmax.f32 %v2415, %v2524
  %v2736 = vmax.f32 %v2416, %v2522
  %v2737 = vmax.f32 %v2417, %v2520
  %v2738 = vmax.f32 %v2418, %v2518
  %v2739 = vmax.f32 %v2419, %v2516
  %v2740 = vmax.f32 %v2420, %v2514
  %v2741 = vmax.f32 %v2421, %v2512
  %v2742 = vmax.f32 %v2422, %v2510
  %v2743 = vmax.f32 %v2423, %v2508
  %v2744 = vmax.f32 %v2424, %v2506
  %v2745 = vmax.f32 %v2425, %v2504
  %v2746 = vmax.f32 %v2426, %v2502
  %v2747 = vmax.f32 %v2427, %v2500
  %v2748 = vmax.f32 %v2428, %v2498
  %v2749 = vmax.f32 %v2429, %v2496
  %v2750 = vmax.f32 %v2430, %v2526
  %v2751 = vmax.f32 %v2619, %v2715
  %v2752 = vmax.f32 %v2617, %v2713
  %v2753 = vmax.f32 %v2615, %v2711
  %v2754 = vmax.f32 %v2613, %v2709
  %v2755 = vmax.f32 %v2611, %v2707
  %v2756 = vmax.f32 %v2609, %v2705
  %v2757 = vmax.f32 %v2607, %v2703
  %v2758 = vmax.f32 %v2605, %v2701
  %v2759 = vmax.f32 %v2603, %v2699
  %v2760 = vmax.f32 %v2601, %v2697
  %v2761 = vmax.f32 %v2599, %v2695
  %v2762 = vmax.f32 %v2597, %v2693
  %v2763 = vmax.f32 %v2595, %v2691
  %v2764 = vmax.f32 %v2593, %v2689
  %v2765 = vmax.f32 %v2591, %v2687
  %v2766 = vmax.f32 %v2621, %v2717
  %v2767 = vmax.f32 %v2620, %v2716
  %v2768 = vmax.f32 %v2618, %v2714
  %v2769 = vmax.f32 %v2616, %v2712
  %v2770 = vmax.f32 %v2614, %v2710
  %v2771 = vmax.f32 %v2612, %v2708
  %v2772 = vmax.f32 %v2610, %v2706
  %v2773 = vmax.f32 %v2608, %v2704
  %v2774 = vmax.f32 %v2606, %v2702
  %v2775 = vmax.f32 %v2604, %v2700
  %v2776 = vmax.f32 %v2602, %v2698
  %v2777 = vmax.f32 %v2600, %v2696
  %v2778 = vmax.f32 %v2598, %v2694
  %v2779 = vmax.f32 %v2596, %v2692
  %v2780 = vmax.f32 %v2594, %v2690
  %v2781 = vmax.f32 %v2592, %v2688
  %v2782 = vmax.f32 %v2622, %v2718
  %v2783 = vmax.f32 %v2719, %v2751
  %v2784 = vmax.f32 %v2720, %v2752
  %v2785 = vmax.f32 %v2721, %v2753
  %v2786 = vmax.f32 %v2722, %v2754
  %v2787 = vmax.f32 %v2723, %v2755
  %v2788 = vmax.f32 %v2724, %v2756
  %v2789 = vmax.f32 %v2725, %v2757
  %v2790 = vmax.f32 %v2726, %v2758
  %v2791 = vmax.f32 %v2727, %v2759
  %v2792 = vmax.f32 %v2728, %v2760
  %v2793 = vmax.f32 %v2729, %v2761
  %v2794 = vmax.f32 %v2730, %v2762
  %v2795 = vmax.f32 %v2731, %v2763
  %v2796 = vmax.f32 %v2732, %v2764
  %v2797 = vmax.f32 %v2733, %v2765
  %v2798 = vmax.f32 %v2734, %v2766
  %v2799 = vmax.f32 %v2735, %v2767
  %v2800 = vmax.f32 %v2736, %v2768
  %v2801 = vmax.f32 %v2737, %v2769
  %v2802 = vmax.f32 %v2738, %v2770
  %v2803 = vmax.f32 %v2739, %v2771
  %v2804 = vmax.f32 %v2740, %v2772
  %v2805 = vmax.f32 %v2741, %v2773
  %v2806 = vmax.f32 %v2742, %v2774
  %v2807 = vmax.f32 %v2743, %v2775
  %v2808 = vmax.f32 %v2744, %v2776
  %v2809 = vmax.f32 %v2745, %v2777
  %v2810 = vmax.f32 %v2746, %v2778
  %v2811 = vmax.f32 %v2747, %v2779
  %v2812 = vmax.f32 %v2748, %v2780
  %v2813 = vmax.f32 %v2749, %v2781
  %v2814 = vmax.f32 %v2750, %v2782
  %2815 = vrot.lane.b32.xlu0 %v2783, 16
  %v2816 = vpop.permute.xlu0 %2815
  %2817 = vrot.lane.b32.xlu0 %v2799, 16
  %v2818 = vpop.permute.xlu0 %2817
  %2819 = vrot.lane.b32.xlu0 %v2784, 16
  %v2820 = vpop.permute.xlu0 %2819
  %2821 = vrot.lane.b32.xlu0 %v2800, 16
  %v2822 = vpop.permute.xlu0 %2821
  %2823 = vrot.lane.b32.xlu0 %v2785, 16
  %v2824 = vpop.permute.xlu0 %2823
  %2825 = vrot.lane.b32.xlu0 %v2801, 16
  %v2826 = vpop.permute.xlu0 %2825
  %2827 = vrot.lane.b32.xlu0 %v2786, 16
  %v2828 = vpop.permute.xlu0 %2827
  %2829 = vrot.lane.b32.xlu0 %v2802, 16
  %v2830 = vpop.permute.xlu0 %2829
  %2831 = vrot.lane.b32.xlu0 %v2787, 16
  %v2832 = vpop.permute.xlu0 %2831
  %2833 = vrot.lane.b32.xlu0 %v2803, 16
  %v2834 = vpop.permute.xlu0 %2833
  %2835 = vrot.lane.b32.xlu0 %v2788, 16
  %v2836 = vpop.permute.xlu0 %2835
  %2837 = vrot.lane.b32.xlu0 %v2804, 16
  %v2838 = vpop.permute.xlu0 %2837
  %2839 = vrot.lane.b32.xlu0 %v2789, 16
  %v2840 = vpop.permute.xlu0 %2839
  %2841 = vrot.lane.b32.xlu0 %v2805, 16
  %v2842 = vpop.permute.xlu0 %2841
  %2843 = vrot.lane.b32.xlu0 %v2790, 16
  %v2844 = vpop.permute.xlu0 %2843
  %2845 = vrot.lane.b32.xlu0 %v2806, 16
  %v2846 = vpop.permute.xlu0 %2845
  %2847 = vrot.lane.b32.xlu0 %v2791, 16
  %v2848 = vpop.permute.xlu0 %2847
  %2849 = vrot.lane.b32.xlu0 %v2807, 16
  %v2850 = vpop.permute.xlu0 %2849
  %2851 = vrot.lane.b32.xlu0 %v2792, 16
  %v2852 = vpop.permute.xlu0 %2851
  %2853 = vrot.lane.b32.xlu0 %v2808, 16
  %v2854 = vpop.permute.xlu0 %2853
  %2855 = vrot.lane.b32.xlu0 %v2793, 16
  %v2856 = vpop.permute.xlu0 %2855
  %2857 = vrot.lane.b32.xlu0 %v2809, 16
  %v2858 = vpop.permute.xlu0 %2857
  %2859 = vrot.lane.b32.xlu0 %v2794, 16
  %v2860 = vpop.permute.xlu0 %2859
  %2861 = vrot.lane.b32.xlu0 %v2810, 16
  %v2862 = vpop.permute.xlu0 %2861
  %2863 = vrot.lane.b32.xlu0 %v2795, 16
  %v2864 = vpop.permute.xlu0 %2863
  %2865 = vrot.lane.b32.xlu0 %v2811, 16
  %v2866 = vpop.permute.xlu0 %2865
  %2867 = vrot.lane.b32.xlu0 %v2796, 16
  %v2868 = vpop.permute.xlu0 %2867
  %2869 = vrot.lane.b32.xlu0 %v2812, 16
  %v2870 = vpop.permute.xlu0 %2869
  %2871 = vrot.lane.b32.xlu0 %v2797, 16
  %v2872 = vpop.permute.xlu0 %2871
  %2873 = vrot.lane.b32.xlu0 %v2813, 16
  %v2874 = vpop.permute.xlu0 %2873
  %2875 = vrot.lane.b32.xlu0 %v2798, 16
  %v2876 = vpop.permute.xlu0 %2875
  %2877 = vrot.lane.b32.xlu0 %v2814, 16
  %v2878 = vpop.permute.xlu0 %2877
  %vm2879 = vcmp.lt.s32.totalorder %v48, 16
  %v2880 = vsel %vm2879, %v2872, %v2876
  %v2881 = vsel %vm2879, %v2874, %v2878
  %v2882 = vsel %vm2879, %v2868, %v2872
  %v2883 = vsel %vm2879, %v2870, %v2874
  %v2884 = vsel %vm2879, %v2864, %v2868
  %v2885 = vsel %vm2879, %v2866, %v2870
  %v2886 = vsel %vm2879, %v2860, %v2864
  %v2887 = vsel %vm2879, %v2862, %v2866
  %v2888 = vsel %vm2879, %v2856, %v2860
  %v2889 = vsel %vm2879, %v2858, %v2862
  %v2890 = vsel %vm2879, %v2852, %v2856
  %v2891 = vsel %vm2879, %v2854, %v2858
  %v2892 = vsel %vm2879, %v2848, %v2852
  %v2893 = vsel %vm2879, %v2850, %v2854
  %v2894 = vsel %vm2879, %v2844, %v2848
  %v2895 = vsel %vm2879, %v2846, %v2850
  %v2896 = vsel %vm2879, %v2840, %v2844
  %v2897 = vsel %vm2879, %v2842, %v2846
  %v2898 = vsel %vm2879, %v2836, %v2840
  %v2899 = vsel %vm2879, %v2838, %v2842
  %v2900 = vsel %vm2879, %v2832, %v2836
  %v2901 = vsel %vm2879, %v2834, %v2838
  %v2902 = vsel %vm2879, %v2828, %v2832
  %v2903 = vsel %vm2879, %v2830, %v2834
  %v2904 = vsel %vm2879, %v2824, %v2828
  %v2905 = vsel %vm2879, %v2826, %v2830
  %v2906 = vsel %vm2879, %v2820, %v2824
  %v2907 = vsel %vm2879, %v2822, %v2826
  %v2908 = vsel %vm2879, %v2816, %v2820
  %v2909 = vsel %vm2879, %v2818, %v2822
  %v2910 = vsel %vm2879, %v2876, %v2816
  %v2911 = vsel %vm2879, %v2878, %v2818
  %v2912 = vsel %vm1760, 0.0, %v2910
  %v2913 = vsel %vm1761, 0.0, %v2908
  %v2914 = vsel %vm1762, 0.0, %v2906
  %v2915 = vsel %vm1763, 0.0, %v2904
  %v2916 = vsel %vm1764, 0.0, %v2902
  %v2917 = vsel %vm1765, 0.0, %v2900
  %v2918 = vsel %vm1766, 0.0, %v2898
  %v2919 = vsel %vm1767, 0.0, %v2896
  %v2920 = vsel %vm1768, 0.0, %v2894
  %v2921 = vsel %vm1769, 0.0, %v2892
  %v2922 = vsel %vm1770, 0.0, %v2890
  %v2923 = vsel %vm1771, 0.0, %v2888
  %v2924 = vsel %vm1772, 0.0, %v2886
  %v2925 = vsel %vm1773, 0.0, %v2884
  %v2926 = vsel %vm1774, 0.0, %v2882
  %v2927 = vsel %vm1775, 0.0, %v2880
  %v2928 = vsel %vm1760, 0.0, %v2911
  %v2929 = vsel %vm1761, 0.0, %v2909
  %v2930 = vsel %vm1762, 0.0, %v2907
  %v2931 = vsel %vm1763, 0.0, %v2905
  %v2932 = vsel %vm1764, 0.0, %v2903
  %v2933 = vsel %vm1765, 0.0, %v2901
  %v2934 = vsel %vm1766, 0.0, %v2899
  %v2935 = vsel %vm1767, 0.0, %v2897
  %v2936 = vsel %vm1768, 0.0, %v2895
  %v2937 = vsel %vm1769, 0.0, %v2893
  %v2938 = vsel %vm1770, 0.0, %v2891
  %v2939 = vsel %vm1771, 0.0, %v2889
  %v2940 = vsel %vm1772, 0.0, %v2887
  %v2941 = vsel %vm1773, 0.0, %v2885
  %v2942 = vsel %vm1774, 0.0, %v2883
  %v2943 = vsel %vm1775, 0.0, %v2881
  %vm2944 = vcmp.eq.s32.totalorder %v64, 784
  %vm2945 = vcmp.eq.s32.totalorder %v65, 784
  %vm2946 = vcmp.eq.s32.totalorder %v66, 784
  %vm2947 = vcmp.eq.s32.totalorder %v67, 784
  %vm2948 = vcmp.eq.s32.totalorder %v68, 784
  %vm2949 = vcmp.eq.s32.totalorder %v69, 784
  %vm2950 = vcmp.eq.s32.totalorder %v70, 784
  %vm2951 = vcmp.eq.s32.totalorder %v71, 784
  %vm2952 = vcmp.eq.s32.totalorder %v72, 784
  %vm2953 = vcmp.eq.s32.totalorder %v73, 784
  %vm2954 = vcmp.eq.s32.totalorder %v74, 784
  %vm2955 = vcmp.eq.s32.totalorder %v75, 784
  %vm2956 = vcmp.eq.s32.totalorder %v76, 784
  %vm2957 = vcmp.eq.s32.totalorder %v77, 784
  %vm2958 = vcmp.eq.s32.totalorder %v78, 784
  %vm2959 = vcmp.eq.s32.totalorder %v79, 784
  %2960 = vrot.lane.b32.xlu0 %v2783, 112
  %v2961 = vpop.permute.xlu0 %2960
  %2962 = vrot.lane.b32.xlu0 %v2799, 112
  %v2963 = vpop.permute.xlu0 %2962
  %2964 = vrot.lane.b32.xlu0 %v2784, 112
  %v2965 = vpop.permute.xlu0 %2964
  %2966 = vrot.lane.b32.xlu0 %v2800, 112
  %v2967 = vpop.permute.xlu0 %2966
  %2968 = vrot.lane.b32.xlu0 %v2785, 112
  %v2969 = vpop.permute.xlu0 %2968
  %2970 = vrot.lane.b32.xlu0 %v2801, 112
  %v2971 = vpop.permute.xlu0 %2970
  %2972 = vrot.lane.b32.xlu0 %v2786, 112
  %v2973 = vpop.permute.xlu0 %2972
  %2974 = vrot.lane.b32.xlu0 %v2802, 112
  %v2975 = vpop.permute.xlu0 %2974
  %2976 = vrot.lane.b32.xlu0 %v2787, 112
  %v2977 = vpop.permute.xlu0 %2976
  %2978 = vrot.lane.b32.xlu0 %v2803, 112
  %v2979 = vpop.permute.xlu0 %2978
  %2980 = vrot.lane.b32.xlu0 %v2788, 112
  %v2981 = vpop.permute.xlu0 %2980
  %2982 = vrot.lane.b32.xlu0 %v2804, 112
  %v2983 = vpop.permute.xlu0 %2982
  %2984 = vrot.lane.b32.xlu0 %v2789, 112
  %v2985 = vpop.permute.xlu0 %2984
  %2986 = vrot.lane.b32.xlu0 %v2805, 112
  %v2987 = vpop.permute.xlu0 %2986
  %2988 = vrot.lane.b32.xlu0 %v2790, 112
  %v2989 = vpop.permute.xlu0 %2988
  %2990 = vrot.lane.b32.xlu0 %v2806, 112
  %v2991 = vpop.permute.xlu0 %2990
  %2992 = vrot.lane.b32.xlu0 %v2791, 112
  %v2993 = vpop.permute.xlu0 %2992
  %2994 = vrot.lane.b32.xlu0 %v2807, 112
  %v2995 = vpop.permute.xlu0 %2994
  %2996 = vrot.lane.b32.xlu0 %v2792, 112
  %v2997 = vpop.permute.xlu0 %2996
  %2998 = vrot.lane.b32.xlu0 %v2808, 112
  %v2999 = vpop.permute.xlu0 %2998
  %3000 = vrot.lane.b32.xlu0 %v2793, 112
  %v3001 = vpop.permute.xlu0 %3000
  %3002 = vrot.lane.b32.xlu0 %v2809, 112
  %v3003 = vpop.permute.xlu0 %3002
  %3004 = vrot.lane.b32.xlu0 %v2794, 112
  %v3005 = vpop.permute.xlu0 %3004
  %3006 = vrot.lane.b32.xlu0 %v2810, 112
  %v3007 = vpop.permute.xlu0 %3006
  %3008 = vrot.lane.b32.xlu0 %v2795, 112
  %v3009 = vpop.permute.xlu0 %3008
  %3010 = vrot.lane.b32.xlu0 %v2811, 112
  %v3011 = vpop.permute.xlu0 %3010
  %3012 = vrot.lane.b32.xlu0 %v2796, 112
  %v3013 = vpop.permute.xlu0 %3012
  %3014 = vrot.lane.b32.xlu0 %v2812, 112
  %v3015 = vpop.permute.xlu0 %3014
  %3016 = vrot.lane.b32.xlu0 %v2797, 112
  %v3017 = vpop.permute.xlu0 %3016
  %3018 = vrot.lane.b32.xlu0 %v2813, 112
  %v3019 = vpop.permute.xlu0 %3018
  %3020 = vrot.lane.b32.xlu0 %v2798, 112
  %v3021 = vpop.permute.xlu0 %3020
  %3022 = vrot.lane.b32.xlu0 %v2814, 112
  %v3023 = vpop.permute.xlu0 %3022
  %v3024 = vsel %vm751, %v3017, %v3021
  %v3025 = vsel %vm751, %v3019, %v3023
  %v3026 = vsel %vm751, %v3013, %v3017
  %v3027 = vsel %vm751, %v3015, %v3019
  %v3028 = vsel %vm751, %v3009, %v3013
  %v3029 = vsel %vm751, %v3011, %v3015
  %v3030 = vsel %vm751, %v3005, %v3009
  %v3031 = vsel %vm751, %v3007, %v3011
  %v3032 = vsel %vm751, %v3001, %v3005
  %v3033 = vsel %vm751, %v3003, %v3007
  %v3034 = vsel %vm751, %v2997, %v3001
  %v3035 = vsel %vm751, %v2999, %v3003
  %v3036 = vsel %vm751, %v2993, %v2997
  %v3037 = vsel %vm751, %v2995, %v2999
  %v3038 = vsel %vm751, %v2989, %v2993
  %v3039 = vsel %vm751, %v2991, %v2995
  %v3040 = vsel %vm751, %v2985, %v2989
  %v3041 = vsel %vm751, %v2987, %v2991
  %v3042 = vsel %vm751, %v2981, %v2985
  %v3043 = vsel %vm751, %v2983, %v2987
  %v3044 = vsel %vm751, %v2977, %v2981
  %v3045 = vsel %vm751, %v2979, %v2983
  %v3046 = vsel %vm751, %v2973, %v2977
  %v3047 = vsel %vm751, %v2975, %v2979
  %v3048 = vsel %vm751, %v2969, %v2973
  %v3049 = vsel %vm751, %v2971, %v2975
  %v3050 = vsel %vm751, %v2965, %v2969
  %v3051 = vsel %vm751, %v2967, %v2971
  %v3052 = vsel %vm751, %v2961, %v2965
  %v3053 = vsel %vm751, %v2963, %v2967
  %v3054 = vsel %vm751, %v3021, %v2961
  %v3055 = vsel %vm751, %v3023, %v2963
  %v3056 = vsel %vm2944, 1, 0
  %v3057 = vsel %vm2945, 1, 0
  %v3058 = vsel %vm2946, 1, 0
  %v3059 = vsel %vm2947, 1, 0
  %v3060 = vsel %vm2948, 1, 0
  %v3061 = vsel %vm2949, 1, 0
  %v3062 = vsel %vm2950, 1, 0
  %v3063 = vsel %vm2951, 1, 0
  %v3064 = vsel %vm2952, 1, 0
  %v3065 = vsel %vm2953, 1, 0
  %v3066 = vsel %vm2954, 1, 0
  %v3067 = vsel %vm2955, 1, 0
  %v3068 = vsel %vm2956, 1, 0
  %v3069 = vsel %vm2957, 1, 0
  %v3070 = vsel %vm2958, 1, 0
  %v3071 = vsel %vm2959, 1, 0
  %vm3072 = vcmp.eq.s32.totalorder %v3056, 1
  %vm3073 = vcmp.eq.s32.totalorder %v3057, 1
  %vm3074 = vcmp.eq.s32.totalorder %v3058, 1
  %vm3075 = vcmp.eq.s32.totalorder %v3059, 1
  %vm3076 = vcmp.eq.s32.totalorder %v3060, 1
  %vm3077 = vcmp.eq.s32.totalorder %v3061, 1
  %vm3078 = vcmp.eq.s32.totalorder %v3062, 1
  %vm3079 = vcmp.eq.s32.totalorder %v3063, 1
  %vm3080 = vcmp.eq.s32.totalorder %v3064, 1
  %vm3081 = vcmp.eq.s32.totalorder %v3065, 1
  %vm3082 = vcmp.eq.s32.totalorder %v3066, 1
  %vm3083 = vcmp.eq.s32.totalorder %v3067, 1
  %vm3084 = vcmp.eq.s32.totalorder %v3068, 1
  %vm3085 = vcmp.eq.s32.totalorder %v3069, 1
  %vm3086 = vcmp.eq.s32.totalorder %v3070, 1
  %vm3087 = vcmp.eq.s32.totalorder %v3071, 1
  %v3088 = vsel %vm3072, 0.0, %v3052
  %v3089 = vsel %vm3073, 0.0, %v3050
  %v3090 = vsel %vm3074, 0.0, %v3048
  %v3091 = vsel %vm3075, 0.0, %v3046
  %v3092 = vsel %vm3076, 0.0, %v3044
  %v3093 = vsel %vm3077, 0.0, %v3042
  %v3094 = vsel %vm3078, 0.0, %v3040
  %v3095 = vsel %vm3079, 0.0, %v3038
  %v3096 = vsel %vm3080, 0.0, %v3036
  %v3097 = vsel %vm3081, 0.0, %v3034
  %v3098 = vsel %vm3082, 0.0, %v3032
  %v3099 = vsel %vm3083, 0.0, %v3030
  %v3100 = vsel %vm3084, 0.0, %v3028
  %v3101 = vsel %vm3085, 0.0, %v3026
  %v3102 = vsel %vm3086, 0.0, %v3024
  %v3103 = vsel %vm3087, 0.0, %v3054
  %v3104 = vsel %vm3072, 0.0, %v3053
  %v3105 = vsel %vm3073, 0.0, %v3051
  %v3106 = vsel %vm3074, 0.0, %v3049
  %v3107 = vsel %vm3075, 0.0, %v3047
  %v3108 = vsel %vm3076, 0.0, %v3045
  %v3109 = vsel %vm3077, 0.0, %v3043
  %v3110 = vsel %vm3078, 0.0, %v3041
  %v3111 = vsel %vm3079, 0.0, %v3039
  %v3112 = vsel %vm3080, 0.0, %v3037
  %v3113 = vsel %vm3081, 0.0, %v3035
  %v3114 = vsel %vm3082, 0.0, %v3033
  %v3115 = vsel %vm3083, 0.0, %v3031
  %v3116 = vsel %vm3084, 0.0, %v3029
  %v3117 = vsel %vm3085, 0.0, %v3027
  %v3118 = vsel %vm3086, 0.0, %v3025
  %v3119 = vsel %vm3087, 0.0, %v3055
  %v3120 = vpack.c.bf16 %v2928, %v2912
  %v3121 = vpack.c.bf16 %v2929, %v2913
  %v3122 = vpack.c.bf16 %v2930, %v2914
  %v3123 = vpack.c.bf16 %v2931, %v2915
  %v3124 = vpack.c.bf16 %v2932, %v2916
  %v3125 = vpack.c.bf16 %v2933, %v2917
  %v3126 = vpack.c.bf16 %v2934, %v2918
  %v3127 = vpack.c.bf16 %v2935, %v2919
  %v3128 = vpack.c.bf16 %v2936, %v2920
  %v3129 = vpack.c.bf16 %v2937, %v2921
  %v3130 = vpack.c.bf16 %v2938, %v2922
  %v3131 = vpack.c.bf16 %v2939, %v2923
  %v3132 = vpack.c.bf16 %v2940, %v2924
  %v3133 = vpack.c.bf16 %v2941, %v2925
  %v3134 = vpack.c.bf16 %v2942, %v2926
  %v3135 = vpack.c.bf16 %v2943, %v2927
  %v3136 = vpack.c.bf16 %v2799, %v2783
  %v3137 = vpack.c.bf16 %v2800, %v2784
  %v3138 = vpack.c.bf16 %v2801, %v2785
  %v3139 = vpack.c.bf16 %v2802, %v2786
  %v3140 = vpack.c.bf16 %v2803, %v2787
  %v3141 = vpack.c.bf16 %v2804, %v2788
  %v3142 = vpack.c.bf16 %v2805, %v2789
  %v3143 = vpack.c.bf16 %v2806, %v2790
  %v3144 = vpack.c.bf16 %v2807, %v2791
  %v3145 = vpack.c.bf16 %v2808, %v2792
  %v3146 = vpack.c.bf16 %v2809, %v2793
  %v3147 = vpack.c.bf16 %v2810, %v2794
  %v3148 = vpack.c.bf16 %v2811, %v2795
  %v3149 = vpack.c.bf16 %v2812, %v2796
  %v3150 = vpack.c.bf16 %v2813, %v2797
  %v3151 = vpack.c.bf16 %v2814, %v2798
  %v3152 = vpack.c.bf16 %v3104, %v3088
  %v3153 = vpack.c.bf16 %v3105, %v3089
  %v3154 = vpack.c.bf16 %v3106, %v3090
  %v3155 = vpack.c.bf16 %v3107, %v3091
  %v3156 = vpack.c.bf16 %v3108, %v3092
  %v3157 = vpack.c.bf16 %v3109, %v3093
  %v3158 = vpack.c.bf16 %v3110, %v3094
  %v3159 = vpack.c.bf16 %v3111, %v3095
  %v3160 = vpack.c.bf16 %v3112, %v3096
  %v3161 = vpack.c.bf16 %v3113, %v3097
  %v3162 = vpack.c.bf16 %v3114, %v3098
  %v3163 = vpack.c.bf16 %v3115, %v3099
  %v3164 = vpack.c.bf16 %v3116, %v3100
  %v3165 = vpack.c.bf16 %v3117, %v3101
  %v3166 = vpack.c.bf16 %v3118, %v3102
  %v3167 = vpack.c.bf16 %v3119, %v3103
  %v3168 = vld [vmem:[%s5] sm:$0xf]
  %v3169 = vld [vmem:[%s5 + $0x4] sm:$0xf]
  %v3170 = vld [vmem:[%s5 + $0x8] sm:$0xf]
  %v3171 = vld [vmem:[%s5 + $0xc] sm:$0xf]
  %v3172 = vld [vmem:[%s6] sm:$0xff]
  %v3173 = vld [vmem:[%s6 + $0x8] sm:$0xff]
  %v3174 = vld [vmem:[%s6 + $0x10] sm:$0xff]
  %v3175 = vld [vmem:[%s6 + $0x18] sm:$0xff]
  %3177 = vset.pattern.permute.xlu0 0
  %3178 = vperm.xlu0 %3177, %v3172
  %v3179 = vpop.permute.xlu0 %3178
  %3182 = vset.pattern.permute.xlu0 0
  %3183 = vperm.xlu0 %3182, %v3173
  %v3184 = vpop.permute.xlu0 %3183
  %3187 = vset.pattern.permute.xlu0 0
  %3188 = vperm.xlu0 %3187, %v3174
  %v3189 = vpop.permute.xlu0 %3188
  %3192 = vset.pattern.permute.xlu0 0
  %3193 = vperm.xlu0 %3192, %v3175
  %v3194 = vpop.permute.xlu0 %3193
  %v3200 = vunpack.c.l.b16 %v3168
  %v3201 = vunpack.c.l.b16 %v3169
  %v3202 = vunpack.c.l.b16 %v3170
  %v3203 = vunpack.c.l.b16 %v3171
  %v3204 = vpack.c.b16 %v3201, %v3200
  %v3205 = vpack.c.b16 %v3203, %v3202
  %v3207 = vsel %vm2051, %v3204, 0
  %v3210 = vsel %vm2051, %v3205, 0
  %3212 = vmatprep.subr.bf16.mxu0 %v3121
  %3213 = vmatpush1.bf16.msra.mxu0 %v3120
  %3214 = vmatprep.subr.bf16.mxu0 %v3137
  %3215 = vmatpush1.bf16.msra.mxu0 %v3136
  %3216 = vmatprep.subr.bf16.mxu0 %v3153
  %3217 = vmatpush1.bf16.msra.mxu0 %v3152
  %3218 = vmatprep.subr.bf16.mxu0 0
  %3219 = vmatpush1.bf16.msra.mxu0 0
  %3220 = vmatprep.subr.bf16.mxu0 0
  %3221 = vmatpush1.bf16.msra.mxu0 0
  %3222 = vmatprep.subr.bf16.mxu0 0
  %3223 = vmatpush1.bf16.msra.mxu0 0
  %3224 = vmatprep.subr.bf16.mxu0 0
  %3225 = vmatpush1.bf16.msra.mxu0 0
  %3226 = vmatprep.subr.bf16.mxu0 0
  %3227 = vmatpush1.bf16.msra.mxu0 0
  %3228 = vmatprep.subr.bf16.mxu0 0
  %3229 = vmatpush1.bf16.msra.mxu0 0
  %3230 = vmatprep.subr.bf16.mxu0 0
  %3231 = vmatpush1.bf16.msra.mxu0 0
  %3232 = vmatprep.subr.bf16.mxu0 0
  %3233 = vmatpush1.bf16.msra.mxu0 0
  %3234 = vmatprep.subr.bf16.mxu0 0
  %3235 = vmatpush1.bf16.msra.mxu0 0
  %3236 = vmatprep.subr.bf16.mxu0 0
  %3237 = vmatpush1.bf16.msra.mxu0 0
  %3238 = vmatprep.subr.bf16.mxu0 0
  %3239 = vmatpush1.bf16.msra.mxu0 0
  %3240 = vmatprep.subr.bf16.mxu0 0
  %3241 = vmatpush1.bf16.msra.mxu0 0
  %3242 = vmatprep.subr.bf16.mxu0 0
  %3243 = vmatpush1.bf16.msra.mxu0 0
  %3244 = vmatprep.mubr.bf16.mxu0 0
  %3245 = vmatmul.mubr.bf16.gmra.mrb[0].mxu0 %v3207
  %v3246 = vpop.f32.mrb[0].mxu0
  %v3247 = vadd.f32 %v3179, %v3246
  %v3248 = vpop.f32.mrb[0].mxu0
  %v3249 = vadd.f32 %v3179, %v3248
  %v3250 = vpop.f32.mrb[0].mxu0
  %v3251 = vadd.f32 %v3184, %v3250
  %v3252 = vpop.f32.mrb[0].mxu0
  %v3253 = vadd.f32 %v3184, %v3252
  %3254 = vmatprep.mubr.bf16.mxu0 0
  %3255 = vmatmul.mubr.bf16.gmra.mrb[0].mxu0 %v3210
  %v3256 = vpop.f32.mrb[0].mxu0
  %v3257 = vadd.f32 %v3189, %v3256
  %v3258 = vpop.f32.mrb[0].mxu0
  %v3259 = vadd.f32 %v3189, %v3258
  %v3260 = vpop.f32.mrb[0].mxu0
  %v3261 = vadd.f32 %v3194, %v3260
  %v3262 = vpop.f32.mrb[0].mxu0
  %v3263 = vadd.f32 %v3194, %v3262
  %3264 = vdwg.mxu0
  %3265 = vmatprep.subr.bf16.mxu0 %v3123
  %3266 = vmatpush1.bf16.msra.mxu0 %v3122
  %3267 = vmatprep.subr.bf16.mxu0 %v3139
  %3268 = vmatpush1.bf16.msra.mxu0 %v3138
  %3269 = vmatprep.subr.bf16.mxu0 %v3155
  %3270 = vmatpush1.bf16.msra.mxu0 %v3154
  %3271 = vmatprep.subr.bf16.mxu0 0
  %3272 = vmatpush1.bf16.msra.mxu0 0
  %3273 = vmatprep.subr.bf16.mxu0 0
  %3274 = vmatpush1.bf16.msra.mxu0 0
  %3275 = vmatprep.subr.bf16.mxu0 0
  %3276 = vmatpush1.bf16.msra.mxu0 0
  %3277 = vmatprep.subr.bf16.mxu0 0
  %3278 = vmatpush1.bf16.msra.mxu0 0
  %3279 = vmatprep.subr.bf16.mxu0 0
  %3280 = vmatpush1.bf16.msra.mxu0 0
  %3281 = vmatprep.subr.bf16.mxu0 0
  %3282 = vmatpush1.bf16.msra.mxu0 0
  %3283 = vmatprep.subr.bf16.mxu0 0
  %3284 = vmatpush1.bf16.msra.mxu0 0
  %3285 = vmatprep.subr.bf16.mxu0 0
  %3286 = vmatpush1.bf16.msra.mxu0 0
  %3287 = vmatprep.subr.bf16.mxu0 0
  %3288 = vmatpush1.bf16.msra.mxu0 0
  %3289 = vmatprep.subr.bf16.mxu0 0
  %3290 = vmatpush1.bf16.msra.mxu0 0
  %3291 = vmatprep.subr.bf16.mxu0 0
  %3292 = vmatpush1.bf16.msra.mxu0 0
  %3293 = vmatprep.subr.bf16.mxu0 0
  %3294 = vmatpush1.bf16.msra.mxu0 0
  %3295 = vmatprep.subr.bf16.mxu0 0
  %3296 = vmatpush1.bf16.msra.mxu0 0
  %3297 = vmatprep.mubr.bf16.mxu0 0
  %3298 = vmatmul.mubr.bf16.gmra.mrb[0].mxu0 %v3207
  %v3299 = vpop.f32.mrb[0].mxu0
  %v3300 = vadd.f32 %v3179, %v3299
  %v3301 = vpop.f32.mrb[0].mxu0
  %v3302 = vadd.f32 %v3179, %v3301
  %v3303 = vpop.f32.mrb[0].mxu0
  %v3304 = vadd.f32 %v3184, %v3303
  %v3305 = vpop.f32.mrb[0].mxu0
  %v3306 = vadd.f32 %v3184, %v3305
  %3307 = vmatprep.mubr.bf16.mxu0 0
  %3308 = vmatmul.mubr.bf16.gmra.mrb[0].mxu0 %v3210
  %v3309 = vpop.f32.mrb[0].mxu0
  %v3310 = vadd.f32 %v3189, %v3309
  %v3311 = vpop.f32.mrb[0].mxu0
  %v3312 = vadd.f32 %v3189, %v3311
  %v3313 = vpop.f32.mrb[0].mxu0
  %v3314 = vadd.f32 %v3194, %v3313
  %v3315 = vpop.f32.mrb[0].mxu0
  %v3316 = vadd.f32 %v3194, %v3315
  %3317 = vdwg.mxu0
  %3318 = vmatprep.subr.bf16.mxu0 %v3125
  %3319 = vmatpush1.bf16.msra.mxu0 %v3124
  %3320 = vmatprep.subr.bf16.mxu0 %v3141
  %3321 = vmatpush1.bf16.msra.mxu0 %v3140
  %3322 = vmatprep.subr.bf16.mxu0 %v3157
  %3323 = vmatpush1.bf16.msra.mxu0 %v3156
  %3324 = vmatprep.subr.bf16.mxu0 0
  %3325 = vmatpush1.bf16.msra.mxu0 0
  %3326 = vmatprep.subr.bf16.mxu0 0
  %3327 = vmatpush1.bf16.msra.mxu0 0
  %3328 = vmatprep.subr.bf16.mxu0 0
  %3329 = vmatpush1.bf16.msra.mxu0 0
  %3330 = vmatprep.subr.bf16.mxu0 0
  %3331 = vmatpush1.bf16.msra.mxu0 0
  %3332 = vmatprep.subr.bf16.mxu0 0
  %3333 = vmatpush1.bf16.msra.mxu0 0
  %3334 = vmatprep.subr.bf16.mxu0 0
  %3335 = vmatpush1.bf16.msra.mxu0 0
  %3336 = vmatprep.subr.bf16.mxu0 0
  %3337 = vmatpush1.bf16.msra.mxu0 0
  %3338 = vmatprep.subr.bf16.mxu0 0
  %3339 = vmatpush1.bf16.msra.mxu0 0
  %3340 = vmatprep.subr.bf16.mxu0 0
  %3341 = vmatpush1.bf16.msra.mxu0 0
  %3342 = vmatprep.subr.bf16.mxu0 0
  %3343 = vmatpush1.bf16.msra.mxu0 0
  %3344 = vmatprep.subr.bf16.mxu0 0
  %3345 = vmatpush1.bf16.msra.mxu0 0
  %3346 = vmatprep.subr.bf16.mxu0 0
  %3347 = vmatpush1.bf16.msra.mxu0 0
  %3348 = vmatprep.subr.bf16.mxu0 0
  %3349 = vmatpush1.bf16.msra.mxu0 0
  %3350 = vmatprep.mubr.bf16.mxu0 0
  %3351 = vmatmul.mubr.bf16.gmra.mrb[0].mxu0 %v3207
  %v3352 = vpop.f32.mrb[0].mxu0
  %v3353 = vadd.f32 %v3179, %v3352
  %v3354 = vpop.f32.mrb[0].mxu0
  %v3355 = vadd.f32 %v3179, %v3354
  %v3356 = vpop.f32.mrb[0].mxu0
  %v3357 = vadd.f32 %v3184, %v3356
  %v3358 = vpop.f32.mrb[0].mxu0
  %v3359 = vadd.f32 %v3184, %v3358
  %3360 = vmatprep.mubr.bf16.mxu0 0
  %3361 = vmatmul.mubr.bf16.gmra.mrb[0].mxu0 %v3210
  %v3362 = vpop.f32.mrb[0].mxu0
  %v3363 = vadd.f32 %v3189, %v3362
  %v3364 = vpop.f32.mrb[0].mxu0
  %v3365 = vadd.f32 %v3189, %v3364
  %v3366 = vpop.f32.mrb[0].mxu0
  %v3367 = vadd.f32 %v3194, %v3366
  %v3368 = vpop.f32.mrb[0].mxu0
  %v3369 = vadd.f32 %v3194, %v3368
  %3370 = vdwg.mxu0
  %3371 = vmatprep.subr.bf16.mxu0 %v3127
  %3372 = vmatpush1.bf16.msra.mxu0 %v3126
  %3373 = vmatprep.subr.bf16.mxu0 %v3143
  %3374 = vmatpush1.bf16.msra.mxu0 %v3142
  %3375 = vmatprep.subr.bf16.mxu0 %v3159
  %3376 = vmatpush1.bf16.msra.mxu0 %v3158
  %3377 = vmatprep.subr.bf16.mxu0 0
  %3378 = vmatpush1.bf16.msra.mxu0 0
  %3379 = vmatprep.subr.bf16.mxu0 0
  %3380 = vmatpush1.bf16.msra.mxu0 0
  %3381 = vmatprep.subr.bf16.mxu0 0
  %3382 = vmatpush1.bf16.msra.mxu0 0
  %3383 = vmatprep.subr.bf16.mxu0 0
  %3384 = vmatpush1.bf16.msra.mxu0 0
  %3385 = vmatprep.subr.bf16.mxu0 0
  %3386 = vmatpush1.bf16.msra.mxu0 0
  %3387 = vmatprep.subr.bf16.mxu0 0
  %3388 = vmatpush1.bf16.msra.mxu0 0
  %3389 = vmatprep.subr.bf16.mxu0 0
  %3390 = vmatpush1.bf16.msra.mxu0 0
  %3391 = vmatprep.subr.bf16.mxu0 0
  %3392 = vmatpush1.bf16.msra.mxu0 0
  %3393 = vmatprep.subr.bf16.mxu0 0
  %3394 = vmatpush1.bf16.msra.mxu0 0
  %3395 = vmatprep.subr.bf16.mxu0 0
  %3396 = vmatpush1.bf16.msra.mxu0 0
  %3397 = vmatprep.subr.bf16.mxu0 0
  %3398 = vmatpush1.bf16.msra.mxu0 0
  %3399 = vmatprep.subr.bf16.mxu0 0
  %3400 = vmatpush1.bf16.msra.mxu0 0
  %3401 = vmatprep.subr.bf16.mxu0 0
  %3402 = vmatpush1.bf16.msra.mxu0 0
  %3403 = vmatprep.mubr.bf16.mxu0 0
  %3404 = vmatmul.mubr.bf16.gmra.mrb[0].mxu0 %v3207
  %v3405 = vpop.f32.mrb[0].mxu0
  %v3406 = vadd.f32 %v3179, %v3405
  %v3407 = vpop.f32.mrb[0].mxu0
  %v3408 = vadd.f32 %v3179, %v3407
  %v3409 = vpop.f32.mrb[0].mxu0
  %v3410 = vadd.f32 %v3184, %v3409
  %v3411 = vpop.f32.mrb[0].mxu0
  %v3412 = vadd.f32 %v3184, %v3411
  %3413 = vmatprep.mubr.bf16.mxu0 0
  %3414 = vmatmul.mubr.bf16.gmra.mrb[0].mxu0 %v3210
  %v3415 = vpop.f32.mrb[0].mxu0
  %v3416 = vadd.f32 %v3189, %v3415
  %v3417 = vpop.f32.mrb[0].mxu0
  %v3418 = vadd.f32 %v3189, %v3417
  %v3419 = vpop.f32.mrb[0].mxu0
  %v3420 = vadd.f32 %v3194, %v3419
  %v3421 = vpop.f32.mrb[0].mxu0
  %v3422 = vadd.f32 %v3194, %v3421
  %3423 = vdwg.mxu0
  %3424 = vmatprep.subr.bf16.mxu0 %v3129
  %3425 = vmatpush1.bf16.msra.mxu0 %v3128
  %3426 = vmatprep.subr.bf16.mxu0 %v3145
  %3427 = vmatpush1.bf16.msra.mxu0 %v3144
  %3428 = vmatprep.subr.bf16.mxu0 %v3161
  %3429 = vmatpush1.bf16.msra.mxu0 %v3160
  %3430 = vmatprep.subr.bf16.mxu0 0
  %3431 = vmatpush1.bf16.msra.mxu0 0
  %3432 = vmatprep.subr.bf16.mxu0 0
  %3433 = vmatpush1.bf16.msra.mxu0 0
  %3434 = vmatprep.subr.bf16.mxu0 0
  %3435 = vmatpush1.bf16.msra.mxu0 0
  %3436 = vmatprep.subr.bf16.mxu0 0
  %3437 = vmatpush1.bf16.msra.mxu0 0
  %3438 = vmatprep.subr.bf16.mxu0 0
  %3439 = vmatpush1.bf16.msra.mxu0 0
  %3440 = vmatprep.subr.bf16.mxu0 0
  %3441 = vmatpush1.bf16.msra.mxu0 0
  %3442 = vmatprep.subr.bf16.mxu0 0
  %3443 = vmatpush1.bf16.msra.mxu0 0
  %3444 = vmatprep.subr.bf16.mxu0 0
  %3445 = vmatpush1.bf16.msra.mxu0 0
  %3446 = vmatprep.subr.bf16.mxu0 0
  %3447 = vmatpush1.bf16.msra.mxu0 0
  %3448 = vmatprep.subr.bf16.mxu0 0
  %3449 = vmatpush1.bf16.msra.mxu0 0
  %3450 = vmatprep.subr.bf16.mxu0 0
  %3451 = vmatpush1.bf16.msra.mxu0 0
  %3452 = vmatprep.subr.bf16.mxu0 0
  %3453 = vmatpush1.bf16.msra.mxu0 0
  %3454 = vmatprep.subr.bf16.mxu0 0
  %3455 = vmatpush1.bf16.msra.mxu0 0
  %3456 = vmatprep.mubr.bf16.mxu0 0
  %3457 = vmatmul.mubr.bf16.gmra.mrb[0].mxu0 %v3207
  %v3458 = vpop.f32.mrb[0].mxu0
  %v3459 = vadd.f32 %v3179, %v3458
  %v3460 = vpop.f32.mrb[0].mxu0
  %v3461 = vadd.f32 %v3179, %v3460
  %v3462 = vpop.f32.mrb[0].mxu0
  %v3463 = vadd.f32 %v3184, %v3462
  %v3464 = vpop.f32.mrb[0].mxu0
  %v3465 = vadd.f32 %v3184, %v3464
  %3466 = vmatprep.mubr.bf16.mxu0 0
  %3467 = vmatmul.mubr.bf16.gmra.mrb[0].mxu0 %v3210
  %v3468 = vpop.f32.mrb[0].mxu0
  %v3469 = vadd.f32 %v3189, %v3468
  %v3470 = vpop.f32.mrb[0].mxu0
  %v3471 = vadd.f32 %v3189, %v3470
  %v3472 = vpop.f32.mrb[0].mxu0
  %v3473 = vadd.f32 %v3194, %v3472
  %v3474 = vpop.f32.mrb[0].mxu0
  %v3475 = vadd.f32 %v3194, %v3474
  %3476 = vdwg.mxu0
  %3477 = vmatprep.subr.bf16.mxu0 %v3131
  %3478 = vmatpush1.bf16.msra.mxu0 %v3130
  %3479 = vmatprep.subr.bf16.mxu0 %v3147
  %3480 = vmatpush1.bf16.msra.mxu0 %v3146
  %3481 = vmatprep.subr.bf16.mxu0 %v3163
  %3482 = vmatpush1.bf16.msra.mxu0 %v3162
  %3483 = vmatprep.subr.bf16.mxu0 0
  %3484 = vmatpush1.bf16.msra.mxu0 0
  %3485 = vmatprep.subr.bf16.mxu0 0
  %3486 = vmatpush1.bf16.msra.mxu0 0
  %3487 = vmatprep.subr.bf16.mxu0 0
  %3488 = vmatpush1.bf16.msra.mxu0 0
  %3489 = vmatprep.subr.bf16.mxu0 0
  %3490 = vmatpush1.bf16.msra.mxu0 0
  %3491 = vmatprep.subr.bf16.mxu0 0
  %3492 = vmatpush1.bf16.msra.mxu0 0
  %3493 = vmatprep.subr.bf16.mxu0 0
  %3494 = vmatpush1.bf16.msra.mxu0 0
  %3495 = vmatprep.subr.bf16.mxu0 0
  %3496 = vmatpush1.bf16.msra.mxu0 0
  %3497 = vmatprep.subr.bf16.mxu0 0
  %3498 = vmatpush1.bf16.msra.mxu0 0
  %3499 = vmatprep.subr.bf16.mxu0 0
  %3500 = vmatpush1.bf16.msra.mxu0 0
  %3501 = vmatprep.subr.bf16.mxu0 0
  %3502 = vmatpush1.bf16.msra.mxu0 0
  %3503 = vmatprep.subr.bf16.mxu0 0
  %3504 = vmatpush1.bf16.msra.mxu0 0
  %3505 = vmatprep.subr.bf16.mxu0 0
  %3506 = vmatpush1.bf16.msra.mxu0 0
  %3507 = vmatprep.subr.bf16.mxu0 0
  %3508 = vmatpush1.bf16.msra.mxu0 0
  %3509 = vmatprep.mubr.bf16.mxu0 0
  %3510 = vmatmul.mubr.bf16.gmra.mrb[0].mxu0 %v3207
  %v3511 = vpop.f32.mrb[0].mxu0
  %v3512 = vadd.f32 %v3179, %v3511
  %v3513 = vpop.f32.mrb[0].mxu0
  %v3514 = vadd.f32 %v3179, %v3513
  %v3515 = vpop.f32.mrb[0].mxu0
  %v3516 = vadd.f32 %v3184, %v3515
  %v3517 = vpop.f32.mrb[0].mxu0
  %v3518 = vadd.f32 %v3184, %v3517
  %3519 = vmatprep.mubr.bf16.mxu0 0
  %3520 = vmatmul.mubr.bf16.gmra.mrb[0].mxu0 %v3210
  %v3521 = vpop.f32.mrb[0].mxu0
  %v3522 = vadd.f32 %v3189, %v3521
  %v3523 = vpop.f32.mrb[0].mxu0
  %v3524 = vadd.f32 %v3189, %v3523
  %v3525 = vpop.f32.mrb[0].mxu0
  %v3526 = vadd.f32 %v3194, %v3525
  %v3527 = vpop.f32.mrb[0].mxu0
  %v3528 = vadd.f32 %v3194, %v3527
  %3529 = vdwg.mxu0
  %3530 = vmatprep.subr.bf16.mxu0 %v3133
  %3531 = vmatpush1.bf16.msra.mxu0 %v3132
  %3532 = vmatprep.subr.bf16.mxu0 %v3149
  %3533 = vmatpush1.bf16.msra.mxu0 %v3148
  %3534 = vmatprep.subr.bf16.mxu0 %v3165
  %3535 = vmatpush1.bf16.msra.mxu0 %v3164
  %3536 = vmatprep.subr.bf16.mxu0 0
  %3537 = vmatpush1.bf16.msra.mxu0 0
  %3538 = vmatprep.subr.bf16.mxu0 0
  %3539 = vmatpush1.bf16.msra.mxu0 0
  %3540 = vmatprep.subr.bf16.mxu0 0
  %3541 = vmatpush1.bf16.msra.mxu0 0
  %3542 = vmatprep.subr.bf16.mxu0 0
  %3543 = vmatpush1.bf16.msra.mxu0 0
  %3544 = vmatprep.subr.bf16.mxu0 0
  %3545 = vmatpush1.bf16.msra.mxu0 0
  %3546 = vmatprep.subr.bf16.mxu0 0
  %3547 = vmatpush1.bf16.msra.mxu0 0
  %3548 = vmatprep.subr.bf16.mxu0 0
  %3549 = vmatpush1.bf16.msra.mxu0 0
  %3550 = vmatprep.subr.bf16.mxu0 0
  %3551 = vmatpush1.bf16.msra.mxu0 0
  %3552 = vmatprep.subr.bf16.mxu0 0
  %3553 = vmatpush1.bf16.msra.mxu0 0
  %3554 = vmatprep.subr.bf16.mxu0 0
  %3555 = vmatpush1.bf16.msra.mxu0 0
  %3556 = vmatprep.subr.bf16.mxu0 0
  %3557 = vmatpush1.bf16.msra.mxu0 0
  %3558 = vmatprep.subr.bf16.mxu0 0
  %3559 = vmatpush1.bf16.msra.mxu0 0
  %3560 = vmatprep.subr.bf16.mxu0 0
  %3561 = vmatpush1.bf16.msra.mxu0 0
  %3562 = vmatprep.mubr.bf16.mxu0 0
  %3563 = vmatmul.mubr.bf16.gmra.mrb[0].mxu0 %v3207
  %v3564 = vpop.f32.mrb[0].mxu0
  %v3565 = vadd.f32 %v3179, %v3564
  %v3566 = vpop.f32.mrb[0].mxu0
  %v3567 = vadd.f32 %v3179, %v3566
  %v3568 = vpop.f32.mrb[0].mxu0
  %v3569 = vadd.f32 %v3184, %v3568
  %v3570 = vpop.f32.mrb[0].mxu0
  %v3571 = vadd.f32 %v3184, %v3570
  %3572 = vmatprep.mubr.bf16.mxu0 0
  %3573 = vmatmul.mubr.bf16.gmra.mrb[0].mxu0 %v3210
  %v3574 = vpop.f32.mrb[0].mxu0
  %v3575 = vadd.f32 %v3189, %v3574
  %v3576 = vpop.f32.mrb[0].mxu0
  %v3577 = vadd.f32 %v3189, %v3576
  %v3578 = vpop.f32.mrb[0].mxu0
  %v3579 = vadd.f32 %v3194, %v3578
  %v3580 = vpop.f32.mrb[0].mxu0
  %v3581 = vadd.f32 %v3194, %v3580
  %3582 = vdwg.mxu0
  %3583 = vmatprep.subr.bf16.mxu0 %v3135
  %3584 = vmatpush1.bf16.msra.mxu0 %v3134
  %3585 = vmatprep.subr.bf16.mxu0 %v3151
  %3586 = vmatpush1.bf16.msra.mxu0 %v3150
  %3587 = vmatprep.subr.bf16.mxu0 %v3167
  %3588 = vmatpush1.bf16.msra.mxu0 %v3166
  %3589 = vmatprep.subr.bf16.mxu0 0
  %3590 = vmatpush1.bf16.msra.mxu0 0
  %3591 = vmatprep.subr.bf16.mxu0 0
  %3592 = vmatpush1.bf16.msra.mxu0 0
  %3593 = vmatprep.subr.bf16.mxu0 0
  %3594 = vmatpush1.bf16.msra.mxu0 0
  %3595 = vmatprep.subr.bf16.mxu0 0
  %3596 = vmatpush1.bf16.msra.mxu0 0
  %3597 = vmatprep.subr.bf16.mxu0 0
  %3598 = vmatpush1.bf16.msra.mxu0 0
  %3599 = vmatprep.subr.bf16.mxu0 0
  %3600 = vmatpush1.bf16.msra.mxu0 0
  %3601 = vmatprep.subr.bf16.mxu0 0
  %3602 = vmatpush1.bf16.msra.mxu0 0
  %3603 = vmatprep.subr.bf16.mxu0 0
  %3604 = vmatpush1.bf16.msra.mxu0 0
  %3605 = vmatprep.subr.bf16.mxu0 0
  %3606 = vmatpush1.bf16.msra.mxu0 0
  %3607 = vmatprep.subr.bf16.mxu0 0
  %3608 = vmatpush1.bf16.msra.mxu0 0
  %3609 = vmatprep.subr.bf16.mxu0 0
  %3610 = vmatpush1.bf16.msra.mxu0 0
  %3611 = vmatprep.subr.bf16.mxu0 0
  %3612 = vmatpush1.bf16.msra.mxu0 0
  %3613 = vmatprep.subr.bf16.mxu0 0
  %3614 = vmatpush1.bf16.msra.mxu0 0
  %3615 = vmatprep.mubr.bf16.mxu0 0
  %3616 = vmatmul.mubr.bf16.gmra.mrb[0].mxu0 %v3207
  %v3617 = vpop.f32.mrb[0].mxu0
  %v3618 = vadd.f32 %v3179, %v3617
  %v3619 = vpop.f32.mrb[0].mxu0
  %v3620 = vadd.f32 %v3179, %v3619
  %v3621 = vpop.f32.mrb[0].mxu0
  %v3622 = vadd.f32 %v3184, %v3621
  %v3623 = vpop.f32.mrb[0].mxu0
  %v3624 = vadd.f32 %v3184, %v3623
  %3625 = vmatprep.mubr.bf16.mxu0 0
  %3626 = vmatmul.mubr.bf16.gmra.mrb[0].mxu0 %v3210
  %v3627 = vpop.f32.mrb[0].mxu0
  %v3628 = vadd.f32 %v3189, %v3627
  %v3629 = vpop.f32.mrb[0].mxu0
  %v3630 = vadd.f32 %v3189, %v3629
  %v3631 = vpop.f32.mrb[0].mxu0
  %v3632 = vadd.f32 %v3194, %v3631
  %v3633 = vpop.f32.mrb[0].mxu0
  %v3634 = vadd.f32 %v3194, %v3633
  %3635 = vdwg.mxu0
  %v3636 = vmax.f32 %v3247, 0.0
  %v3637 = vmax.f32 %v3249, 0.0
  %v3638 = vmax.f32 %v3300, 0.0
  %v3639 = vmax.f32 %v3302, 0.0
  %v3640 = vmax.f32 %v3353, 0.0
  %v3641 = vmax.f32 %v3355, 0.0
  %v3642 = vmax.f32 %v3406, 0.0
  %v3643 = vmax.f32 %v3408, 0.0
  %v3644 = vmax.f32 %v3459, 0.0
  %v3645 = vmax.f32 %v3461, 0.0
  %v3646 = vmax.f32 %v3512, 0.0
  %v3647 = vmax.f32 %v3514, 0.0
  %v3648 = vmax.f32 %v3565, 0.0
  %v3649 = vmax.f32 %v3567, 0.0
  %v3650 = vmax.f32 %v3618, 0.0
  %v3651 = vmax.f32 %v3620, 0.0
  %v3652 = vmax.f32 %v3251, 0.0
  %v3653 = vmax.f32 %v3253, 0.0
  %v3654 = vmax.f32 %v3304, 0.0
  %v3655 = vmax.f32 %v3306, 0.0
  %v3656 = vmax.f32 %v3357, 0.0
  %v3657 = vmax.f32 %v3359, 0.0
  %v3658 = vmax.f32 %v3410, 0.0
  %v3659 = vmax.f32 %v3412, 0.0
  %v3660 = vmax.f32 %v3463, 0.0
  %v3661 = vmax.f32 %v3465, 0.0
  %v3662 = vmax.f32 %v3516, 0.0
  %v3663 = vmax.f32 %v3518, 0.0
  %v3664 = vmax.f32 %v3569, 0.0
  %v3665 = vmax.f32 %v3571, 0.0
  %v3666 = vmax.f32 %v3622, 0.0
  %v3667 = vmax.f32 %v3624, 0.0
  %v3668 = vmax.f32 %v3257, 0.0
  %v3669 = vmax.f32 %v3259, 0.0
  %v3670 = vmax.f32 %v3310, 0.0
  %v3671 = vmax.f32 %v3312, 0.0
  %v3672 = vmax.f32 %v3363, 0.0
  %v3673 = vmax.f32 %v3365, 0.0
  %v3674 = vmax.f32 %v3416, 0.0
  %v3675 = vmax.f32 %v3418, 0.0
  %v3676 = vmax.f32 %v3469, 0.0
  %v3677 = vmax.f32 %v3471, 0.0
  %v3678 = vmax.f32 %v3522, 0.0
  %v3679 = vmax.f32 %v3524, 0.0
  %v3680 = vmax.f32 %v3575, 0.0
  %v3681 = vmax.f32 %v3577, 0.0
  %v3682 = vmax.f32 %v3628, 0.0
  %v3683 = vmax.f32 %v3630, 0.0
  %v3684 = vmax.f32 %v3261, 0.0
  %v3685 = vmax.f32 %v3263, 0.0
  %v3686 = vmax.f32 %v3314, 0.0
  %v3687 = vmax.f32 %v3316, 0.0
  %v3688 = vmax.f32 %v3367, 0.0
  %v3689 = vmax.f32 %v3369, 0.0
  %v3690 = vmax.f32 %v3420, 0.0
  %v3691 = vmax.f32 %v3422, 0.0
  %v3692 = vmax.f32 %v3473, 0.0
  %v3693 = vmax.f32 %v3475, 0.0
  %v3694 = vmax.f32 %v3526, 0.0
  %v3695 = vmax.f32 %v3528, 0.0
  %v3696 = vmax.f32 %v3579, 0.0
  %v3697 = vmax.f32 %v3581, 0.0
  %v3698 = vmax.f32 %v3632, 0.0
  %v3699 = vmax.f32 %v3634, 0.0
  %3700 = vrot.lane.b32.xlu0 %v3636, 112
  %v3701 = vpop.permute.xlu0 %3700
  %3702 = vrot.lane.b32.xlu0 %v3652, 112
  %v3703 = vpop.permute.xlu0 %3702
  %3704 = vrot.lane.b32.xlu0 %v3668, 112
  %v3705 = vpop.permute.xlu0 %3704
  %3706 = vrot.lane.b32.xlu0 %v3684, 112
  %v3707 = vpop.permute.xlu0 %3706
  %3708 = vrot.lane.b32.xlu0 %v3637, 112
  %v3709 = vpop.permute.xlu0 %3708
  %3710 = vrot.lane.b32.xlu0 %v3653, 112
  %v3711 = vpop.permute.xlu0 %3710
  %3712 = vrot.lane.b32.xlu0 %v3669, 112
  %v3713 = vpop.permute.xlu0 %3712
  %3714 = vrot.lane.b32.xlu0 %v3685, 112
  %v3715 = vpop.permute.xlu0 %3714
  %3716 = vrot.lane.b32.xlu0 %v3638, 112
  %v3717 = vpop.permute.xlu0 %3716
  %3718 = vrot.lane.b32.xlu0 %v3654, 112
  %v3719 = vpop.permute.xlu0 %3718
  %3720 = vrot.lane.b32.xlu0 %v3670, 112
  %v3721 = vpop.permute.xlu0 %3720
  %3722 = vrot.lane.b32.xlu0 %v3686, 112
  %v3723 = vpop.permute.xlu0 %3722
  %3724 = vrot.lane.b32.xlu0 %v3639, 112
  %v3725 = vpop.permute.xlu0 %3724
  %3726 = vrot.lane.b32.xlu0 %v3655, 112
  %v3727 = vpop.permute.xlu0 %3726
  %3728 = vrot.lane.b32.xlu0 %v3671, 112
  %v3729 = vpop.permute.xlu0 %3728
  %3730 = vrot.lane.b32.xlu0 %v3687, 112
  %v3731 = vpop.permute.xlu0 %3730
  %3732 = vrot.lane.b32.xlu0 %v3640, 112
  %v3733 = vpop.permute.xlu0 %3732
  %3734 = vrot.lane.b32.xlu0 %v3656, 112
  %v3735 = vpop.permute.xlu0 %3734
  %3736 = vrot.lane.b32.xlu0 %v3672, 112
  %v3737 = vpop.permute.xlu0 %3736
  %3738 = vrot.lane.b32.xlu0 %v3688, 112
  %v3739 = vpop.permute.xlu0 %3738
  %3740 = vrot.lane.b32.xlu0 %v3641, 112
  %v3741 = vpop.permute.xlu0 %3740
  %3742 = vrot.lane.b32.xlu0 %v3657, 112
  %v3743 = vpop.permute.xlu0 %3742
  %3744 = vrot.lane.b32.xlu0 %v3673, 112
  %v3745 = vpop.permute.xlu0 %3744
  %3746 = vrot.lane.b32.xlu0 %v3689, 112
  %v3747 = vpop.permute.xlu0 %3746
  %3748 = vrot.lane.b32.xlu0 %v3642, 112
  %v3749 = vpop.permute.xlu0 %3748
  %3750 = vrot.lane.b32.xlu0 %v3658, 112
  %v3751 = vpop.permute.xlu0 %3750
  %3752 = vrot.lane.b32.xlu0 %v3674, 112
  %v3753 = vpop.permute.xlu0 %3752
  %3754 = vrot.lane.b32.xlu0 %v3690, 112
  %v3755 = vpop.permute.xlu0 %3754
  %3756 = vrot.lane.b32.xlu0 %v3643, 112
  %v3757 = vpop.permute.xlu0 %3756
  %3758 = vrot.lane.b32.xlu0 %v3659, 112
  %v3759 = vpop.permute.xlu0 %3758
  %3760 = vrot.lane.b32.xlu0 %v3675, 112
  %v3761 = vpop.permute.xlu0 %3760
  %3762 = vrot.lane.b32.xlu0 %v3691, 112
  %v3763 = vpop.permute.xlu0 %3762
  %3764 = vrot.lane.b32.xlu0 %v3644, 112
  %v3765 = vpop.permute.xlu0 %3764
  %3766 = vrot.lane.b32.xlu0 %v3660, 112
  %v3767 = vpop.permute.xlu0 %3766
  %3768 = vrot.lane.b32.xlu0 %v3676, 112
  %v3769 = vpop.permute.xlu0 %3768
  %3770 = vrot.lane.b32.xlu0 %v3692, 112
  %v3771 = vpop.permute.xlu0 %3770
  %3772 = vrot.lane.b32.xlu0 %v3645, 112
  %v3773 = vpop.permute.xlu0 %3772
  %3774 = vrot.lane.b32.xlu0 %v3661, 112
  %v3775 = vpop.permute.xlu0 %3774
  %3776 = vrot.lane.b32.xlu0 %v3677, 112
  %v3777 = vpop.permute.xlu0 %3776
  %3778 = vrot.lane.b32.xlu0 %v3693, 112
  %v3779 = vpop.permute.xlu0 %3778
  %3780 = vrot.lane.b32.xlu0 %v3646, 112
  %v3781 = vpop.permute.xlu0 %3780
  %3782 = vrot.lane.b32.xlu0 %v3662, 112
  %v3783 = vpop.permute.xlu0 %3782
  %3784 = vrot.lane.b32.xlu0 %v3678, 112
  %v3785 = vpop.permute.xlu0 %3784
  %3786 = vrot.lane.b32.xlu0 %v3694, 112
  %v3787 = vpop.permute.xlu0 %3786
  %3788 = vrot.lane.b32.xlu0 %v3647, 112
  %v3789 = vpop.permute.xlu0 %3788
  %3790 = vrot.lane.b32.xlu0 %v3663, 112
  %v3791 = vpop.permute.xlu0 %3790
  %3792 = vrot.lane.b32.xlu0 %v3679, 112
  %v3793 = vpop.permute.xlu0 %3792
  %3794 = vrot.lane.b32.xlu0 %v3695, 112
  %v3795 = vpop.permute.xlu0 %3794
  %3796 = vrot.lane.b32.xlu0 %v3648, 112
  %v3797 = vpop.permute.xlu0 %3796
  %3798 = vrot.lane.b32.xlu0 %v3664, 112
  %v3799 = vpop.permute.xlu0 %3798
  %3800 = vrot.lane.b32.xlu0 %v3680, 112
  %v3801 = vpop.permute.xlu0 %3800
  %3802 = vrot.lane.b32.xlu0 %v3696, 112
  %v3803 = vpop.permute.xlu0 %3802
  %3804 = vrot.lane.b32.xlu0 %v3649, 112
  %v3805 = vpop.permute.xlu0 %3804
  %3806 = vrot.lane.b32.xlu0 %v3665, 112
  %v3807 = vpop.permute.xlu0 %3806
  %3808 = vrot.lane.b32.xlu0 %v3681, 112
  %v3809 = vpop.permute.xlu0 %3808
  %3810 = vrot.lane.b32.xlu0 %v3697, 112
  %v3811 = vpop.permute.xlu0 %3810
  %3812 = vrot.lane.b32.xlu0 %v3650, 112
  %v3813 = vpop.permute.xlu0 %3812
  %3814 = vrot.lane.b32.xlu0 %v3666, 112
  %v3815 = vpop.permute.xlu0 %3814
  %3816 = vrot.lane.b32.xlu0 %v3682, 112
  %v3817 = vpop.permute.xlu0 %3816
  %3818 = vrot.lane.b32.xlu0 %v3698, 112
  %v3819 = vpop.permute.xlu0 %3818
  %3820 = vrot.lane.b32.xlu0 %v3651, 112
  %v3821 = vpop.permute.xlu0 %3820
  %3822 = vrot.lane.b32.xlu0 %v3667, 112
  %v3823 = vpop.permute.xlu0 %3822
  %3824 = vrot.lane.b32.xlu0 %v3683, 112
  %v3825 = vpop.permute.xlu0 %3824
  %3826 = vrot.lane.b32.xlu0 %v3699, 112
  %v3827 = vpop.permute.xlu0 %3826
  %v3828 = vsel %vm751, %v3813, %v3821
  %v3829 = vsel %vm751, %v3815, %v3823
  %v3830 = vsel %vm751, %v3817, %v3825
  %v3831 = vsel %vm751, %v3819, %v3827
  %v3832 = vsel %vm751, %v3805, %v3813
  %v3833 = vsel %vm751, %v3807, %v3815
  %v3834 = vsel %vm751, %v3809, %v3817
  %v3835 = vsel %vm751, %v3811, %v3819
  %v3836 = vsel %vm751, %v3797, %v3805
  %v3837 = vsel %vm751, %v3799, %v3807
  %v3838 = vsel %vm751, %v3801, %v3809
  %v3839 = vsel %vm751, %v3803, %v3811
  %v3840 = vsel %vm751, %v3789, %v3797
  %v3841 = vsel %vm751, %v3791, %v3799
  %v3842 = vsel %vm751, %v3793, %v3801
  %v3843 = vsel %vm751, %v3795, %v3803
  %v3844 = vsel %vm751, %v3781, %v3789
  %v3845 = vsel %vm751, %v3783, %v3791
  %v3846 = vsel %vm751, %v3785, %v3793
  %v3847 = vsel %vm751, %v3787, %v3795
  %v3848 = vsel %vm751, %v3773, %v3781
  %v3849 = vsel %vm751, %v3775, %v3783
  %v3850 = vsel %vm751, %v3777, %v3785
  %v3851 = vsel %vm751, %v3779, %v3787
  %v3852 = vsel %vm751, %v3765, %v3773
  %v3853 = vsel %vm751, %v3767, %v3775
  %v3854 = vsel %vm751, %v3769, %v3777
  %v3855 = vsel %vm751, %v3771, %v3779
  %v3856 = vsel %vm751, %v3757, %v3765
  %v3857 = vsel %vm751, %v3759, %v3767
  %v3858 = vsel %vm751, %v3761, %v3769
  %v3859 = vsel %vm751, %v3763, %v3771
  %v3860 = vsel %vm751, %v3749, %v3757
  %v3861 = vsel %vm751, %v3751, %v3759
  %v3862 = vsel %vm751, %v3753, %v3761
  %v3863 = vsel %vm751, %v3755, %v3763
  %v3864 = vsel %vm751, %v3741, %v3749
  %v3865 = vsel %vm751, %v3743, %v3751
  %v3866 = vsel %vm751, %v3745, %v3753
  %v3867 = vsel %vm751, %v3747, %v3755
  %v3868 = vsel %vm751, %v3733, %v3741
  %v3869 = vsel %vm751, %v3735, %v3743
  %v3870 = vsel %vm751, %v3737, %v3745
  %v3871 = vsel %vm751, %v3739, %v3747
  %v3872 = vsel %vm751, %v3725, %v3733
  %v3873 = vsel %vm751, %v3727, %v3735
  %v3874 = vsel %vm751, %v3729, %v3737
  %v3875 = vsel %vm751, %v3731, %v3739
  %v3876 = vsel %vm751, %v3717, %v3725
  %v3877 = vsel %vm751, %v3719, %v3727
  %v3878 = vsel %vm751, %v3721, %v3729
  %v3879 = vsel %vm751, %v3723, %v3731
  %v3880 = vsel %vm751, %v3709, %v3717
  %v3881 = vsel %vm751, %v3711, %v3719
  %v3882 = vsel %vm751, %v3713, %v3721
  %v3883 = vsel %vm751, %v3715, %v3723
  %v3884 = vsel %vm751, %v3701, %v3709
  %v3885 = vsel %vm751, %v3703, %v3711
  %v3886 = vsel %vm751, %v3705, %v3713
  %v3887 = vsel %vm751, %v3707, %v3715
  %v3888 = vsel %vm751, %v3821, %v3701
  %v3889 = vsel %vm751, %v3823, %v3703
  %v3890 = vsel %vm751, %v3825, %v3705
  %v3891 = vsel %vm751, %v3827, %v3707
  %3892 = vrot.lane.b32.xlu0 %v3636, 96
  %v3893 = vpop.permute.xlu0 %3892
  %3894 = vrot.lane.b32.xlu0 %v3652, 96
  %v3895 = vpop.permute.xlu0 %3894
  %3896 = vrot.lane.b32.xlu0 %v3668, 96
  %v3897 = vpop.permute.xlu0 %3896
  %3898 = vrot.lane.b32.xlu0 %v3684, 96
  %v3899 = vpop.permute.xlu0 %3898
  %3900 = vrot.lane.b32.xlu0 %v3637, 96
  %v3901 = vpop.permute.xlu0 %3900
  %3902 = vrot.lane.b32.xlu0 %v3653, 96
  %v3903 = vpop.permute.xlu0 %3902
  %3904 = vrot.lane.b32.xlu0 %v3669, 96
  %v3905 = vpop.permute.xlu0 %3904
  %3906 = vrot.lane.b32.xlu0 %v3685, 96
  %v3907 = vpop.permute.xlu0 %3906
  %3908 = vrot.lane.b32.xlu0 %v3638, 96
  %v3909 = vpop.permute.xlu0 %3908
  %3910 = vrot.lane.b32.xlu0 %v3654, 96
  %v3911 = vpop.permute.xlu0 %3910
  %3912 = vrot.lane.b32.xlu0 %v3670, 96
  %v3913 = vpop.permute.xlu0 %3912
  %3914 = vrot.lane.b32.xlu0 %v3686, 96
  %v3915 = vpop.permute.xlu0 %3914
  %3916 = vrot.lane.b32.xlu0 %v3639, 96
  %v3917 = vpop.permute.xlu0 %3916
  %3918 = vrot.lane.b32.xlu0 %v3655, 96
  %v3919 = vpop.permute.xlu0 %3918
  %3920 = vrot.lane.b32.xlu0 %v3671, 96
  %v3921 = vpop.permute.xlu0 %3920
  %3922 = vrot.lane.b32.xlu0 %v3687, 96
  %v3923 = vpop.permute.xlu0 %3922
  %3924 = vrot.lane.b32.xlu0 %v3640, 96
  %v3925 = vpop.permute.xlu0 %3924
  %3926 = vrot.lane.b32.xlu0 %v3656, 96
  %v3927 = vpop.permute.xlu0 %3926
  %3928 = vrot.lane.b32.xlu0 %v3672, 96
  %v3929 = vpop.permute.xlu0 %3928
  %3930 = vrot.lane.b32.xlu0 %v3688, 96
  %v3931 = vpop.permute.xlu0 %3930
  %3932 = vrot.lane.b32.xlu0 %v3641, 96
  %v3933 = vpop.permute.xlu0 %3932
  %3934 = vrot.lane.b32.xlu0 %v3657, 96
  %v3935 = vpop.permute.xlu0 %3934
  %3936 = vrot.lane.b32.xlu0 %v3673, 96
  %v3937 = vpop.permute.xlu0 %3936
  %3938 = vrot.lane.b32.xlu0 %v3689, 96
  %v3939 = vpop.permute.xlu0 %3938
  %3940 = vrot.lane.b32.xlu0 %v3642, 96
  %v3941 = vpop.permute.xlu0 %3940
  %3942 = vrot.lane.b32.xlu0 %v3658, 96
  %v3943 = vpop.permute.xlu0 %3942
  %3944 = vrot.lane.b32.xlu0 %v3674, 96
  %v3945 = vpop.permute.xlu0 %3944
  %3946 = vrot.lane.b32.xlu0 %v3690, 96
  %v3947 = vpop.permute.xlu0 %3946
  %3948 = vrot.lane.b32.xlu0 %v3643, 96
  %v3949 = vpop.permute.xlu0 %3948
  %3950 = vrot.lane.b32.xlu0 %v3659, 96
  %v3951 = vpop.permute.xlu0 %3950
  %3952 = vrot.lane.b32.xlu0 %v3675, 96
  %v3953 = vpop.permute.xlu0 %3952
  %3954 = vrot.lane.b32.xlu0 %v3691, 96
  %v3955 = vpop.permute.xlu0 %3954
  %3956 = vrot.lane.b32.xlu0 %v3644, 96
  %v3957 = vpop.permute.xlu0 %3956
  %3958 = vrot.lane.b32.xlu0 %v3660, 96
  %v3959 = vpop.permute.xlu0 %3958
  %3960 = vrot.lane.b32.xlu0 %v3676, 96
  %v3961 = vpop.permute.xlu0 %3960
  %3962 = vrot.lane.b32.xlu0 %v3692, 96
  %v3963 = vpop.permute.xlu0 %3962
  %3964 = vrot.lane.b32.xlu0 %v3645, 96
  %v3965 = vpop.permute.xlu0 %3964
  %3966 = vrot.lane.b32.xlu0 %v3661, 96
  %v3967 = vpop.permute.xlu0 %3966
  %3968 = vrot.lane.b32.xlu0 %v3677, 96
  %v3969 = vpop.permute.xlu0 %3968
  %3970 = vrot.lane.b32.xlu0 %v3693, 96
  %v3971 = vpop.permute.xlu0 %3970
  %3972 = vrot.lane.b32.xlu0 %v3646, 96
  %v3973 = vpop.permute.xlu0 %3972
  %3974 = vrot.lane.b32.xlu0 %v3662, 96
  %v3975 = vpop.permute.xlu0 %3974
  %3976 = vrot.lane.b32.xlu0 %v3678, 96
  %v3977 = vpop.permute.xlu0 %3976
  %3978 = vrot.lane.b32.xlu0 %v3694, 96
  %v3979 = vpop.permute.xlu0 %3978
  %3980 = vrot.lane.b32.xlu0 %v3647, 96
  %v3981 = vpop.permute.xlu0 %3980
  %3982 = vrot.lane.b32.xlu0 %v3663, 96
  %v3983 = vpop.permute.xlu0 %3982
  %3984 = vrot.lane.b32.xlu0 %v3679, 96
  %v3985 = vpop.permute.xlu0 %3984
  %3986 = vrot.lane.b32.xlu0 %v3695, 96
  %v3987 = vpop.permute.xlu0 %3986
  %3988 = vrot.lane.b32.xlu0 %v3648, 96
  %v3989 = vpop.permute.xlu0 %3988
  %3990 = vrot.lane.b32.xlu0 %v3664, 96
  %v3991 = vpop.permute.xlu0 %3990
  %3992 = vrot.lane.b32.xlu0 %v3680, 96
  %v3993 = vpop.permute.xlu0 %3992
  %3994 = vrot.lane.b32.xlu0 %v3696, 96
  %v3995 = vpop.permute.xlu0 %3994
  %3996 = vrot.lane.b32.xlu0 %v3649, 96
  %v3997 = vpop.permute.xlu0 %3996
  %3998 = vrot.lane.b32.xlu0 %v3665, 96
  %v3999 = vpop.permute.xlu0 %3998
  %4000 = vrot.lane.b32.xlu0 %v3681, 96
  %v4001 = vpop.permute.xlu0 %4000
  %4002 = vrot.lane.b32.xlu0 %v3697, 96
  %v4003 = vpop.permute.xlu0 %4002
  %4004 = vrot.lane.b32.xlu0 %v3650, 96
  %v4005 = vpop.permute.xlu0 %4004
  %4006 = vrot.lane.b32.xlu0 %v3666, 96
  %v4007 = vpop.permute.xlu0 %4006
  %4008 = vrot.lane.b32.xlu0 %v3682, 96
  %v4009 = vpop.permute.xlu0 %4008
  %4010 = vrot.lane.b32.xlu0 %v3698, 96
  %v4011 = vpop.permute.xlu0 %4010
  %4012 = vrot.lane.b32.xlu0 %v3651, 96
  %v4013 = vpop.permute.xlu0 %4012
  %4014 = vrot.lane.b32.xlu0 %v3667, 96
  %v4015 = vpop.permute.xlu0 %4014
  %4016 = vrot.lane.b32.xlu0 %v3683, 96
  %v4017 = vpop.permute.xlu0 %4016
  %4018 = vrot.lane.b32.xlu0 %v3699, 96
  %v4019 = vpop.permute.xlu0 %4018
  %vm4020 = vcmp.lt.s32.totalorder %v48, 96
  %v4021 = vsel %vm4020, %v4005, %v4013
  %v4022 = vsel %vm4020, %v4007, %v4015
  %v4023 = vsel %vm4020, %v4009, %v4017
  %v4024 = vsel %vm4020, %v4011, %v4019
  %v4025 = vsel %vm4020, %v3997, %v4005
  %v4026 = vsel %vm4020, %v3999, %v4007
  %v4027 = vsel %vm4020, %v4001, %v4009
  %v4028 = vsel %vm4020, %v4003, %v4011
  %v4029 = vsel %vm4020, %v3989, %v3997
  %v4030 = vsel %vm4020, %v3991, %v3999
  %v4031 = vsel %vm4020, %v3993, %v4001
  %v4032 = vsel %vm4020, %v3995, %v4003
  %v4033 = vsel %vm4020, %v3981, %v3989
  %v4034 = vsel %vm4020, %v3983, %v3991
  %v4035 = vsel %vm4020, %v3985, %v3993
  %v4036 = vsel %vm4020, %v3987, %v3995
  %v4037 = vsel %vm4020, %v3973, %v3981
  %v4038 = vsel %vm4020, %v3975, %v3983
  %v4039 = vsel %vm4020, %v3977, %v3985
  %v4040 = vsel %vm4020, %v3979, %v3987
  %v4041 = vsel %vm4020, %v3965, %v3973
  %v4042 = vsel %vm4020, %v3967, %v3975
  %v4043 = vsel %vm4020, %v3969, %v3977
  %v4044 = vsel %vm4020, %v3971, %v3979
  %v4045 = vsel %vm4020, %v3957, %v3965
  %v4046 = vsel %vm4020, %v3959, %v3967
  %v4047 = vsel %vm4020, %v3961, %v3969
  %v4048 = vsel %vm4020, %v3963, %v3971
  %v4049 = vsel %vm4020, %v3949, %v3957
  %v4050 = vsel %vm4020, %v3951, %v3959
  %v4051 = vsel %vm4020, %v3953, %v3961
  %v4052 = vsel %vm4020, %v3955, %v3963
  %v4053 = vsel %vm4020, %v3941, %v3949
  %v4054 = vsel %vm4020, %v3943, %v3951
  %v4055 = vsel %vm4020, %v3945, %v3953
  %v4056 = vsel %vm4020, %v3947, %v3955
  %v4057 = vsel %vm4020, %v3933, %v3941
  %v4058 = vsel %vm4020, %v3935, %v3943
  %v4059 = vsel %vm4020, %v3937, %v3945
  %v4060 = vsel %vm4020, %v3939, %v3947
  %v4061 = vsel %vm4020, %v3925, %v3933
  %v4062 = vsel %vm4020, %v3927, %v3935
  %v4063 = vsel %vm4020, %v3929, %v3937
  %v4064 = vsel %vm4020, %v3931, %v3939
  %v4065 = vsel %vm4020, %v3917, %v3925
  %v4066 = vsel %vm4020, %v3919, %v3927
  %v4067 = vsel %vm4020, %v3921, %v3929
  %v4068 = vsel %vm4020, %v3923, %v3931
  %v4069 = vsel %vm4020, %v3909, %v3917
  %v4070 = vsel %vm4020, %v3911, %v3919
  %v4071 = vsel %vm4020, %v3913, %v3921
  %v4072 = vsel %vm4020, %v3915, %v3923
  %v4073 = vsel %vm4020, %v3901, %v3909
  %v4074 = vsel %vm4020, %v3903, %v3911
  %v4075 = vsel %vm4020, %v3905, %v3913
  %v4076 = vsel %vm4020, %v3907, %v3915
  %v4077 = vsel %vm4020, %v3893, %v3901
  %v4078 = vsel %vm4020, %v3895, %v3903
  %v4079 = vsel %vm4020, %v3897, %v3905
  %v4080 = vsel %vm4020, %v3899, %v3907
  %v4081 = vsel %vm4020, %v4013, %v3893
  %v4082 = vsel %vm4020, %v4015, %v3895
  %v4083 = vsel %vm4020, %v4017, %v3897
  %v4084 = vsel %vm4020, %v4019, %v3899
  %4085 = vrot.lane.b32.xlu0 %v3636, 80
  %v4086 = vpop.permute.xlu0 %4085
  %4087 = vrot.lane.b32.xlu0 %v3652, 80
  %v4088 = vpop.permute.xlu0 %4087
  %4089 = vrot.lane.b32.xlu0 %v3668, 80
  %v4090 = vpop.permute.xlu0 %4089
  %4091 = vrot.lane.b32.xlu0 %v3684, 80
  %v4092 = vpop.permute.xlu0 %4091
  %4093 = vrot.lane.b32.xlu0 %v3637, 80
  %v4094 = vpop.permute.xlu0 %4093
  %4095 = vrot.lane.b32.xlu0 %v3653, 80
  %v4096 = vpop.permute.xlu0 %4095
  %4097 = vrot.lane.b32.xlu0 %v3669, 80
  %v4098 = vpop.permute.xlu0 %4097
  %4099 = vrot.lane.b32.xlu0 %v3685, 80
  %v4100 = vpop.permute.xlu0 %4099
  %4101 = vrot.lane.b32.xlu0 %v3638, 80
  %v4102 = vpop.permute.xlu0 %4101
  %4103 = vrot.lane.b32.xlu0 %v3654, 80
  %v4104 = vpop.permute.xlu0 %4103
  %4105 = vrot.lane.b32.xlu0 %v3670, 80
  %v4106 = vpop.permute.xlu0 %4105
  %4107 = vrot.lane.b32.xlu0 %v3686, 80
  %v4108 = vpop.permute.xlu0 %4107
  %4109 = vrot.lane.b32.xlu0 %v3639, 80
  %v4110 = vpop.permute.xlu0 %4109
  %4111 = vrot.lane.b32.xlu0 %v3655, 80
  %v4112 = vpop.permute.xlu0 %4111
  %4113 = vrot.lane.b32.xlu0 %v3671, 80
  %v4114 = vpop.permute.xlu0 %4113
  %4115 = vrot.lane.b32.xlu0 %v3687, 80
  %v4116 = vpop.permute.xlu0 %4115
  %4117 = vrot.lane.b32.xlu0 %v3640, 80
  %v4118 = vpop.permute.xlu0 %4117
  %4119 = vrot.lane.b32.xlu0 %v3656, 80
  %v4120 = vpop.permute.xlu0 %4119
  %4121 = vrot.lane.b32.xlu0 %v3672, 80
  %v4122 = vpop.permute.xlu0 %4121
  %4123 = vrot.lane.b32.xlu0 %v3688, 80
  %v4124 = vpop.permute.xlu0 %4123
  %4125 = vrot.lane.b32.xlu0 %v3641, 80
  %v4126 = vpop.permute.xlu0 %4125
  %4127 = vrot.lane.b32.xlu0 %v3657, 80
  %v4128 = vpop.permute.xlu0 %4127
  %4129 = vrot.lane.b32.xlu0 %v3673, 80
  %v4130 = vpop.permute.xlu0 %4129
  %4131 = vrot.lane.b32.xlu0 %v3689, 80
  %v4132 = vpop.permute.xlu0 %4131
  %4133 = vrot.lane.b32.xlu0 %v3642, 80
  %v4134 = vpop.permute.xlu0 %4133
  %4135 = vrot.lane.b32.xlu0 %v3658, 80
  %v4136 = vpop.permute.xlu0 %4135
  %4137 = vrot.lane.b32.xlu0 %v3674, 80
  %v4138 = vpop.permute.xlu0 %4137
  %4139 = vrot.lane.b32.xlu0 %v3690, 80
  %v4140 = vpop.permute.xlu0 %4139
  %4141 = vrot.lane.b32.xlu0 %v3643, 80
  %v4142 = vpop.permute.xlu0 %4141
  %4143 = vrot.lane.b32.xlu0 %v3659, 80
  %v4144 = vpop.permute.xlu0 %4143
  %4145 = vrot.lane.b32.xlu0 %v3675, 80
  %v4146 = vpop.permute.xlu0 %4145
  %4147 = vrot.lane.b32.xlu0 %v3691, 80
  %v4148 = vpop.permute.xlu0 %4147
  %4149 = vrot.lane.b32.xlu0 %v3644, 80
  %v4150 = vpop.permute.xlu0 %4149
  %4151 = vrot.lane.b32.xlu0 %v3660, 80
  %v4152 = vpop.permute.xlu0 %4151
  %4153 = vrot.lane.b32.xlu0 %v3676, 80
  %v4154 = vpop.permute.xlu0 %4153
  %4155 = vrot.lane.b32.xlu0 %v3692, 80
  %v4156 = vpop.permute.xlu0 %4155
  %4157 = vrot.lane.b32.xlu0 %v3645, 80
  %v4158 = vpop.permute.xlu0 %4157
  %4159 = vrot.lane.b32.xlu0 %v3661, 80
  %v4160 = vpop.permute.xlu0 %4159
  %4161 = vrot.lane.b32.xlu0 %v3677, 80
  %v4162 = vpop.permute.xlu0 %4161
  %4163 = vrot.lane.b32.xlu0 %v3693, 80
  %v4164 = vpop.permute.xlu0 %4163
  %4165 = vrot.lane.b32.xlu0 %v3646, 80
  %v4166 = vpop.permute.xlu0 %4165
  %4167 = vrot.lane.b32.xlu0 %v3662, 80
  %v4168 = vpop.permute.xlu0 %4167
  %4169 = vrot.lane.b32.xlu0 %v3678, 80
  %v4170 = vpop.permute.xlu0 %4169
  %4171 = vrot.lane.b32.xlu0 %v3694, 80
  %v4172 = vpop.permute.xlu0 %4171
  %4173 = vrot.lane.b32.xlu0 %v3647, 80
  %v4174 = vpop.permute.xlu0 %4173
  %4175 = vrot.lane.b32.xlu0 %v3663, 80
  %v4176 = vpop.permute.xlu0 %4175
  %4177 = vrot.lane.b32.xlu0 %v3679, 80
  %v4178 = vpop.permute.xlu0 %4177
  %4179 = vrot.lane.b32.xlu0 %v3695, 80
  %v4180 = vpop.permute.xlu0 %4179
  %4181 = vrot.lane.b32.xlu0 %v3648, 80
  %v4182 = vpop.permute.xlu0 %4181
  %4183 = vrot.lane.b32.xlu0 %v3664, 80
  %v4184 = vpop.permute.xlu0 %4183
  %4185 = vrot.lane.b32.xlu0 %v3680, 80
  %v4186 = vpop.permute.xlu0 %4185
  %4187 = vrot.lane.b32.xlu0 %v3696, 80
  %v4188 = vpop.permute.xlu0 %4187
  %4189 = vrot.lane.b32.xlu0 %v3649, 80
  %v4190 = vpop.permute.xlu0 %4189
  %4191 = vrot.lane.b32.xlu0 %v3665, 80
  %v4192 = vpop.permute.xlu0 %4191
  %4193 = vrot.lane.b32.xlu0 %v3681, 80
  %v4194 = vpop.permute.xlu0 %4193
  %4195 = vrot.lane.b32.xlu0 %v3697, 80
  %v4196 = vpop.permute.xlu0 %4195
  %4197 = vrot.lane.b32.xlu0 %v3650, 80
  %v4198 = vpop.permute.xlu0 %4197
  %4199 = vrot.lane.b32.xlu0 %v3666, 80
  %v4200 = vpop.permute.xlu0 %4199
  %4201 = vrot.lane.b32.xlu0 %v3682, 80
  %v4202 = vpop.permute.xlu0 %4201
  %4203 = vrot.lane.b32.xlu0 %v3698, 80
  %v4204 = vpop.permute.xlu0 %4203
  %4205 = vrot.lane.b32.xlu0 %v3651, 80
  %v4206 = vpop.permute.xlu0 %4205
  %4207 = vrot.lane.b32.xlu0 %v3667, 80
  %v4208 = vpop.permute.xlu0 %4207
  %4209 = vrot.lane.b32.xlu0 %v3683, 80
  %v4210 = vpop.permute.xlu0 %4209
  %4211 = vrot.lane.b32.xlu0 %v3699, 80
  %v4212 = vpop.permute.xlu0 %4211
  %vm4213 = vcmp.lt.s32.totalorder %v48, 80
  %v4214 = vsel %vm4213, %v4198, %v4206
  %v4215 = vsel %vm4213, %v4200, %v4208
  %v4216 = vsel %vm4213, %v4202, %v4210
  %v4217 = vsel %vm4213, %v4204, %v4212
  %v4218 = vsel %vm4213, %v4190, %v4198
  %v4219 = vsel %vm4213, %v4192, %v4200
  %v4220 = vsel %vm4213, %v4194, %v4202
  %v4221 = vsel %vm4213, %v4196, %v4204
  %v4222 = vsel %vm4213, %v4182, %v4190
  %v4223 = vsel %vm4213, %v4184, %v4192
  %v4224 = vsel %vm4213, %v4186, %v4194
  %v4225 = vsel %vm4213, %v4188, %v4196
  %v4226 = vsel %vm4213, %v4174, %v4182
  %v4227 = vsel %vm4213, %v4176, %v4184
  %v4228 = vsel %vm4213, %v4178, %v4186
  %v4229 = vsel %vm4213, %v4180, %v4188
  %v4230 = vsel %vm4213, %v4166, %v4174
  %v4231 = vsel %vm4213, %v4168, %v4176
  %v4232 = vsel %vm4213, %v4170, %v4178
  %v4233 = vsel %vm4213, %v4172, %v4180
  %v4234 = vsel %vm4213, %v4158, %v4166
  %v4235 = vsel %vm4213, %v4160, %v4168
  %v4236 = vsel %vm4213, %v4162, %v4170
  %v4237 = vsel %vm4213, %v4164, %v4172
  %v4238 = vsel %vm4213, %v4150, %v4158
  %v4239 = vsel %vm4213, %v4152, %v4160
  %v4240 = vsel %vm4213, %v4154, %v4162
  %v4241 = vsel %vm4213, %v4156, %v4164
  %v4242 = vsel %vm4213, %v4142, %v4150
  %v4243 = vsel %vm4213, %v4144, %v4152
  %v4244 = vsel %vm4213, %v4146, %v4154
  %v4245 = vsel %vm4213, %v4148, %v4156
  %v4246 = vsel %vm4213, %v4134, %v4142
  %v4247 = vsel %vm4213, %v4136, %v4144
  %v4248 = vsel %vm4213, %v4138, %v4146
  %v4249 = vsel %vm4213, %v4140, %v4148
  %v4250 = vsel %vm4213, %v4126, %v4134
  %v4251 = vsel %vm4213, %v4128, %v4136
  %v4252 = vsel %vm4213, %v4130, %v4138
  %v4253 = vsel %vm4213, %v4132, %v4140
  %v4254 = vsel %vm4213, %v4118, %v4126
  %v4255 = vsel %vm4213, %v4120, %v4128
  %v4256 = vsel %vm4213, %v4122, %v4130
  %v4257 = vsel %vm4213, %v4124, %v4132
  %v4258 = vsel %vm4213, %v4110, %v4118
  %v4259 = vsel %vm4213, %v4112, %v4120
  %v4260 = vsel %vm4213, %v4114, %v4122
  %v4261 = vsel %vm4213, %v4116, %v4124
  %v4262 = vsel %vm4213, %v4102, %v4110
  %v4263 = vsel %vm4213, %v4104, %v4112
  %v4264 = vsel %vm4213, %v4106, %v4114
  %v4265 = vsel %vm4213, %v4108, %v4116
  %v4266 = vsel %vm4213, %v4094, %v4102
  %v4267 = vsel %vm4213, %v4096, %v4104
  %v4268 = vsel %vm4213, %v4098, %v4106
  %v4269 = vsel %vm4213, %v4100, %v4108
  %v4270 = vsel %vm4213, %v4086, %v4094
  %v4271 = vsel %vm4213, %v4088, %v4096
  %v4272 = vsel %vm4213, %v4090, %v4098
  %v4273 = vsel %vm4213, %v4092, %v4100
  %v4274 = vsel %vm4213, %v4206, %v4086
  %v4275 = vsel %vm4213, %v4208, %v4088
  %v4276 = vsel %vm4213, %v4210, %v4090
  %v4277 = vsel %vm4213, %v4212, %v4092
  %v4278 = vmax.f32 %v3636, %v3884
  %v4279 = vmax.f32 %v3637, %v3880
  %v4280 = vmax.f32 %v3638, %v3876
  %v4281 = vmax.f32 %v3639, %v3872
  %v4282 = vmax.f32 %v3640, %v3868
  %v4283 = vmax.f32 %v3641, %v3864
  %v4284 = vmax.f32 %v3642, %v3860
  %v4285 = vmax.f32 %v3643, %v3856
  %v4286 = vmax.f32 %v3644, %v3852
  %v4287 = vmax.f32 %v3645, %v3848
  %v4288 = vmax.f32 %v3646, %v3844
  %v4289 = vmax.f32 %v3647, %v3840
  %v4290 = vmax.f32 %v3648, %v3836
  %v4291 = vmax.f32 %v3649, %v3832
  %v4292 = vmax.f32 %v3650, %v3828
  %v4293 = vmax.f32 %v3651, %v3888
  %v4294 = vmax.f32 %v3652, %v3885
  %v4295 = vmax.f32 %v3653, %v3881
  %v4296 = vmax.f32 %v3654, %v3877
  %v4297 = vmax.f32 %v3655, %v3873
  %v4298 = vmax.f32 %v3656, %v3869
  %v4299 = vmax.f32 %v3657, %v3865
  %v4300 = vmax.f32 %v3658, %v3861
  %v4301 = vmax.f32 %v3659, %v3857
  %v4302 = vmax.f32 %v3660, %v3853
  %v4303 = vmax.f32 %v3661, %v3849
  %v4304 = vmax.f32 %v3662, %v3845
  %v4305 = vmax.f32 %v3663, %v3841
  %v4306 = vmax.f32 %v3664, %v3837
  %v4307 = vmax.f32 %v3665, %v3833
  %v4308 = vmax.f32 %v3666, %v3829
  %v4309 = vmax.f32 %v3667, %v3889
  %v4310 = vmax.f32 %v3668, %v3886
  %v4311 = vmax.f32 %v3669, %v3882
  %v4312 = vmax.f32 %v3670, %v3878
  %v4313 = vmax.f32 %v3671, %v3874
  %v4314 = vmax.f32 %v3672, %v3870
  %v4315 = vmax.f32 %v3673, %v3866
  %v4316 = vmax.f32 %v3674, %v3862
  %v4317 = vmax.f32 %v3675, %v3858
  %v4318 = vmax.f32 %v3676, %v3854
  %v4319 = vmax.f32 %v3677, %v3850
  %v4320 = vmax.f32 %v3678, %v3846
  %v4321 = vmax.f32 %v3679, %v3842
  %v4322 = vmax.f32 %v3680, %v3838
  %v4323 = vmax.f32 %v3681, %v3834
  %v4324 = vmax.f32 %v3682, %v3830
  %v4325 = vmax.f32 %v3683, %v3890
  %v4326 = vmax.f32 %v3684, %v3887
  %v4327 = vmax.f32 %v3685, %v3883
  %v4328 = vmax.f32 %v3686, %v3879
  %v4329 = vmax.f32 %v3687, %v3875
  %v4330 = vmax.f32 %v3688, %v3871
  %v4331 = vmax.f32 %v3689, %v3867
  %v4332 = vmax.f32 %v3690, %v3863
  %v4333 = vmax.f32 %v3691, %v3859
  %v4334 = vmax.f32 %v3692, %v3855
  %v4335 = vmax.f32 %v3693, %v3851
  %v4336 = vmax.f32 %v3694, %v3847
  %v4337 = vmax.f32 %v3695, %v3843
  %v4338 = vmax.f32 %v3696, %v3839
  %v4339 = vmax.f32 %v3697, %v3835
  %v4340 = vmax.f32 %v3698, %v3831
  %v4341 = vmax.f32 %v3699, %v3891
  %v4342 = vmax.f32 %v4077, %v4270
  %v4343 = vmax.f32 %v4073, %v4266
  %v4344 = vmax.f32 %v4069, %v4262
  %v4345 = vmax.f32 %v4065, %v4258
  %v4346 = vmax.f32 %v4061, %v4254
  %v4347 = vmax.f32 %v4057, %v4250
  %v4348 = vmax.f32 %v4053, %v4246
  %v4349 = vmax.f32 %v4049, %v4242
  %v4350 = vmax.f32 %v4045, %v4238
  %v4351 = vmax.f32 %v4041, %v4234
  %v4352 = vmax.f32 %v4037, %v4230
  %v4353 = vmax.f32 %v4033, %v4226
  %v4354 = vmax.f32 %v4029, %v4222
  %v4355 = vmax.f32 %v4025, %v4218
  %v4356 = vmax.f32 %v4021, %v4214
  %v4357 = vmax.f32 %v4081, %v4274
  %v4358 = vmax.f32 %v4078, %v4271
  %v4359 = vmax.f32 %v4074, %v4267
  %v4360 = vmax.f32 %v4070, %v4263
  %v4361 = vmax.f32 %v4066, %v4259
  %v4362 = vmax.f32 %v4062, %v4255
  %v4363 = vmax.f32 %v4058, %v4251
  %v4364 = vmax.f32 %v4054, %v4247
  %v4365 = vmax.f32 %v4050, %v4243
  %v4366 = vmax.f32 %v4046, %v4239
  %v4367 = vmax.f32 %v4042, %v4235
  %v4368 = vmax.f32 %v4038, %v4231
  %v4369 = vmax.f32 %v4034, %v4227
  %v4370 = vmax.f32 %v4030, %v4223
  %v4371 = vmax.f32 %v4026, %v4219
  %v4372 = vmax.f32 %v4022, %v4215
  %v4373 = vmax.f32 %v4082, %v4275
  %v4374 = vmax.f32 %v4079, %v4272
  %v4375 = vmax.f32 %v4075, %v4268
  %v4376 = vmax.f32 %v4071, %v4264
  %v4377 = vmax.f32 %v4067, %v4260
  %v4378 = vmax.f32 %v4063, %v4256
  %v4379 = vmax.f32 %v4059, %v4252
  %v4380 = vmax.f32 %v4055, %v4248
  %v4381 = vmax.f32 %v4051, %v4244
  %v4382 = vmax.f32 %v4047, %v4240
  %v4383 = vmax.f32 %v4043, %v4236
  %v4384 = vmax.f32 %v4039, %v4232
  %v4385 = vmax.f32 %v4035, %v4228
  %v4386 = vmax.f32 %v4031, %v4224
  %v4387 = vmax.f32 %v4027, %v4220
  %v4388 = vmax.f32 %v4023, %v4216
  %v4389 = vmax.f32 %v4083, %v4276
  %v4390 = vmax.f32 %v4080, %v4273
  %v4391 = vmax.f32 %v4076, %v4269
  %v4392 = vmax.f32 %v4072, %v4265
  %v4393 = vmax.f32 %v4068, %v4261
  %v4394 = vmax.f32 %v4064, %v4257
  %v4395 = vmax.f32 %v4060, %v4253
  %v4396 = vmax.f32 %v4056, %v4249
  %v4397 = vmax.f32 %v4052, %v4245
  %v4398 = vmax.f32 %v4048, %v4241
  %v4399 = vmax.f32 %v4044, %v4237
  %v4400 = vmax.f32 %v4040, %v4233
  %v4401 = vmax.f32 %v4036, %v4229
  %v4402 = vmax.f32 %v4032, %v4225
  %v4403 = vmax.f32 %v4028, %v4221
  %v4404 = vmax.f32 %v4024, %v4217
  %v4405 = vmax.f32 %v4084, %v4277
  %v4406 = vmax.f32 %v4278, %v4342
  %v4407 = vmax.f32 %v4279, %v4343
  %v4408 = vmax.f32 %v4280, %v4344
  %v4409 = vmax.f32 %v4281, %v4345
  %v4410 = vmax.f32 %v4282, %v4346
  %v4411 = vmax.f32 %v4283, %v4347
  %v4412 = vmax.f32 %v4284, %v4348
  %v4413 = vmax.f32 %v4285, %v4349
  %v4414 = vmax.f32 %v4286, %v4350
  %v4415 = vmax.f32 %v4287, %v4351
  %v4416 = vmax.f32 %v4288, %v4352
  %v4417 = vmax.f32 %v4289, %v4353
  %v4418 = vmax.f32 %v4290, %v4354
  %v4419 = vmax.f32 %v4291, %v4355
  %v4420 = vmax.f32 %v4292, %v4356
  %v4421 = vmax.f32 %v4293, %v4357
  %v4422 = vmax.f32 %v4294, %v4358
  %v4423 = vmax.f32 %v4295, %v4359
  %v4424 = vmax.f32 %v4296, %v4360
  %v4425 = vmax.f32 %v4297, %v4361
  %v4426 = vmax.f32 %v4298, %v4362
  %v4427 = vmax.f32 %v4299, %v4363
  %v4428 = vmax.f32 %v4300, %v4364
  %v4429 = vmax.f32 %v4301, %v4365
  %v4430 = vmax.f32 %v4302, %v4366
  %v4431 = vmax.f32 %v4303, %v4367
  %v4432 = vmax.f32 %v4304, %v4368
  %v4433 = vmax.f32 %v4305, %v4369
  %v4434 = vmax.f32 %v4306, %v4370
  %v4435 = vmax.f32 %v4307, %v4371
  %v4436 = vmax.f32 %v4308, %v4372
  %v4437 = vmax.f32 %v4309, %v4373
  %v4438 = vmax.f32 %v4310, %v4374
  %v4439 = vmax.f32 %v4311, %v4375
  %v4440 = vmax.f32 %v4312, %v4376
  %v4441 = vmax.f32 %v4313, %v4377
  %v4442 = vmax.f32 %v4314, %v4378
  %v4443 = vmax.f32 %v4315, %v4379
  %v4444 = vmax.f32 %v4316, %v4380
  %v4445 = vmax.f32 %v4317, %v4381
  %v4446 = vmax.f32 %v4318, %v4382
  %v4447 = vmax.f32 %v4319, %v4383
  %v4448 = vmax.f32 %v4320, %v4384
  %v4449 = vmax.f32 %v4321, %v4385
  %v4450 = vmax.f32 %v4322, %v4386
  %v4451 = vmax.f32 %v4323, %v4387
  %v4452 = vmax.f32 %v4324, %v4388
  %v4453 = vmax.f32 %v4325, %v4389
  %v4454 = vmax.f32 %v4326, %v4390
  %v4455 = vmax.f32 %v4327, %v4391
  %v4456 = vmax.f32 %v4328, %v4392
  %v4457 = vmax.f32 %v4329, %v4393
  %v4458 = vmax.f32 %v4330, %v4394
  %v4459 = vmax.f32 %v4331, %v4395
  %v4460 = vmax.f32 %v4332, %v4396
  %v4461 = vmax.f32 %v4333, %v4397
  %v4462 = vmax.f32 %v4334, %v4398
  %v4463 = vmax.f32 %v4335, %v4399
  %v4464 = vmax.f32 %v4336, %v4400
  %v4465 = vmax.f32 %v4337, %v4401
  %v4466 = vmax.f32 %v4338, %v4402
  %v4467 = vmax.f32 %v4339, %v4403
  %v4468 = vmax.f32 %v4340, %v4404
  %v4469 = vmax.f32 %v4341, %v4405
  %4470 = vrot.lane.b32.xlu0 %v4406, 64
  %v4471 = vpop.permute.xlu0 %4470
  %4472 = vrot.lane.b32.xlu0 %v4422, 64
  %v4473 = vpop.permute.xlu0 %4472
  %4474 = vrot.lane.b32.xlu0 %v4438, 64
  %v4475 = vpop.permute.xlu0 %4474
  %4476 = vrot.lane.b32.xlu0 %v4454, 64
  %v4477 = vpop.permute.xlu0 %4476
  %4478 = vrot.lane.b32.xlu0 %v4407, 64
  %v4479 = vpop.permute.xlu0 %4478
  %4480 = vrot.lane.b32.xlu0 %v4423, 64
  %v4481 = vpop.permute.xlu0 %4480
  %4482 = vrot.lane.b32.xlu0 %v4439, 64
  %v4483 = vpop.permute.xlu0 %4482
  %4484 = vrot.lane.b32.xlu0 %v4455, 64
  %v4485 = vpop.permute.xlu0 %4484
  %4486 = vrot.lane.b32.xlu0 %v4408, 64
  %v4487 = vpop.permute.xlu0 %4486
  %4488 = vrot.lane.b32.xlu0 %v4424, 64
  %v4489 = vpop.permute.xlu0 %4488
  %4490 = vrot.lane.b32.xlu0 %v4440, 64
  %v4491 = vpop.permute.xlu0 %4490
  %4492 = vrot.lane.b32.xlu0 %v4456, 64
  %v4493 = vpop.permute.xlu0 %4492
  %4494 = vrot.lane.b32.xlu0 %v4409, 64
  %v4495 = vpop.permute.xlu0 %4494
  %4496 = vrot.lane.b32.xlu0 %v4425, 64
  %v4497 = vpop.permute.xlu0 %4496
  %4498 = vrot.lane.b32.xlu0 %v4441, 64
  %v4499 = vpop.permute.xlu0 %4498
  %4500 = vrot.lane.b32.xlu0 %v4457, 64
  %v4501 = vpop.permute.xlu0 %4500
  %4502 = vrot.lane.b32.xlu0 %v4410, 64
  %v4503 = vpop.permute.xlu0 %4502
  %4504 = vrot.lane.b32.xlu0 %v4426, 64
  %v4505 = vpop.permute.xlu0 %4504
  %4506 = vrot.lane.b32.xlu0 %v4442, 64
  %v4507 = vpop.permute.xlu0 %4506
  %4508 = vrot.lane.b32.xlu0 %v4458, 64
  %v4509 = vpop.permute.xlu0 %4508
  %4510 = vrot.lane.b32.xlu0 %v4411, 64
  %v4511 = vpop.permute.xlu0 %4510
  %4512 = vrot.lane.b32.xlu0 %v4427, 64
  %v4513 = vpop.permute.xlu0 %4512
  %4514 = vrot.lane.b32.xlu0 %v4443, 64
  %v4515 = vpop.permute.xlu0 %4514
  %4516 = vrot.lane.b32.xlu0 %v4459, 64
  %v4517 = vpop.permute.xlu0 %4516
  %4518 = vrot.lane.b32.xlu0 %v4412, 64
  %v4519 = vpop.permute.xlu0 %4518
  %4520 = vrot.lane.b32.xlu0 %v4428, 64
  %v4521 = vpop.permute.xlu0 %4520
  %4522 = vrot.lane.b32.xlu0 %v4444, 64
  %v4523 = vpop.permute.xlu0 %4522
  %4524 = vrot.lane.b32.xlu0 %v4460, 64
  %v4525 = vpop.permute.xlu0 %4524
  %4526 = vrot.lane.b32.xlu0 %v4413, 64
  %v4527 = vpop.permute.xlu0 %4526
  %4528 = vrot.lane.b32.xlu0 %v4429, 64
  %v4529 = vpop.permute.xlu0 %4528
  %4530 = vrot.lane.b32.xlu0 %v4445, 64
  %v4531 = vpop.permute.xlu0 %4530
  %4532 = vrot.lane.b32.xlu0 %v4461, 64
  %v4533 = vpop.permute.xlu0 %4532
  %4534 = vrot.lane.b32.xlu0 %v4414, 64
  %v4535 = vpop.permute.xlu0 %4534
  %4536 = vrot.lane.b32.xlu0 %v4430, 64
  %v4537 = vpop.permute.xlu0 %4536
  %4538 = vrot.lane.b32.xlu0 %v4446, 64
  %v4539 = vpop.permute.xlu0 %4538
  %4540 = vrot.lane.b32.xlu0 %v4462, 64
  %v4541 = vpop.permute.xlu0 %4540
  %4542 = vrot.lane.b32.xlu0 %v4415, 64
  %v4543 = vpop.permute.xlu0 %4542
  %4544 = vrot.lane.b32.xlu0 %v4431, 64
  %v4545 = vpop.permute.xlu0 %4544
  %4546 = vrot.lane.b32.xlu0 %v4447, 64
  %v4547 = vpop.permute.xlu0 %4546
  %4548 = vrot.lane.b32.xlu0 %v4463, 64
  %v4549 = vpop.permute.xlu0 %4548
  %4550 = vrot.lane.b32.xlu0 %v4416, 64
  %v4551 = vpop.permute.xlu0 %4550
  %4552 = vrot.lane.b32.xlu0 %v4432, 64
  %v4553 = vpop.permute.xlu0 %4552
  %4554 = vrot.lane.b32.xlu0 %v4448, 64
  %v4555 = vpop.permute.xlu0 %4554
  %4556 = vrot.lane.b32.xlu0 %v4464, 64
  %v4557 = vpop.permute.xlu0 %4556
  %4558 = vrot.lane.b32.xlu0 %v4417, 64
  %v4559 = vpop.permute.xlu0 %4558
  %4560 = vrot.lane.b32.xlu0 %v4433, 64
  %v4561 = vpop.permute.xlu0 %4560
  %4562 = vrot.lane.b32.xlu0 %v4449, 64
  %v4563 = vpop.permute.xlu0 %4562
  %4564 = vrot.lane.b32.xlu0 %v4465, 64
  %v4565 = vpop.permute.xlu0 %4564
  %4566 = vrot.lane.b32.xlu0 %v4418, 64
  %v4567 = vpop.permute.xlu0 %4566
  %4568 = vrot.lane.b32.xlu0 %v4434, 64
  %v4569 = vpop.permute.xlu0 %4568
  %4570 = vrot.lane.b32.xlu0 %v4450, 64
  %v4571 = vpop.permute.xlu0 %4570
  %4572 = vrot.lane.b32.xlu0 %v4466, 64
  %v4573 = vpop.permute.xlu0 %4572
  %4574 = vrot.lane.b32.xlu0 %v4419, 64
  %v4575 = vpop.permute.xlu0 %4574
  %4576 = vrot.lane.b32.xlu0 %v4435, 64
  %v4577 = vpop.permute.xlu0 %4576
  %4578 = vrot.lane.b32.xlu0 %v4451, 64
  %v4579 = vpop.permute.xlu0 %4578
  %4580 = vrot.lane.b32.xlu0 %v4467, 64
  %v4581 = vpop.permute.xlu0 %4580
  %4582 = vrot.lane.b32.xlu0 %v4420, 64
  %v4583 = vpop.permute.xlu0 %4582
  %4584 = vrot.lane.b32.xlu0 %v4436, 64
  %v4585 = vpop.permute.xlu0 %4584
  %4586 = vrot.lane.b32.xlu0 %v4452, 64
  %v4587 = vpop.permute.xlu0 %4586
  %4588 = vrot.lane.b32.xlu0 %v4468, 64
  %v4589 = vpop.permute.xlu0 %4588
  %4590 = vrot.lane.b32.xlu0 %v4421, 64
  %v4591 = vpop.permute.xlu0 %4590
  %4592 = vrot.lane.b32.xlu0 %v4437, 64
  %v4593 = vpop.permute.xlu0 %4592
  %4594 = vrot.lane.b32.xlu0 %v4453, 64
  %v4595 = vpop.permute.xlu0 %4594
  %4596 = vrot.lane.b32.xlu0 %v4469, 64
  %v4597 = vpop.permute.xlu0 %4596
  %vm4598 = vcmp.lt.s32.totalorder %v48, 64
  %v4599 = vsel %vm4598, %v4583, %v4591
  %v4600 = vsel %vm4598, %v4585, %v4593
  %v4601 = vsel %vm4598, %v4587, %v4595
  %v4602 = vsel %vm4598, %v4589, %v4597
  %v4603 = vsel %vm4598, %v4575, %v4583
  %v4604 = vsel %vm4598, %v4577, %v4585
  %v4605 = vsel %vm4598, %v4579, %v4587
  %v4606 = vsel %vm4598, %v4581, %v4589
  %v4607 = vsel %vm4598, %v4567, %v4575
  %v4608 = vsel %vm4598, %v4569, %v4577
  %v4609 = vsel %vm4598, %v4571, %v4579
  %v4610 = vsel %vm4598, %v4573, %v4581
  %v4611 = vsel %vm4598, %v4559, %v4567
  %v4612 = vsel %vm4598, %v4561, %v4569
  %v4613 = vsel %vm4598, %v4563, %v4571
  %v4614 = vsel %vm4598, %v4565, %v4573
  %v4615 = vsel %vm4598, %v4551, %v4559
  %v4616 = vsel %vm4598, %v4553, %v4561
  %v4617 = vsel %vm4598, %v4555, %v4563
  %v4618 = vsel %vm4598, %v4557, %v4565
  %v4619 = vsel %vm4598, %v4543, %v4551
  %v4620 = vsel %vm4598, %v4545, %v4553
  %v4621 = vsel %vm4598, %v4547, %v4555
  %v4622 = vsel %vm4598, %v4549, %v4557
  %v4623 = vsel %vm4598, %v4535, %v4543
  %v4624 = vsel %vm4598, %v4537, %v4545
  %v4625 = vsel %vm4598, %v4539, %v4547
  %v4626 = vsel %vm4598, %v4541, %v4549
  %v4627 = vsel %vm4598, %v4527, %v4535
  %v4628 = vsel %vm4598, %v4529, %v4537
  %v4629 = vsel %vm4598, %v4531, %v4539
  %v4630 = vsel %vm4598, %v4533, %v4541
  %v4631 = vsel %vm4598, %v4519, %v4527
  %v4632 = vsel %vm4598, %v4521, %v4529
  %v4633 = vsel %vm4598, %v4523, %v4531
  %v4634 = vsel %vm4598, %v4525, %v4533
  %v4635 = vsel %vm4598, %v4511, %v4519
  %v4636 = vsel %vm4598, %v4513, %v4521
  %v4637 = vsel %vm4598, %v4515, %v4523
  %v4638 = vsel %vm4598, %v4517, %v4525
  %v4639 = vsel %vm4598, %v4503, %v4511
  %v4640 = vsel %vm4598, %v4505, %v4513
  %v4641 = vsel %vm4598, %v4507, %v4515
  %v4642 = vsel %vm4598, %v4509, %v4517
  %v4643 = vsel %vm4598, %v4495, %v4503
  %v4644 = vsel %vm4598, %v4497, %v4505
  %v4645 = vsel %vm4598, %v4499, %v4507
  %v4646 = vsel %vm4598, %v4501, %v4509
  %v4647 = vsel %vm4598, %v4487, %v4495
  %v4648 = vsel %vm4598, %v4489, %v4497
  %v4649 = vsel %vm4598, %v4491, %v4499
  %v4650 = vsel %vm4598, %v4493, %v4501
  %v4651 = vsel %vm4598, %v4479, %v4487
  %v4652 = vsel %vm4598, %v4481, %v4489
  %v4653 = vsel %vm4598, %v4483, %v4491
  %v4654 = vsel %vm4598, %v4485, %v4493
  %v4655 = vsel %vm4598, %v4471, %v4479
  %v4656 = vsel %vm4598, %v4473, %v4481
  %v4657 = vsel %vm4598, %v4475, %v4483
  %v4658 = vsel %vm4598, %v4477, %v4485
  %v4659 = vsel %vm4598, %v4591, %v4471
  %v4660 = vsel %vm4598, %v4593, %v4473
  %v4661 = vsel %vm4598, %v4595, %v4475
  %v4662 = vsel %vm4598, %v4597, %v4477
  %v4663 = vsel %vm1760, 0.0, %v4659
  %v4664 = vsel %vm1761, 0.0, %v4655
  %v4665 = vsel %vm1762, 0.0, %v4651
  %v4666 = vsel %vm1763, 0.0, %v4647
  %v4667 = vsel %vm1764, 0.0, %v4643
  %v4668 = vsel %vm1765, 0.0, %v4639
  %v4669 = vsel %vm1766, 0.0, %v4635
  %v4670 = vsel %vm1767, 0.0, %v4631
  %v4671 = vsel %vm1768, 0.0, %v4627
  %v4672 = vsel %vm1769, 0.0, %v4623
  %v4673 = vsel %vm1770, 0.0, %v4619
  %v4674 = vsel %vm1771, 0.0, %v4615
  %v4675 = vsel %vm1772, 0.0, %v4611
  %v4676 = vsel %vm1773, 0.0, %v4607
  %v4677 = vsel %vm1774, 0.0, %v4603
  %v4678 = vsel %vm1775, 0.0, %v4599
  %v4679 = vsel %vm1760, 0.0, %v4660
  %v4680 = vsel %vm1761, 0.0, %v4656
  %v4681 = vsel %vm1762, 0.0, %v4652
  %v4682 = vsel %vm1763, 0.0, %v4648
  %v4683 = vsel %vm1764, 0.0, %v4644
  %v4684 = vsel %vm1765, 0.0, %v4640
  %v4685 = vsel %vm1766, 0.0, %v4636
  %v4686 = vsel %vm1767, 0.0, %v4632
  %v4687 = vsel %vm1768, 0.0, %v4628
  %v4688 = vsel %vm1769, 0.0, %v4624
  %v4689 = vsel %vm1770, 0.0, %v4620
  %v4690 = vsel %vm1771, 0.0, %v4616
  %v4691 = vsel %vm1772, 0.0, %v4612
  %v4692 = vsel %vm1773, 0.0, %v4608
  %v4693 = vsel %vm1774, 0.0, %v4604
  %v4694 = vsel %vm1775, 0.0, %v4600
  %v4695 = vsel %vm1760, 0.0, %v4661
  %v4696 = vsel %vm1761, 0.0, %v4657
  %v4697 = vsel %vm1762, 0.0, %v4653
  %v4698 = vsel %vm1763, 0.0, %v4649
  %v4699 = vsel %vm1764, 0.0, %v4645
  %v4700 = vsel %vm1765, 0.0, %v4641
  %v4701 = vsel %vm1766, 0.0, %v4637
  %v4702 = vsel %vm1767, 0.0, %v4633
  %v4703 = vsel %vm1768, 0.0, %v4629
  %v4704 = vsel %vm1769, 0.0, %v4625
  %v4705 = vsel %vm1770, 0.0, %v4621
  %v4706 = vsel %vm1771, 0.0, %v4617
  %v4707 = vsel %vm1772, 0.0, %v4613
  %v4708 = vsel %vm1773, 0.0, %v4609
  %v4709 = vsel %vm1774, 0.0, %v4605
  %v4710 = vsel %vm1775, 0.0, %v4601
  %v4711 = vsel %vm1760, 0.0, %v4662
  %v4712 = vsel %vm1761, 0.0, %v4658
  %v4713 = vsel %vm1762, 0.0, %v4654
  %v4714 = vsel %vm1763, 0.0, %v4650
  %v4715 = vsel %vm1764, 0.0, %v4646
  %v4716 = vsel %vm1765, 0.0, %v4642
  %v4717 = vsel %vm1766, 0.0, %v4638
  %v4718 = vsel %vm1767, 0.0, %v4634
  %v4719 = vsel %vm1768, 0.0, %v4630
  %v4720 = vsel %vm1769, 0.0, %v4626
  %v4721 = vsel %vm1770, 0.0, %v4622
  %v4722 = vsel %vm1771, 0.0, %v4618
  %v4723 = vsel %vm1772, 0.0, %v4614
  %v4724 = vsel %vm1773, 0.0, %v4610
  %v4725 = vsel %vm1774, 0.0, %v4606
  %v4726 = vsel %vm1775, 0.0, %v4602
  %vm4727 = vcmp.eq.s32.totalorder %v64, 704
  %vm4728 = vcmp.eq.s32.totalorder %v65, 704
  %vm4729 = vcmp.eq.s32.totalorder %v66, 704
  %vm4730 = vcmp.eq.s32.totalorder %v67, 704
  %vm4731 = vcmp.eq.s32.totalorder %v68, 704
  %vm4732 = vcmp.eq.s32.totalorder %v69, 704
  %vm4733 = vcmp.eq.s32.totalorder %v70, 704
  %vm4734 = vcmp.eq.s32.totalorder %v71, 704
  %vm4735 = vcmp.eq.s32.totalorder %v72, 704
  %vm4736 = vcmp.eq.s32.totalorder %v73, 704
  %vm4737 = vcmp.eq.s32.totalorder %v74, 704
  %vm4738 = vcmp.eq.s32.totalorder %v75, 704
  %vm4739 = vcmp.eq.s32.totalorder %v76, 704
  %vm4740 = vcmp.eq.s32.totalorder %v77, 704
  %vm4741 = vcmp.eq.s32.totalorder %v78, 704
  %vm4742 = vcmp.eq.s32.totalorder %v79, 704
  %v4743 = vsel %vm4727, 1, 0
  %v4744 = vsel %vm4728, 1, 0
  %v4745 = vsel %vm4729, 1, 0
  %v4746 = vsel %vm4730, 1, 0
  %v4747 = vsel %vm4731, 1, 0
  %v4748 = vsel %vm4732, 1, 0
  %v4749 = vsel %vm4733, 1, 0
  %v4750 = vsel %vm4734, 1, 0
  %v4751 = vsel %vm4735, 1, 0
  %v4752 = vsel %vm4736, 1, 0
  %v4753 = vsel %vm4737, 1, 0
  %v4754 = vsel %vm4738, 1, 0
  %v4755 = vsel %vm4739, 1, 0
  %v4756 = vsel %vm4740, 1, 0
  %v4757 = vsel %vm4741, 1, 0
  %v4758 = vsel %vm4742, 1, 0
  %vm4759 = vcmp.eq.s32.totalorder %v4743, 1
  %vm4760 = vcmp.eq.s32.totalorder %v4744, 1
  %vm4761 = vcmp.eq.s32.totalorder %v4745, 1
  %vm4762 = vcmp.eq.s32.totalorder %v4746, 1
  %vm4763 = vcmp.eq.s32.totalorder %v4747, 1
  %vm4764 = vcmp.eq.s32.totalorder %v4748, 1
  %vm4765 = vcmp.eq.s32.totalorder %v4749, 1
  %vm4766 = vcmp.eq.s32.totalorder %v4750, 1
  %vm4767 = vcmp.eq.s32.totalorder %v4751, 1
  %vm4768 = vcmp.eq.s32.totalorder %v4752, 1
  %vm4769 = vcmp.eq.s32.totalorder %v4753, 1
  %vm4770 = vcmp.eq.s32.totalorder %v4754, 1
  %vm4771 = vcmp.eq.s32.totalorder %v4755, 1
  %vm4772 = vcmp.eq.s32.totalorder %v4756, 1
  %vm4773 = vcmp.eq.s32.totalorder %v4757, 1
  %vm4774 = vcmp.eq.s32.totalorder %v4758, 1
  %v4775 = vsel %vm4759, 0.0, %v4655
  %v4776 = vsel %vm4760, 0.0, %v4651
  %v4777 = vsel %vm4761, 0.0, %v4647
  %v4778 = vsel %vm4762, 0.0, %v4643
  %v4779 = vsel %vm4763, 0.0, %v4639
  %v4780 = vsel %vm4764, 0.0, %v4635
  %v4781 = vsel %vm4765, 0.0, %v4631
  %v4782 = vsel %vm4766, 0.0, %v4627
  %v4783 = vsel %vm4767, 0.0, %v4623
  %v4784 = vsel %vm4768, 0.0, %v4619
  %v4785 = vsel %vm4769, 0.0, %v4615
  %v4786 = vsel %vm4770, 0.0, %v4611
  %v4787 = vsel %vm4771, 0.0, %v4607
  %v4788 = vsel %vm4772, 0.0, %v4603
  %v4789 = vsel %vm4773, 0.0, %v4599
  %v4790 = vsel %vm4774, 0.0, %v4659
  %v4791 = vsel %vm4759, 0.0, %v4656
  %v4792 = vsel %vm4760, 0.0, %v4652
  %v4793 = vsel %vm4761, 0.0, %v4648
  %v4794 = vsel %vm4762, 0.0, %v4644
  %v4795 = vsel %vm4763, 0.0, %v4640
  %v4796 = vsel %vm4764, 0.0, %v4636
  %v4797 = vsel %vm4765, 0.0, %v4632
  %v4798 = vsel %vm4766, 0.0, %v4628
  %v4799 = vsel %vm4767, 0.0, %v4624
  %v4800 = vsel %vm4768, 0.0, %v4620
  %v4801 = vsel %vm4769, 0.0, %v4616
  %v4802 = vsel %vm4770, 0.0, %v4612
  %v4803 = vsel %vm4771, 0.0, %v4608
  %v4804 = vsel %vm4772, 0.0, %v4604
  %v4805 = vsel %vm4773, 0.0, %v4600
  %v4806 = vsel %vm4774, 0.0, %v4660
  %v4807 = vsel %vm4759, 0.0, %v4657
  %v4808 = vsel %vm4760, 0.0, %v4653
  %v4809 = vsel %vm4761, 0.0, %v4649
  %v4810 = vsel %vm4762, 0.0, %v4645
  %v4811 = vsel %vm4763, 0.0, %v4641
  %v4812 = vsel %vm4764, 0.0, %v4637
  %v4813 = vsel %vm4765, 0.0, %v4633
  %v4814 = vsel %vm4766, 0.0, %v4629
  %v4815 = vsel %vm4767, 0.0, %v4625
  %v4816 = vsel %vm4768, 0.0, %v4621
  %v4817 = vsel %vm4769, 0.0, %v4617
  %v4818 = vsel %vm4770, 0.0, %v4613
  %v4819 = vsel %vm4771, 0.0, %v4609
  %v4820 = vsel %vm4772, 0.0, %v4605
  %v4821 = vsel %vm4773, 0.0, %v4601
  %v4822 = vsel %vm4774, 0.0, %v4661
  %v4823 = vsel %vm4759, 0.0, %v4658
  %v4824 = vsel %vm4760, 0.0, %v4654
  %v4825 = vsel %vm4761, 0.0, %v4650
  %v4826 = vsel %vm4762, 0.0, %v4646
  %v4827 = vsel %vm4763, 0.0, %v4642
  %v4828 = vsel %vm4764, 0.0, %v4638
  %v4829 = vsel %vm4765, 0.0, %v4634
  %v4830 = vsel %vm4766, 0.0, %v4630
  %v4831 = vsel %vm4767, 0.0, %v4626
  %v4832 = vsel %vm4768, 0.0, %v4622
  %v4833 = vsel %vm4769, 0.0, %v4618
  %v4834 = vsel %vm4770, 0.0, %v4614
  %v4835 = vsel %vm4771, 0.0, %v4610
  %v4836 = vsel %vm4772, 0.0, %v4606
  %v4837 = vsel %vm4773, 0.0, %v4602
  %v4838 = vsel %vm4774, 0.0, %v4662
  %v4839 = vpack.c.bf16 %v4679, %v4663
  %v4840 = vpack.c.bf16 %v4680, %v4664
  %v4841 = vpack.c.bf16 %v4681, %v4665
  %v4842 = vpack.c.bf16 %v4682, %v4666
  %v4843 = vpack.c.bf16 %v4683, %v4667
  %v4844 = vpack.c.bf16 %v4684, %v4668
  %v4845 = vpack.c.bf16 %v4685, %v4669
  %v4846 = vpack.c.bf16 %v4686, %v4670
  %v4847 = vpack.c.bf16 %v4687, %v4671
  %v4848 = vpack.c.bf16 %v4688, %v4672
  %v4849 = vpack.c.bf16 %v4689, %v4673
  %v4850 = vpack.c.bf16 %v4690, %v4674
  %v4851 = vpack.c.bf16 %v4691, %v4675
  %v4852 = vpack.c.bf16 %v4692, %v4676
  %v4853 = vpack.c.bf16 %v4693, %v4677
  %v4854 = vpack.c.bf16 %v4694, %v4678
  %v4855 = vpack.c.bf16 %v4711, %v4695
  %v4856 = vpack.c.bf16 %v4712, %v4696
  %v4857 = vpack.c.bf16 %v4713, %v4697
  %v4858 = vpack.c.bf16 %v4714, %v4698
  %v4859 = vpack.c.bf16 %v4715, %v4699
  %v4860 = vpack.c.bf16 %v4716, %v4700
  %v4861 = vpack.c.bf16 %v4717, %v4701
  %v4862 = vpack.c.bf16 %v4718, %v4702
  %v4863 = vpack.c.bf16 %v4719, %v4703
  %v4864 = vpack.c.bf16 %v4720, %v4704
  %v4865 = vpack.c.bf16 %v4721, %v4705
  %v4866 = vpack.c.bf16 %v4722, %v4706
  %v4867 = vpack.c.bf16 %v4723, %v4707
  %v4868 = vpack.c.bf16 %v4724, %v4708
  %v4869 = vpack.c.bf16 %v4725, %v4709
  %v4870 = vpack.c.bf16 %v4726, %v4710
  %v4871 = vpack.c.bf16 %v4422, %v4406
  %v4872 = vpack.c.bf16 %v4423, %v4407
  %v4873 = vpack.c.bf16 %v4424, %v4408
  %v4874 = vpack.c.bf16 %v4425, %v4409
  %v4875 = vpack.c.bf16 %v4426, %v4410
  %v4876 = vpack.c.bf16 %v4427, %v4411
  %v4877 = vpack.c.bf16 %v4428, %v4412
  %v4878 = vpack.c.bf16 %v4429, %v4413
  %v4879 = vpack.c.bf16 %v4430, %v4414
  %v4880 = vpack.c.bf16 %v4431, %v4415
  %v4881 = vpack.c.bf16 %v4432, %v4416
  %v4882 = vpack.c.bf16 %v4433, %v4417
  %v4883 = vpack.c.bf16 %v4434, %v4418
  %v4884 = vpack.c.bf16 %v4435, %v4419
  %v4885 = vpack.c.bf16 %v4436, %v4420
  %v4886 = vpack.c.bf16 %v4437, %v4421
  %v4887 = vpack.c.bf16 %v4454, %v4438
  %v4888 = vpack.c.bf16 %v4455, %v4439
  %v4889 = vpack.c.bf16 %v4456, %v4440
  %v4890 = vpack.c.bf16 %v4457, %v4441
  %v4891 = vpack.c.bf16 %v4458, %v4442
  %v4892 = vpack.c.bf16 %v4459, %v4443
  %v4893 = vpack.c.bf16 %v4460, %v4444
  %v4894 = vpack.c.bf16 %v4461, %v4445
  %v4895 = vpack.c.bf16 %v4462, %v4446
  %v4896 = vpack.c.bf16 %v4463, %v4447
  %v4897 = vpack.c.bf16 %v4464, %v4448
  %v4898 = vpack.c.bf16 %v4465, %v4449
  %v4899 = vpack.c.bf16 %v4466, %v4450
  %v4900 = vpack.c.bf16 %v4467, %v4451
  %v4901 = vpack.c.bf16 %v4468, %v4452
  %v4902 = vpack.c.bf16 %v4469, %v4453
  %v4903 = vpack.c.bf16 %v4791, %v4775
  %v4904 = vpack.c.bf16 %v4792, %v4776
  %v4905 = vpack.c.bf16 %v4793, %v4777
  %v4906 = vpack.c.bf16 %v4794, %v4778
  %v4907 = vpack.c.bf16 %v4795, %v4779
  %v4908 = vpack.c.bf16 %v4796, %v4780
  %v4909 = vpack.c.bf16 %v4797, %v4781
  %v4910 = vpack.c.bf16 %v4798, %v4782
  %v4911 = vpack.c.bf16 %v4799, %v4783
  %v4912 = vpack.c.bf16 %v4800, %v4784
  %v4913 = vpack.c.bf16 %v4801, %v4785
  %v4914 = vpack.c.bf16 %v4802, %v4786
  %v4915 = vpack.c.bf16 %v4803, %v4787
  %v4916 = vpack.c.bf16 %v4804, %v4788
  %v4917 = vpack.c.bf16 %v4805, %v4789
  %v4918 = vpack.c.bf16 %v4806, %v4790
  %v4919 = vpack.c.bf16 %v4823, %v4807
  %v4920 = vpack.c.bf16 %v4824, %v4808
  %v4921 = vpack.c.bf16 %v4825, %v4809
  %v4922 = vpack.c.bf16 %v4826, %v4810
  %v4923 = vpack.c.bf16 %v4827, %v4811
  %v4924 = vpack.c.bf16 %v4828, %v4812
  %v4925 = vpack.c.bf16 %v4829, %v4813
  %v4926 = vpack.c.bf16 %v4830, %v4814
  %v4927 = vpack.c.bf16 %v4831, %v4815
  %v4928 = vpack.c.bf16 %v4832, %v4816
  %v4929 = vpack.c.bf16 %v4833, %v4817
  %v4930 = vpack.c.bf16 %v4834, %v4818
  %v4931 = vpack.c.bf16 %v4835, %v4819
  %v4932 = vpack.c.bf16 %v4836, %v4820
  %v4933 = vpack.c.bf16 %v4837, %v4821
  %v4934 = vpack.c.bf16 %v4838, %v4822
  %v4935 = vld [vmem:[%s7] sm:$0xf]
  %v4936 = vld [vmem:[%s7 + $0x4] sm:$0xf]
  %v4937 = vld [vmem:[%s7 + $0x8] sm:$0xf]
  %v4938 = vld [vmem:[%s7 + $0xc] sm:$0xf]
  %v4939 = vld [vmem:[%s7 + $0x10] sm:$0xf]
  %v4940 = vld [vmem:[%s7 + $0x14] sm:$0xf]
  %v4941 = vld [vmem:[%s7 + $0x18] sm:$0xf]
  %v4942 = vld [vmem:[%s7 + $0x1c] sm:$0xf]
  %v4943 = vld [vmem:[%s8] sm:$0xff]
  %v4944 = vld [vmem:[%s8 + $0x8] sm:$0xff]
  %v4945 = vld [vmem:[%s8 + $0x10] sm:$0xff]
  %v4946 = vld [vmem:[%s8 + $0x18] sm:$0xff]
  %v4947 = vld [vmem:[%s8 + $0x20] sm:$0xff]
  %v4948 = vld [vmem:[%s8 + $0x28] sm:$0xff]
  %v4949 = vld [vmem:[%s8 + $0x30] sm:$0xff]
  %v4950 = vld [vmem:[%s8 + $0x38] sm:$0xff]
  %4952 = vset.pattern.permute.xlu0 0
  %4953 = vperm.xlu0 %4952, %v4943
  %v4954 = vpop.permute.xlu0 %4953
  %4957 = vset.pattern.permute.xlu0 0
  %4958 = vperm.xlu0 %4957, %v4944
  %v4959 = vpop.permute.xlu0 %4958
  %4962 = vset.pattern.permute.xlu0 0
  %4963 = vperm.xlu0 %4962, %v4945
  %v4964 = vpop.permute.xlu0 %4963
  %4967 = vset.pattern.permute.xlu0 0
  %4968 = vperm.xlu0 %4967, %v4946
  %v4969 = vpop.permute.xlu0 %4968
  %4972 = vset.pattern.permute.xlu0 0
  %4973 = vperm.xlu0 %4972, %v4947
  %v4974 = vpop.permute.xlu0 %4973
  %4977 = vset.pattern.permute.xlu0 0
  %4978 = vperm.xlu0 %4977, %v4948
  %v4979 = vpop.permute.xlu0 %4978
  %4982 = vset.pattern.permute.xlu0 0
  %4983 = vperm.xlu0 %4982, %v4949
  %v4984 = vpop.permute.xlu0 %4983
  %4987 = vset.pattern.permute.xlu0 0
  %4988 = vperm.xlu0 %4987, %v4950
  %v4989 = vpop.permute.xlu0 %4988
  %v4999 = vunpack.c.l.b16 %v4935
  %v5000 = vunpack.c.l.b16 %v4936
  %v5001 = vunpack.c.l.b16 %v4937
  %v5002 = vunpack.c.l.b16 %v4938
  %v5003 = vunpack.c.l.b16 %v4939
  %v5004 = vunpack.c.l.b16 %v4940
  %v5005 = vunpack.c.l.b16 %v4941
  %v5006 = vunpack.c.l.b16 %v4942
  %v5007 = vpack.c.b16 %v5000, %v4999
  %v5008 = vpack.c.b16 %v5002, %v5001
  %v5009 = vpack.c.b16 %v5004, %v5003
  %v5010 = vpack.c.b16 %v5006, %v5005
  %vm5011 = vcmask 785408
  %v5013 = vsel %vm5011, %v5007, 0
  %v5016 = vsel %vm5011, %v5008, 0
  %v5019 = vsel %vm5011, %v5009, 0
  %v5022 = vsel %vm5011, %v5010, 0
  %5024 = vmatprep.subr.bf16.mxu0 %v4840
  %5025 = vmatpush1.bf16.msra.mxu0 %v4839
  %5026 = vmatprep.subr.bf16.mxu0 %v4856
  %5027 = vmatpush1.bf16.msra.mxu0 %v4855
  %5028 = vmatprep.subr.bf16.mxu0 %v4872
  %5029 = vmatpush1.bf16.msra.mxu0 %v4871
  %5030 = vmatprep.subr.bf16.mxu0 %v4888
  %5031 = vmatpush1.bf16.msra.mxu0 %v4887
  %5032 = vmatprep.subr.bf16.mxu0 %v4904
  %5033 = vmatpush1.bf16.msra.mxu0 %v4903
  %5034 = vmatprep.subr.bf16.mxu0 %v4920
  %5035 = vmatpush1.bf16.msra.mxu0 %v4919
  %5036 = vmatprep.subr.bf16.mxu0 0
  %5037 = vmatpush1.bf16.msra.mxu0 0
  %5038 = vmatprep.subr.bf16.mxu0 0
  %5039 = vmatpush1.bf16.msra.mxu0 0
  %5040 = vmatprep.subr.bf16.mxu0 0
  %5041 = vmatpush1.bf16.msra.mxu0 0
  %5042 = vmatprep.subr.bf16.mxu0 0
  %5043 = vmatpush1.bf16.msra.mxu0 0
  %5044 = vmatprep.subr.bf16.mxu0 0
  %5045 = vmatpush1.bf16.msra.mxu0 0
  %5046 = vmatprep.subr.bf16.mxu0 0
  %5047 = vmatpush1.bf16.msra.mxu0 0
  %5048 = vmatprep.subr.bf16.mxu0 0
  %5049 = vmatpush1.bf16.msra.mxu0 0
  %5050 = vmatprep.subr.bf16.mxu0 0
  %5051 = vmatpush1.bf16.msra.mxu0 0
  %5052 = vmatprep.subr.bf16.mxu0 0
  %5053 = vmatpush1.bf16.msra.mxu0 0
  %5054 = vmatprep.subr.bf16.mxu0 0
  %5055 = vmatpush1.bf16.msra.mxu0 0
  %5056 = vmatprep.mubr.bf16.mxu0 0
  %5057 = vmatmul.mubr.bf16.gmra.mrb[0].mxu0 %v5013
  %v5058 = vpop.f32.mrb[0].mxu0
  %v5059 = vadd.f32 %v4954, %v5058
  %v5060 = vpop.f32.mrb[0].mxu0
  %v5061 = vadd.f32 %v4954, %v5060
  %v5062 = vpop.f32.mrb[0].mxu0
  %v5063 = vadd.f32 %v4959, %v5062
  %v5064 = vpop.f32.mrb[0].mxu0
  %v5065 = vadd.f32 %v4959, %v5064
  %5066 = vmatprep.mubr.bf16.mxu0 0
  %5067 = vmatmul.mubr.bf16.gmra.mrb[0].mxu0 %v5016
  %v5068 = vpop.f32.mrb[0].mxu0
  %v5069 = vadd.f32 %v4964, %v5068
  %v5070 = vpop.f32.mrb[0].mxu0
  %v5071 = vadd.f32 %v4964, %v5070
  %v5072 = vpop.f32.mrb[0].mxu0
  %v5073 = vadd.f32 %v4969, %v5072
  %v5074 = vpop.f32.mrb[0].mxu0
  %v5075 = vadd.f32 %v4969, %v5074
  %5076 = vmatprep.mubr.bf16.mxu0 0
  %5077 = vmatmul.mubr.bf16.gmra.mrb[0].mxu0 %v5019
  %v5078 = vpop.f32.mrb[0].mxu0
  %v5079 = vadd.f32 %v4974, %v5078
  %v5080 = vpop.f32.mrb[0].mxu0
  %v5081 = vadd.f32 %v4974, %v5080
  %v5082 = vpop.f32.mrb[0].mxu0
  %v5083 = vadd.f32 %v4979, %v5082
  %v5084 = vpop.f32.mrb[0].mxu0
  %v5085 = vadd.f32 %v4979, %v5084
  %5086 = vmatprep.mubr.bf16.mxu0 0
  %5087 = vmatmul.mubr.bf16.gmra.mrb[0].mxu0 %v5022
  %v5088 = vpop.f32.mrb[0].mxu0
  %v5089 = vadd.f32 %v4984, %v5088
  %v5090 = vpop.f32.mrb[0].mxu0
  %v5091 = vadd.f32 %v4984, %v5090
  %v5092 = vpop.f32.mrb[0].mxu0
  %v5093 = vadd.f32 %v4989, %v5092
  %v5094 = vpop.f32.mrb[0].mxu0
  %v5095 = vadd.f32 %v4989, %v5094
  %5096 = vdwg.mxu0
  %5097 = vmatprep.subr.bf16.mxu0 %v4842
  %5098 = vmatpush1.bf16.msra.mxu0 %v4841
  %5099 = vmatprep.subr.bf16.mxu0 %v4858
  %5100 = vmatpush1.bf16.msra.mxu0 %v4857
  %5101 = vmatprep.subr.bf16.mxu0 %v4874
  %5102 = vmatpush1.bf16.msra.mxu0 %v4873
  %5103 = vmatprep.subr.bf16.mxu0 %v4890
  %5104 = vmatpush1.bf16.msra.mxu0 %v4889
  %5105 = vmatprep.subr.bf16.mxu0 %v4906
  %5106 = vmatpush1.bf16.msra.mxu0 %v4905
  %5107 = vmatprep.subr.bf16.mxu0 %v4922
  %5108 = vmatpush1.bf16.msra.mxu0 %v4921
  %5109 = vmatprep.subr.bf16.mxu0 0
  %5110 = vmatpush1.bf16.msra.mxu0 0
  %5111 = vmatprep.subr.bf16.mxu0 0
  %5112 = vmatpush1.bf16.msra.mxu0 0
  %5113 = vmatprep.subr.bf16.mxu0 0
  %5114 = vmatpush1.bf16.msra.mxu0 0
  %5115 = vmatprep.subr.bf16.mxu0 0
  %5116 = vmatpush1.bf16.msra.mxu0 0
  %5117 = vmatprep.subr.bf16.mxu0 0
  %5118 = vmatpush1.bf16.msra.mxu0 0
  %5119 = vmatprep.subr.bf16.mxu0 0
  %5120 = vmatpush1.bf16.msra.mxu0 0
  %5121 = vmatprep.subr.bf16.mxu0 0
  %5122 = vmatpush1.bf16.msra.mxu0 0
  %5123 = vmatprep.subr.bf16.mxu0 0
  %5124 = vmatpush1.bf16.msra.mxu0 0
  %5125 = vmatprep.subr.bf16.mxu0 0
  %5126 = vmatpush1.bf16.msra.mxu0 0
  %5127 = vmatprep.subr.bf16.mxu0 0
  %5128 = vmatpush1.bf16.msra.mxu0 0
  %5129 = vmatprep.mubr.bf16.mxu0 0
  %5130 = vmatmul.mubr.bf16.gmra.mrb[0].mxu0 %v5013
  %v5131 = vpop.f32.mrb[0].mxu0
  %v5132 = vadd.f32 %v4954, %v5131
  %v5133 = vpop.f32.mrb[0].mxu0
  %v5134 = vadd.f32 %v4954, %v5133
  %v5135 = vpop.f32.mrb[0].mxu0
  %v5136 = vadd.f32 %v4959, %v5135
  %v5137 = vpop.f32.mrb[0].mxu0
  %v5138 = vadd.f32 %v4959, %v5137
  %5139 = vmatprep.mubr.bf16.mxu0 0
  %5140 = vmatmul.mubr.bf16.gmra.mrb[0].mxu0 %v5016
  %v5141 = vpop.f32.mrb[0].mxu0
  %v5142 = vadd.f32 %v4964, %v5141
  %v5143 = vpop.f32.mrb[0].mxu0
  %v5144 = vadd.f32 %v4964, %v5143
  %v5145 = vpop.f32.mrb[0].mxu0
  %v5146 = vadd.f32 %v4969, %v5145
  %v5147 = vpop.f32.mrb[0].mxu0
  %v5148 = vadd.f32 %v4969, %v5147
  %5149 = vmatprep.mubr.bf16.mxu0 0
  %5150 = vmatmul.mubr.bf16.gmra.mrb[0].mxu0 %v5019
  %v5151 = vpop.f32.mrb[0].mxu0
  %v5152 = vadd.f32 %v4974, %v5151
  %v5153 = vpop.f32.mrb[0].mxu0
  %v5154 = vadd.f32 %v4974, %v5153
  %v5155 = vpop.f32.mrb[0].mxu0
  %v5156 = vadd.f32 %v4979, %v5155
  %v5157 = vpop.f32.mrb[0].mxu0
  %v5158 = vadd.f32 %v4979, %v5157
  %5159 = vmatprep.mubr.bf16.mxu0 0
  %5160 = vmatmul.mubr.bf16.gmra.mrb[0].mxu0 %v5022
  %v5161 = vpop.f32.mrb[0].mxu0
  %v5162 = vadd.f32 %v4984, %v5161
  %v5163 = vpop.f32.mrb[0].mxu0
  %v5164 = vadd.f32 %v4984, %v5163
  %v5165 = vpop.f32.mrb[0].mxu0
  %v5166 = vadd.f32 %v4989, %v5165
  %v5167 = vpop.f32.mrb[0].mxu0
  %v5168 = vadd.f32 %v4989, %v5167
  %5169 = vdwg.mxu0
  %5170 = vmatprep.subr.bf16.mxu0 %v4844
  %5171 = vmatpush1.bf16.msra.mxu0 %v4843
  %5172 = vmatprep.subr.bf16.mxu0 %v4860
  %5173 = vmatpush1.bf16.msra.mxu0 %v4859
  %5174 = vmatprep.subr.bf16.mxu0 %v4876
  %5175 = vmatpush1.bf16.msra.mxu0 %v4875
  %5176 = vmatprep.subr.bf16.mxu0 %v4892
  %5177 = vmatpush1.bf16.msra.mxu0 %v4891
  %5178 = vmatprep.subr.bf16.mxu0 %v4908
  %5179 = vmatpush1.bf16.msra.mxu0 %v4907
  %5180 = vmatprep.subr.bf16.mxu0 %v4924
  %5181 = vmatpush1.bf16.msra.mxu0 %v4923
  %5182 = vmatprep.subr.bf16.mxu0 0
  %5183 = vmatpush1.bf16.msra.mxu0 0
  %5184 = vmatprep.subr.bf16.mxu0 0
  %5185 = vmatpush1.bf16.msra.mxu0 0
  %5186 = vmatprep.subr.bf16.mxu0 0
  %5187 = vmatpush1.bf16.msra.mxu0 0
  %5188 = vmatprep.subr.bf16.mxu0 0
  %5189 = vmatpush1.bf16.msra.mxu0 0
  %5190 = vmatprep.subr.bf16.mxu0 0
  %5191 = vmatpush1.bf16.msra.mxu0 0
  %5192 = vmatprep.subr.bf16.mxu0 0
  %5193 = vmatpush1.bf16.msra.mxu0 0
  %5194 = vmatprep.subr.bf16.mxu0 0
  %5195 = vmatpush1.bf16.msra.mxu0 0
  %5196 = vmatprep.subr.bf16.mxu0 0
  %5197 = vmatpush1.bf16.msra.mxu0 0
  %5198 = vmatprep.subr.bf16.mxu0 0
  %5199 = vmatpush1.bf16.msra.mxu0 0
  %5200 = vmatprep.subr.bf16.mxu0 0
  %5201 = vmatpush1.bf16.msra.mxu0 0
  %5202 = vmatprep.mubr.bf16.mxu0 0
  %5203 = vmatmul.mubr.bf16.gmra.mrb[0].mxu0 %v5013
  %v5204 = vpop.f32.mrb[0].mxu0
  %v5205 = vadd.f32 %v4954, %v5204
  %v5206 = vpop.f32.mrb[0].mxu0
  %v5207 = vadd.f32 %v4954, %v5206
  %v5208 = vpop.f32.mrb[0].mxu0
  %v5209 = vadd.f32 %v4959, %v5208
  %v5210 = vpop.f32.mrb[0].mxu0
  %v5211 = vadd.f32 %v4959, %v5210
  %5212 = vmatprep.mubr.bf16.mxu0 0
  %5213 = vmatmul.mubr.bf16.gmra.mrb[0].mxu0 %v5016
  %v5214 = vpop.f32.mrb[0].mxu0
  %v5215 = vadd.f32 %v4964, %v5214
  %v5216 = vpop.f32.mrb[0].mxu0
  %v5217 = vadd.f32 %v4964, %v5216
  %v5218 = vpop.f32.mrb[0].mxu0
  %v5219 = vadd.f32 %v4969, %v5218
  %v5220 = vpop.f32.mrb[0].mxu0
  %v5221 = vadd.f32 %v4969, %v5220
  %5222 = vmatprep.mubr.bf16.mxu0 0
  %5223 = vmatmul.mubr.bf16.gmra.mrb[0].mxu0 %v5019
  %v5224 = vpop.f32.mrb[0].mxu0
  %v5225 = vadd.f32 %v4974, %v5224
  %v5226 = vpop.f32.mrb[0].mxu0
  %v5227 = vadd.f32 %v4974, %v5226
  %v5228 = vpop.f32.mrb[0].mxu0
  %v5229 = vadd.f32 %v4979, %v5228
  %v5230 = vpop.f32.mrb[0].mxu0
  %v5231 = vadd.f32 %v4979, %v5230
  %5232 = vmatprep.mubr.bf16.mxu0 0
  %5233 = vmatmul.mubr.bf16.gmra.mrb[0].mxu0 %v5022
  %v5234 = vpop.f32.mrb[0].mxu0
  %v5235 = vadd.f32 %v4984, %v5234
  %v5236 = vpop.f32.mrb[0].mxu0
  %v5237 = vadd.f32 %v4984, %v5236
  %v5238 = vpop.f32.mrb[0].mxu0
  %v5239 = vadd.f32 %v4989, %v5238
  %v5240 = vpop.f32.mrb[0].mxu0
  %v5241 = vadd.f32 %v4989, %v5240
  %5242 = vdwg.mxu0
  %5243 = vmatprep.subr.bf16.mxu0 %v4846
  %5244 = vmatpush1.bf16.msra.mxu0 %v4845
  %5245 = vmatprep.subr.bf16.mxu0 %v4862
  %5246 = vmatpush1.bf16.msra.mxu0 %v4861
  %5247 = vmatprep.subr.bf16.mxu0 %v4878
  %5248 = vmatpush1.bf16.msra.mxu0 %v4877
  %5249 = vmatprep.subr.bf16.mxu0 %v4894
  %5250 = vmatpush1.bf16.msra.mxu0 %v4893
  %5251 = vmatprep.subr.bf16.mxu0 %v4910
  %5252 = vmatpush1.bf16.msra.mxu0 %v4909
  %5253 = vmatprep.subr.bf16.mxu0 %v4926
  %5254 = vmatpush1.bf16.msra.mxu0 %v4925
  %5255 = vmatprep.subr.bf16.mxu0 0
  %5256 = vmatpush1.bf16.msra.mxu0 0
  %5257 = vmatprep.subr.bf16.mxu0 0
  %5258 = vmatpush1.bf16.msra.mxu0 0
  %5259 = vmatprep.subr.bf16.mxu0 0
  %5260 = vmatpush1.bf16.msra.mxu0 0
  %5261 = vmatprep.subr.bf16.mxu0 0
  %5262 = vmatpush1.bf16.msra.mxu0 0
  %5263 = vmatprep.subr.bf16.mxu0 0
  %5264 = vmatpush1.bf16.msra.mxu0 0
  %5265 = vmatprep.subr.bf16.mxu0 0
  %5266 = vmatpush1.bf16.msra.mxu0 0
  %5267 = vmatprep.subr.bf16.mxu0 0
  %5268 = vmatpush1.bf16.msra.mxu0 0
  %5269 = vmatprep.subr.bf16.mxu0 0
  %5270 = vmatpush1.bf16.msra.mxu0 0
  %5271 = vmatprep.subr.bf16.mxu0 0
  %5272 = vmatpush1.bf16.msra.mxu0 0
  %5273 = vmatprep.subr.bf16.mxu0 0
  %5274 = vmatpush1.bf16.msra.mxu0 0
  %5275 = vmatprep.mubr.bf16.mxu0 0
  %5276 = vmatmul.mubr.bf16.gmra.mrb[0].mxu0 %v5013
  %v5277 = vpop.f32.mrb[0].mxu0
  %v5278 = vadd.f32 %v4954, %v5277
  %v5279 = vpop.f32.mrb[0].mxu0
  %v5280 = vadd.f32 %v4954, %v5279
  %v5281 = vpop.f32.mrb[0].mxu0
  %v5282 = vadd.f32 %v4959, %v5281
  %v5283 = vpop.f32.mrb[0].mxu0
  %v5284 = vadd.f32 %v4959, %v5283
  %5285 = vmatprep.mubr.bf16.mxu0 0
  %5286 = vmatmul.mubr.bf16.gmra.mrb[0].mxu0 %v5016
  %v5287 = vpop.f32.mrb[0].mxu0
  %v5288 = vadd.f32 %v4964, %v5287
  %v5289 = vpop.f32.mrb[0].mxu0
  %v5290 = vadd.f32 %v4964, %v5289
  %v5291 = vpop.f32.mrb[0].mxu0
  %v5292 = vadd.f32 %v4969, %v5291
  %v5293 = vpop.f32.mrb[0].mxu0
  %v5294 = vadd.f32 %v4969, %v5293
  %5295 = vmatprep.mubr.bf16.mxu0 0
  %5296 = vmatmul.mubr.bf16.gmra.mrb[0].mxu0 %v5019
  %v5297 = vpop.f32.mrb[0].mxu0
  %v5298 = vadd.f32 %v4974, %v5297
  %v5299 = vpop.f32.mrb[0].mxu0
  %v5300 = vadd.f32 %v4974, %v5299
  %v5301 = vpop.f32.mrb[0].mxu0
  %v5302 = vadd.f32 %v4979, %v5301
  %v5303 = vpop.f32.mrb[0].mxu0
  %v5304 = vadd.f32 %v4979, %v5303
  %5305 = vmatprep.mubr.bf16.mxu0 0
  %5306 = vmatmul.mubr.bf16.gmra.mrb[0].mxu0 %v5022
  %v5307 = vpop.f32.mrb[0].mxu0
  %v5308 = vadd.f32 %v4984, %v5307
  %v5309 = vpop.f32.mrb[0].mxu0
  %v5310 = vadd.f32 %v4984, %v5309
  %v5311 = vpop.f32.mrb[0].mxu0
  %v5312 = vadd.f32 %v4989, %v5311
  %v5313 = vpop.f32.mrb[0].mxu0
  %v5314 = vadd.f32 %v4989, %v5313
  %5315 = vdwg.mxu0
  %5316 = vmatprep.subr.bf16.mxu0 %v4848
  %5317 = vmatpush1.bf16.msra.mxu0 %v4847
  %5318 = vmatprep.subr.bf16.mxu0 %v4864
  %5319 = vmatpush1.bf16.msra.mxu0 %v4863
  %5320 = vmatprep.subr.bf16.mxu0 %v4880
  %5321 = vmatpush1.bf16.msra.mxu0 %v4879
  %5322 = vmatprep.subr.bf16.mxu0 %v4896
  %5323 = vmatpush1.bf16.msra.mxu0 %v4895
  %5324 = vmatprep.subr.bf16.mxu0 %v4912
  %5325 = vmatpush1.bf16.msra.mxu0 %v4911
  %5326 = vmatprep.subr.bf16.mxu0 %v4928
  %5327 = vmatpush1.bf16.msra.mxu0 %v4927
  %5328 = vmatprep.subr.bf16.mxu0 0
  %5329 = vmatpush1.bf16.msra.mxu0 0
  %5330 = vmatprep.subr.bf16.mxu0 0
  %5331 = vmatpush1.bf16.msra.mxu0 0
  %5332 = vmatprep.subr.bf16.mxu0 0
  %5333 = vmatpush1.bf16.msra.mxu0 0
  %5334 = vmatprep.subr.bf16.mxu0 0
  %5335 = vmatpush1.bf16.msra.mxu0 0
  %5336 = vmatprep.subr.bf16.mxu0 0
  %5337 = vmatpush1.bf16.msra.mxu0 0
  %5338 = vmatprep.subr.bf16.mxu0 0
  %5339 = vmatpush1.bf16.msra.mxu0 0
  %5340 = vmatprep.subr.bf16.mxu0 0
  %5341 = vmatpush1.bf16.msra.mxu0 0
  %5342 = vmatprep.subr.bf16.mxu0 0
  %5343 = vmatpush1.bf16.msra.mxu0 0
  %5344 = vmatprep.subr.bf16.mxu0 0
  %5345 = vmatpush1.bf16.msra.mxu0 0
  %5346 = vmatprep.subr.bf16.mxu0 0
  %5347 = vmatpush1.bf16.msra.mxu0 0
  %5348 = vmatprep.mubr.bf16.mxu0 0
  %5349 = vmatmul.mubr.bf16.gmra.mrb[0].mxu0 %v5013
  %v5350 = vpop.f32.mrb[0].mxu0
  %v5351 = vadd.f32 %v4954, %v5350
  %v5352 = vpop.f32.mrb[0].mxu0
  %v5353 = vadd.f32 %v4954, %v5352
  %v5354 = vpop.f32.mrb[0].mxu0
  %v5355 = vadd.f32 %v4959, %v5354
  %v5356 = vpop.f32.mrb[0].mxu0
  %v5357 = vadd.f32 %v4959, %v5356
  %5358 = vmatprep.mubr.bf16.mxu0 0
  %5359 = vmatmul.mubr.bf16.gmra.mrb[0].mxu0 %v5016
  %v5360 = vpop.f32.mrb[0].mxu0
  %v5361 = vadd.f32 %v4964, %v5360
  %v5362 = vpop.f32.mrb[0].mxu0
  %v5363 = vadd.f32 %v4964, %v5362
  %v5364 = vpop.f32.mrb[0].mxu0
  %v5365 = vadd.f32 %v4969, %v5364
  %v5366 = vpop.f32.mrb[0].mxu0
  %v5367 = vadd.f32 %v4969, %v5366
  %5368 = vmatprep.mubr.bf16.mxu0 0
  %5369 = vmatmul.mubr.bf16.gmra.mrb[0].mxu0 %v5019
  %v5370 = vpop.f32.mrb[0].mxu0
  %v5371 = vadd.f32 %v4974, %v5370
  %v5372 = vpop.f32.mrb[0].mxu0
  %v5373 = vadd.f32 %v4974, %v5372
  %v5374 = vpop.f32.mrb[0].mxu0
  %v5375 = vadd.f32 %v4979, %v5374
  %v5376 = vpop.f32.mrb[0].mxu0
  %v5377 = vadd.f32 %v4979, %v5376
  %5378 = vmatprep.mubr.bf16.mxu0 0
  %5379 = vmatmul.mubr.bf16.gmra.mrb[0].mxu0 %v5022
  %v5380 = vpop.f32.mrb[0].mxu0
  %v5381 = vadd.f32 %v4984, %v5380
  %v5382 = vpop.f32.mrb[0].mxu0
  %v5383 = vadd.f32 %v4984, %v5382
  %v5384 = vpop.f32.mrb[0].mxu0
  %v5385 = vadd.f32 %v4989, %v5384
  %v5386 = vpop.f32.mrb[0].mxu0
  %v5387 = vadd.f32 %v4989, %v5386
  %5388 = vdwg.mxu0
  %5389 = vmatprep.subr.bf16.mxu0 %v4850
  %5390 = vmatpush1.bf16.msra.mxu0 %v4849
  %5391 = vmatprep.subr.bf16.mxu0 %v4866
  %5392 = vmatpush1.bf16.msra.mxu0 %v4865
  %5393 = vmatprep.subr.bf16.mxu0 %v4882
  %5394 = vmatpush1.bf16.msra.mxu0 %v4881
  %5395 = vmatprep.subr.bf16.mxu0 %v4898
  %5396 = vmatpush1.bf16.msra.mxu0 %v4897
  %5397 = vmatprep.subr.bf16.mxu0 %v4914
  %5398 = vmatpush1.bf16.msra.mxu0 %v4913
  %5399 = vmatprep.subr.bf16.mxu0 %v4930
  %5400 = vmatpush1.bf16.msra.mxu0 %v4929
  %5401 = vmatprep.subr.bf16.mxu0 0
  %5402 = vmatpush1.bf16.msra.mxu0 0
  %5403 = vmatprep.subr.bf16.mxu0 0
  %5404 = vmatpush1.bf16.msra.mxu0 0
  %5405 = vmatprep.subr.bf16.mxu0 0
  %5406 = vmatpush1.bf16.msra.mxu0 0
  %5407 = vmatprep.subr.bf16.mxu0 0
  %5408 = vmatpush1.bf16.msra.mxu0 0
  %5409 = vmatprep.subr.bf16.mxu0 0
  %5410 = vmatpush1.bf16.msra.mxu0 0
  %5411 = vmatprep.subr.bf16.mxu0 0
  %5412 = vmatpush1.bf16.msra.mxu0 0
  %5413 = vmatprep.subr.bf16.mxu0 0
  %5414 = vmatpush1.bf16.msra.mxu0 0
  %5415 = vmatprep.subr.bf16.mxu0 0
  %5416 = vmatpush1.bf16.msra.mxu0 0
  %5417 = vmatprep.subr.bf16.mxu0 0
  %5418 = vmatpush1.bf16.msra.mxu0 0
  %5419 = vmatprep.subr.bf16.mxu0 0
  %5420 = vmatpush1.bf16.msra.mxu0 0
  %5421 = vmatprep.mubr.bf16.mxu0 0
  %5422 = vmatmul.mubr.bf16.gmra.mrb[0].mxu0 %v5013
  %v5423 = vpop.f32.mrb[0].mxu0
  %v5424 = vadd.f32 %v4954, %v5423
  %v5425 = vpop.f32.mrb[0].mxu0
  %v5426 = vadd.f32 %v4954, %v5425
  %v5427 = vpop.f32.mrb[0].mxu0
  %v5428 = vadd.f32 %v4959, %v5427
  %v5429 = vpop.f32.mrb[0].mxu0
  %v5430 = vadd.f32 %v4959, %v5429
  %5431 = vmatprep.mubr.bf16.mxu0 0
  %5432 = vmatmul.mubr.bf16.gmra.mrb[0].mxu0 %v5016
  %v5433 = vpop.f32.mrb[0].mxu0
  %v5434 = vadd.f32 %v4964, %v5433
  %v5435 = vpop.f32.mrb[0].mxu0
  %v5436 = vadd.f32 %v4964, %v5435
  %v5437 = vpop.f32.mrb[0].mxu0
  %v5438 = vadd.f32 %v4969, %v5437
  %v5439 = vpop.f32.mrb[0].mxu0
  %v5440 = vadd.f32 %v4969, %v5439
  %5441 = vmatprep.mubr.bf16.mxu0 0
  %5442 = vmatmul.mubr.bf16.gmra.mrb[0].mxu0 %v5019
  %v5443 = vpop.f32.mrb[0].mxu0
  %v5444 = vadd.f32 %v4974, %v5443
  %v5445 = vpop.f32.mrb[0].mxu0
  %v5446 = vadd.f32 %v4974, %v5445
  %v5447 = vpop.f32.mrb[0].mxu0
  %v5448 = vadd.f32 %v4979, %v5447
  %v5449 = vpop.f32.mrb[0].mxu0
  %v5450 = vadd.f32 %v4979, %v5449
  %5451 = vmatprep.mubr.bf16.mxu0 0
  %5452 = vmatmul.mubr.bf16.gmra.mrb[0].mxu0 %v5022
  %v5453 = vpop.f32.mrb[0].mxu0
  %v5454 = vadd.f32 %v4984, %v5453
  %v5455 = vpop.f32.mrb[0].mxu0
  %v5456 = vadd.f32 %v4984, %v5455
  %v5457 = vpop.f32.mrb[0].mxu0
  %v5458 = vadd.f32 %v4989, %v5457
  %v5459 = vpop.f32.mrb[0].mxu0
  %v5460 = vadd.f32 %v4989, %v5459
  %5461 = vdwg.mxu0
  %5462 = vmatprep.subr.bf16.mxu0 %v4852
  %5463 = vmatpush1.bf16.msra.mxu0 %v4851
  %5464 = vmatprep.subr.bf16.mxu0 %v4868
  %5465 = vmatpush1.bf16.msra.mxu0 %v4867
  %5466 = vmatprep.subr.bf16.mxu0 %v4884
  %5467 = vmatpush1.bf16.msra.mxu0 %v4883
  %5468 = vmatprep.subr.bf16.mxu0 %v4900
  %5469 = vmatpush1.bf16.msra.mxu0 %v4899
  %5470 = vmatprep.subr.bf16.mxu0 %v4916
  %5471 = vmatpush1.bf16.msra.mxu0 %v4915
  %5472 = vmatprep.subr.bf16.mxu0 %v4932
  %5473 = vmatpush1.bf16.msra.mxu0 %v4931
  %5474 = vmatprep.subr.bf16.mxu0 0
  %5475 = vmatpush1.bf16.msra.mxu0 0
  %5476 = vmatprep.subr.bf16.mxu0 0
  %5477 = vmatpush1.bf16.msra.mxu0 0
  %5478 = vmatprep.subr.bf16.mxu0 0
  %5479 = vmatpush1.bf16.msra.mxu0 0
  %5480 = vmatprep.subr.bf16.mxu0 0
  %5481 = vmatpush1.bf16.msra.mxu0 0
  %5482 = vmatprep.subr.bf16.mxu0 0
  %5483 = vmatpush1.bf16.msra.mxu0 0
  %5484 = vmatprep.subr.bf16.mxu0 0
  %5485 = vmatpush1.bf16.msra.mxu0 0
  %5486 = vmatprep.subr.bf16.mxu0 0
  %5487 = vmatpush1.bf16.msra.mxu0 0
  %5488 = vmatprep.subr.bf16.mxu0 0
  %5489 = vmatpush1.bf16.msra.mxu0 0
  %5490 = vmatprep.subr.bf16.mxu0 0
  %5491 = vmatpush1.bf16.msra.mxu0 0
  %5492 = vmatprep.subr.bf16.mxu0 0
  %5493 = vmatpush1.bf16.msra.mxu0 0
  %5494 = vmatprep.mubr.bf16.mxu0 0
  %5495 = vmatmul.mubr.bf16.gmra.mrb[0].mxu0 %v5013
  %v5496 = vpop.f32.mrb[0].mxu0
  %v5497 = vadd.f32 %v4954, %v5496
  %v5498 = vpop.f32.mrb[0].mxu0
  %v5499 = vadd.f32 %v4954, %v5498
  %v5500 = vpop.f32.mrb[0].mxu0
  %v5501 = vadd.f32 %v4959, %v5500
  %v5502 = vpop.f32.mrb[0].mxu0
  %v5503 = vadd.f32 %v4959, %v5502
  %5504 = vmatprep.mubr.bf16.mxu0 0
  %5505 = vmatmul.mubr.bf16.gmra.mrb[0].mxu0 %v5016
  %v5506 = vpop.f32.mrb[0].mxu0
  %v5507 = vadd.f32 %v4964, %v5506
  %v5508 = vpop.f32.mrb[0].mxu0
  %v5509 = vadd.f32 %v4964, %v5508
  %v5510 = vpop.f32.mrb[0].mxu0
  %v5511 = vadd.f32 %v4969, %v5510
  %v5512 = vpop.f32.mrb[0].mxu0
  %v5513 = vadd.f32 %v4969, %v5512
  %5514 = vmatprep.mubr.bf16.mxu0 0
  %5515 = vmatmul.mubr.bf16.gmra.mrb[0].mxu0 %v5019
  %v5516 = vpop.f32.mrb[0].mxu0
  %v5517 = vadd.f32 %v4974, %v5516
  %v5518 = vpop.f32.mrb[0].mxu0
  %v5519 = vadd.f32 %v4974, %v5518
  %v5520 = vpop.f32.mrb[0].mxu0
  %v5521 = vadd.f32 %v4979, %v5520
  %v5522 = vpop.f32.mrb[0].mxu0
  %v5523 = vadd.f32 %v4979, %v5522
  %5524 = vmatprep.mubr.bf16.mxu0 0
  %5525 = vmatmul.mubr.bf16.gmra.mrb[0].mxu0 %v5022
  %v5526 = vpop.f32.mrb[0].mxu0
  %v5527 = vadd.f32 %v4984, %v5526
  %v5528 = vpop.f32.mrb[0].mxu0
  %v5529 = vadd.f32 %v4984, %v5528
  %v5530 = vpop.f32.mrb[0].mxu0
  %v5531 = vadd.f32 %v4989, %v5530
  %v5532 = vpop.f32.mrb[0].mxu0
  %v5533 = vadd.f32 %v4989, %v5532
  %5534 = vdwg.mxu0
  %5535 = vmatprep.subr.bf16.mxu0 %v4854
  %5536 = vmatpush1.bf16.msra.mxu0 %v4853
  %5537 = vmatprep.subr.bf16.mxu0 %v4870
  %5538 = vmatpush1.bf16.msra.mxu0 %v4869
  %5539 = vmatprep.subr.bf16.mxu0 %v4886
  %5540 = vmatpush1.bf16.msra.mxu0 %v4885
  %5541 = vmatprep.subr.bf16.mxu0 %v4902
  %5542 = vmatpush1.bf16.msra.mxu0 %v4901
  %5543 = vmatprep.subr.bf16.mxu0 %v4918
  %5544 = vmatpush1.bf16.msra.mxu0 %v4917
  %5545 = vmatprep.subr.bf16.mxu0 %v4934
  %5546 = vmatpush1.bf16.msra.mxu0 %v4933
  %5547 = vmatprep.subr.bf16.mxu0 0
  %5548 = vmatpush1.bf16.msra.mxu0 0
  %5549 = vmatprep.subr.bf16.mxu0 0
  %5550 = vmatpush1.bf16.msra.mxu0 0
  %5551 = vmatprep.subr.bf16.mxu0 0
  %5552 = vmatpush1.bf16.msra.mxu0 0
  %5553 = vmatprep.subr.bf16.mxu0 0
  %5554 = vmatpush1.bf16.msra.mxu0 0
  %5555 = vmatprep.subr.bf16.mxu0 0
  %5556 = vmatpush1.bf16.msra.mxu0 0
  %5557 = vmatprep.subr.bf16.mxu0 0
  %5558 = vmatpush1.bf16.msra.mxu0 0
  %5559 = vmatprep.subr.bf16.mxu0 0
  %5560 = vmatpush1.bf16.msra.mxu0 0
  %5561 = vmatprep.subr.bf16.mxu0 0
  %5562 = vmatpush1.bf16.msra.mxu0 0
  %5563 = vmatprep.subr.bf16.mxu0 0
  %5564 = vmatpush1.bf16.msra.mxu0 0
  %5565 = vmatprep.subr.bf16.mxu0 0
  %5566 = vmatpush1.bf16.msra.mxu0 0
  %5567 = vmatprep.mubr.bf16.mxu0 0
  %5568 = vmatmul.mubr.bf16.gmra.mrb[0].mxu0 %v5013
  %v5569 = vpop.f32.mrb[0].mxu0
  %v5570 = vadd.f32 %v4954, %v5569
  %v5571 = vpop.f32.mrb[0].mxu0
  %v5572 = vadd.f32 %v4954, %v5571
  %v5573 = vpop.f32.mrb[0].mxu0
  %v5574 = vadd.f32 %v4959, %v5573
  %v5575 = vpop.f32.mrb[0].mxu0
  %v5576 = vadd.f32 %v4959, %v5575
  %5577 = vmatprep.mubr.bf16.mxu0 0
  %5578 = vmatmul.mubr.bf16.gmra.mrb[0].mxu0 %v5016
  %v5579 = vpop.f32.mrb[0].mxu0
  %v5580 = vadd.f32 %v4964, %v5579
  %v5581 = vpop.f32.mrb[0].mxu0
  %v5582 = vadd.f32 %v4964, %v5581
  %v5583 = vpop.f32.mrb[0].mxu0
  %v5584 = vadd.f32 %v4969, %v5583
  %v5585 = vpop.f32.mrb[0].mxu0
  %v5586 = vadd.f32 %v4969, %v5585
  %5587 = vmatprep.mubr.bf16.mxu0 0
  %5588 = vmatmul.mubr.bf16.gmra.mrb[0].mxu0 %v5019
  %v5589 = vpop.f32.mrb[0].mxu0
  %v5590 = vadd.f32 %v4974, %v5589
  %v5591 = vpop.f32.mrb[0].mxu0
  %v5592 = vadd.f32 %v4974, %v5591
  %v5593 = vpop.f32.mrb[0].mxu0
  %v5594 = vadd.f32 %v4979, %v5593
  %v5595 = vpop.f32.mrb[0].mxu0
  %v5596 = vadd.f32 %v4979, %v5595
  %5597 = vmatprep.mubr.bf16.mxu0 0
  %5598 = vmatmul.mubr.bf16.gmra.mrb[0].mxu0 %v5022
  %v5599 = vpop.f32.mrb[0].mxu0
  %v5600 = vadd.f32 %v4984, %v5599
  %v5601 = vpop.f32.mrb[0].mxu0
  %v5602 = vadd.f32 %v4984, %v5601
  %v5603 = vpop.f32.mrb[0].mxu0
  %v5604 = vadd.f32 %v4989, %v5603
  %v5605 = vpop.f32.mrb[0].mxu0
  %v5606 = vadd.f32 %v4989, %v5605
  %5607 = vdwg.mxu0
  %v5608 = vmax.f32 %v5059, 0.0
  %v5609 = vmax.f32 %v5061, 0.0
  %v5610 = vmax.f32 %v5132, 0.0
  %v5611 = vmax.f32 %v5134, 0.0
  %v5612 = vmax.f32 %v5205, 0.0
  %v5613 = vmax.f32 %v5207, 0.0
  %v5614 = vmax.f32 %v5278, 0.0
  %v5615 = vmax.f32 %v5280, 0.0
  %v5616 = vmax.f32 %v5351, 0.0
  %v5617 = vmax.f32 %v5353, 0.0
  %v5618 = vmax.f32 %v5424, 0.0
  %v5619 = vmax.f32 %v5426, 0.0
  %v5620 = vmax.f32 %v5497, 0.0
  %v5621 = vmax.f32 %v5499, 0.0
  %v5622 = vmax.f32 %v5570, 0.0
  %v5623 = vmax.f32 %v5572, 0.0
  %v5624 = vmax.f32 %v5063, 0.0
  %v5625 = vmax.f32 %v5065, 0.0
  %v5626 = vmax.f32 %v5136, 0.0
  %v5627 = vmax.f32 %v5138, 0.0
  %v5628 = vmax.f32 %v5209, 0.0
  %v5629 = vmax.f32 %v5211, 0.0
  %v5630 = vmax.f32 %v5282, 0.0
  %v5631 = vmax.f32 %v5284, 0.0
  %v5632 = vmax.f32 %v5355, 0.0
  %v5633 = vmax.f32 %v5357, 0.0
  %v5634 = vmax.f32 %v5428, 0.0
  %v5635 = vmax.f32 %v5430, 0.0
  %v5636 = vmax.f32 %v5501, 0.0
  %v5637 = vmax.f32 %v5503, 0.0
  %v5638 = vmax.f32 %v5574, 0.0
  %v5639 = vmax.f32 %v5576, 0.0
  %v5640 = vmax.f32 %v5069, 0.0
  %v5641 = vmax.f32 %v5071, 0.0
  %v5642 = vmax.f32 %v5142, 0.0
  %v5643 = vmax.f32 %v5144, 0.0
  %v5644 = vmax.f32 %v5215, 0.0
  %v5645 = vmax.f32 %v5217, 0.0
  %v5646 = vmax.f32 %v5288, 0.0
  %v5647 = vmax.f32 %v5290, 0.0
  %v5648 = vmax.f32 %v5361, 0.0
  %v5649 = vmax.f32 %v5363, 0.0
  %v5650 = vmax.f32 %v5434, 0.0
  %v5651 = vmax.f32 %v5436, 0.0
  %v5652 = vmax.f32 %v5507, 0.0
  %v5653 = vmax.f32 %v5509, 0.0
  %v5654 = vmax.f32 %v5580, 0.0
  %v5655 = vmax.f32 %v5582, 0.0
  %v5656 = vmax.f32 %v5073, 0.0
  %v5657 = vmax.f32 %v5075, 0.0
  %v5658 = vmax.f32 %v5146, 0.0
  %v5659 = vmax.f32 %v5148, 0.0
  %v5660 = vmax.f32 %v5219, 0.0
  %v5661 = vmax.f32 %v5221, 0.0
  %v5662 = vmax.f32 %v5292, 0.0
  %v5663 = vmax.f32 %v5294, 0.0
  %v5664 = vmax.f32 %v5365, 0.0
  %v5665 = vmax.f32 %v5367, 0.0
  %v5666 = vmax.f32 %v5438, 0.0
  %v5667 = vmax.f32 %v5440, 0.0
  %v5668 = vmax.f32 %v5511, 0.0
  %v5669 = vmax.f32 %v5513, 0.0
  %v5670 = vmax.f32 %v5584, 0.0
  %v5671 = vmax.f32 %v5586, 0.0
  %v5672 = vmax.f32 %v5079, 0.0
  %v5673 = vmax.f32 %v5081, 0.0
  %v5674 = vmax.f32 %v5152, 0.0
  %v5675 = vmax.f32 %v5154, 0.0
  %v5676 = vmax.f32 %v5225, 0.0
  %v5677 = vmax.f32 %v5227, 0.0
  %v5678 = vmax.f32 %v5298, 0.0
  %v5679 = vmax.f32 %v5300, 0.0
  %v5680 = vmax.f32 %v5371, 0.0
  %v5681 = vmax.f32 %v5373, 0.0
  %v5682 = vmax.f32 %v5444, 0.0
  %v5683 = vmax.f32 %v5446, 0.0
  %v5684 = vmax.f32 %v5517, 0.0
  %v5685 = vmax.f32 %v5519, 0.0
  %v5686 = vmax.f32 %v5590, 0.0
  %v5687 = vmax.f32 %v5592, 0.0
  %v5688 = vmax.f32 %v5083, 0.0
  %v5689 = vmax.f32 %v5085, 0.0
  %v5690 = vmax.f32 %v5156, 0.0
  %v5691 = vmax.f32 %v5158, 0.0
  %v5692 = vmax.f32 %v5229, 0.0
  %v5693 = vmax.f32 %v5231, 0.0
  %v5694 = vmax.f32 %v5302, 0.0
  %v5695 = vmax.f32 %v5304, 0.0
  %v5696 = vmax.f32 %v5375, 0.0
  %v5697 = vmax.f32 %v5377, 0.0
  %v5698 = vmax.f32 %v5448, 0.0
  %v5699 = vmax.f32 %v5450, 0.0
  %v5700 = vmax.f32 %v5521, 0.0
  %v5701 = vmax.f32 %v5523, 0.0
  %v5702 = vmax.f32 %v5594, 0.0
  %v5703 = vmax.f32 %v5596, 0.0
  %v5704 = vmax.f32 %v5089, 0.0
  %v5705 = vmax.f32 %v5091, 0.0
  %v5706 = vmax.f32 %v5162, 0.0
  %v5707 = vmax.f32 %v5164, 0.0
  %v5708 = vmax.f32 %v5235, 0.0
  %v5709 = vmax.f32 %v5237, 0.0
  %v5710 = vmax.f32 %v5308, 0.0
  %v5711 = vmax.f32 %v5310, 0.0
  %v5712 = vmax.f32 %v5381, 0.0
  %v5713 = vmax.f32 %v5383, 0.0
  %v5714 = vmax.f32 %v5454, 0.0
  %v5715 = vmax.f32 %v5456, 0.0
  %v5716 = vmax.f32 %v5527, 0.0
  %v5717 = vmax.f32 %v5529, 0.0
  %v5718 = vmax.f32 %v5600, 0.0
  %v5719 = vmax.f32 %v5602, 0.0
  %v5720 = vmax.f32 %v5093, 0.0
  %v5721 = vmax.f32 %v5095, 0.0
  %v5722 = vmax.f32 %v5166, 0.0
  %v5723 = vmax.f32 %v5168, 0.0
  %v5724 = vmax.f32 %v5239, 0.0
  %v5725 = vmax.f32 %v5241, 0.0
  %v5726 = vmax.f32 %v5312, 0.0
  %v5727 = vmax.f32 %v5314, 0.0
  %v5728 = vmax.f32 %v5385, 0.0
  %v5729 = vmax.f32 %v5387, 0.0
  %v5730 = vmax.f32 %v5458, 0.0
  %v5731 = vmax.f32 %v5460, 0.0
  %v5732 = vmax.f32 %v5531, 0.0
  %v5733 = vmax.f32 %v5533, 0.0
  %v5734 = vmax.f32 %v5604, 0.0
  %v5735 = vmax.f32 %v5606, 0.0
  %5736 = vrot.lane.b32.xlu0 %v5608, 64
  %v5737 = vpop.permute.xlu0 %5736
  %5738 = vrot.lane.b32.xlu0 %v5624, 64
  %v5739 = vpop.permute.xlu0 %5738
  %5740 = vrot.lane.b32.xlu0 %v5640, 64
  %v5741 = vpop.permute.xlu0 %5740
  %5742 = vrot.lane.b32.xlu0 %v5656, 64
  %v5743 = vpop.permute.xlu0 %5742
  %5744 = vrot.lane.b32.xlu0 %v5672, 64
  %v5745 = vpop.permute.xlu0 %5744
  %5746 = vrot.lane.b32.xlu0 %v5688, 64
  %v5747 = vpop.permute.xlu0 %5746
  %5748 = vrot.lane.b32.xlu0 %v5704, 64
  %v5749 = vpop.permute.xlu0 %5748
  %5750 = vrot.lane.b32.xlu0 %v5720, 64
  %v5751 = vpop.permute.xlu0 %5750
  %5752 = vrot.lane.b32.xlu0 %v5609, 64
  %v5753 = vpop.permute.xlu0 %5752
  %5754 = vrot.lane.b32.xlu0 %v5625, 64
  %v5755 = vpop.permute.xlu0 %5754
  %5756 = vrot.lane.b32.xlu0 %v5641, 64
  %v5757 = vpop.permute.xlu0 %5756
  %5758 = vrot.lane.b32.xlu0 %v5657, 64
  %v5759 = vpop.permute.xlu0 %5758
  %5760 = vrot.lane.b32.xlu0 %v5673, 64
  %v5761 = vpop.permute.xlu0 %5760
  %5762 = vrot.lane.b32.xlu0 %v5689, 64
  %v5763 = vpop.permute.xlu0 %5762
  %5764 = vrot.lane.b32.xlu0 %v5705, 64
  %v5765 = vpop.permute.xlu0 %5764
  %5766 = vrot.lane.b32.xlu0 %v5721, 64
  %v5767 = vpop.permute.xlu0 %5766
  %5768 = vrot.lane.b32.xlu0 %v5610, 64
  %v5769 = vpop.permute.xlu0 %5768
  %5770 = vrot.lane.b32.xlu0 %v5626, 64
  %v5771 = vpop.permute.xlu0 %5770
  %5772 = vrot.lane.b32.xlu0 %v5642, 64
  %v5773 = vpop.permute.xlu0 %5772
  %5774 = vrot.lane.b32.xlu0 %v5658, 64
  %v5775 = vpop.permute.xlu0 %5774
  %5776 = vrot.lane.b32.xlu0 %v5674, 64
  %v5777 = vpop.permute.xlu0 %5776
  %5778 = vrot.lane.b32.xlu0 %v5690, 64
  %v5779 = vpop.permute.xlu0 %5778
  %5780 = vrot.lane.b32.xlu0 %v5706, 64
  %v5781 = vpop.permute.xlu0 %5780
  %5782 = vrot.lane.b32.xlu0 %v5722, 64
  %v5783 = vpop.permute.xlu0 %5782
  %5784 = vrot.lane.b32.xlu0 %v5611, 64
  %v5785 = vpop.permute.xlu0 %5784
  %5786 = vrot.lane.b32.xlu0 %v5627, 64
  %v5787 = vpop.permute.xlu0 %5786
  %5788 = vrot.lane.b32.xlu0 %v5643, 64
  %v5789 = vpop.permute.xlu0 %5788
  %5790 = vrot.lane.b32.xlu0 %v5659, 64
  %v5791 = vpop.permute.xlu0 %5790
  %5792 = vrot.lane.b32.xlu0 %v5675, 64
  %v5793 = vpop.permute.xlu0 %5792
  %5794 = vrot.lane.b32.xlu0 %v5691, 64
  %v5795 = vpop.permute.xlu0 %5794
  %5796 = vrot.lane.b32.xlu0 %v5707, 64
  %v5797 = vpop.permute.xlu0 %5796
  %5798 = vrot.lane.b32.xlu0 %v5723, 64
  %v5799 = vpop.permute.xlu0 %5798
  %5800 = vrot.lane.b32.xlu0 %v5612, 64
  %v5801 = vpop.permute.xlu0 %5800
  %5802 = vrot.lane.b32.xlu0 %v5628, 64
  %v5803 = vpop.permute.xlu0 %5802
  %5804 = vrot.lane.b32.xlu0 %v5644, 64
  %v5805 = vpop.permute.xlu0 %5804
  %5806 = vrot.lane.b32.xlu0 %v5660, 64
  %v5807 = vpop.permute.xlu0 %5806
  %5808 = vrot.lane.b32.xlu0 %v5676, 64
  %v5809 = vpop.permute.xlu0 %5808
  %5810 = vrot.lane.b32.xlu0 %v5692, 64
  %v5811 = vpop.permute.xlu0 %5810
  %5812 = vrot.lane.b32.xlu0 %v5708, 64
  %v5813 = vpop.permute.xlu0 %5812
  %5814 = vrot.lane.b32.xlu0 %v5724, 64
  %v5815 = vpop.permute.xlu0 %5814
  %5816 = vrot.lane.b32.xlu0 %v5613, 64
  %v5817 = vpop.permute.xlu0 %5816
  %5818 = vrot.lane.b32.xlu0 %v5629, 64
  %v5819 = vpop.permute.xlu0 %5818
  %5820 = vrot.lane.b32.xlu0 %v5645, 64
  %v5821 = vpop.permute.xlu0 %5820
  %5822 = vrot.lane.b32.xlu0 %v5661, 64
  %v5823 = vpop.permute.xlu0 %5822
  %5824 = vrot.lane.b32.xlu0 %v5677, 64
  %v5825 = vpop.permute.xlu0 %5824
  %5826 = vrot.lane.b32.xlu0 %v5693, 64
  %v5827 = vpop.permute.xlu0 %5826
  %5828 = vrot.lane.b32.xlu0 %v5709, 64
  %v5829 = vpop.permute.xlu0 %5828
  %5830 = vrot.lane.b32.xlu0 %v5725, 64
  %v5831 = vpop.permute.xlu0 %5830
  %5832 = vrot.lane.b32.xlu0 %v5614, 64
  %v5833 = vpop.permute.xlu0 %5832
  %5834 = vrot.lane.b32.xlu0 %v5630, 64
  %v5835 = vpop.permute.xlu0 %5834
  %5836 = vrot.lane.b32.xlu0 %v5646, 64
  %v5837 = vpop.permute.xlu0 %5836
  %5838 = vrot.lane.b32.xlu0 %v5662, 64
  %v5839 = vpop.permute.xlu0 %5838
  %5840 = vrot.lane.b32.xlu0 %v5678, 64
  %v5841 = vpop.permute.xlu0 %5840
  %5842 = vrot.lane.b32.xlu0 %v5694, 64
  %v5843 = vpop.permute.xlu0 %5842
  %5844 = vrot.lane.b32.xlu0 %v5710, 64
  %v5845 = vpop.permute.xlu0 %5844
  %5846 = vrot.lane.b32.xlu0 %v5726, 64
  %v5847 = vpop.permute.xlu0 %5846
  %5848 = vrot.lane.b32.xlu0 %v5615, 64
  %v5849 = vpop.permute.xlu0 %5848
  %5850 = vrot.lane.b32.xlu0 %v5631, 64
  %v5851 = vpop.permute.xlu0 %5850
  %5852 = vrot.lane.b32.xlu0 %v5647, 64
  %v5853 = vpop.permute.xlu0 %5852
  %5854 = vrot.lane.b32.xlu0 %v5663, 64
  %v5855 = vpop.permute.xlu0 %5854
  %5856 = vrot.lane.b32.xlu0 %v5679, 64
  %v5857 = vpop.permute.xlu0 %5856
  %5858 = vrot.lane.b32.xlu0 %v5695, 64
  %v5859 = vpop.permute.xlu0 %5858
  %5860 = vrot.lane.b32.xlu0 %v5711, 64
  %v5861 = vpop.permute.xlu0 %5860
  %5862 = vrot.lane.b32.xlu0 %v5727, 64
  %v5863 = vpop.permute.xlu0 %5862
  %5864 = vrot.lane.b32.xlu0 %v5616, 64
  %v5865 = vpop.permute.xlu0 %5864
  %5866 = vrot.lane.b32.xlu0 %v5632, 64
  %v5867 = vpop.permute.xlu0 %5866
  %5868 = vrot.lane.b32.xlu0 %v5648, 64
  %v5869 = vpop.permute.xlu0 %5868
  %5870 = vrot.lane.b32.xlu0 %v5664, 64
  %v5871 = vpop.permute.xlu0 %5870
  %5872 = vrot.lane.b32.xlu0 %v5680, 64
  %v5873 = vpop.permute.xlu0 %5872
  %5874 = vrot.lane.b32.xlu0 %v5696, 64
  %v5875 = vpop.permute.xlu0 %5874
  %5876 = vrot.lane.b32.xlu0 %v5712, 64
  %v5877 = vpop.permute.xlu0 %5876
  %5878 = vrot.lane.b32.xlu0 %v5728, 64
  %v5879 = vpop.permute.xlu0 %5878
  %5880 = vrot.lane.b32.xlu0 %v5617, 64
  %v5881 = vpop.permute.xlu0 %5880
  %5882 = vrot.lane.b32.xlu0 %v5633, 64
  %v5883 = vpop.permute.xlu0 %5882
  %5884 = vrot.lane.b32.xlu0 %v5649, 64
  %v5885 = vpop.permute.xlu0 %5884
  %5886 = vrot.lane.b32.xlu0 %v5665, 64
  %v5887 = vpop.permute.xlu0 %5886
  %5888 = vrot.lane.b32.xlu0 %v5681, 64
  %v5889 = vpop.permute.xlu0 %5888
  %5890 = vrot.lane.b32.xlu0 %v5697, 64
  %v5891 = vpop.permute.xlu0 %5890
  %5892 = vrot.lane.b32.xlu0 %v5713, 64
  %v5893 = vpop.permute.xlu0 %5892
  %5894 = vrot.lane.b32.xlu0 %v5729, 64
  %v5895 = vpop.permute.xlu0 %5894
  %5896 = vrot.lane.b32.xlu0 %v5618, 64
  %v5897 = vpop.permute.xlu0 %5896
  %5898 = vrot.lane.b32.xlu0 %v5634, 64
  %v5899 = vpop.permute.xlu0 %5898
  %5900 = vrot.lane.b32.xlu0 %v5650, 64
  %v5901 = vpop.permute.xlu0 %5900
  %5902 = vrot.lane.b32.xlu0 %v5666, 64
  %v5903 = vpop.permute.xlu0 %5902
  %5904 = vrot.lane.b32.xlu0 %v5682, 64
  %v5905 = vpop.permute.xlu0 %5904
  %5906 = vrot.lane.b32.xlu0 %v5698, 64
  %v5907 = vpop.permute.xlu0 %5906
  %5908 = vrot.lane.b32.xlu0 %v5714, 64
  %v5909 = vpop.permute.xlu0 %5908
  %5910 = vrot.lane.b32.xlu0 %v5730, 64
  %v5911 = vpop.permute.xlu0 %5910
  %5912 = vrot.lane.b32.xlu0 %v5619, 64
  %v5913 = vpop.permute.xlu0 %5912
  %5914 = vrot.lane.b32.xlu0 %v5635, 64
  %v5915 = vpop.permute.xlu0 %5914
  %5916 = vrot.lane.b32.xlu0 %v5651, 64
  %v5917 = vpop.permute.xlu0 %5916
  %5918 = vrot.lane.b32.xlu0 %v5667, 64
  %v5919 = vpop.permute.xlu0 %5918
  %5920 = vrot.lane.b32.xlu0 %v5683, 64
  %v5921 = vpop.permute.xlu0 %5920
  %5922 = vrot.lane.b32.xlu0 %v5699, 64
  %v5923 = vpop.permute.xlu0 %5922
  %5924 = vrot.lane.b32.xlu0 %v5715, 64
  %v5925 = vpop.permute.xlu0 %5924
  %5926 = vrot.lane.b32.xlu0 %v5731, 64
  %v5927 = vpop.permute.xlu0 %5926
  %5928 = vrot.lane.b32.xlu0 %v5620, 64
  %v5929 = vpop.permute.xlu0 %5928
  %5930 = vrot.lane.b32.xlu0 %v5636, 64
  %v5931 = vpop.permute.xlu0 %5930
  %5932 = vrot.lane.b32.xlu0 %v5652, 64
  %v5933 = vpop.permute.xlu0 %5932
  %5934 = vrot.lane.b32.xlu0 %v5668, 64
  %v5935 = vpop.permute.xlu0 %5934
  %5936 = vrot.lane.b32.xlu0 %v5684, 64
  %v5937 = vpop.permute.xlu0 %5936
  %5938 = vrot.lane.b32.xlu0 %v5700, 64
  %v5939 = vpop.permute.xlu0 %5938
  %5940 = vrot.lane.b32.xlu0 %v5716, 64
  %v5941 = vpop.permute.xlu0 %5940
  %5942 = vrot.lane.b32.xlu0 %v5732, 64
  %v5943 = vpop.permute.xlu0 %5942
  %5944 = vrot.lane.b32.xlu0 %v5621, 64
  %v5945 = vpop.permute.xlu0 %5944
  %5946 = vrot.lane.b32.xlu0 %v5637, 64
  %v5947 = vpop.permute.xlu0 %5946
  %5948 = vrot.lane.b32.xlu0 %v5653, 64
  %v5949 = vpop.permute.xlu0 %5948
  %5950 = vrot.lane.b32.xlu0 %v5669, 64
  %v5951 = vpop.permute.xlu0 %5950
  %5952 = vrot.lane.b32.xlu0 %v5685, 64
  %v5953 = vpop.permute.xlu0 %5952
  %5954 = vrot.lane.b32.xlu0 %v5701, 64
  %v5955 = vpop.permute.xlu0 %5954
  %5956 = vrot.lane.b32.xlu0 %v5717, 64
  %v5957 = vpop.permute.xlu0 %5956
  %5958 = vrot.lane.b32.xlu0 %v5733, 64
  %v5959 = vpop.permute.xlu0 %5958
  %5960 = vrot.lane.b32.xlu0 %v5622, 64
  %v5961 = vpop.permute.xlu0 %5960
  %5962 = vrot.lane.b32.xlu0 %v5638, 64
  %v5963 = vpop.permute.xlu0 %5962
  %5964 = vrot.lane.b32.xlu0 %v5654, 64
  %v5965 = vpop.permute.xlu0 %5964
  %5966 = vrot.lane.b32.xlu0 %v5670, 64
  %v5967 = vpop.permute.xlu0 %5966
  %5968 = vrot.lane.b32.xlu0 %v5686, 64
  %v5969 = vpop.permute.xlu0 %5968
  %5970 = vrot.lane.b32.xlu0 %v5702, 64
  %v5971 = vpop.permute.xlu0 %5970
  %5972 = vrot.lane.b32.xlu0 %v5718, 64
  %v5973 = vpop.permute.xlu0 %5972
  %5974 = vrot.lane.b32.xlu0 %v5734, 64
  %v5975 = vpop.permute.xlu0 %5974
  %5976 = vrot.lane.b32.xlu0 %v5623, 64
  %v5977 = vpop.permute.xlu0 %5976
  %5978 = vrot.lane.b32.xlu0 %v5639, 64
  %v5979 = vpop.permute.xlu0 %5978
  %5980 = vrot.lane.b32.xlu0 %v5655, 64
  %v5981 = vpop.permute.xlu0 %5980
  %5982 = vrot.lane.b32.xlu0 %v5671, 64
  %v5983 = vpop.permute.xlu0 %5982
  %5984 = vrot.lane.b32.xlu0 %v5687, 64
  %v5985 = vpop.permute.xlu0 %5984
  %5986 = vrot.lane.b32.xlu0 %v5703, 64
  %v5987 = vpop.permute.xlu0 %5986
  %5988 = vrot.lane.b32.xlu0 %v5719, 64
  %v5989 = vpop.permute.xlu0 %5988
  %5990 = vrot.lane.b32.xlu0 %v5735, 64
  %v5991 = vpop.permute.xlu0 %5990
  %v5992 = vsel %vm4598, %v5961, %v5977
  %v5993 = vsel %vm4598, %v5963, %v5979
  %v5994 = vsel %vm4598, %v5965, %v5981
  %v5995 = vsel %vm4598, %v5967, %v5983
  %v5996 = vsel %vm4598, %v5969, %v5985
  %v5997 = vsel %vm4598, %v5971, %v5987
  %v5998 = vsel %vm4598, %v5973, %v5989
  %v5999 = vsel %vm4598, %v5975, %v5991
  %v6000 = vsel %vm4598, %v5945, %v5961
  %v6001 = vsel %vm4598, %v5947, %v5963
  %v6002 = vsel %vm4598, %v5949, %v5965
  %v6003 = vsel %vm4598, %v5951, %v5967
  %v6004 = vsel %vm4598, %v5953, %v5969
  %v6005 = vsel %vm4598, %v5955, %v5971
  %v6006 = vsel %vm4598, %v5957, %v5973
  %v6007 = vsel %vm4598, %v5959, %v5975
  %v6008 = vsel %vm4598, %v5929, %v5945
  %v6009 = vsel %vm4598, %v5931, %v5947
  %v6010 = vsel %vm4598, %v5933, %v5949
  %v6011 = vsel %vm4598, %v5935, %v5951
  %v6012 = vsel %vm4598, %v5937, %v5953
  %v6013 = vsel %vm4598, %v5939, %v5955
  %v6014 = vsel %vm4598, %v5941, %v5957
  %v6015 = vsel %vm4598, %v5943, %v5959
  %v6016 = vsel %vm4598, %v5913, %v5929
  %v6017 = vsel %vm4598, %v5915, %v5931
  %v6018 = vsel %vm4598, %v5917, %v5933
  %v6019 = vsel %vm4598, %v5919, %v5935
  %v6020 = vsel %vm4598, %v5921, %v5937
  %v6021 = vsel %vm4598, %v5923, %v5939
  %v6022 = vsel %vm4598, %v5925, %v5941
  %v6023 = vsel %vm4598, %v5927, %v5943
  %v6024 = vsel %vm4598, %v5897, %v5913
  %v6025 = vsel %vm4598, %v5899, %v5915
  %v6026 = vsel %vm4598, %v5901, %v5917
  %v6027 = vsel %vm4598, %v5903, %v5919
  %v6028 = vsel %vm4598, %v5905, %v5921
  %v6029 = vsel %vm4598, %v5907, %v5923
  %v6030 = vsel %vm4598, %v5909, %v5925
  %v6031 = vsel %vm4598, %v5911, %v5927
  %v6032 = vsel %vm4598, %v5881, %v5897
  %v6033 = vsel %vm4598, %v5883, %v5899
  %v6034 = vsel %vm4598, %v5885, %v5901
  %v6035 = vsel %vm4598, %v5887, %v5903
  %v6036 = vsel %vm4598, %v5889, %v5905
  %v6037 = vsel %vm4598, %v5891, %v5907
  %v6038 = vsel %vm4598, %v5893, %v5909
  %v6039 = vsel %vm4598, %v5895, %v5911
  %v6040 = vsel %vm4598, %v5865, %v5881
  %v6041 = vsel %vm4598, %v5867, %v5883
  %v6042 = vsel %vm4598, %v5869, %v5885
  %v6043 = vsel %vm4598, %v5871, %v5887
  %v6044 = vsel %vm4598, %v5873, %v5889
  %v6045 = vsel %vm4598, %v5875, %v5891
  %v6046 = vsel %vm4598, %v5877, %v5893
  %v6047 = vsel %vm4598, %v5879, %v5895
  %v6048 = vsel %vm4598, %v5849, %v5865
  %v6049 = vsel %vm4598, %v5851, %v5867
  %v6050 = vsel %vm4598, %v5853, %v5869
  %v6051 = vsel %vm4598, %v5855, %v5871
  %v6052 = vsel %vm4598, %v5857, %v5873
  %v6053 = vsel %vm4598, %v5859, %v5875
  %v6054 = vsel %vm4598, %v5861, %v5877
  %v6055 = vsel %vm4598, %v5863, %v5879
  %v6056 = vsel %vm4598, %v5833, %v5849
  %v6057 = vsel %vm4598, %v5835, %v5851
  %v6058 = vsel %vm4598, %v5837, %v5853
  %v6059 = vsel %vm4598, %v5839, %v5855
  %v6060 = vsel %vm4598, %v5841, %v5857
  %v6061 = vsel %vm4598, %v5843, %v5859
  %v6062 = vsel %vm4598, %v5845, %v5861
  %v6063 = vsel %vm4598, %v5847, %v5863
  %v6064 = vsel %vm4598, %v5817, %v5833
  %v6065 = vsel %vm4598, %v5819, %v5835
  %v6066 = vsel %vm4598, %v5821, %v5837
  %v6067 = vsel %vm4598, %v5823, %v5839
  %v6068 = vsel %vm4598, %v5825, %v5841
  %v6069 = vsel %vm4598, %v5827, %v5843
  %v6070 = vsel %vm4598, %v5829, %v5845
  %v6071 = vsel %vm4598, %v5831, %v5847
  %v6072 = vsel %vm4598, %v5801, %v5817
  %v6073 = vsel %vm4598, %v5803, %v5819
  %v6074 = vsel %vm4598, %v5805, %v5821
  %v6075 = vsel %vm4598, %v5807, %v5823
  %v6076 = vsel %vm4598, %v5809, %v5825
  %v6077 = vsel %vm4598, %v5811, %v5827
  %v6078 = vsel %vm4598, %v5813, %v5829
  %v6079 = vsel %vm4598, %v5815, %v5831
  %v6080 = vsel %vm4598, %v5785, %v5801
  %v6081 = vsel %vm4598, %v5787, %v5803
  %v6082 = vsel %vm4598, %v5789, %v5805
  %v6083 = vsel %vm4598, %v5791, %v5807
  %v6084 = vsel %vm4598, %v5793, %v5809
  %v6085 = vsel %vm4598, %v5795, %v5811
  %v6086 = vsel %vm4598, %v5797, %v5813
  %v6087 = vsel %vm4598, %v5799, %v5815
  %v6088 = vsel %vm4598, %v5769, %v5785
  %v6089 = vsel %vm4598, %v5771, %v5787
  %v6090 = vsel %vm4598, %v5773, %v5789
  %v6091 = vsel %vm4598, %v5775, %v5791
  %v6092 = vsel %vm4598, %v5777, %v5793
  %v6093 = vsel %vm4598, %v5779, %v5795
  %v6094 = vsel %vm4598, %v5781, %v5797
  %v6095 = vsel %vm4598, %v5783, %v5799
  %v6096 = vsel %vm4598, %v5753, %v5769
  %v6097 = vsel %vm4598, %v5755, %v5771
  %v6098 = vsel %vm4598, %v5757, %v5773
  %v6099 = vsel %vm4598, %v5759, %v5775
  %v6100 = vsel %vm4598, %v5761, %v5777
  %v6101 = vsel %vm4598, %v5763, %v5779
  %v6102 = vsel %vm4598, %v5765, %v5781
  %v6103 = vsel %vm4598, %v5767, %v5783
  %v6104 = vsel %vm4598, %v5737, %v5753
  %v6105 = vsel %vm4598, %v5739, %v5755
  %v6106 = vsel %vm4598, %v5741, %v5757
  %v6107 = vsel %vm4598, %v5743, %v5759
  %v6108 = vsel %vm4598, %v5745, %v5761
  %v6109 = vsel %vm4598, %v5747, %v5763
  %v6110 = vsel %vm4598, %v5749, %v5765
  %v6111 = vsel %vm4598, %v5751, %v5767
  %v6112 = vsel %vm4598, %v5977, %v5737
  %v6113 = vsel %vm4598, %v5979, %v5739
  %v6114 = vsel %vm4598, %v5981, %v5741
  %v6115 = vsel %vm4598, %v5983, %v5743
  %v6116 = vsel %vm4598, %v5985, %v5745
  %v6117 = vsel %vm4598, %v5987, %v5747
  %v6118 = vsel %vm4598, %v5989, %v5749
  %v6119 = vsel %vm4598, %v5991, %v5751
  %v6120 = vmax.f32 %v5608, %v6104
  %v6121 = vmax.f32 %v5609, %v6096
  %v6122 = vmax.f32 %v5610, %v6088
  %v6123 = vmax.f32 %v5611, %v6080
  %v6124 = vmax.f32 %v5612, %v6072
  %v6125 = vmax.f32 %v5613, %v6064
  %v6126 = vmax.f32 %v5614, %v6056
  %v6127 = vmax.f32 %v5615, %v6048
  %v6128 = vmax.f32 %v5616, %v6040
  %v6129 = vmax.f32 %v5617, %v6032
  %v6130 = vmax.f32 %v5618, %v6024
  %v6131 = vmax.f32 %v5619, %v6016
  %v6132 = vmax.f32 %v5620, %v6008
  %v6133 = vmax.f32 %v5621, %v6000
  %v6134 = vmax.f32 %v5622, %v5992
  %v6135 = vmax.f32 %v5623, %v6112
  %v6136 = vmax.f32 %v5624, %v6105
  %v6137 = vmax.f32 %v5625, %v6097
  %v6138 = vmax.f32 %v5626, %v6089
  %v6139 = vmax.f32 %v5627, %v6081
  %v6140 = vmax.f32 %v5628, %v6073
  %v6141 = vmax.f32 %v5629, %v6065
  %v6142 = vmax.f32 %v5630, %v6057
  %v6143 = vmax.f32 %v5631, %v6049
  %v6144 = vmax.f32 %v5632, %v6041
  %v6145 = vmax.f32 %v5633, %v6033
  %v6146 = vmax.f32 %v5634, %v6025
  %v6147 = vmax.f32 %v5635, %v6017
  %v6148 = vmax.f32 %v5636, %v6009
  %v6149 = vmax.f32 %v5637, %v6001
  %v6150 = vmax.f32 %v5638, %v5993
  %v6151 = vmax.f32 %v5639, %v6113
  %v6152 = vmax.f32 %v5640, %v6106
  %v6153 = vmax.f32 %v5641, %v6098
  %v6154 = vmax.f32 %v5642, %v6090
  %v6155 = vmax.f32 %v5643, %v6082
  %v6156 = vmax.f32 %v5644, %v6074
  %v6157 = vmax.f32 %v5645, %v6066
  %v6158 = vmax.f32 %v5646, %v6058
  %v6159 = vmax.f32 %v5647, %v6050
  %v6160 = vmax.f32 %v5648, %v6042
  %v6161 = vmax.f32 %v5649, %v6034
  %v6162 = vmax.f32 %v5650, %v6026
  %v6163 = vmax.f32 %v5651, %v6018
  %v6164 = vmax.f32 %v5652, %v6010
  %v6165 = vmax.f32 %v5653, %v6002
  %v6166 = vmax.f32 %v5654, %v5994
  %v6167 = vmax.f32 %v5655, %v6114
  %v6168 = vmax.f32 %v5656, %v6107
  %v6169 = vmax.f32 %v5657, %v6099
  %v6170 = vmax.f32 %v5658, %v6091
  %v6171 = vmax.f32 %v5659, %v6083
  %v6172 = vmax.f32 %v5660, %v6075
  %v6173 = vmax.f32 %v5661, %v6067
  %v6174 = vmax.f32 %v5662, %v6059
  %v6175 = vmax.f32 %v5663, %v6051
  %v6176 = vmax.f32 %v5664, %v6043
  %v6177 = vmax.f32 %v5665, %v6035
  %v6178 = vmax.f32 %v5666, %v6027
  %v6179 = vmax.f32 %v5667, %v6019
  %v6180 = vmax.f32 %v5668, %v6011
  %v6181 = vmax.f32 %v5669, %v6003
  %v6182 = vmax.f32 %v5670, %v5995
  %v6183 = vmax.f32 %v5671, %v6115
  %v6184 = vmax.f32 %v5672, %v6108
  %v6185 = vmax.f32 %v5673, %v6100
  %v6186 = vmax.f32 %v5674, %v6092
  %v6187 = vmax.f32 %v5675, %v6084
  %v6188 = vmax.f32 %v5676, %v6076
  %v6189 = vmax.f32 %v5677, %v6068
  %v6190 = vmax.f32 %v5678, %v6060
  %v6191 = vmax.f32 %v5679, %v6052
  %v6192 = vmax.f32 %v5680, %v6044
  %v6193 = vmax.f32 %v5681, %v6036
  %v6194 = vmax.f32 %v5682, %v6028
  %v6195 = vmax.f32 %v5683, %v6020
  %v6196 = vmax.f32 %v5684, %v6012
  %v6197 = vmax.f32 %v5685, %v6004
  %v6198 = vmax.f32 %v5686, %v5996
  %v6199 = vmax.f32 %v5687, %v6116
  %v6200 = vmax.f32 %v5688, %v6109
  %v6201 = vmax.f32 %v5689, %v6101
  %v6202 = vmax.f32 %v5690, %v6093
  %v6203 = vmax.f32 %v5691, %v6085
  %v6204 = vmax.f32 %v5692, %v6077
  %v6205 = vmax.f32 %v5693, %v6069
  %v6206 = vmax.f32 %v5694, %v6061
  %v6207 = vmax.f32 %v5695, %v6053
  %v6208 = vmax.f32 %v5696, %v6045
  %v6209 = vmax.f32 %v5697, %v6037
  %v6210 = vmax.f32 %v5698, %v6029
  %v6211 = vmax.f32 %v5699, %v6021
  %v6212 = vmax.f32 %v5700, %v6013
  %v6213 = vmax.f32 %v5701, %v6005
  %v6214 = vmax.f32 %v5702, %v5997
  %v6215 = vmax.f32 %v5703, %v6117
  %v6216 = vmax.f32 %v5704, %v6110
  %v6217 = vmax.f32 %v5705, %v6102
  %v6218 = vmax.f32 %v5706, %v6094
  %v6219 = vmax.f32 %v5707, %v6086
  %v6220 = vmax.f32 %v5708, %v6078
  %v6221 = vmax.f32 %v5709, %v6070
  %v6222 = vmax.f32 %v5710, %v6062
  %v6223 = vmax.f32 %v5711, %v6054
  %v6224 = vmax.f32 %v5712, %v6046
  %v6225 = vmax.f32 %v5713, %v6038
  %v6226 = vmax.f32 %v5714, %v6030
  %v6227 = vmax.f32 %v5715, %v6022
  %v6228 = vmax.f32 %v5716, %v6014
  %v6229 = vmax.f32 %v5717, %v6006
  %v6230 = vmax.f32 %v5718, %v5998
  %v6231 = vmax.f32 %v5719, %v6118
  %v6232 = vmax.f32 %v5720, %v6111
  %v6233 = vmax.f32 %v5721, %v6103
  %v6234 = vmax.f32 %v5722, %v6095
  %v6235 = vmax.f32 %v5723, %v6087
  %v6236 = vmax.f32 %v5724, %v6079
  %v6237 = vmax.f32 %v5725, %v6071
  %v6238 = vmax.f32 %v5726, %v6063
  %v6239 = vmax.f32 %v5727, %v6055
  %v6240 = vmax.f32 %v5728, %v6047
  %v6241 = vmax.f32 %v5729, %v6039
  %v6242 = vmax.f32 %v5730, %v6031
  %v6243 = vmax.f32 %v5731, %v6023
  %v6244 = vmax.f32 %v5732, %v6015
  %v6245 = vmax.f32 %v5733, %v6007
  %v6246 = vmax.f32 %v5734, %v5999
  %v6247 = vmax.f32 %v5735, %v6119
  %v6248 = vmax.f32 %v6120, %v6121
  %v6249 = vmax.f32 %v6121, %v6122
  %v6250 = vmax.f32 %v6122, %v6123
  %v6251 = vmax.f32 %v6123, %v6124
  %v6252 = vmax.f32 %v6124, %v6125
  %v6253 = vmax.f32 %v6125, %v6126
  %v6254 = vmax.f32 %v6126, %v6127
  %v6255 = vmax.f32 %v6127, %v6128
  %v6256 = vmax.f32 %v6128, %v6129
  %v6257 = vmax.f32 %v6129, %v6130
  %v6258 = vmax.f32 %v6130, %v6131
  %v6259 = vmax.f32 %v6131, %v6132
  %v6260 = vmax.f32 %v6132, %v6133
  %v6261 = vmax.f32 %v6133, %v6134
  %v6262 = vmax.f32 %v6134, %v6135
  %v6263 = vmax.f32 %v6135, %v6120
  %v6264 = vmax.f32 %v6136, %v6137
  %v6265 = vmax.f32 %v6137, %v6138
  %v6266 = vmax.f32 %v6138, %v6139
  %v6267 = vmax.f32 %v6139, %v6140
  %v6268 = vmax.f32 %v6140, %v6141
  %v6269 = vmax.f32 %v6141, %v6142
  %v6270 = vmax.f32 %v6142, %v6143
  %v6271 = vmax.f32 %v6143, %v6144
  %v6272 = vmax.f32 %v6144, %v6145
  %v6273 = vmax.f32 %v6145, %v6146
  %v6274 = vmax.f32 %v6146, %v6147
  %v6275 = vmax.f32 %v6147, %v6148
  %v6276 = vmax.f32 %v6148, %v6149
  %v6277 = vmax.f32 %v6149, %v6150
  %v6278 = vmax.f32 %v6150, %v6151
  %v6279 = vmax.f32 %v6151, %v6136
  %v6280 = vmax.f32 %v6152, %v6153
  %v6281 = vmax.f32 %v6153, %v6154
  %v6282 = vmax.f32 %v6154, %v6155
  %v6283 = vmax.f32 %v6155, %v6156
  %v6284 = vmax.f32 %v6156, %v6157
  %v6285 = vmax.f32 %v6157, %v6158
  %v6286 = vmax.f32 %v6158, %v6159
  %v6287 = vmax.f32 %v6159, %v6160
  %v6288 = vmax.f32 %v6160, %v6161
  %v6289 = vmax.f32 %v6161, %v6162
  %v6290 = vmax.f32 %v6162, %v6163
  %v6291 = vmax.f32 %v6163, %v6164
  %v6292 = vmax.f32 %v6164, %v6165
  %v6293 = vmax.f32 %v6165, %v6166
  %v6294 = vmax.f32 %v6166, %v6167
  %v6295 = vmax.f32 %v6167, %v6152
  %v6296 = vmax.f32 %v6168, %v6169
  %v6297 = vmax.f32 %v6169, %v6170
  %v6298 = vmax.f32 %v6170, %v6171
  %v6299 = vmax.f32 %v6171, %v6172
  %v6300 = vmax.f32 %v6172, %v6173
  %v6301 = vmax.f32 %v6173, %v6174
  %v6302 = vmax.f32 %v6174, %v6175
  %v6303 = vmax.f32 %v6175, %v6176
  %v6304 = vmax.f32 %v6176, %v6177
  %v6305 = vmax.f32 %v6177, %v6178
  %v6306 = vmax.f32 %v6178, %v6179
  %v6307 = vmax.f32 %v6179, %v6180
  %v6308 = vmax.f32 %v6180, %v6181
  %v6309 = vmax.f32 %v6181, %v6182
  %v6310 = vmax.f32 %v6182, %v6183
  %v6311 = vmax.f32 %v6183, %v6168
  %v6312 = vmax.f32 %v6184, %v6185
  %v6313 = vmax.f32 %v6185, %v6186
  %v6314 = vmax.f32 %v6186, %v6187
  %v6315 = vmax.f32 %v6187, %v6188
  %v6316 = vmax.f32 %v6188, %v6189
  %v6317 = vmax.f32 %v6189, %v6190
  %v6318 = vmax.f32 %v6190, %v6191
  %v6319 = vmax.f32 %v6191, %v6192
  %v6320 = vmax.f32 %v6192, %v6193
  %v6321 = vmax.f32 %v6193, %v6194
  %v6322 = vmax.f32 %v6194, %v6195
  %v6323 = vmax.f32 %v6195, %v6196
  %v6324 = vmax.f32 %v6196, %v6197
  %v6325 = vmax.f32 %v6197, %v6198
  %v6326 = vmax.f32 %v6198, %v6199
  %v6327 = vmax.f32 %v6199, %v6184
  %v6328 = vmax.f32 %v6200, %v6201
  %v6329 = vmax.f32 %v6201, %v6202
  %v6330 = vmax.f32 %v6202, %v6203
  %v6331 = vmax.f32 %v6203, %v6204
  %v6332 = vmax.f32 %v6204, %v6205
  %v6333 = vmax.f32 %v6205, %v6206
  %v6334 = vmax.f32 %v6206, %v6207
  %v6335 = vmax.f32 %v6207, %v6208
  %v6336 = vmax.f32 %v6208, %v6209
  %v6337 = vmax.f32 %v6209, %v6210
  %v6338 = vmax.f32 %v6210, %v6211
  %v6339 = vmax.f32 %v6211, %v6212
  %v6340 = vmax.f32 %v6212, %v6213
  %v6341 = vmax.f32 %v6213, %v6214
  %v6342 = vmax.f32 %v6214, %v6215
  %v6343 = vmax.f32 %v6215, %v6200
  %v6344 = vmax.f32 %v6216, %v6217
  %v6345 = vmax.f32 %v6217, %v6218
  %v6346 = vmax.f32 %v6218, %v6219
  %v6347 = vmax.f32 %v6219, %v6220
  %v6348 = vmax.f32 %v6220, %v6221
  %v6349 = vmax.f32 %v6221, %v6222
  %v6350 = vmax.f32 %v6222, %v6223
  %v6351 = vmax.f32 %v6223, %v6224
  %v6352 = vmax.f32 %v6224, %v6225
  %v6353 = vmax.f32 %v6225, %v6226
  %v6354 = vmax.f32 %v6226, %v6227
  %v6355 = vmax.f32 %v6227, %v6228
  %v6356 = vmax.f32 %v6228, %v6229
  %v6357 = vmax.f32 %v6229, %v6230
  %v6358 = vmax.f32 %v6230, %v6231
  %v6359 = vmax.f32 %v6231, %v6216
  %v6360 = vmax.f32 %v6232, %v6233
  %v6361 = vmax.f32 %v6233, %v6234
  %v6362 = vmax.f32 %v6234, %v6235
  %v6363 = vmax.f32 %v6235, %v6236
  %v6364 = vmax.f32 %v6236, %v6237
  %v6365 = vmax.f32 %v6237, %v6238
  %v6366 = vmax.f32 %v6238, %v6239
  %v6367 = vmax.f32 %v6239, %v6240
  %v6368 = vmax.f32 %v6240, %v6241
  %v6369 = vmax.f32 %v6241, %v6242
  %v6370 = vmax.f32 %v6242, %v6243
  %v6371 = vmax.f32 %v6243, %v6244
  %v6372 = vmax.f32 %v6244, %v6245
  %v6373 = vmax.f32 %v6245, %v6246
  %v6374 = vmax.f32 %v6246, %v6247
  %v6375 = vmax.f32 %v6247, %v6232
  %v6376 = vadd.f32 %v6248, %v6250
  %v6377 = vadd.f32 %v6249, %v6251
  %v6378 = vadd.f32 %v6250, %v6252
  %v6379 = vadd.f32 %v6251, %v6253
  %v6380 = vadd.f32 %v6252, %v6254
  %v6381 = vadd.f32 %v6253, %v6255
  %v6382 = vadd.f32 %v6254, %v6256
  %v6383 = vadd.f32 %v6255, %v6257
  %v6384 = vadd.f32 %v6256, %v6258
  %v6385 = vadd.f32 %v6257, %v6259
  %v6386 = vadd.f32 %v6258, %v6260
  %v6387 = vadd.f32 %v6259, %v6261
  %v6388 = vadd.f32 %v6260, %v6262
  %v6389 = vadd.f32 %v6261, %v6263
  %v6390 = vadd.f32 %v6262, %v6248
  %v6391 = vadd.f32 %v6263, %v6249
  %v6392 = vadd.f32 %v6264, %v6266
  %v6393 = vadd.f32 %v6265, %v6267
  %v6394 = vadd.f32 %v6266, %v6268
  %v6395 = vadd.f32 %v6267, %v6269
  %v6396 = vadd.f32 %v6268, %v6270
  %v6397 = vadd.f32 %v6269, %v6271
  %v6398 = vadd.f32 %v6270, %v6272
  %v6399 = vadd.f32 %v6271, %v6273
  %v6400 = vadd.f32 %v6272, %v6274
  %v6401 = vadd.f32 %v6273, %v6275
  %v6402 = vadd.f32 %v6274, %v6276
  %v6403 = vadd.f32 %v6275, %v6277
  %v6404 = vadd.f32 %v6276, %v6278
  %v6405 = vadd.f32 %v6277, %v6279
  %v6406 = vadd.f32 %v6278, %v6264
  %v6407 = vadd.f32 %v6279, %v6265
  %v6408 = vadd.f32 %v6280, %v6282
  %v6409 = vadd.f32 %v6281, %v6283
  %v6410 = vadd.f32 %v6282, %v6284
  %v6411 = vadd.f32 %v6283, %v6285
  %v6412 = vadd.f32 %v6284, %v6286
  %v6413 = vadd.f32 %v6285, %v6287
  %v6414 = vadd.f32 %v6286, %v6288
  %v6415 = vadd.f32 %v6287, %v6289
  %v6416 = vadd.f32 %v6288, %v6290
  %v6417 = vadd.f32 %v6289, %v6291
  %v6418 = vadd.f32 %v6290, %v6292
  %v6419 = vadd.f32 %v6291, %v6293
  %v6420 = vadd.f32 %v6292, %v6294
  %v6421 = vadd.f32 %v6293, %v6295
  %v6422 = vadd.f32 %v6294, %v6280
  %v6423 = vadd.f32 %v6295, %v6281
  %v6424 = vadd.f32 %v6296, %v6298
  %v6425 = vadd.f32 %v6297, %v6299
  %v6426 = vadd.f32 %v6298, %v6300
  %v6427 = vadd.f32 %v6299, %v6301
  %v6428 = vadd.f32 %v6300, %v6302
  %v6429 = vadd.f32 %v6301, %v6303
  %v6430 = vadd.f32 %v6302, %v6304
  %v6431 = vadd.f32 %v6303, %v6305
  %v6432 = vadd.f32 %v6304, %v6306
  %v6433 = vadd.f32 %v6305, %v6307
  %v6434 = vadd.f32 %v6306, %v6308
  %v6435 = vadd.f32 %v6307, %v6309
  %v6436 = vadd.f32 %v6308, %v6310
  %v6437 = vadd.f32 %v6309, %v6311
  %v6438 = vadd.f32 %v6310, %v6296
  %v6439 = vadd.f32 %v6311, %v6297
  %v6440 = vadd.f32 %v6312, %v6314
  %v6441 = vadd.f32 %v6313, %v6315
  %v6442 = vadd.f32 %v6314, %v6316
  %v6443 = vadd.f32 %v6315, %v6317
  %v6444 = vadd.f32 %v6316, %v6318
  %v6445 = vadd.f32 %v6317, %v6319
  %v6446 = vadd.f32 %v6318, %v6320
  %v6447 = vadd.f32 %v6319, %v6321
  %v6448 = vadd.f32 %v6320, %v6322
  %v6449 = vadd.f32 %v6321, %v6323
  %v6450 = vadd.f32 %v6322, %v6324
  %v6451 = vadd.f32 %v6323, %v6325
  %v6452 = vadd.f32 %v6324, %v6326
  %v6453 = vadd.f32 %v6325, %v6327
  %v6454 = vadd.f32 %v6326, %v6312
  %v6455 = vadd.f32 %v6327, %v6313
  %v6456 = vadd.f32 %v6328, %v6330
  %v6457 = vadd.f32 %v6329, %v6331
  %v6458 = vadd.f32 %v6330, %v6332
  %v6459 = vadd.f32 %v6331, %v6333
  %v6460 = vadd.f32 %v6332, %v6334
  %v6461 = vadd.f32 %v6333, %v6335
  %v6462 = vadd.f32 %v6334, %v6336
  %v6463 = vadd.f32 %v6335, %v6337
  %v6464 = vadd.f32 %v6336, %v6338
  %v6465 = vadd.f32 %v6337, %v6339
  %v6466 = vadd.f32 %v6338, %v6340
  %v6467 = vadd.f32 %v6339, %v6341
  %v6468 = vadd.f32 %v6340, %v6342
  %v6469 = vadd.f32 %v6341, %v6343
  %v6470 = vadd.f32 %v6342, %v6328
  %v6471 = vadd.f32 %v6343, %v6329
  %v6472 = vadd.f32 %v6344, %v6346
  %v6473 = vadd.f32 %v6345, %v6347
  %v6474 = vadd.f32 %v6346, %v6348
  %v6475 = vadd.f32 %v6347, %v6349
  %v6476 = vadd.f32 %v6348, %v6350
  %v6477 = vadd.f32 %v6349, %v6351
  %v6478 = vadd.f32 %v6350, %v6352
  %v6479 = vadd.f32 %v6351, %v6353
  %v6480 = vadd.f32 %v6352, %v6354
  %v6481 = vadd.f32 %v6353, %v6355
  %v6482 = vadd.f32 %v6354, %v6356
  %v6483 = vadd.f32 %v6355, %v6357
  %v6484 = vadd.f32 %v6356, %v6358
  %v6485 = vadd.f32 %v6357, %v6359
  %v6486 = vadd.f32 %v6358, %v6344
  %v6487 = vadd.f32 %v6359, %v6345
  %v6488 = vadd.f32 %v6360, %v6362
  %v6489 = vadd.f32 %v6361, %v6363
  %v6490 = vadd.f32 %v6362, %v6364
  %v6491 = vadd.f32 %v6363, %v6365
  %v6492 = vadd.f32 %v6364, %v6366
  %v6493 = vadd.f32 %v6365, %v6367
  %v6494 = vadd.f32 %v6366, %v6368
  %v6495 = vadd.f32 %v6367, %v6369
  %v6496 = vadd.f32 %v6368, %v6370
  %v6497 = vadd.f32 %v6369, %v6371
  %v6498 = vadd.f32 %v6370, %v6372
  %v6499 = vadd.f32 %v6371, %v6373
  %v6500 = vadd.f32 %v6372, %v6374
  %v6501 = vadd.f32 %v6373, %v6375
  %v6502 = vadd.f32 %v6374, %v6360
  %v6503 = vadd.f32 %v6375, %v6361
  %v6504 = vadd.f32 %v6376, %v6252
  %v6505 = vadd.f32 %v6377, %v6253
  %v6506 = vadd.f32 %v6378, %v6254
  %v6507 = vadd.f32 %v6379, %v6255
  %v6508 = vadd.f32 %v6380, %v6256
  %v6509 = vadd.f32 %v6381, %v6257
  %v6510 = vadd.f32 %v6382, %v6258
  %v6511 = vadd.f32 %v6383, %v6259
  %v6512 = vadd.f32 %v6384, %v6260
  %v6513 = vadd.f32 %v6385, %v6261
  %v6514 = vadd.f32 %v6386, %v6262
  %v6515 = vadd.f32 %v6387, %v6263
  %v6516 = vadd.f32 %v6388, %v6248
  %v6517 = vadd.f32 %v6389, %v6249
  %v6518 = vadd.f32 %v6390, %v6250
  %v6519 = vadd.f32 %v6391, %v6251
  %v6520 = vadd.f32 %v6392, %v6268
  %v6521 = vadd.f32 %v6393, %v6269
  %v6522 = vadd.f32 %v6394, %v6270
  %v6523 = vadd.f32 %v6395, %v6271
  %v6524 = vadd.f32 %v6396, %v6272
  %v6525 = vadd.f32 %v6397, %v6273
  %v6526 = vadd.f32 %v6398, %v6274
  %v6527 = vadd.f32 %v6399, %v6275
  %v6528 = vadd.f32 %v6400, %v6276
  %v6529 = vadd.f32 %v6401, %v6277
  %v6530 = vadd.f32 %v6402, %v6278
  %v6531 = vadd.f32 %v6403, %v6279
  %v6532 = vadd.f32 %v6404, %v6264
  %v6533 = vadd.f32 %v6405, %v6265
  %v6534 = vadd.f32 %v6406, %v6266
  %v6535 = vadd.f32 %v6407, %v6267
  %v6536 = vadd.f32 %v6408, %v6284
  %v6537 = vadd.f32 %v6409, %v6285
  %v6538 = vadd.f32 %v6410, %v6286
  %v6539 = vadd.f32 %v6411, %v6287
  %v6540 = vadd.f32 %v6412, %v6288
  %v6541 = vadd.f32 %v6413, %v6289
  %v6542 = vadd.f32 %v6414, %v6290
  %v6543 = vadd.f32 %v6415, %v6291
  %v6544 = vadd.f32 %v6416, %v6292
  %v6545 = vadd.f32 %v6417, %v6293
  %v6546 = vadd.f32 %v6418, %v6294
  %v6547 = vadd.f32 %v6419, %v6295
  %v6548 = vadd.f32 %v6420, %v6280
  %v6549 = vadd.f32 %v6421, %v6281
  %v6550 = vadd.f32 %v6422, %v6282
  %v6551 = vadd.f32 %v6423, %v6283
  %v6552 = vadd.f32 %v6424, %v6300
  %v6553 = vadd.f32 %v6425, %v6301
  %v6554 = vadd.f32 %v6426, %v6302
  %v6555 = vadd.f32 %v6427, %v6303
  %v6556 = vadd.f32 %v6428, %v6304
  %v6557 = vadd.f32 %v6429, %v6305
  %v6558 = vadd.f32 %v6430, %v6306
  %v6559 = vadd.f32 %v6431, %v6307
  %v6560 = vadd.f32 %v6432, %v6308
  %v6561 = vadd.f32 %v6433, %v6309
  %v6562 = vadd.f32 %v6434, %v6310
  %v6563 = vadd.f32 %v6435, %v6311
  %v6564 = vadd.f32 %v6436, %v6296
  %v6565 = vadd.f32 %v6437, %v6297
  %v6566 = vadd.f32 %v6438, %v6298
  %v6567 = vadd.f32 %v6439, %v6299
  %v6568 = vadd.f32 %v6440, %v6316
  %v6569 = vadd.f32 %v6441, %v6317
  %v6570 = vadd.f32 %v6442, %v6318
  %v6571 = vadd.f32 %v6443, %v6319
  %v6572 = vadd.f32 %v6444, %v6320
  %v6573 = vadd.f32 %v6445, %v6321
  %v6574 = vadd.f32 %v6446, %v6322
  %v6575 = vadd.f32 %v6447, %v6323
  %v6576 = vadd.f32 %v6448, %v6324
  %v6577 = vadd.f32 %v6449, %v6325
  %v6578 = vadd.f32 %v6450, %v6326
  %v6579 = vadd.f32 %v6451, %v6327
  %v6580 = vadd.f32 %v6452, %v6312
  %v6581 = vadd.f32 %v6453, %v6313
  %v6582 = vadd.f32 %v6454, %v6314
  %v6583 = vadd.f32 %v6455, %v6315
  %v6584 = vadd.f32 %v6456, %v6332
  %v6585 = vadd.f32 %v6457, %v6333
  %v6586 = vadd.f32 %v6458, %v6334
  %v6587 = vadd.f32 %v6459, %v6335
  %v6588 = vadd.f32 %v6460, %v6336
  %v6589 = vadd.f32 %v6461, %v6337
  %v6590 = vadd.f32 %v6462, %v6338
  %v6591 = vadd.f32 %v6463, %v6339
  %v6592 = vadd.f32 %v6464, %v6340
  %v6593 = vadd.f32 %v6465, %v6341
  %v6594 = vadd.f32 %v6466, %v6342
  %v6595 = vadd.f32 %v6467, %v6343
  %v6596 = vadd.f32 %v6468, %v6328
  %v6597 = vadd.f32 %v6469, %v6329
  %v6598 = vadd.f32 %v6470, %v6330
  %v6599 = vadd.f32 %v6471, %v6331
  %v6600 = vadd.f32 %v6472, %v6348
  %v6601 = vadd.f32 %v6473, %v6349
  %v6602 = vadd.f32 %v6474, %v6350
  %v6603 = vadd.f32 %v6475, %v6351
  %v6604 = vadd.f32 %v6476, %v6352
  %v6605 = vadd.f32 %v6477, %v6353
  %v6606 = vadd.f32 %v6478, %v6354
  %v6607 = vadd.f32 %v6479, %v6355
  %v6608 = vadd.f32 %v6480, %v6356
  %v6609 = vadd.f32 %v6481, %v6357
  %v6610 = vadd.f32 %v6482, %v6358
  %v6611 = vadd.f32 %v6483, %v6359
  %v6612 = vadd.f32 %v6484, %v6344
  %v6613 = vadd.f32 %v6485, %v6345
  %v6614 = vadd.f32 %v6486, %v6346
  %v6615 = vadd.f32 %v6487, %v6347
  %v6616 = vadd.f32 %v6488, %v6364
  %v6617 = vadd.f32 %v6489, %v6365
  %v6618 = vadd.f32 %v6490, %v6366
  %v6619 = vadd.f32 %v6491, %v6367
  %v6620 = vadd.f32 %v6492, %v6368
  %v6621 = vadd.f32 %v6493, %v6369
  %v6622 = vadd.f32 %v6494, %v6370
  %v6623 = vadd.f32 %v6495, %v6371
  %v6624 = vadd.f32 %v6496, %v6372
  %v6625 = vadd.f32 %v6497, %v6373
  %v6626 = vadd.f32 %v6498, %v6374
  %v6627 = vadd.f32 %v6499, %v6375
  %v6628 = vadd.f32 %v6500, %v6360
  %v6629 = vadd.f32 %v6501, %v6361
  %v6630 = vadd.f32 %v6502, %v6362
  %v6631 = vadd.f32 %v6503, %v6363
  %v6632 = vmul.f32 %v6504, 0.33333334
  %v6633 = vmul.f32 %v6505, 0.33333334
  %v6634 = vmul.f32 %v6506, 0.33333334
  %v6635 = vmul.f32 %v6507, 0.33333334
  %v6636 = vmul.f32 %v6508, 0.33333334
  %v6637 = vmul.f32 %v6509, 0.33333334
  %v6638 = vmul.f32 %v6510, 0.33333334
  %v6639 = vmul.f32 %v6511, 0.33333334
  %v6640 = vmul.f32 %v6512, 0.33333334
  %v6641 = vmul.f32 %v6513, 0.33333334
  %v6642 = vmul.f32 %v6514, 0.33333334
  %v6643 = vmul.f32 %v6515, 0.33333334
  %v6644 = vmul.f32 %v6516, 0.33333334
  %v6645 = vmul.f32 %v6517, 0.33333334
  %v6646 = vmul.f32 %v6518, 0.33333334
  %v6647 = vmul.f32 %v6519, 0.33333334
  %v6648 = vmul.f32 %v6520, 0.33333334
  %v6649 = vmul.f32 %v6521, 0.33333334
  %v6650 = vmul.f32 %v6522, 0.33333334
  %v6651 = vmul.f32 %v6523, 0.33333334
  %v6652 = vmul.f32 %v6524, 0.33333334
  %v6653 = vmul.f32 %v6525, 0.33333334
  %v6654 = vmul.f32 %v6526, 0.33333334
  %v6655 = vmul.f32 %v6527, 0.33333334
  %v6656 = vmul.f32 %v6528, 0.33333334
  %v6657 = vmul.f32 %v6529, 0.33333334
  %v6658 = vmul.f32 %v6530, 0.33333334
  %v6659 = vmul.f32 %v6531, 0.33333334
  %v6660 = vmul.f32 %v6532, 0.33333334
  %v6661 = vmul.f32 %v6533, 0.33333334
  %v6662 = vmul.f32 %v6534, 0.33333334
  %v6663 = vmul.f32 %v6535, 0.33333334
  %v6664 = vmul.f32 %v6536, 0.33333334
  %v6665 = vmul.f32 %v6537, 0.33333334
  %v6666 = vmul.f32 %v6538, 0.33333334
  %v6667 = vmul.f32 %v6539, 0.33333334
  %v6668 = vmul.f32 %v6540, 0.33333334
  %v6669 = vmul.f32 %v6541, 0.33333334
  %v6670 = vmul.f32 %v6542, 0.33333334
  %v6671 = vmul.f32 %v6543, 0.33333334
  %v6672 = vmul.f32 %v6544, 0.33333334
  %v6673 = vmul.f32 %v6545, 0.33333334
  %v6674 = vmul.f32 %v6546, 0.33333334
  %v6675 = vmul.f32 %v6547, 0.33333334
  %v6676 = vmul.f32 %v6548, 0.33333334
  %v6677 = vmul.f32 %v6549, 0.33333334
  %v6678 = vmul.f32 %v6550, 0.33333334
  %v6679 = vmul.f32 %v6551, 0.33333334
  %v6680 = vmul.f32 %v6552, 0.33333334
  %v6681 = vmul.f32 %v6553, 0.33333334
  %v6682 = vmul.f32 %v6554, 0.33333334
  %v6683 = vmul.f32 %v6555, 0.33333334
  %v6684 = vmul.f32 %v6556, 0.33333334
  %v6685 = vmul.f32 %v6557, 0.33333334
  %v6686 = vmul.f32 %v6558, 0.33333334
  %v6687 = vmul.f32 %v6559, 0.33333334
  %v6688 = vmul.f32 %v6560, 0.33333334
  %v6689 = vmul.f32 %v6561, 0.33333334
  %v6690 = vmul.f32 %v6562, 0.33333334
  %v6691 = vmul.f32 %v6563, 0.33333334
  %v6692 = vmul.f32 %v6564, 0.33333334
  %v6693 = vmul.f32 %v6565, 0.33333334
  %v6694 = vmul.f32 %v6566, 0.33333334
  %v6695 = vmul.f32 %v6567, 0.33333334
  %v6696 = vmul.f32 %v6568, 0.33333334
  %v6697 = vmul.f32 %v6569, 0.33333334
  %v6698 = vmul.f32 %v6570, 0.33333334
  %v6699 = vmul.f32 %v6571, 0.33333334
  %v6700 = vmul.f32 %v6572, 0.33333334
  %v6701 = vmul.f32 %v6573, 0.33333334
  %v6702 = vmul.f32 %v6574, 0.33333334
  %v6703 = vmul.f32 %v6575, 0.33333334
  %v6704 = vmul.f32 %v6576, 0.33333334
  %v6705 = vmul.f32 %v6577, 0.33333334
  %v6706 = vmul.f32 %v6578, 0.33333334
  %v6707 = vmul.f32 %v6579, 0.33333334
  %v6708 = vmul.f32 %v6580, 0.33333334
  %v6709 = vmul.f32 %v6581, 0.33333334
  %v6710 = vmul.f32 %v6582, 0.33333334
  %v6711 = vmul.f32 %v6583, 0.33333334
  %v6712 = vmul.f32 %v6584, 0.33333334
  %v6713 = vmul.f32 %v6585, 0.33333334
  %v6714 = vmul.f32 %v6586, 0.33333334
  %v6715 = vmul.f32 %v6587, 0.33333334
  %v6716 = vmul.f32 %v6588, 0.33333334
  %v6717 = vmul.f32 %v6589, 0.33333334
  %v6718 = vmul.f32 %v6590, 0.33333334
  %v6719 = vmul.f32 %v6591, 0.33333334
  %v6720 = vmul.f32 %v6592, 0.33333334
  %v6721 = vmul.f32 %v6593, 0.33333334
  %v6722 = vmul.f32 %v6594, 0.33333334
  %v6723 = vmul.f32 %v6595, 0.33333334
  %v6724 = vmul.f32 %v6596, 0.33333334
  %v6725 = vmul.f32 %v6597, 0.33333334
  %v6726 = vmul.f32 %v6598, 0.33333334
  %v6727 = vmul.f32 %v6599, 0.33333334
  %v6728 = vmul.f32 %v6600, 0.33333334
  %v6729 = vmul.f32 %v6601, 0.33333334
  %v6730 = vmul.f32 %v6602, 0.33333334
  %v6731 = vmul.f32 %v6603, 0.33333334
  %v6732 = vmul.f32 %v6604, 0.33333334
  %v6733 = vmul.f32 %v6605, 0.33333334
  %v6734 = vmul.f32 %v6606, 0.33333334
  %v6735 = vmul.f32 %v6607, 0.33333334
  %v6736 = vmul.f32 %v6608, 0.33333334
  %v6737 = vmul.f32 %v6609, 0.33333334
  %v6738 = vmul.f32 %v6610, 0.33333334
  %v6739 = vmul.f32 %v6611, 0.33333334
  %v6740 = vmul.f32 %v6612, 0.33333334
  %v6741 = vmul.f32 %v6613, 0.33333334
  %v6742 = vmul.f32 %v6614, 0.33333334
  %v6743 = vmul.f32 %v6615, 0.33333334
  %v6744 = vmul.f32 %v6616, 0.33333334
  %v6745 = vmul.f32 %v6617, 0.33333334
  %v6746 = vmul.f32 %v6618, 0.33333334
  %v6747 = vmul.f32 %v6619, 0.33333334
  %v6748 = vmul.f32 %v6620, 0.33333334
  %v6749 = vmul.f32 %v6621, 0.33333334
  %v6750 = vmul.f32 %v6622, 0.33333334
  %v6751 = vmul.f32 %v6623, 0.33333334
  %v6752 = vmul.f32 %v6624, 0.33333334
  %v6753 = vmul.f32 %v6625, 0.33333334
  %v6754 = vmul.f32 %v6626, 0.33333334
  %v6755 = vmul.f32 %v6627, 0.33333334
  %v6756 = vmul.f32 %v6628, 0.33333334
  %v6757 = vmul.f32 %v6629, 0.33333334
  %v6758 = vmul.f32 %v6630, 0.33333334
  %v6759 = vmul.f32 %v6631, 0.33333334
  %v6760 = vld [vmem:[%s9] sm:$0xf]
  %v6761 = vpack.c.bf16 %v6648, %v6632
  %v6762 = vpack.c.bf16 %v6649, %v6633
  %v6763 = vpack.c.bf16 %v6650, %v6634
  %v6764 = vpack.c.bf16 %v6651, %v6635
  %v6765 = vpack.c.bf16 %v6652, %v6636
  %v6766 = vpack.c.bf16 %v6653, %v6637
  %v6767 = vpack.c.bf16 %v6654, %v6638
  %v6768 = vpack.c.bf16 %v6655, %v6639
  %v6769 = vpack.c.bf16 %v6656, %v6640
  %v6770 = vpack.c.bf16 %v6657, %v6641
  %v6771 = vpack.c.bf16 %v6658, %v6642
  %v6772 = vpack.c.bf16 %v6659, %v6643
  %v6773 = vpack.c.bf16 %v6660, %v6644
  %v6774 = vpack.c.bf16 %v6661, %v6645
  %v6775 = vpack.c.bf16 %v6662, %v6646
  %v6776 = vpack.c.bf16 %v6663, %v6647
  %v6777 = vpack.c.bf16 %v6680, %v6664
  %v6778 = vpack.c.bf16 %v6681, %v6665
  %v6779 = vpack.c.bf16 %v6682, %v6666
  %v6780 = vpack.c.bf16 %v6683, %v6667
  %v6781 = vpack.c.bf16 %v6684, %v6668
  %v6782 = vpack.c.bf16 %v6685, %v6669
  %v6783 = vpack.c.bf16 %v6686, %v6670
  %v6784 = vpack.c.bf16 %v6687, %v6671
  %v6785 = vpack.c.bf16 %v6688, %v6672
  %v6786 = vpack.c.bf16 %v6689, %v6673
  %v6787 = vpack.c.bf16 %v6690, %v6674
  %v6788 = vpack.c.bf16 %v6691, %v6675
  %v6789 = vpack.c.bf16 %v6692, %v6676
  %v6790 = vpack.c.bf16 %v6693, %v6677
  %v6791 = vpack.c.bf16 %v6694, %v6678
  %v6792 = vpack.c.bf16 %v6695, %v6679
  %v6793 = vpack.c.bf16 %v6712, %v6696
  %v6794 = vpack.c.bf16 %v6713, %v6697
  %v6795 = vpack.c.bf16 %v6714, %v6698
  %v6796 = vpack.c.bf16 %v6715, %v6699
  %v6797 = vpack.c.bf16 %v6716, %v6700
  %v6798 = vpack.c.bf16 %v6717, %v6701
  %v6799 = vpack.c.bf16 %v6718, %v6702
  %v6800 = vpack.c.bf16 %v6719, %v6703
  %v6801 = vpack.c.bf16 %v6720, %v6704
  %v6802 = vpack.c.bf16 %v6721, %v6705
  %v6803 = vpack.c.bf16 %v6722, %v6706
  %v6804 = vpack.c.bf16 %v6723, %v6707
  %v6805 = vpack.c.bf16 %v6724, %v6708
  %v6806 = vpack.c.bf16 %v6725, %v6709
  %v6807 = vpack.c.bf16 %v6726, %v6710
  %v6808 = vpack.c.bf16 %v6727, %v6711
  %v6809 = vpack.c.bf16 %v6744, %v6728
  %v6810 = vpack.c.bf16 %v6745, %v6729
  %v6811 = vpack.c.bf16 %v6746, %v6730
  %v6812 = vpack.c.bf16 %v6747, %v6731
  %v6813 = vpack.c.bf16 %v6748, %v6732
  %v6814 = vpack.c.bf16 %v6749, %v6733
  %v6815 = vpack.c.bf16 %v6750, %v6734
  %v6816 = vpack.c.bf16 %v6751, %v6735
  %v6817 = vpack.c.bf16 %v6752, %v6736
  %v6818 = vpack.c.bf16 %v6753, %v6737
  %v6819 = vpack.c.bf16 %v6754, %v6738
  %v6820 = vpack.c.bf16 %v6755, %v6739
  %v6821 = vpack.c.bf16 %v6756, %v6740
  %v6822 = vpack.c.bf16 %v6757, %v6741
  %v6823 = vpack.c.bf16 %v6758, %v6742
  %v6824 = vpack.c.bf16 %v6759, %v6743
  %v6825 = vld [vmem:[%s10] sm:$0xff]
  %6827 = vset.pattern.permute.xlu0 0
  %6828 = vperm.xlu0 %6827, %v6825
  %v6829 = vpop.permute.xlu0 %6828
  %vm6831 = vcmask 523264
  %v6833 = vsel %vm6831, %v6760, 0
  %6835 = vmatprep.subr.bf16.mxu0 %v6762
  %6836 = vmatpush1.bf16.msra.mxu0 %v6761
  %6837 = vmatprep.subr.bf16.mxu0 %v6778
  %6838 = vmatpush1.bf16.msra.mxu0 %v6777
  %6839 = vmatprep.subr.bf16.mxu0 %v6794
  %6840 = vmatpush1.bf16.msra.mxu0 %v6793
  %6841 = vmatprep.subr.bf16.mxu0 %v6810
  %6842 = vmatpush1.bf16.msra.mxu0 %v6809
  %6843 = vmatprep.subr.bf16.mxu0 0
  %6844 = vmatpush1.bf16.msra.mxu0 0
  %6845 = vmatprep.subr.bf16.mxu0 0
  %6846 = vmatpush1.bf16.msra.mxu0 0
  %6847 = vmatprep.subr.bf16.mxu0 0
  %6848 = vmatpush1.bf16.msra.mxu0 0
  %6849 = vmatprep.subr.bf16.mxu0 0
  %6850 = vmatpush1.bf16.msra.mxu0 0
  %6851 = vmatprep.subr.bf16.mxu0 0
  %6852 = vmatpush1.bf16.msra.mxu0 0
  %6853 = vmatprep.subr.bf16.mxu0 0
  %6854 = vmatpush1.bf16.msra.mxu0 0
  %6855 = vmatprep.subr.bf16.mxu0 0
  %6856 = vmatpush1.bf16.msra.mxu0 0
  %6857 = vmatprep.subr.bf16.mxu0 0
  %6858 = vmatpush1.bf16.msra.mxu0 0
  %6859 = vmatprep.subr.bf16.mxu0 0
  %6860 = vmatpush1.bf16.msra.mxu0 0
  %6861 = vmatprep.subr.bf16.mxu0 0
  %6862 = vmatpush1.bf16.msra.mxu0 0
  %6863 = vmatprep.subr.bf16.mxu0 0
  %6864 = vmatpush1.bf16.msra.mxu0 0
  %6865 = vmatprep.subr.bf16.mxu0 0
  %6866 = vmatpush1.bf16.msra.mxu0 0
  %6867 = vmatprep.mubr.bf16.mxu0 0
  %6868 = vmatmul.mubr.bf16.gmra.mrb[0].mxu0 %v6833
  %v6869 = vpop.f32.mrb[0].mxu0
  %v6870 = vadd.f32 %v6829, %v6869
  %v6871 = vpop.f32.mrb[0].mxu0
  %v6872 = vadd.f32 %v6829, %v6871
  %v6873 = vpop.f32.mrb[0].mxu0
  %v6874 = vpop.f32.mrb[0].mxu0
  %6875 = vdwg.mxu0
  %6876 = vmatprep.subr.bf16.mxu0 %v6764
  %6877 = vmatpush1.bf16.msra.mxu0 %v6763
  %6878 = vmatprep.subr.bf16.mxu0 %v6780
  %6879 = vmatpush1.bf16.msra.mxu0 %v6779
  %6880 = vmatprep.subr.bf16.mxu0 %v6796
  %6881 = vmatpush1.bf16.msra.mxu0 %v6795
  %6882 = vmatprep.subr.bf16.mxu0 %v6812
  %6883 = vmatpush1.bf16.msra.mxu0 %v6811
  %6884 = vmatprep.subr.bf16.mxu0 0
  %6885 = vmatpush1.bf16.msra.mxu0 0
  %6886 = vmatprep.subr.bf16.mxu0 0
  %6887 = vmatpush1.bf16.msra.mxu0 0
  %6888 = vmatprep.subr.bf16.mxu0 0
  %6889 = vmatpush1.bf16.msra.mxu0 0
  %6890 = vmatprep.subr.bf16.mxu0 0
  %6891 = vmatpush1.bf16.msra.mxu0 0
  %6892 = vmatprep.subr.bf16.mxu0 0
  %6893 = vmatpush1.bf16.msra.mxu0 0
  %6894 = vmatprep.subr.bf16.mxu0 0
  %6895 = vmatpush1.bf16.msra.mxu0 0
  %6896 = vmatprep.subr.bf16.mxu0 0
  %6897 = vmatpush1.bf16.msra.mxu0 0
  %6898 = vmatprep.subr.bf16.mxu0 0
  %6899 = vmatpush1.bf16.msra.mxu0 0
  %6900 = vmatprep.subr.bf16.mxu0 0
  %6901 = vmatpush1.bf16.msra.mxu0 0
  %6902 = vmatprep.subr.bf16.mxu0 0
  %6903 = vmatpush1.bf16.msra.mxu0 0
  %6904 = vmatprep.subr.bf16.mxu0 0
  %6905 = vmatpush1.bf16.msra.mxu0 0
  %6906 = vmatprep.subr.bf16.mxu0 0
  %6907 = vmatpush1.bf16.msra.mxu0 0
  %6908 = vmatprep.mubr.bf16.mxu0 0
  %6909 = vmatmul.mubr.bf16.gmra.mrb[0].mxu0 %v6833
  %v6910 = vpop.f32.mrb[0].mxu0
  %v6911 = vadd.f32 %v6829, %v6910
  %v6912 = vpop.f32.mrb[0].mxu0
  %v6913 = vadd.f32 %v6829, %v6912
  %v6914 = vpop.f32.mrb[0].mxu0
  %v6915 = vpop.f32.mrb[0].mxu0
  %6916 = vdwg.mxu0
  %6917 = vmatprep.subr.bf16.mxu0 %v6766
  %6918 = vmatpush1.bf16.msra.mxu0 %v6765
  %6919 = vmatprep.subr.bf16.mxu0 %v6782
  %6920 = vmatpush1.bf16.msra.mxu0 %v6781
  %6921 = vmatprep.subr.bf16.mxu0 %v6798
  %6922 = vmatpush1.bf16.msra.mxu0 %v6797
  %6923 = vmatprep.subr.bf16.mxu0 %v6814
  %6924 = vmatpush1.bf16.msra.mxu0 %v6813
  %6925 = vmatprep.subr.bf16.mxu0 0
  %6926 = vmatpush1.bf16.msra.mxu0 0
  %6927 = vmatprep.subr.bf16.mxu0 0
  %6928 = vmatpush1.bf16.msra.mxu0 0
  %6929 = vmatprep.subr.bf16.mxu0 0
  %6930 = vmatpush1.bf16.msra.mxu0 0
  %6931 = vmatprep.subr.bf16.mxu0 0
  %6932 = vmatpush1.bf16.msra.mxu0 0
  %6933 = vmatprep.subr.bf16.mxu0 0
  %6934 = vmatpush1.bf16.msra.mxu0 0
  %6935 = vmatprep.subr.bf16.mxu0 0
  %6936 = vmatpush1.bf16.msra.mxu0 0
  %6937 = vmatprep.subr.bf16.mxu0 0
  %6938 = vmatpush1.bf16.msra.mxu0 0
  %6939 = vmatprep.subr.bf16.mxu0 0
  %6940 = vmatpush1.bf16.msra.mxu0 0
  %6941 = vmatprep.subr.bf16.mxu0 0
  %6942 = vmatpush1.bf16.msra.mxu0 0
  %6943 = vmatprep.subr.bf16.mxu0 0
  %6944 = vmatpush1.bf16.msra.mxu0 0
  %6945 = vmatprep.subr.bf16.mxu0 0
  %6946 = vmatpush1.bf16.msra.mxu0 0
  %6947 = vmatprep.subr.bf16.mxu0 0
  %6948 = vmatpush1.bf16.msra.mxu0 0
  %6949 = vmatprep.mubr.bf16.mxu0 0
  %6950 = vmatmul.mubr.bf16.gmra.mrb[0].mxu0 %v6833
  %v6951 = vpop.f32.mrb[0].mxu0
  %v6952 = vadd.f32 %v6829, %v6951
  %v6953 = vpop.f32.mrb[0].mxu0
  %v6954 = vadd.f32 %v6829, %v6953
  %v6955 = vpop.f32.mrb[0].mxu0
  %v6956 = vpop.f32.mrb[0].mxu0
  %6957 = vdwg.mxu0
  %6958 = vmatprep.subr.bf16.mxu0 %v6768
  %6959 = vmatpush1.bf16.msra.mxu0 %v6767
  %6960 = vmatprep.subr.bf16.mxu0 %v6784
  %6961 = vmatpush1.bf16.msra.mxu0 %v6783
  %6962 = vmatprep.subr.bf16.mxu0 %v6800
  %6963 = vmatpush1.bf16.msra.mxu0 %v6799
  %6964 = vmatprep.subr.bf16.mxu0 %v6816
  %6965 = vmatpush1.bf16.msra.mxu0 %v6815
  %6966 = vmatprep.subr.bf16.mxu0 0
  %6967 = vmatpush1.bf16.msra.mxu0 0
  %6968 = vmatprep.subr.bf16.mxu0 0
  %6969 = vmatpush1.bf16.msra.mxu0 0
  %6970 = vmatprep.subr.bf16.mxu0 0
  %6971 = vmatpush1.bf16.msra.mxu0 0
  %6972 = vmatprep.subr.bf16.mxu0 0
  %6973 = vmatpush1.bf16.msra.mxu0 0
  %6974 = vmatprep.subr.bf16.mxu0 0
  %6975 = vmatpush1.bf16.msra.mxu0 0
  %6976 = vmatprep.subr.bf16.mxu0 0
  %6977 = vmatpush1.bf16.msra.mxu0 0
  %6978 = vmatprep.subr.bf16.mxu0 0
  %6979 = vmatpush1.bf16.msra.mxu0 0
  %6980 = vmatprep.subr.bf16.mxu0 0
  %6981 = vmatpush1.bf16.msra.mxu0 0
  %6982 = vmatprep.subr.bf16.mxu0 0
  %6983 = vmatpush1.bf16.msra.mxu0 0
  %6984 = vmatprep.subr.bf16.mxu0 0
  %6985 = vmatpush1.bf16.msra.mxu0 0
  %6986 = vmatprep.subr.bf16.mxu0 0
  %6987 = vmatpush1.bf16.msra.mxu0 0
  %6988 = vmatprep.subr.bf16.mxu0 0
  %6989 = vmatpush1.bf16.msra.mxu0 0
  %6990 = vmatprep.mubr.bf16.mxu0 0
  %6991 = vmatmul.mubr.bf16.gmra.mrb[0].mxu0 %v6833
  %v6992 = vpop.f32.mrb[0].mxu0
  %v6993 = vadd.f32 %v6829, %v6992
  %v6994 = vpop.f32.mrb[0].mxu0
  %v6995 = vadd.f32 %v6829, %v6994
  %v6996 = vpop.f32.mrb[0].mxu0
  %v6997 = vpop.f32.mrb[0].mxu0
  %6998 = vdwg.mxu0
  %6999 = vmatprep.subr.bf16.mxu0 %v6770
  %7000 = vmatpush1.bf16.msra.mxu0 %v6769
  %7001 = vmatprep.subr.bf16.mxu0 %v6786
  %7002 = vmatpush1.bf16.msra.mxu0 %v6785
  %7003 = vmatprep.subr.bf16.mxu0 %v6802
  %7004 = vmatpush1.bf16.msra.mxu0 %v6801
  %7005 = vmatprep.subr.bf16.mxu0 %v6818
  %7006 = vmatpush1.bf16.msra.mxu0 %v6817
  %7007 = vmatprep.subr.bf16.mxu0 0
  %7008 = vmatpush1.bf16.msra.mxu0 0
  %7009 = vmatprep.subr.bf16.mxu0 0
  %7010 = vmatpush1.bf16.msra.mxu0 0
  %7011 = vmatprep.subr.bf16.mxu0 0
  %7012 = vmatpush1.bf16.msra.mxu0 0
  %7013 = vmatprep.subr.bf16.mxu0 0
  %7014 = vmatpush1.bf16.msra.mxu0 0
  %7015 = vmatprep.subr.bf16.mxu0 0
  %7016 = vmatpush1.bf16.msra.mxu0 0
  %7017 = vmatprep.subr.bf16.mxu0 0
  %7018 = vmatpush1.bf16.msra.mxu0 0
  %7019 = vmatprep.subr.bf16.mxu0 0
  %7020 = vmatpush1.bf16.msra.mxu0 0
  %7021 = vmatprep.subr.bf16.mxu0 0
  %7022 = vmatpush1.bf16.msra.mxu0 0
  %7023 = vmatprep.subr.bf16.mxu0 0
  %7024 = vmatpush1.bf16.msra.mxu0 0
  %7025 = vmatprep.subr.bf16.mxu0 0
  %7026 = vmatpush1.bf16.msra.mxu0 0
  %7027 = vmatprep.subr.bf16.mxu0 0
  %7028 = vmatpush1.bf16.msra.mxu0 0
  %7029 = vmatprep.subr.bf16.mxu0 0
  %7030 = vmatpush1.bf16.msra.mxu0 0
  %7031 = vmatprep.mubr.bf16.mxu0 0
  %7032 = vmatmul.mubr.bf16.gmra.mrb[0].mxu0 %v6833
  %v7033 = vpop.f32.mrb[0].mxu0
  %v7034 = vadd.f32 %v6829, %v7033
  %v7035 = vpop.f32.mrb[0].mxu0
  %v7036 = vadd.f32 %v6829, %v7035
  %v7037 = vpop.f32.mrb[0].mxu0
  %v7038 = vpop.f32.mrb[0].mxu0
  %7039 = vdwg.mxu0
  %7040 = vmatprep.subr.bf16.mxu0 %v6772
  %7041 = vmatpush1.bf16.msra.mxu0 %v6771
  %7042 = vmatprep.subr.bf16.mxu0 %v6788
  %7043 = vmatpush1.bf16.msra.mxu0 %v6787
  %7044 = vmatprep.subr.bf16.mxu0 %v6804
  %7045 = vmatpush1.bf16.msra.mxu0 %v6803
  %7046 = vmatprep.subr.bf16.mxu0 %v6820
  %7047 = vmatpush1.bf16.msra.mxu0 %v6819
  %7048 = vmatprep.subr.bf16.mxu0 0
  %7049 = vmatpush1.bf16.msra.mxu0 0
  %7050 = vmatprep.subr.bf16.mxu0 0
  %7051 = vmatpush1.bf16.msra.mxu0 0
  %7052 = vmatprep.subr.bf16.mxu0 0
  %7053 = vmatpush1.bf16.msra.mxu0 0
  %7054 = vmatprep.subr.bf16.mxu0 0
  %7055 = vmatpush1.bf16.msra.mxu0 0
  %7056 = vmatprep.subr.bf16.mxu0 0
  %7057 = vmatpush1.bf16.msra.mxu0 0
  %7058 = vmatprep.subr.bf16.mxu0 0
  %7059 = vmatpush1.bf16.msra.mxu0 0
  %7060 = vmatprep.subr.bf16.mxu0 0
  %7061 = vmatpush1.bf16.msra.mxu0 0
  %7062 = vmatprep.subr.bf16.mxu0 0
  %7063 = vmatpush1.bf16.msra.mxu0 0
  %7064 = vmatprep.subr.bf16.mxu0 0
  %7065 = vmatpush1.bf16.msra.mxu0 0
  %7066 = vmatprep.subr.bf16.mxu0 0
  %7067 = vmatpush1.bf16.msra.mxu0 0
  %7068 = vmatprep.subr.bf16.mxu0 0
  %7069 = vmatpush1.bf16.msra.mxu0 0
  %7070 = vmatprep.subr.bf16.mxu0 0
  %7071 = vmatpush1.bf16.msra.mxu0 0
  %7072 = vmatprep.mubr.bf16.mxu0 0
  %7073 = vmatmul.mubr.bf16.gmra.mrb[0].mxu0 %v6833
  %v7074 = vpop.f32.mrb[0].mxu0
  %v7075 = vadd.f32 %v6829, %v7074
  %v7076 = vpop.f32.mrb[0].mxu0
  %v7077 = vadd.f32 %v6829, %v7076
  %v7078 = vpop.f32.mrb[0].mxu0
  %v7079 = vpop.f32.mrb[0].mxu0
  %7080 = vdwg.mxu0
  %7081 = vmatprep.subr.bf16.mxu0 %v6774
  %7082 = vmatpush1.bf16.msra.mxu0 %v6773
  %7083 = vmatprep.subr.bf16.mxu0 %v6790
  %7084 = vmatpush1.bf16.msra.mxu0 %v6789
  %7085 = vmatprep.subr.bf16.mxu0 %v6806
  %7086 = vmatpush1.bf16.msra.mxu0 %v6805
  %7087 = vmatprep.subr.bf16.mxu0 %v6822
  %7088 = vmatpush1.bf16.msra.mxu0 %v6821
  %7089 = vmatprep.subr.bf16.mxu0 0
  %7090 = vmatpush1.bf16.msra.mxu0 0
  %7091 = vmatprep.subr.bf16.mxu0 0
  %7092 = vmatpush1.bf16.msra.mxu0 0
  %7093 = vmatprep.subr.bf16.mxu0 0
  %7094 = vmatpush1.bf16.msra.mxu0 0
  %7095 = vmatprep.subr.bf16.mxu0 0
  %7096 = vmatpush1.bf16.msra.mxu0 0
  %7097 = vmatprep.subr.bf16.mxu0 0
  %7098 = vmatpush1.bf16.msra.mxu0 0
  %7099 = vmatprep.subr.bf16.mxu0 0
  %7100 = vmatpush1.bf16.msra.mxu0 0
  %7101 = vmatprep.subr.bf16.mxu0 0
  %7102 = vmatpush1.bf16.msra.mxu0 0
  %7103 = vmatprep.subr.bf16.mxu0 0
  %7104 = vmatpush1.bf16.msra.mxu0 0
  %7105 = vmatprep.subr.bf16.mxu0 0
  %7106 = vmatpush1.bf16.msra.mxu0 0
  %7107 = vmatprep.subr.bf16.mxu0 0
  %7108 = vmatpush1.bf16.msra.mxu0 0
  %7109 = vmatprep.subr.bf16.mxu0 0
  %7110 = vmatpush1.bf16.msra.mxu0 0
  %7111 = vmatprep.subr.bf16.mxu0 0
  %7112 = vmatpush1.bf16.msra.mxu0 0
  %7113 = vmatprep.mubr.bf16.mxu0 0
  %7114 = vmatmul.mubr.bf16.gmra.mrb[0].mxu0 %v6833
  %v7115 = vpop.f32.mrb[0].mxu0
  %v7116 = vadd.f32 %v6829, %v7115
  %v7117 = vpop.f32.mrb[0].mxu0
  %v7118 = vadd.f32 %v6829, %v7117
  %v7119 = vpop.f32.mrb[0].mxu0
  %v7120 = vpop.f32.mrb[0].mxu0
  %7121 = vdwg.mxu0
  %7122 = vmatprep.subr.bf16.mxu0 %v6776
  %7123 = vmatpush1.bf16.msra.mxu0 %v6775
  %7124 = vmatprep.subr.bf16.mxu0 %v6792
  %7125 = vmatpush1.bf16.msra.mxu0 %v6791
  %7126 = vmatprep.subr.bf16.mxu0 %v6808
  %7127 = vmatpush1.bf16.msra.mxu0 %v6807
  %7128 = vmatprep.subr.bf16.mxu0 %v6824
  %7129 = vmatpush1.bf16.msra.mxu0 %v6823
  %7130 = vmatprep.subr.bf16.mxu0 0
  %7131 = vmatpush1.bf16.msra.mxu0 0
  %7132 = vmatprep.subr.bf16.mxu0 0
  %7133 = vmatpush1.bf16.msra.mxu0 0
  %7134 = vmatprep.subr.bf16.mxu0 0
  %7135 = vmatpush1.bf16.msra.mxu0 0
  %7136 = vmatprep.subr.bf16.mxu0 0
  %7137 = vmatpush1.bf16.msra.mxu0 0
  %7138 = vmatprep.subr.bf16.mxu0 0
  %7139 = vmatpush1.bf16.msra.mxu0 0
  %7140 = vmatprep.subr.bf16.mxu0 0
  %7141 = vmatpush1.bf16.msra.mxu0 0
  %7142 = vmatprep.subr.bf16.mxu0 0
  %7143 = vmatpush1.bf16.msra.mxu0 0
  %7144 = vmatprep.subr.bf16.mxu0 0
  %7145 = vmatpush1.bf16.msra.mxu0 0
  %7146 = vmatprep.subr.bf16.mxu0 0
  %7147 = vmatpush1.bf16.msra.mxu0 0
  %7148 = vmatprep.subr.bf16.mxu0 0
  %7149 = vmatpush1.bf16.msra.mxu0 0
  %7150 = vmatprep.subr.bf16.mxu0 0
  %7151 = vmatpush1.bf16.msra.mxu0 0
  %7152 = vmatprep.subr.bf16.mxu0 0
  %7153 = vmatpush1.bf16.msra.mxu0 0
  %7154 = vmatprep.mubr.bf16.mxu0 0
  %7155 = vmatmul.mubr.bf16.gmra.mrb[0].mxu0 %v6833
  %v7156 = vpop.f32.mrb[0].mxu0
  %v7157 = vadd.f32 %v6829, %v7156
  %v7158 = vpop.f32.mrb[0].mxu0
  %v7159 = vadd.f32 %v6829, %v7158
  %v7160 = vpop.f32.mrb[0].mxu0
  %v7161 = vpop.f32.mrb[0].mxu0
  %7162 = vdwg.mxu0
  %7163 = vst [vmem:[%s11] sm:$0xff] %v6870
  %7164 = vst [vmem:[%s11 + $0x8] sm:$0xff] %v6872
  %7165 = vst [vmem:[%s11 + $0x10] sm:$0xff] %v6911
  %7166 = vst [vmem:[%s11 + $0x18] sm:$0xff] %v6913
  %7167 = vst [vmem:[%s11 + $0x20] sm:$0xff] %v6952
  %7168 = vst [vmem:[%s11 + $0x28] sm:$0xff] %v6954
  %7169 = vst [vmem:[%s11 + $0x30] sm:$0xff] %v6993
  %7170 = vst [vmem:[%s11 + $0x38] sm:$0xff] %v6995
  %7171 = vst [vmem:[%s11 + $0x40] sm:$0xff] %v7034
  %7172 = vst [vmem:[%s11 + $0x48] sm:$0xff] %v7036
  %7173 = vst [vmem:[%s11 + $0x50] sm:$0xff] %v7075
  %7174 = vst [vmem:[%s11 + $0x58] sm:$0xff] %v7077
  %7175 = vst [vmem:[%s11 + $0x60] sm:$0xff] %v7116
  %7176 = vst [vmem:[%s11 + $0x68] sm:$0xff] %v7118
  %7177 = vst [vmem:[%s11 + $0x70] sm:$0xff] %v7157
  %7178 = vst [vmem:[%s11 + $0x78] sm:$0xff] %v7159
  // Predicated region
  $region46: #{music_net_forward.1} parent=0 // pred_check
    _
  $region47: #{music_net_forward.1} parent=0 // pred_check_branch
    %7180 = sbr.rel (0) target = $region49
  $region48: #{music_net_forward.1} parent=0 // pred_region
    _
  $region49: #{music_net_forward.1} parent=0 // pred_fallthru
    _
  // Predicated region
  $region50: #{music_net_forward.1} parent=0 // pred_check
    _
  $region51: #{music_net_forward.1} parent=0 // pred_check_branch
    %7182 = sbr.rel (0) target = $region53
  $region52: #{music_net_forward.1} parent=0 // pred_region
    _
  $region53: #{music_net_forward.1} parent=0 // pred_fallthru
    _

</llo_original>
